<compile_context>
chip_gen: v7x
topology: tpu7x:2x2x1
jax: 0.10.0
libtpu: 0.0.40
codegen_flags: <defaults>
</compile_context>

<pallas_src>
import math

import jax
import jax.numpy as jnp
from jax.experimental import pallas as pl
from jax.experimental.pallas import tpu as pltpu

D_MODEL = 32
N_HEADS = 4
D_K = D_MODEL // N_HEADS
D_FF = 64
N_LAYERS = 2
EPS = 1e-6
NEG_INF = -1e9
ATTN_SCALE = 1.0 / math.sqrt(D_K)

PARAM_KEYS = (
    "e_wqkv", "e_bqkv", "e_wo", "e_bo", "e_w1", "e_b1", "e_w2", "e_b2", "e_lns", "e_lnf",
    "d_wqkv", "d_bqkv", "d_wo", "d_bo", "d_w1", "d_b1", "d_w2", "d_b2", "d_lns", "d_lnf",
)


# ---------------------------------------------------------------------------
# In-kernel math helpers (whole batch folded into the row/M dimension)
# ---------------------------------------------------------------------------
def _layer_norm(x, g, b):
    """a2 * (x - mean) / (std + eps) + b2 with torch.std's unbiased (N-1) divisor."""
    mean = jnp.mean(x, axis=-1, keepdims=True)
    diff = x - mean
    var = jnp.sum(diff * diff, axis=-1, keepdims=True) * (1.0 / (x.shape[-1] - 1))
    inv = pl.reciprocal(jnp.sqrt(var) + EPS, approx=True)   # EUP slot instead of VALU divide
    return g * diff * inv + b


def _mha(q_in, kv_in, bias, wqkv, bqkv, wo, bo):
    """Multi-head attention over the whole (batch-folded) token slab.

    q_in:  [Nq, D] f32, kv_in: [Nk, D] f32
    bias:  [Nq, Nk] f32 additive, block-diagonal across batch (-1e9 off-block / masked)
    wqkv:  [D, 3D] bf16, bqkv: [1, 3D] f32
    wo:    [H, dk, D] bf16 (per-head slices of the output Linear), bo: [1, D] f32
    """
    if q_in is kv_in:                       # self-attention: ONE fused QKV matmul
        qkv = jnp.dot(q_in.astype(jnp.bfloat16), wqkv,
                      preferred_element_type=jnp.float32) + bqkv
        q = qkv[:, :D_MODEL]
        k = qkv[:, D_MODEL:2 * D_MODEL]
        v = qkv[:, 2 * D_MODEL:]
    else:                                   # cross-attention: Q from q_in, fused K|V from kv_in
        q = jnp.dot(q_in.astype(jnp.bfloat16), wqkv[:, :D_MODEL],
                    preferred_element_type=jnp.float32) + bqkv[:, :D_MODEL]
        kv = jnp.dot(kv_in.astype(jnp.bfloat16), wqkv[:, D_MODEL:],
                     preferred_element_type=jnp.float32) + bqkv[:, D_MODEL:]
        k = kv[:, :D_MODEL]
        v = kv[:, D_MODEL:]

    out = bo                                # [1, D], broadcasts over rows
    for h in range(N_HEADS):                # static unroll; per-head lane slices
        sl = slice(h * D_K, (h + 1) * D_K)
        qh = q[:, sl].astype(jnp.bfloat16)
        kh = k[:, sl].astype(jnp.bfloat16)
        vh = v[:, sl].astype(jnp.bfloat16)
        # contract the last dims of q and k (no in-kernel transpose)
        s = jax.lax.dot_general(qh, kh, (((1,), (1,)), ((), ())),
                                preferred_element_type=jnp.float32) * ATTN_SCALE + bias
        s = s - jnp.max(s, axis=-1, keepdims=True)
        p = jnp.exp(s)
        p = p * pl.reciprocal(jnp.sum(p, axis=-1, keepdims=True), approx=True)
        oh = jnp.dot(p.astype(jnp.bfloat16), vh, preferred_element_type=jnp.float32)
        out = out + jnp.dot(oh.astype(jnp.bfloat16), wo[h],
                            preferred_element_type=jnp.float32)   # fold head back to D
    return out


def _ffn(x, w1, b1, w2, b2):
    h = jnp.maximum(jnp.dot(x.astype(jnp.bfloat16), w1,
                            preferred_element_type=jnp.float32) + b1, 0.0)
    return jnp.dot(h.astype(jnp.bfloat16), w2, preferred_element_type=jnp.float32) + b2


# ---------------------------------------------------------------------------
# Single fused encoder+decoder kernel (memory stays resident in VMEM/vregs)
# ---------------------------------------------------------------------------
def fused_encdec_kernel(src_ref, tgt_ref, ebias_ref, dsbias_ref, dcbias_ref,
                        e_wqkv, e_bqkv, e_wo, e_bo, e_w1, e_b1, e_w2, e_b2, e_lns, e_lnf,
                        d_wqkv, d_bqkv, d_wo, d_bo, d_w1, d_b1, d_w2, d_b2, d_lns, d_lnf,
                        o_ref):
    enc_bias = ebias_ref[...]       # [B*S, B*S]
    self_bias = dsbias_ref[...]     # [B*T, B*T]
    cross_bias = dcbias_ref[...]    # [B*T, B*S]

    # -------- encoder stack --------
    x = src_ref[...]                # [B*S, D] f32
    for l in range(N_LAYERS):
        xn = _layer_norm(x, e_lns[l, 0], e_lns[l, 1])
        x = x + _mha(xn, xn, enc_bias, e_wqkv[l], e_bqkv[l], e_wo[l], e_bo[l])
        xn = _layer_norm(x, e_lns[l, 2], e_lns[l, 3])
        x = x + _ffn(xn, e_w1[l], e_b1[l], e_w2[l], e_b2[l])
    memory = _layer_norm(x, e_lnf[0], e_lnf[1])   # [B*S, D], never written to HBM

    # -------- decoder stack --------
    x = tgt_ref[...]                # [B*T, D] f32
    for l in range(N_LAYERS):
        xn = _layer_norm(x, d_lns[l, 0], d_lns[l, 1])
        x = x + _mha(xn, xn, self_bias,
                     d_wqkv[2 * l], d_bqkv[2 * l], d_wo[2 * l], d_bo[2 * l])
        xn = _layer_norm(x, d_lns[l, 2], d_lns[l, 3])
        x = x + _mha(xn, memory, cross_bias,
                     d_wqkv[2 * l + 1], d_bqkv[2 * l + 1], d_wo[2 * l + 1], d_bo[2 * l + 1])
        xn = _layer_norm(x, d_lns[l, 4], d_lns[l, 5])
        x = x + _ffn(xn, d_w1[l], d_b1[l], d_w2[l], d_b2[l])
    o_ref[...] = _layer_norm(x, d_lnf[0], d_lnf[1]).astype(o_ref.dtype)


# ---------------------------------------------------------------------------
# pallas_call wrapper
# ---------------------------------------------------------------------------
def _zero_map(ndim):
    return lambda i, _nd=ndim: (0,) * _nd


def _additive_block_bias(mask, nq):
    """mask: [B, mq, nk] (1 = attend). Returns block-diagonal additive bias [B*nq, B*nk]."""
    mask = mask.astype(jnp.float32)
    b, _, nk = mask.shape
    m = jnp.broadcast_to(mask, (b, nq, nk))
    eye = jnp.eye(b, dtype=jnp.float32)
    keep = m[:, :, None, :] * eye[:, None, :, None]          # [B, nq, B, nk]
    return jnp.where(keep > 0.5, 0.0, NEG_INF).reshape(b * nq, b * nk)


@jax.jit
def encoder_decoder_forward(params, source, target, source_mask, target_mask):
    """EncoderDecoder.forward: decode(encode(source, source_mask), source_mask, target, target_mask)."""
    b, s, d = source.shape
    t = target.shape[1]

    enc_bias = _additive_block_bias(source_mask, s)   # [B*S, B*S]
    dec_sbias = _additive_block_bias(target_mask, t)  # [B*T, B*T]
    dec_cbias = _additive_block_bias(source_mask, t)  # [B*T, B*S]

    args = [source.reshape(b * s, d), target.reshape(b * t, d),
            enc_bias, dec_sbias, dec_cbias] + [params[k] for k in PARAM_KEYS]

    out2d = pl.pallas_call(
        fused_encdec_kernel,
        out_shape=jax.ShapeDtypeStruct((b * t, d), source.dtype),
        grid=(1,),
        in_specs=[pl.BlockSpec(a.shape, _zero_map(a.ndim)) for a in args],
        out_specs=pl.BlockSpec((b * t, d), lambda i: (0, 0)),
        compiler_params=pltpu.CompilerParams(dimension_semantics=("arbitrary",)),
    )(*args)
    return out2d.reshape(b, t, d)


# ---------------------------------------------------------------------------
# Deterministic parameter init (nn.Linear-style, packed / pre-transposed / bf16 MXU operands)
# ---------------------------------------------------------------------------
def _linear_init(key, din, dout):
    bound = 1.0 / math.sqrt(din)
    kw, kb = jax.random.split(key)
    w = jax.random.uniform(kw, (dout, din), jnp.float32, -bound, bound)
    b = jax.random.uniform(kb, (dout,), jnp.float32, -bound, bound)
    return w.T, b                                   # x @ W form


def _attn_pack(key):
    """One attention block: wqkv [D,3D], bqkv [1,3D], wo [H,dk,D], bo [1,D]."""
    kq, kk, kv, ko = jax.random.split(key, 4)
    wq, bq = _linear_init(kq, D_MODEL, D_MODEL)
    wk, bk = _linear_init(kk, D_MODEL, D_MODEL)
    wv, bv = _linear_init(kv, D_MODEL, D_MODEL)
    wo, bo = _linear_init(ko, D_MODEL, D_MODEL)
    wqkv = jnp.concatenate([wq, wk, wv], axis=1)
    bqkv = jnp.concatenate([bq, bk, bv]).reshape(1, 3 * D_MODEL)
    return wqkv, bqkv, wo.reshape(N_HEADS, D_K, D_MODEL), bo.reshape(1, D_MODEL)


def _ffn_pack(key):
    k1, k2 = jax.random.split(key)
    w1, b1 = _linear_init(k1, D_MODEL, D_FF)
    w2, b2 = _linear_init(k2, D_FF, D_MODEL)
    return w1, b1.reshape(1, D_FF), w2, b2.reshape(1, D_MODEL)


def _ln_pack(n_ln):
    g = jnp.ones((1, D_MODEL), jnp.float32)
    b = jnp.zeros((1, D_MODEL), jnp.float32)
    per_layer = jnp.stack([g, b] * n_ln)            # [2*n_ln, 1, D]
    return jnp.stack([per_layer] * N_LAYERS)        # [L, 2*n_ln, 1, D]


def init_params(key):
    k_eattn, k_effn, k_dsa, k_dca, k_dffn = jax.random.split(key, 5)
    p = {}

    ea = [_attn_pack(k) for k in jax.random.split(k_eattn, N_LAYERS)]
    ef = [_ffn_pack(k) for k in jax.random.split(k_effn, N_LAYERS)]
    p["e_wqkv"] = jnp.stack([a[0] for a in ea]).astype(jnp.bfloat16)
    p["e_bqkv"] = jnp.stack([a[1] for a in ea])
    p["e_wo"] = jnp.stack([a[2] for a in ea]).astype(jnp.bfloat16)
    p["e_bo"] = jnp.stack([a[3] for a in ea])
    p["e_w1"] = jnp.stack([f[0] for f in ef]).astype(jnp.bfloat16)
    p["e_b1"] = jnp.stack([f[1] for f in ef])
    p["e_w2"] = jnp.stack([f[2] for f in ef]).astype(jnp.bfloat16)
    p["e_b2"] = jnp.stack([f[3] for f in ef])
    p["e_lns"] = _ln_pack(2)                        # [L, 4, 1, D]
    p["e_lnf"] = jnp.stack([jnp.ones((1, D_MODEL), jnp.float32),
                            jnp.zeros((1, D_MODEL), jnp.float32)])

    dsa = [_attn_pack(k) for k in jax.random.split(k_dsa, N_LAYERS)]
    dca = [_attn_pack(k) for k in jax.random.split(k_dca, N_LAYERS)]
    dff = [_ffn_pack(k) for k in jax.random.split(k_dffn, N_LAYERS)]
    d_attn = []
    for l in range(N_LAYERS):                       # index 2*l = self-attn, 2*l+1 = cross-attn
        d_attn.append(dsa[l])
        d_attn.append(dca[l])
    p["d_wqkv"] = jnp.stack([a[0] for a in d_attn]).astype(jnp.bfloat16)
    p["d_bqkv"] = jnp.stack([a[1] for a in d_attn])
    p["d_wo"] = jnp.stack([a[2] for a in d_attn]).astype(jnp.bfloat16)
    p["d_bo"] = jnp.stack([a[3] for a in d_attn])
    p["d_w1"] = jnp.stack([f[0] for f in dff]).astype(jnp.bfloat16)
    p["d_b1"] = jnp.stack([f[1] for f in dff])
    p["d_w2"] = jnp.stack([f[2] for f in dff]).astype(jnp.bfloat16)
    p["d_b2"] = jnp.stack([f[3] for f in dff])
    p["d_lns"] = _ln_pack(3)                        # [L, 6, 1, D]
    p["d_lnf"] = jnp.stack([jnp.ones((1, D_MODEL), jnp.float32),
                            jnp.zeros((1, D_MODEL), jnp.float32)])
    return p


# ---------------------------------------------------------------------------
# Pure-JAX reference (f32 math, same bf16-quantized weights) for a correctness check
# ---------------------------------------------------------------------------
def _ref_ln(x, g, b):
    mean = jnp.mean(x, axis=-1, keepdims=True)
    diff = x - mean
    var = jnp.sum(diff * diff, axis=-1, keepdims=True) / (x.shape[-1] - 1)
    return g * diff / (jnp.sqrt(var) + EPS) + b


def _ref_mha(q_in, kv_in, bias, wqkv, bqkv, wo, bo):
    wqkv = wqkv.astype(jnp.float32)
    wo = wo.astype(jnp.float32)
    q = q_in @ wqkv[:, :D_MODEL] + bqkv[:, :D_MODEL]
    k = kv_in @ wqkv[:, D_MODEL:2 * D_MODEL] + bqkv[:, D_MODEL:2 * D_MODEL]
    v = kv_in @ wqkv[:, 2 * D_MODEL:] + bqkv[:, 2 * D_MODEL:]
    out = bo
    for h in range(N_HEADS):
        sl = slice(h * D_K, (h + 1) * D_K)
        s = q[:, sl] @ k[:, sl].T * ATTN_SCALE + bias
        p = jax.nn.softmax(s, axis=-1)
        out = out + (p @ v[:, sl]) @ wo[h]
    return out


def _ref_ffn(x, w1, b1, w2, b2):
    h = jnp.maximum(x @ w1.astype(jnp.float32) + b1, 0.0)
    return h @ w2.astype(jnp.float32) + b2


def reference_forward(p, source, target, source_mask, target_mask):
    sbias = (1.0 - source_mask.astype(jnp.float32)) * NEG_INF   # [B, 1, S]
    tbias = (1.0 - target_mask.astype(jnp.float32)) * NEG_INF   # [B, T, T]
    outs = []
    for b in range(source.shape[0]):
        x = source[b]
        for l in range(N_LAYERS):
            xn = _ref_ln(x, p["e_lns"][l, 0], p["e_lns"][l, 1])
            x = x + _ref_mha(xn, xn, sbias[b], p["e_wqkv"][l], p["e_bqkv"][l],
                             p["e_wo"][l], p["e_bo"][l])
            xn = _ref_ln(x, p["e_lns"][l, 2], p["e_lns"][l, 3])
            x = x + _ref_ffn(xn, p["e_w1"][l], p["e_b1"][l], p["e_w2"][l], p["e_b2"][l])
        mem = _ref_ln(x, p["e_lnf"][0], p["e_lnf"][1])
        x = target[b]
        for l in range(N_LAYERS):
            xn = _ref_ln(x, p["d_lns"][l, 0], p["d_lns"][l, 1])
            x = x + _ref_mha(xn, xn, tbias[b], p["d_wqkv"][2 * l], p["d_bqkv"][2 * l],
                             p["d_wo"][2 * l], p["d_bo"][2 * l])
            xn = _ref_ln(x, p["d_lns"][l, 2], p["d_lns"][l, 3])
            x = x + _ref_mha(xn, mem, sbias[b], p["d_wqkv"][2 * l + 1], p["d_bqkv"][2 * l + 1],
                             p["d_wo"][2 * l + 1], p["d_bo"][2 * l + 1])
            xn = _ref_ln(x, p["d_lns"][l, 4], p["d_lns"][l, 5])
            x = x + _ref_ffn(xn, p["d_w1"][l], p["d_b1"][l], p["d_w2"][l], p["d_b2"][l])
        outs.append(_ref_ln(x, p["d_lnf"][0], p["d_lnf"][1]))
    return jnp.stack(outs)


if __name__ == "__main__":
    key = jax.random.PRNGKey(0)
    kp, ks, kt = jax.random.split(key, 3)
    params = init_params(kp)

    B, S, T = 2, 8, 8
    source = jax.random.normal(ks, (B, S, D_MODEL), jnp.float32)   # embedded source tokens
    target = jax.random.normal(kt, (B, T, D_MODEL), jnp.float32)   # embedded target tokens
    source_mask = jnp.ones((B, 1, S), jnp.float32)                 # all source positions visible
    target_mask = jnp.broadcast_to(jnp.tril(jnp.ones((T, T), jnp.float32)), (B, T, T))  # causal

    out = encoder_decoder_forward(params, source, target, source_mask, target_mask)
    out = jax.block_until_ready(out)
    assert out.shape == (B, T, D_MODEL)

    ref = reference_forward(params, source, target, source_mask, target_mask)
    err = float(jnp.max(jnp.abs(out - ref)))
    # loose tolerance: bf16 MXU operands + approx EUP reciprocal in softmax/LayerNorm
    assert jnp.allclose(out, ref, rtol=5e-2, atol=5e-2), f"max abs err {err}"

    print("KERNEL_OK")
</pallas_src>

<mosaic_0001>
module attributes {stable_mosaic.version = 11 : i64} {
  func.func @fused_encdec_kernel(%arg0: i32, %arg1: memref<16x32xf32, #tpu.memory_space<vmem>>, %arg2: memref<16x32xf32, #tpu.memory_space<vmem>>, %arg3: memref<16x16xf32, #tpu.memory_space<vmem>>, %arg4: memref<16x16xf32, #tpu.memory_space<vmem>>, %arg5: memref<16x16xf32, #tpu.memory_space<vmem>>, %arg6: memref<2x32x96xbf16, #tpu.memory_space<vmem>>, %arg7: memref<2x1x96xf32, #tpu.memory_space<vmem>>, %arg8: memref<2x4x8x32xbf16, #tpu.memory_space<vmem>>, %arg9: memref<2x1x32xf32, #tpu.memory_space<vmem>>, %arg10: memref<2x32x64xbf16, #tpu.memory_space<vmem>>, %arg11: memref<2x1x64xf32, #tpu.memory_space<vmem>>, %arg12: memref<2x64x32xbf16, #tpu.memory_space<vmem>>, %arg13: memref<2x1x32xf32, #tpu.memory_space<vmem>>, %arg14: memref<2x4x1x32xf32, #tpu.memory_space<vmem>>, %arg15: memref<2x1x32xf32, #tpu.memory_space<vmem>>, %arg16: memref<4x32x96xbf16, #tpu.memory_space<vmem>>, %arg17: memref<4x1x96xf32, #tpu.memory_space<vmem>>, %arg18: memref<4x4x8x32xbf16, #tpu.memory_space<vmem>>, %arg19: memref<4x1x32xf32, #tpu.memory_space<vmem>>, %arg20: memref<2x32x64xbf16, #tpu.memory_space<vmem>>, %arg21: memref<2x1x64xf32, #tpu.memory_space<vmem>>, %arg22: memref<2x64x32xbf16, #tpu.memory_space<vmem>>, %arg23: memref<2x1x32xf32, #tpu.memory_space<vmem>>, %arg24: memref<2x6x1x32xf32, #tpu.memory_space<vmem>>, %arg25: memref<2x1x32xf32, #tpu.memory_space<vmem>>, %arg26: memref<16x32xf32, #tpu.memory_space<vmem>>) attributes {dimension_semantics = [#tpu.dimension_semantics<arbitrary>], iteration_bounds = array<i64: 1>, scalar_prefetch = 0 : i64, scratch_operands = 0 : i64, tpu.core_type = #tpu.core_type<tc>, window_params = [{pipeline_mode = #tpu.pipeline_mode<synchronous>, transform_indices = @transform_0, window_bounds = array<i64: 16, 32>}, {pipeline_mode = #tpu.pipeline_mode<synchronous>, transform_indices = @transform_1, window_bounds = array<i64: 16, 32>}, {pipeline_mode = #tpu.pipeline_mode<synchronous>, transform_indices = @transform_2, window_bounds = array<i64: 16, 16>}, {pipeline_mode = #tpu.pipeline_mode<synchronous>, transform_indices = @transform_3, window_bounds = array<i64: 16, 16>}, {pipeline_mode = #tpu.pipeline_mode<synchronous>, transform_indices = @transform_4, window_bounds = array<i64: 16, 16>}, {pipeline_mode = #tpu.pipeline_mode<synchronous>, transform_indices = @transform_5, window_bounds = array<i64: 2, 32, 96>}, {pipeline_mode = #tpu.pipeline_mode<synchronous>, transform_indices = @transform_6, window_bounds = array<i64: 2, 1, 96>}, {pipeline_mode = #tpu.pipeline_mode<synchronous>, transform_indices = @transform_7, window_bounds = array<i64: 2, 4, 8, 32>}, {pipeline_mode = #tpu.pipeline_mode<synchronous>, transform_indices = @transform_8, window_bounds = array<i64: 2, 1, 32>}, {pipeline_mode = #tpu.pipeline_mode<synchronous>, transform_indices = @transform_9, window_bounds = array<i64: 2, 32, 64>}, {pipeline_mode = #tpu.pipeline_mode<synchronous>, transform_indices = @transform_10, window_bounds = array<i64: 2, 1, 64>}, {pipeline_mode = #tpu.pipeline_mode<synchronous>, transform_indices = @transform_11, window_bounds = array<i64: 2, 64, 32>}, {pipeline_mode = #tpu.pipeline_mode<synchronous>, transform_indices = @transform_12, window_bounds = array<i64: 2, 1, 32>}, {pipeline_mode = #tpu.pipeline_mode<synchronous>, transform_indices = @transform_13, window_bounds = array<i64: 2, 4, 1, 32>}, {pipeline_mode = #tpu.pipeline_mode<synchronous>, transform_indices = @transform_14, window_bounds = array<i64: 2, 1, 32>}, {pipeline_mode = #tpu.pipeline_mode<synchronous>, transform_indices = @transform_15, window_bounds = array<i64: 4, 32, 96>}, {pipeline_mode = #tpu.pipeline_mode<synchronous>, transform_indices = @transform_16, window_bounds = array<i64: 4, 1, 96>}, {pipeline_mode = #tpu.pipeline_mode<synchronous>, transform_indices = @transform_17, window_bounds = array<i64: 4, 4, 8, 32>}, {pipeline_mode = #tpu.pipeline_mode<synchronous>, transform_indices = @transform_18, window_bounds = array<i64: 4, 1, 32>}, {pipeline_mode = #tpu.pipeline_mode<synchronous>, transform_indices = @transform_19, window_bounds = array<i64: 2, 32, 64>}, {pipeline_mode = #tpu.pipeline_mode<synchronous>, transform_indices = @transform_20, window_bounds = array<i64: 2, 1, 64>}, {pipeline_mode = #tpu.pipeline_mode<synchronous>, transform_indices = @transform_21, window_bounds = array<i64: 2, 64, 32>}, {pipeline_mode = #tpu.pipeline_mode<synchronous>, transform_indices = @transform_22, window_bounds = array<i64: 2, 1, 32>}, {pipeline_mode = #tpu.pipeline_mode<synchronous>, transform_indices = @transform_23, window_bounds = array<i64: 2, 6, 1, 32>}, {pipeline_mode = #tpu.pipeline_mode<synchronous>, transform_indices = @transform_24, window_bounds = array<i64: 2, 1, 32>}, {pipeline_mode = #tpu.pipeline_mode<synchronous>, transform_indices = @transform_25, window_bounds = array<i64: 16, 32>}]} {
    %c0 = arith.constant 0 : index
    %c0_0 = arith.constant 0 : index
    %0 = vector.load %arg3[%c0, %c0_0] : memref<16x16xf32, #tpu.memory_space<vmem>>, vector<16x16xf32>
    %1 = vector.shape_cast %0 : vector<16x16xf32> to vector<16x16xf32>
    %c0_1 = arith.constant 0 : index
    %c0_2 = arith.constant 0 : index
    %2 = vector.load %arg4[%c0_1, %c0_2] : memref<16x16xf32, #tpu.memory_space<vmem>>, vector<16x16xf32>
    %3 = vector.shape_cast %2 : vector<16x16xf32> to vector<16x16xf32>
    %c0_3 = arith.constant 0 : index
    %c0_4 = arith.constant 0 : index
    %4 = vector.load %arg5[%c0_3, %c0_4] : memref<16x16xf32, #tpu.memory_space<vmem>>, vector<16x16xf32>
    %5 = vector.shape_cast %4 : vector<16x16xf32> to vector<16x16xf32>
    %c0_5 = arith.constant 0 : index
    %c0_6 = arith.constant 0 : index
    %6 = vector.load %arg1[%c0_5, %c0_6] : memref<16x32xf32, #tpu.memory_space<vmem>>, vector<16x32xf32>
    %c0_7 = arith.constant 0 : index
    %c0_8 = arith.constant 0 : index
    %c0_9 = arith.constant 0 : index
    %c0_10 = arith.constant 0 : index
    %7 = vector.load %arg14[%c0_7, %c0_8, %c0_9, %c0_10] : memref<2x4x1x32xf32, #tpu.memory_space<vmem>>, vector<1x1x1x32xf32>
    %8 = vector.shape_cast %7 : vector<1x1x1x32xf32> to vector<1x32xf32>
    %c0_11 = arith.constant 0 : index
    %c1 = arith.constant 1 : index
    %c0_12 = arith.constant 0 : index
    %c0_13 = arith.constant 0 : index
    %9 = vector.load %arg14[%c0_11, %c1, %c0_12, %c0_13] : memref<2x4x1x32xf32, #tpu.memory_space<vmem>>, vector<1x1x1x32xf32>
    %10 = vector.shape_cast %9 : vector<1x1x1x32xf32> to vector<1x32xf32>
    %cst = arith.constant dense<0.000000e+00> : vector<16xf32>
    %11 = vector.multi_reduction <add>, %6, %cst [1] : vector<16x32xf32> to vector<16xf32>
    %12 = vector.shape_cast %11 : vector<16xf32> to vector<16x1xf32>
    %cst_14 = arith.constant 3.200000e+01 : f32
    %13 = vector.broadcast %cst_14 : f32 to vector<16x1xf32>
    %14 = arith.divf %12, %13 : vector<16x1xf32>
    %15 = vector.broadcast %14 : vector<16x1xf32> to vector<16x32xf32>
    %16 = arith.subf %6, %15 : vector<16x32xf32>
    %17 = arith.mulf %16, %16 : vector<16x32xf32>
    %cst_15 = arith.constant dense<0.000000e+00> : vector<16xf32>
    %18 = vector.multi_reduction <add>, %17, %cst_15 [1] : vector<16x32xf32> to vector<16xf32>
    %19 = vector.shape_cast %18 : vector<16xf32> to vector<16x1xf32>
    %cst_16 = arith.constant 0.0322580636 : f32
    %20 = vector.broadcast %cst_16 : f32 to vector<16x1xf32>
    %21 = arith.mulf %19, %20 : vector<16x1xf32>
    %22 = math.sqrt %21 : vector<16x1xf32>
    %cst_17 = arith.constant 9.99999997E-7 : f32
    %23 = vector.broadcast %cst_17 : f32 to vector<16x1xf32>
    %24 = arith.addf %22, %23 : vector<16x1xf32>
    %25 = tpu.reciprocal %24 {approx = true} : vector<16x1xf32> -> vector<16x1xf32>
    %26 = vector.broadcast %8 : vector<1x32xf32> to vector<16x32xf32>
    %27 = arith.mulf %26, %16 : vector<16x32xf32>
    %28 = vector.broadcast %25 : vector<16x1xf32> to vector<16x32xf32>
    %29 = arith.mulf %27, %28 : vector<16x32xf32>
    %30 = vector.broadcast %10 : vector<1x32xf32> to vector<16x32xf32>
    %31 = arith.addf %29, %30 : vector<16x32xf32>
    %c0_18 = arith.constant 0 : index
    %c0_19 = arith.constant 0 : index
    %c0_20 = arith.constant 0 : index
    %32 = vector.load %arg6[%c0_18, %c0_19, %c0_20] : memref<2x32x96xbf16, #tpu.memory_space<vmem>>, vector<1x32x96xbf16>
    %33 = vector.shape_cast %32 : vector<1x32x96xbf16> to vector<32x96xbf16>
    %c0_21 = arith.constant 0 : index
    %c0_22 = arith.constant 0 : index
    %c0_23 = arith.constant 0 : index
    %34 = vector.load %arg7[%c0_21, %c0_22, %c0_23] : memref<2x1x96xf32, #tpu.memory_space<vmem>>, vector<1x1x96xf32>
    %35 = vector.shape_cast %34 : vector<1x1x96xf32> to vector<1x96xf32>
    %c0_24 = arith.constant 0 : index
    %c0_25 = arith.constant 0 : index
    %c0_26 = arith.constant 0 : index
    %c0_27 = arith.constant 0 : index
    %36 = vector.load %arg8[%c0_24, %c0_25, %c0_26, %c0_27] : memref<2x4x8x32xbf16, #tpu.memory_space<vmem>>, vector<1x4x8x32xbf16>
    %37 = vector.shape_cast %36 : vector<1x4x8x32xbf16> to vector<4x8x32xbf16>
    %c0_28 = arith.constant 0 : index
    %c0_29 = arith.constant 0 : index
    %c0_30 = arith.constant 0 : index
    %38 = vector.load %arg9[%c0_28, %c0_29, %c0_30] : memref<2x1x32xf32, #tpu.memory_space<vmem>>, vector<1x1x32xf32>
    %39 = vector.shape_cast %38 : vector<1x1x32xf32> to vector<1x32xf32>
    %40 = arith.truncf %31 : vector<16x32xf32> to vector<16x32xbf16>
    %cst_31 = arith.constant dense<0.000000e+00> : vector<16x96xf32>
    %41 = tpu.matmul %40, %33, %cst_31 {dimension_numbers = #tpu.dot_dimension_numbers<[1], [0], [0], [1], [0, 0, 1, 1], [], []>} : vector<16x32xbf16>, vector<32x96xbf16>, vector<16x96xf32> -> vector<16x96xf32>
    %42 = vector.broadcast %35 : vector<1x96xf32> to vector<16x96xf32>
    %43 = arith.addf %41, %42 : vector<16x96xf32>
    %44 = vector.extract_strided_slice %43 {offsets = [0, 0], sizes = [16, 32], strides = [1, 1]} : vector<16x96xf32> to vector<16x32xf32>
    %45 = vector.extract_strided_slice %43 {offsets = [0, 32], sizes = [16, 32], strides = [1, 1]} : vector<16x96xf32> to vector<16x32xf32>
    %46 = vector.extract_strided_slice %43 {offsets = [0, 64], sizes = [16, 32], strides = [1, 1]} : vector<16x96xf32> to vector<16x32xf32>
    %47 = vector.extract_strided_slice %44 {offsets = [0, 0], sizes = [16, 8], strides = [1, 1]} : vector<16x32xf32> to vector<16x8xf32>
    %48 = arith.truncf %47 : vector<16x8xf32> to vector<16x8xbf16>
    %49 = vector.extract_strided_slice %45 {offsets = [0, 0], sizes = [16, 8], strides = [1, 1]} : vector<16x32xf32> to vector<16x8xf32>
    %50 = arith.truncf %49 : vector<16x8xf32> to vector<16x8xbf16>
    %51 = vector.extract_strided_slice %46 {offsets = [0, 0], sizes = [16, 8], strides = [1, 1]} : vector<16x32xf32> to vector<16x8xf32>
    %52 = arith.truncf %51 : vector<16x8xf32> to vector<16x8xbf16>
    %cst_32 = arith.constant dense<0.000000e+00> : vector<16x16xf32>
    %53 = tpu.matmul %48, %50, %cst_32 {dimension_numbers = #tpu.dot_dimension_numbers<[1], [1], [0], [0], [0, 0, 1, 0], [], []>} : vector<16x8xbf16>, vector<16x8xbf16>, vector<16x16xf32> -> vector<16x16xf32>
    %cst_33 = arith.constant 0.353553385 : f32
    %54 = vector.broadcast %cst_33 : f32 to vector<16x16xf32>
    %55 = arith.mulf %53, %54 : vector<16x16xf32>
    %56 = arith.addf %55, %1 : vector<16x16xf32>
    %cst_34 = arith.constant dense<0xFF800000> : vector<16xf32>
    %57 = vector.multi_reduction <maximumf>, %56, %cst_34 [1] : vector<16x16xf32> to vector<16xf32>
    %58 = vector.shape_cast %57 : vector<16xf32> to vector<16x1xf32>
    %59 = vector.broadcast %58 : vector<16x1xf32> to vector<16x16xf32>
    %60 = arith.subf %56, %59 : vector<16x16xf32>
    %61 = math.exp %60 : vector<16x16xf32>
    %cst_35 = arith.constant dense<0.000000e+00> : vector<16xf32>
    %62 = vector.multi_reduction <add>, %61, %cst_35 [1] : vector<16x16xf32> to vector<16xf32>
    %63 = vector.shape_cast %62 : vector<16xf32> to vector<16x1xf32>
    %64 = tpu.reciprocal %63 {approx = true} : vector<16x1xf32> -> vector<16x1xf32>
    %65 = vector.broadcast %64 : vector<16x1xf32> to vector<16x16xf32>
    %66 = arith.mulf %61, %65 : vector<16x16xf32>
    %67 = arith.truncf %66 : vector<16x16xf32> to vector<16x16xbf16>
    %cst_36 = arith.constant dense<0.000000e+00> : vector<16x8xf32>
    %68 = tpu.matmul %67, %52, %cst_36 {dimension_numbers = #tpu.dot_dimension_numbers<[1], [0], [0], [1], [0, 0, 1, 1], [], []>} : vector<16x16xbf16>, vector<16x8xbf16>, vector<16x8xf32> -> vector<16x8xf32>
    %69 = arith.truncf %68 : vector<16x8xf32> to vector<16x8xbf16>
    %70 = vector.extract_strided_slice %37 {offsets = [0, 0, 0], sizes = [1, 8, 32], strides = [1, 1, 1]} : vector<4x8x32xbf16> to vector<1x8x32xbf16>
    %71 = vector.shape_cast %70 : vector<1x8x32xbf16> to vector<8x32xbf16>
    %cst_37 = arith.constant dense<0.000000e+00> : vector<16x32xf32>
    %72 = tpu.matmul %69, %71, %cst_37 {dimension_numbers = #tpu.dot_dimension_numbers<[1], [0], [0], [1], [0, 0, 1, 1], [], []>} : vector<16x8xbf16>, vector<8x32xbf16>, vector<16x32xf32> -> vector<16x32xf32>
    %73 = vector.broadcast %39 : vector<1x32xf32> to vector<16x32xf32>
    %74 = arith.addf %73, %72 : vector<16x32xf32>
    %75 = vector.extract_strided_slice %44 {offsets = [0, 8], sizes = [16, 8], strides = [1, 1]} : vector<16x32xf32> to vector<16x8xf32>
    %76 = arith.truncf %75 : vector<16x8xf32> to vector<16x8xbf16>
    %77 = vector.extract_strided_slice %45 {offsets = [0, 8], sizes = [16, 8], strides = [1, 1]} : vector<16x32xf32> to vector<16x8xf32>
    %78 = arith.truncf %77 : vector<16x8xf32> to vector<16x8xbf16>
    %79 = vector.extract_strided_slice %46 {offsets = [0, 8], sizes = [16, 8], strides = [1, 1]} : vector<16x32xf32> to vector<16x8xf32>
    %80 = arith.truncf %79 : vector<16x8xf32> to vector<16x8xbf16>
    %cst_38 = arith.constant dense<0.000000e+00> : vector<16x16xf32>
    %81 = tpu.matmul %76, %78, %cst_38 {dimension_numbers = #tpu.dot_dimension_numbers<[1], [1], [0], [0], [0, 0, 1, 0], [], []>} : vector<16x8xbf16>, vector<16x8xbf16>, vector<16x16xf32> -> vector<16x16xf32>
    %cst_39 = arith.constant 0.353553385 : f32
    %82 = vector.broadcast %cst_39 : f32 to vector<16x16xf32>
    %83 = arith.mulf %81, %82 : vector<16x16xf32>
    %84 = arith.addf %83, %1 : vector<16x16xf32>
    %cst_40 = arith.constant dense<0xFF800000> : vector<16xf32>
    %85 = vector.multi_reduction <maximumf>, %84, %cst_40 [1] : vector<16x16xf32> to vector<16xf32>
    %86 = vector.shape_cast %85 : vector<16xf32> to vector<16x1xf32>
    %87 = vector.broadcast %86 : vector<16x1xf32> to vector<16x16xf32>
    %88 = arith.subf %84, %87 : vector<16x16xf32>
    %89 = math.exp %88 : vector<16x16xf32>
    %cst_41 = arith.constant dense<0.000000e+00> : vector<16xf32>
    %90 = vector.multi_reduction <add>, %89, %cst_41 [1] : vector<16x16xf32> to vector<16xf32>
    %91 = vector.shape_cast %90 : vector<16xf32> to vector<16x1xf32>
    %92 = tpu.reciprocal %91 {approx = true} : vector<16x1xf32> -> vector<16x1xf32>
    %93 = vector.broadcast %92 : vector<16x1xf32> to vector<16x16xf32>
    %94 = arith.mulf %89, %93 : vector<16x16xf32>
    %95 = arith.truncf %94 : vector<16x16xf32> to vector<16x16xbf16>
    %cst_42 = arith.constant dense<0.000000e+00> : vector<16x8xf32>
    %96 = tpu.matmul %95, %80, %cst_42 {dimension_numbers = #tpu.dot_dimension_numbers<[1], [0], [0], [1], [0, 0, 1, 1], [], []>} : vector<16x16xbf16>, vector<16x8xbf16>, vector<16x8xf32> -> vector<16x8xf32>
    %97 = arith.truncf %96 : vector<16x8xf32> to vector<16x8xbf16>
    %98 = vector.extract_strided_slice %37 {offsets = [1, 0, 0], sizes = [1, 8, 32], strides = [1, 1, 1]} : vector<4x8x32xbf16> to vector<1x8x32xbf16>
    %99 = vector.shape_cast %98 : vector<1x8x32xbf16> to vector<8x32xbf16>
    %cst_43 = arith.constant dense<0.000000e+00> : vector<16x32xf32>
    %100 = tpu.matmul %97, %99, %cst_43 {dimension_numbers = #tpu.dot_dimension_numbers<[1], [0], [0], [1], [0, 0, 1, 1], [], []>} : vector<16x8xbf16>, vector<8x32xbf16>, vector<16x32xf32> -> vector<16x32xf32>
    %101 = arith.addf %74, %100 : vector<16x32xf32>
    %102 = vector.extract_strided_slice %44 {offsets = [0, 16], sizes = [16, 8], strides = [1, 1]} : vector<16x32xf32> to vector<16x8xf32>
    %103 = arith.truncf %102 : vector<16x8xf32> to vector<16x8xbf16>
    %104 = vector.extract_strided_slice %45 {offsets = [0, 16], sizes = [16, 8], strides = [1, 1]} : vector<16x32xf32> to vector<16x8xf32>
    %105 = arith.truncf %104 : vector<16x8xf32> to vector<16x8xbf16>
    %106 = vector.extract_strided_slice %46 {offsets = [0, 16], sizes = [16, 8], strides = [1, 1]} : vector<16x32xf32> to vector<16x8xf32>
    %107 = arith.truncf %106 : vector<16x8xf32> to vector<16x8xbf16>
    %cst_44 = arith.constant dense<0.000000e+00> : vector<16x16xf32>
    %108 = tpu.matmul %103, %105, %cst_44 {dimension_numbers = #tpu.dot_dimension_numbers<[1], [1], [0], [0], [0, 0, 1, 0], [], []>} : vector<16x8xbf16>, vector<16x8xbf16>, vector<16x16xf32> -> vector<16x16xf32>
    %cst_45 = arith.constant 0.353553385 : f32
    %109 = vector.broadcast %cst_45 : f32 to vector<16x16xf32>
    %110 = arith.mulf %108, %109 : vector<16x16xf32>
    %111 = arith.addf %110, %1 : vector<16x16xf32>
    %cst_46 = arith.constant dense<0xFF800000> : vector<16xf32>
    %112 = vector.multi_reduction <maximumf>, %111, %cst_46 [1] : vector<16x16xf32> to vector<16xf32>
    %113 = vector.shape_cast %112 : vector<16xf32> to vector<16x1xf32>
    %114 = vector.broadcast %113 : vector<16x1xf32> to vector<16x16xf32>
    %115 = arith.subf %111, %114 : vector<16x16xf32>
    %116 = math.exp %115 : vector<16x16xf32>
    %cst_47 = arith.constant dense<0.000000e+00> : vector<16xf32>
    %117 = vector.multi_reduction <add>, %116, %cst_47 [1] : vector<16x16xf32> to vector<16xf32>
    %118 = vector.shape_cast %117 : vector<16xf32> to vector<16x1xf32>
    %119 = tpu.reciprocal %118 {approx = true} : vector<16x1xf32> -> vector<16x1xf32>
    %120 = vector.broadcast %119 : vector<16x1xf32> to vector<16x16xf32>
    %121 = arith.mulf %116, %120 : vector<16x16xf32>
    %122 = arith.truncf %121 : vector<16x16xf32> to vector<16x16xbf16>
    %cst_48 = arith.constant dense<0.000000e+00> : vector<16x8xf32>
    %123 = tpu.matmul %122, %107, %cst_48 {dimension_numbers = #tpu.dot_dimension_numbers<[1], [0], [0], [1], [0, 0, 1, 1], [], []>} : vector<16x16xbf16>, vector<16x8xbf16>, vector<16x8xf32> -> vector<16x8xf32>
    %124 = arith.truncf %123 : vector<16x8xf32> to vector<16x8xbf16>
    %125 = vector.extract_strided_slice %37 {offsets = [2, 0, 0], sizes = [1, 8, 32], strides = [1, 1, 1]} : vector<4x8x32xbf16> to vector<1x8x32xbf16>
    %126 = vector.shape_cast %125 : vector<1x8x32xbf16> to vector<8x32xbf16>
    %cst_49 = arith.constant dense<0.000000e+00> : vector<16x32xf32>
    %127 = tpu.matmul %124, %126, %cst_49 {dimension_numbers = #tpu.dot_dimension_numbers<[1], [0], [0], [1], [0, 0, 1, 1], [], []>} : vector<16x8xbf16>, vector<8x32xbf16>, vector<16x32xf32> -> vector<16x32xf32>
    %128 = arith.addf %101, %127 : vector<16x32xf32>
    %129 = vector.extract_strided_slice %44 {offsets = [0, 24], sizes = [16, 8], strides = [1, 1]} : vector<16x32xf32> to vector<16x8xf32>
    %130 = arith.truncf %129 : vector<16x8xf32> to vector<16x8xbf16>
    %131 = vector.extract_strided_slice %45 {offsets = [0, 24], sizes = [16, 8], strides = [1, 1]} : vector<16x32xf32> to vector<16x8xf32>
    %132 = arith.truncf %131 : vector<16x8xf32> to vector<16x8xbf16>
    %133 = vector.extract_strided_slice %46 {offsets = [0, 24], sizes = [16, 8], strides = [1, 1]} : vector<16x32xf32> to vector<16x8xf32>
    %134 = arith.truncf %133 : vector<16x8xf32> to vector<16x8xbf16>
    %cst_50 = arith.constant dense<0.000000e+00> : vector<16x16xf32>
    %135 = tpu.matmul %130, %132, %cst_50 {dimension_numbers = #tpu.dot_dimension_numbers<[1], [1], [0], [0], [0, 0, 1, 0], [], []>} : vector<16x8xbf16>, vector<16x8xbf16>, vector<16x16xf32> -> vector<16x16xf32>
    %cst_51 = arith.constant 0.353553385 : f32
    %136 = vector.broadcast %cst_51 : f32 to vector<16x16xf32>
    %137 = arith.mulf %135, %136 : vector<16x16xf32>
    %138 = arith.addf %137, %1 : vector<16x16xf32>
    %cst_52 = arith.constant dense<0xFF800000> : vector<16xf32>
    %139 = vector.multi_reduction <maximumf>, %138, %cst_52 [1] : vector<16x16xf32> to vector<16xf32>
    %140 = vector.shape_cast %139 : vector<16xf32> to vector<16x1xf32>
    %141 = vector.broadcast %140 : vector<16x1xf32> to vector<16x16xf32>
    %142 = arith.subf %138, %141 : vector<16x16xf32>
    %143 = math.exp %142 : vector<16x16xf32>
    %cst_53 = arith.constant dense<0.000000e+00> : vector<16xf32>
    %144 = vector.multi_reduction <add>, %143, %cst_53 [1] : vector<16x16xf32> to vector<16xf32>
    %145 = vector.shape_cast %144 : vector<16xf32> to vector<16x1xf32>
    %146 = tpu.reciprocal %145 {approx = true} : vector<16x1xf32> -> vector<16x1xf32>
    %147 = vector.broadcast %146 : vector<16x1xf32> to vector<16x16xf32>
    %148 = arith.mulf %143, %147 : vector<16x16xf32>
    %149 = arith.truncf %148 : vector<16x16xf32> to vector<16x16xbf16>
    %cst_54 = arith.constant dense<0.000000e+00> : vector<16x8xf32>
    %150 = tpu.matmul %149, %134, %cst_54 {dimension_numbers = #tpu.dot_dimension_numbers<[1], [0], [0], [1], [0, 0, 1, 1], [], []>} : vector<16x16xbf16>, vector<16x8xbf16>, vector<16x8xf32> -> vector<16x8xf32>
    %151 = arith.truncf %150 : vector<16x8xf32> to vector<16x8xbf16>
    %152 = vector.extract_strided_slice %37 {offsets = [3, 0, 0], sizes = [1, 8, 32], strides = [1, 1, 1]} : vector<4x8x32xbf16> to vector<1x8x32xbf16>
    %153 = vector.shape_cast %152 : vector<1x8x32xbf16> to vector<8x32xbf16>
    %cst_55 = arith.constant dense<0.000000e+00> : vector<16x32xf32>
    %154 = tpu.matmul %151, %153, %cst_55 {dimension_numbers = #tpu.dot_dimension_numbers<[1], [0], [0], [1], [0, 0, 1, 1], [], []>} : vector<16x8xbf16>, vector<8x32xbf16>, vector<16x32xf32> -> vector<16x32xf32>
    %155 = arith.addf %128, %154 : vector<16x32xf32>
    %156 = arith.addf %6, %155 : vector<16x32xf32>
    %c0_56 = arith.constant 0 : index
    %c2 = arith.constant 2 : index
    %c0_57 = arith.constant 0 : index
    %c0_58 = arith.constant 0 : index
    %157 = vector.load %arg14[%c0_56, %c2, %c0_57, %c0_58] : memref<2x4x1x32xf32, #tpu.memory_space<vmem>>, vector<1x1x1x32xf32>
    %158 = vector.shape_cast %157 : vector<1x1x1x32xf32> to vector<1x32xf32>
    %c0_59 = arith.constant 0 : index
    %c3 = arith.constant 3 : index
    %c0_60 = arith.constant 0 : index
    %c0_61 = arith.constant 0 : index
    %159 = vector.load %arg14[%c0_59, %c3, %c0_60, %c0_61] : memref<2x4x1x32xf32, #tpu.memory_space<vmem>>, vector<1x1x1x32xf32>
    %160 = vector.shape_cast %159 : vector<1x1x1x32xf32> to vector<1x32xf32>
    %cst_62 = arith.constant dense<0.000000e+00> : vector<16xf32>
    %161 = vector.multi_reduction <add>, %156, %cst_62 [1] : vector<16x32xf32> to vector<16xf32>
    %162 = vector.shape_cast %161 : vector<16xf32> to vector<16x1xf32>
    %cst_63 = arith.constant 3.200000e+01 : f32
    %163 = vector.broadcast %cst_63 : f32 to vector<16x1xf32>
    %164 = arith.divf %162, %163 : vector<16x1xf32>
    %165 = vector.broadcast %164 : vector<16x1xf32> to vector<16x32xf32>
    %166 = arith.subf %156, %165 : vector<16x32xf32>
    %167 = arith.mulf %166, %166 : vector<16x32xf32>
    %cst_64 = arith.constant dense<0.000000e+00> : vector<16xf32>
    %168 = vector.multi_reduction <add>, %167, %cst_64 [1] : vector<16x32xf32> to vector<16xf32>
    %169 = vector.shape_cast %168 : vector<16xf32> to vector<16x1xf32>
    %cst_65 = arith.constant 0.0322580636 : f32
    %170 = vector.broadcast %cst_65 : f32 to vector<16x1xf32>
    %171 = arith.mulf %169, %170 : vector<16x1xf32>
    %172 = math.sqrt %171 : vector<16x1xf32>
    %cst_66 = arith.constant 9.99999997E-7 : f32
    %173 = vector.broadcast %cst_66 : f32 to vector<16x1xf32>
    %174 = arith.addf %172, %173 : vector<16x1xf32>
    %175 = tpu.reciprocal %174 {approx = true} : vector<16x1xf32> -> vector<16x1xf32>
    %176 = vector.broadcast %158 : vector<1x32xf32> to vector<16x32xf32>
    %177 = arith.mulf %176, %166 : vector<16x32xf32>
    %178 = vector.broadcast %175 : vector<16x1xf32> to vector<16x32xf32>
    %179 = arith.mulf %177, %178 : vector<16x32xf32>
    %180 = vector.broadcast %160 : vector<1x32xf32> to vector<16x32xf32>
    %181 = arith.addf %179, %180 : vector<16x32xf32>
    %c0_67 = arith.constant 0 : index
    %c0_68 = arith.constant 0 : index
    %c0_69 = arith.constant 0 : index
    %182 = vector.load %arg10[%c0_67, %c0_68, %c0_69] : memref<2x32x64xbf16, #tpu.memory_space<vmem>>, vector<1x32x64xbf16>
    %183 = vector.shape_cast %182 : vector<1x32x64xbf16> to vector<32x64xbf16>
    %c0_70 = arith.constant 0 : index
    %c0_71 = arith.constant 0 : index
    %c0_72 = arith.constant 0 : index
    %184 = vector.load %arg11[%c0_70, %c0_71, %c0_72] : memref<2x1x64xf32, #tpu.memory_space<vmem>>, vector<1x1x64xf32>
    %185 = vector.shape_cast %184 : vector<1x1x64xf32> to vector<1x64xf32>
    %c0_73 = arith.constant 0 : index
    %c0_74 = arith.constant 0 : index
    %c0_75 = arith.constant 0 : index
    %186 = vector.load %arg12[%c0_73, %c0_74, %c0_75] : memref<2x64x32xbf16, #tpu.memory_space<vmem>>, vector<1x64x32xbf16>
    %187 = vector.shape_cast %186 : vector<1x64x32xbf16> to vector<64x32xbf16>
    %c0_76 = arith.constant 0 : index
    %c0_77 = arith.constant 0 : index
    %c0_78 = arith.constant 0 : index
    %188 = vector.load %arg13[%c0_76, %c0_77, %c0_78] : memref<2x1x32xf32, #tpu.memory_space<vmem>>, vector<1x1x32xf32>
    %189 = vector.shape_cast %188 : vector<1x1x32xf32> to vector<1x32xf32>
    %190 = arith.truncf %181 : vector<16x32xf32> to vector<16x32xbf16>
    %cst_79 = arith.constant dense<0.000000e+00> : vector<16x64xf32>
    %191 = tpu.matmul %190, %183, %cst_79 {dimension_numbers = #tpu.dot_dimension_numbers<[1], [0], [0], [1], [0, 0, 1, 1], [], []>} : vector<16x32xbf16>, vector<32x64xbf16>, vector<16x64xf32> -> vector<16x64xf32>
    %192 = vector.broadcast %185 : vector<1x64xf32> to vector<16x64xf32>
    %193 = arith.addf %191, %192 : vector<16x64xf32>
    %cst_80 = arith.constant 0.000000e+00 : f32
    %194 = vector.broadcast %cst_80 : f32 to vector<16x64xf32>
    %195 = arith.maximumf %193, %194 : vector<16x64xf32>
    %196 = arith.truncf %195 : vector<16x64xf32> to vector<16x64xbf16>
    %cst_81 = arith.constant dense<0.000000e+00> : vector<16x32xf32>
    %197 = tpu.matmul %196, %187, %cst_81 {dimension_numbers = #tpu.dot_dimension_numbers<[1], [0], [0], [1], [0, 0, 1, 1], [], []>} : vector<16x64xbf16>, vector<64x32xbf16>, vector<16x32xf32> -> vector<16x32xf32>
    %198 = vector.broadcast %189 : vector<1x32xf32> to vector<16x32xf32>
    %199 = arith.addf %197, %198 : vector<16x32xf32>
    %200 = arith.addf %156, %199 : vector<16x32xf32>
    %c1_82 = arith.constant 1 : index
    %c0_83 = arith.constant 0 : index
    %c0_84 = arith.constant 0 : index
    %c0_85 = arith.constant 0 : index
    %201 = vector.load %arg14[%c1_82, %c0_83, %c0_84, %c0_85] : memref<2x4x1x32xf32, #tpu.memory_space<vmem>>, vector<1x1x1x32xf32>
    %202 = vector.shape_cast %201 : vector<1x1x1x32xf32> to vector<1x32xf32>
    %c1_86 = arith.constant 1 : index
    %c1_87 = arith.constant 1 : index
    %c0_88 = arith.constant 0 : index
    %c0_89 = arith.constant 0 : index
    %203 = vector.load %arg14[%c1_86, %c1_87, %c0_88, %c0_89] : memref<2x4x1x32xf32, #tpu.memory_space<vmem>>, vector<1x1x1x32xf32>
    %204 = vector.shape_cast %203 : vector<1x1x1x32xf32> to vector<1x32xf32>
    %cst_90 = arith.constant dense<0.000000e+00> : vector<16xf32>
    %205 = vector.multi_reduction <add>, %200, %cst_90 [1] : vector<16x32xf32> to vector<16xf32>
    %206 = vector.shape_cast %205 : vector<16xf32> to vector<16x1xf32>
    %cst_91 = arith.constant 3.200000e+01 : f32
    %207 = vector.broadcast %cst_91 : f32 to vector<16x1xf32>
    %208 = arith.divf %206, %207 : vector<16x1xf32>
    %209 = vector.broadcast %208 : vector<16x1xf32> to vector<16x32xf32>
    %210 = arith.subf %200, %209 : vector<16x32xf32>
    %211 = arith.mulf %210, %210 : vector<16x32xf32>
    %cst_92 = arith.constant dense<0.000000e+00> : vector<16xf32>
    %212 = vector.multi_reduction <add>, %211, %cst_92 [1] : vector<16x32xf32> to vector<16xf32>
    %213 = vector.shape_cast %212 : vector<16xf32> to vector<16x1xf32>
    %cst_93 = arith.constant 0.0322580636 : f32
    %214 = vector.broadcast %cst_93 : f32 to vector<16x1xf32>
    %215 = arith.mulf %213, %214 : vector<16x1xf32>
    %216 = math.sqrt %215 : vector<16x1xf32>
    %cst_94 = arith.constant 9.99999997E-7 : f32
    %217 = vector.broadcast %cst_94 : f32 to vector<16x1xf32>
    %218 = arith.addf %216, %217 : vector<16x1xf32>
    %219 = tpu.reciprocal %218 {approx = true} : vector<16x1xf32> -> vector<16x1xf32>
    %220 = vector.broadcast %202 : vector<1x32xf32> to vector<16x32xf32>
    %221 = arith.mulf %220, %210 : vector<16x32xf32>
    %222 = vector.broadcast %219 : vector<16x1xf32> to vector<16x32xf32>
    %223 = arith.mulf %221, %222 : vector<16x32xf32>
    %224 = vector.broadcast %204 : vector<1x32xf32> to vector<16x32xf32>
    %225 = arith.addf %223, %224 : vector<16x32xf32>
    %c1_95 = arith.constant 1 : index
    %c0_96 = arith.constant 0 : index
    %c0_97 = arith.constant 0 : index
    %226 = vector.load %arg6[%c1_95, %c0_96, %c0_97] : memref<2x32x96xbf16, #tpu.memory_space<vmem>>, vector<1x32x96xbf16>
    %227 = vector.shape_cast %226 : vector<1x32x96xbf16> to vector<32x96xbf16>
    %c1_98 = arith.constant 1 : index
    %c0_99 = arith.constant 0 : index
    %c0_100 = arith.constant 0 : index
    %228 = vector.load %arg7[%c1_98, %c0_99, %c0_100] : memref<2x1x96xf32, #tpu.memory_space<vmem>>, vector<1x1x96xf32>
    %229 = vector.shape_cast %228 : vector<1x1x96xf32> to vector<1x96xf32>
    %c1_101 = arith.constant 1 : index
    %c0_102 = arith.constant 0 : index
    %c0_103 = arith.constant 0 : index
    %c0_104 = arith.constant 0 : index
    %230 = vector.load %arg8[%c1_101, %c0_102, %c0_103, %c0_104] : memref<2x4x8x32xbf16, #tpu.memory_space<vmem>>, vector<1x4x8x32xbf16>
    %231 = vector.shape_cast %230 : vector<1x4x8x32xbf16> to vector<4x8x32xbf16>
    %c1_105 = arith.constant 1 : index
    %c0_106 = arith.constant 0 : index
    %c0_107 = arith.constant 0 : index
    %232 = vector.load %arg9[%c1_105, %c0_106, %c0_107] : memref<2x1x32xf32, #tpu.memory_space<vmem>>, vector<1x1x32xf32>
    %233 = vector.shape_cast %232 : vector<1x1x32xf32> to vector<1x32xf32>
    %234 = arith.truncf %225 : vector<16x32xf32> to vector<16x32xbf16>
    %cst_108 = arith.constant dense<0.000000e+00> : vector<16x96xf32>
    %235 = tpu.matmul %234, %227, %cst_108 {dimension_numbers = #tpu.dot_dimension_numbers<[1], [0], [0], [1], [0, 0, 1, 1], [], []>} : vector<16x32xbf16>, vector<32x96xbf16>, vector<16x96xf32> -> vector<16x96xf32>
    %236 = vector.broadcast %229 : vector<1x96xf32> to vector<16x96xf32>
    %237 = arith.addf %235, %236 : vector<16x96xf32>
    %238 = vector.extract_strided_slice %237 {offsets = [0, 0], sizes = [16, 32], strides = [1, 1]} : vector<16x96xf32> to vector<16x32xf32>
    %239 = vector.extract_strided_slice %237 {offsets = [0, 32], sizes = [16, 32], strides = [1, 1]} : vector<16x96xf32> to vector<16x32xf32>
    %240 = vector.extract_strided_slice %237 {offsets = [0, 64], sizes = [16, 32], strides = [1, 1]} : vector<16x96xf32> to vector<16x32xf32>
    %241 = vector.extract_strided_slice %238 {offsets = [0, 0], sizes = [16, 8], strides = [1, 1]} : vector<16x32xf32> to vector<16x8xf32>
    %242 = arith.truncf %241 : vector<16x8xf32> to vector<16x8xbf16>
    %243 = vector.extract_strided_slice %239 {offsets = [0, 0], sizes = [16, 8], strides = [1, 1]} : vector<16x32xf32> to vector<16x8xf32>
    %244 = arith.truncf %243 : vector<16x8xf32> to vector<16x8xbf16>
    %245 = vector.extract_strided_slice %240 {offsets = [0, 0], sizes = [16, 8], strides = [1, 1]} : vector<16x32xf32> to vector<16x8xf32>
    %246 = arith.truncf %245 : vector<16x8xf32> to vector<16x8xbf16>
    %cst_109 = arith.constant dense<0.000000e+00> : vector<16x16xf32>
    %247 = tpu.matmul %242, %244, %cst_109 {dimension_numbers = #tpu.dot_dimension_numbers<[1], [1], [0], [0], [0, 0, 1, 0], [], []>} : vector<16x8xbf16>, vector<16x8xbf16>, vector<16x16xf32> -> vector<16x16xf32>
    %cst_110 = arith.constant 0.353553385 : f32
    %248 = vector.broadcast %cst_110 : f32 to vector<16x16xf32>
    %249 = arith.mulf %247, %248 : vector<16x16xf32>
    %250 = arith.addf %249, %1 : vector<16x16xf32>
    %cst_111 = arith.constant dense<0xFF800000> : vector<16xf32>
    %251 = vector.multi_reduction <maximumf>, %250, %cst_111 [1] : vector<16x16xf32> to vector<16xf32>
    %252 = vector.shape_cast %251 : vector<16xf32> to vector<16x1xf32>
    %253 = vector.broadcast %252 : vector<16x1xf32> to vector<16x16xf32>
    %254 = arith.subf %250, %253 : vector<16x16xf32>
    %255 = math.exp %254 : vector<16x16xf32>
    %cst_112 = arith.constant dense<0.000000e+00> : vector<16xf32>
    %256 = vector.multi_reduction <add>, %255, %cst_112 [1] : vector<16x16xf32> to vector<16xf32>
    %257 = vector.shape_cast %256 : vector<16xf32> to vector<16x1xf32>
    %258 = tpu.reciprocal %257 {approx = true} : vector<16x1xf32> -> vector<16x1xf32>
    %259 = vector.broadcast %258 : vector<16x1xf32> to vector<16x16xf32>
    %260 = arith.mulf %255, %259 : vector<16x16xf32>
    %261 = arith.truncf %260 : vector<16x16xf32> to vector<16x16xbf16>
    %cst_113 = arith.constant dense<0.000000e+00> : vector<16x8xf32>
    %262 = tpu.matmul %261, %246, %cst_113 {dimension_numbers = #tpu.dot_dimension_numbers<[1], [0], [0], [1], [0, 0, 1, 1], [], []>} : vector<16x16xbf16>, vector<16x8xbf16>, vector<16x8xf32> -> vector<16x8xf32>
    %263 = arith.truncf %262 : vector<16x8xf32> to vector<16x8xbf16>
    %264 = vector.extract_strided_slice %231 {offsets = [0, 0, 0], sizes = [1, 8, 32], strides = [1, 1, 1]} : vector<4x8x32xbf16> to vector<1x8x32xbf16>
    %265 = vector.shape_cast %264 : vector<1x8x32xbf16> to vector<8x32xbf16>
    %cst_114 = arith.constant dense<0.000000e+00> : vector<16x32xf32>
    %266 = tpu.matmul %263, %265, %cst_114 {dimension_numbers = #tpu.dot_dimension_numbers<[1], [0], [0], [1], [0, 0, 1, 1], [], []>} : vector<16x8xbf16>, vector<8x32xbf16>, vector<16x32xf32> -> vector<16x32xf32>
    %267 = vector.broadcast %233 : vector<1x32xf32> to vector<16x32xf32>
    %268 = arith.addf %267, %266 : vector<16x32xf32>
    %269 = vector.extract_strided_slice %238 {offsets = [0, 8], sizes = [16, 8], strides = [1, 1]} : vector<16x32xf32> to vector<16x8xf32>
    %270 = arith.truncf %269 : vector<16x8xf32> to vector<16x8xbf16>
    %271 = vector.extract_strided_slice %239 {offsets = [0, 8], sizes = [16, 8], strides = [1, 1]} : vector<16x32xf32> to vector<16x8xf32>
    %272 = arith.truncf %271 : vector<16x8xf32> to vector<16x8xbf16>
    %273 = vector.extract_strided_slice %240 {offsets = [0, 8], sizes = [16, 8], strides = [1, 1]} : vector<16x32xf32> to vector<16x8xf32>
    %274 = arith.truncf %273 : vector<16x8xf32> to vector<16x8xbf16>
    %cst_115 = arith.constant dense<0.000000e+00> : vector<16x16xf32>
    %275 = tpu.matmul %270, %272, %cst_115 {dimension_numbers = #tpu.dot_dimension_numbers<[1], [1], [0], [0], [0, 0, 1, 0], [], []>} : vector<16x8xbf16>, vector<16x8xbf16>, vector<16x16xf32> -> vector<16x16xf32>
    %cst_116 = arith.constant 0.353553385 : f32
    %276 = vector.broadcast %cst_116 : f32 to vector<16x16xf32>
    %277 = arith.mulf %275, %276 : vector<16x16xf32>
    %278 = arith.addf %277, %1 : vector<16x16xf32>
    %cst_117 = arith.constant dense<0xFF800000> : vector<16xf32>
    %279 = vector.multi_reduction <maximumf>, %278, %cst_117 [1] : vector<16x16xf32> to vector<16xf32>
    %280 = vector.shape_cast %279 : vector<16xf32> to vector<16x1xf32>
    %281 = vector.broadcast %280 : vector<16x1xf32> to vector<16x16xf32>
    %282 = arith.subf %278, %281 : vector<16x16xf32>
    %283 = math.exp %282 : vector<16x16xf32>
    %cst_118 = arith.constant dense<0.000000e+00> : vector<16xf32>
    %284 = vector.multi_reduction <add>, %283, %cst_118 [1] : vector<16x16xf32> to vector<16xf32>
    %285 = vector.shape_cast %284 : vector<16xf32> to vector<16x1xf32>
    %286 = tpu.reciprocal %285 {approx = true} : vector<16x1xf32> -> vector<16x1xf32>
    %287 = vector.broadcast %286 : vector<16x1xf32> to vector<16x16xf32>
    %288 = arith.mulf %283, %287 : vector<16x16xf32>
    %289 = arith.truncf %288 : vector<16x16xf32> to vector<16x16xbf16>
    %cst_119 = arith.constant dense<0.000000e+00> : vector<16x8xf32>
    %290 = tpu.matmul %289, %274, %cst_119 {dimension_numbers = #tpu.dot_dimension_numbers<[1], [0], [0], [1], [0, 0, 1, 1], [], []>} : vector<16x16xbf16>, vector<16x8xbf16>, vector<16x8xf32> -> vector<16x8xf32>
    %291 = arith.truncf %290 : vector<16x8xf32> to vector<16x8xbf16>
    %292 = vector.extract_strided_slice %231 {offsets = [1, 0, 0], sizes = [1, 8, 32], strides = [1, 1, 1]} : vector<4x8x32xbf16> to vector<1x8x32xbf16>
    %293 = vector.shape_cast %292 : vector<1x8x32xbf16> to vector<8x32xbf16>
    %cst_120 = arith.constant dense<0.000000e+00> : vector<16x32xf32>
    %294 = tpu.matmul %291, %293, %cst_120 {dimension_numbers = #tpu.dot_dimension_numbers<[1], [0], [0], [1], [0, 0, 1, 1], [], []>} : vector<16x8xbf16>, vector<8x32xbf16>, vector<16x32xf32> -> vector<16x32xf32>
    %295 = arith.addf %268, %294 : vector<16x32xf32>
    %296 = vector.extract_strided_slice %238 {offsets = [0, 16], sizes = [16, 8], strides = [1, 1]} : vector<16x32xf32> to vector<16x8xf32>
    %297 = arith.truncf %296 : vector<16x8xf32> to vector<16x8xbf16>
    %298 = vector.extract_strided_slice %239 {offsets = [0, 16], sizes = [16, 8], strides = [1, 1]} : vector<16x32xf32> to vector<16x8xf32>
    %299 = arith.truncf %298 : vector<16x8xf32> to vector<16x8xbf16>
    %300 = vector.extract_strided_slice %240 {offsets = [0, 16], sizes = [16, 8], strides = [1, 1]} : vector<16x32xf32> to vector<16x8xf32>
    %301 = arith.truncf %300 : vector<16x8xf32> to vector<16x8xbf16>
    %cst_121 = arith.constant dense<0.000000e+00> : vector<16x16xf32>
    %302 = tpu.matmul %297, %299, %cst_121 {dimension_numbers = #tpu.dot_dimension_numbers<[1], [1], [0], [0], [0, 0, 1, 0], [], []>} : vector<16x8xbf16>, vector<16x8xbf16>, vector<16x16xf32> -> vector<16x16xf32>
    %cst_122 = arith.constant 0.353553385 : f32
    %303 = vector.broadcast %cst_122 : f32 to vector<16x16xf32>
    %304 = arith.mulf %302, %303 : vector<16x16xf32>
    %305 = arith.addf %304, %1 : vector<16x16xf32>
    %cst_123 = arith.constant dense<0xFF800000> : vector<16xf32>
    %306 = vector.multi_reduction <maximumf>, %305, %cst_123 [1] : vector<16x16xf32> to vector<16xf32>
    %307 = vector.shape_cast %306 : vector<16xf32> to vector<16x1xf32>
    %308 = vector.broadcast %307 : vector<16x1xf32> to vector<16x16xf32>
    %309 = arith.subf %305, %308 : vector<16x16xf32>
    %310 = math.exp %309 : vector<16x16xf32>
    %cst_124 = arith.constant dense<0.000000e+00> : vector<16xf32>
    %311 = vector.multi_reduction <add>, %310, %cst_124 [1] : vector<16x16xf32> to vector<16xf32>
    %312 = vector.shape_cast %311 : vector<16xf32> to vector<16x1xf32>
    %313 = tpu.reciprocal %312 {approx = true} : vector<16x1xf32> -> vector<16x1xf32>
    %314 = vector.broadcast %313 : vector<16x1xf32> to vector<16x16xf32>
    %315 = arith.mulf %310, %314 : vector<16x16xf32>
    %316 = arith.truncf %315 : vector<16x16xf32> to vector<16x16xbf16>
    %cst_125 = arith.constant dense<0.000000e+00> : vector<16x8xf32>
    %317 = tpu.matmul %316, %301, %cst_125 {dimension_numbers = #tpu.dot_dimension_numbers<[1], [0], [0], [1], [0, 0, 1, 1], [], []>} : vector<16x16xbf16>, vector<16x8xbf16>, vector<16x8xf32> -> vector<16x8xf32>
    %318 = arith.truncf %317 : vector<16x8xf32> to vector<16x8xbf16>
    %319 = vector.extract_strided_slice %231 {offsets = [2, 0, 0], sizes = [1, 8, 32], strides = [1, 1, 1]} : vector<4x8x32xbf16> to vector<1x8x32xbf16>
    %320 = vector.shape_cast %319 : vector<1x8x32xbf16> to vector<8x32xbf16>
    %cst_126 = arith.constant dense<0.000000e+00> : vector<16x32xf32>
    %321 = tpu.matmul %318, %320, %cst_126 {dimension_numbers = #tpu.dot_dimension_numbers<[1], [0], [0], [1], [0, 0, 1, 1], [], []>} : vector<16x8xbf16>, vector<8x32xbf16>, vector<16x32xf32> -> vector<16x32xf32>
    %322 = arith.addf %295, %321 : vector<16x32xf32>
    %323 = vector.extract_strided_slice %238 {offsets = [0, 24], sizes = [16, 8], strides = [1, 1]} : vector<16x32xf32> to vector<16x8xf32>
    %324 = arith.truncf %323 : vector<16x8xf32> to vector<16x8xbf16>
    %325 = vector.extract_strided_slice %239 {offsets = [0, 24], sizes = [16, 8], strides = [1, 1]} : vector<16x32xf32> to vector<16x8xf32>
    %326 = arith.truncf %325 : vector<16x8xf32> to vector<16x8xbf16>
    %327 = vector.extract_strided_slice %240 {offsets = [0, 24], sizes = [16, 8], strides = [1, 1]} : vector<16x32xf32> to vector<16x8xf32>
    %328 = arith.truncf %327 : vector<16x8xf32> to vector<16x8xbf16>
    %cst_127 = arith.constant dense<0.000000e+00> : vector<16x16xf32>
    %329 = tpu.matmul %324, %326, %cst_127 {dimension_numbers = #tpu.dot_dimension_numbers<[1], [1], [0], [0], [0, 0, 1, 0], [], []>} : vector<16x8xbf16>, vector<16x8xbf16>, vector<16x16xf32> -> vector<16x16xf32>
    %cst_128 = arith.constant 0.353553385 : f32
    %330 = vector.broadcast %cst_128 : f32 to vector<16x16xf32>
    %331 = arith.mulf %329, %330 : vector<16x16xf32>
    %332 = arith.addf %331, %1 : vector<16x16xf32>
    %cst_129 = arith.constant dense<0xFF800000> : vector<16xf32>
    %333 = vector.multi_reduction <maximumf>, %332, %cst_129 [1] : vector<16x16xf32> to vector<16xf32>
    %334 = vector.shape_cast %333 : vector<16xf32> to vector<16x1xf32>
    %335 = vector.broadcast %334 : vector<16x1xf32> to vector<16x16xf32>
    %336 = arith.subf %332, %335 : vector<16x16xf32>
    %337 = math.exp %336 : vector<16x16xf32>
    %cst_130 = arith.constant dense<0.000000e+00> : vector<16xf32>
    %338 = vector.multi_reduction <add>, %337, %cst_130 [1] : vector<16x16xf32> to vector<16xf32>
    %339 = vector.shape_cast %338 : vector<16xf32> to vector<16x1xf32>
    %340 = tpu.reciprocal %339 {approx = true} : vector<16x1xf32> -> vector<16x1xf32>
    %341 = vector.broadcast %340 : vector<16x1xf32> to vector<16x16xf32>
    %342 = arith.mulf %337, %341 : vector<16x16xf32>
    %343 = arith.truncf %342 : vector<16x16xf32> to vector<16x16xbf16>
    %cst_131 = arith.constant dense<0.000000e+00> : vector<16x8xf32>
    %344 = tpu.matmul %343, %328, %cst_131 {dimension_numbers = #tpu.dot_dimension_numbers<[1], [0], [0], [1], [0, 0, 1, 1], [], []>} : vector<16x16xbf16>, vector<16x8xbf16>, vector<16x8xf32> -> vector<16x8xf32>
    %345 = arith.truncf %344 : vector<16x8xf32> to vector<16x8xbf16>
    %346 = vector.extract_strided_slice %231 {offsets = [3, 0, 0], sizes = [1, 8, 32], strides = [1, 1, 1]} : vector<4x8x32xbf16> to vector<1x8x32xbf16>
    %347 = vector.shape_cast %346 : vector<1x8x32xbf16> to vector<8x32xbf16>
    %cst_132 = arith.constant dense<0.000000e+00> : vector<16x32xf32>
    %348 = tpu.matmul %345, %347, %cst_132 {dimension_numbers = #tpu.dot_dimension_numbers<[1], [0], [0], [1], [0, 0, 1, 1], [], []>} : vector<16x8xbf16>, vector<8x32xbf16>, vector<16x32xf32> -> vector<16x32xf32>
    %349 = arith.addf %322, %348 : vector<16x32xf32>
    %350 = arith.addf %200, %349 : vector<16x32xf32>
    %c1_133 = arith.constant 1 : index
    %c2_134 = arith.constant 2 : index
    %c0_135 = arith.constant 0 : index
    %c0_136 = arith.constant 0 : index
    %351 = vector.load %arg14[%c1_133, %c2_134, %c0_135, %c0_136] : memref<2x4x1x32xf32, #tpu.memory_space<vmem>>, vector<1x1x1x32xf32>
    %352 = vector.shape_cast %351 : vector<1x1x1x32xf32> to vector<1x32xf32>
    %c1_137 = arith.constant 1 : index
    %c3_138 = arith.constant 3 : index
    %c0_139 = arith.constant 0 : index
    %c0_140 = arith.constant 0 : index
    %353 = vector.load %arg14[%c1_137, %c3_138, %c0_139, %c0_140] : memref<2x4x1x32xf32, #tpu.memory_space<vmem>>, vector<1x1x1x32xf32>
    %354 = vector.shape_cast %353 : vector<1x1x1x32xf32> to vector<1x32xf32>
    %cst_141 = arith.constant dense<0.000000e+00> : vector<16xf32>
    %355 = vector.multi_reduction <add>, %350, %cst_141 [1] : vector<16x32xf32> to vector<16xf32>
    %356 = vector.shape_cast %355 : vector<16xf32> to vector<16x1xf32>
    %cst_142 = arith.constant 3.200000e+01 : f32
    %357 = vector.broadcast %cst_142 : f32 to vector<16x1xf32>
    %358 = arith.divf %356, %357 : vector<16x1xf32>
    %359 = vector.broadcast %358 : vector<16x1xf32> to vector<16x32xf32>
    %360 = arith.subf %350, %359 : vector<16x32xf32>
    %361 = arith.mulf %360, %360 : vector<16x32xf32>
    %cst_143 = arith.constant dense<0.000000e+00> : vector<16xf32>
    %362 = vector.multi_reduction <add>, %361, %cst_143 [1] : vector<16x32xf32> to vector<16xf32>
    %363 = vector.shape_cast %362 : vector<16xf32> to vector<16x1xf32>
    %cst_144 = arith.constant 0.0322580636 : f32
    %364 = vector.broadcast %cst_144 : f32 to vector<16x1xf32>
    %365 = arith.mulf %363, %364 : vector<16x1xf32>
    %366 = math.sqrt %365 : vector<16x1xf32>
    %cst_145 = arith.constant 9.99999997E-7 : f32
    %367 = vector.broadcast %cst_145 : f32 to vector<16x1xf32>
    %368 = arith.addf %366, %367 : vector<16x1xf32>
    %369 = tpu.reciprocal %368 {approx = true} : vector<16x1xf32> -> vector<16x1xf32>
    %370 = vector.broadcast %352 : vector<1x32xf32> to vector<16x32xf32>
    %371 = arith.mulf %370, %360 : vector<16x32xf32>
    %372 = vector.broadcast %369 : vector<16x1xf32> to vector<16x32xf32>
    %373 = arith.mulf %371, %372 : vector<16x32xf32>
    %374 = vector.broadcast %354 : vector<1x32xf32> to vector<16x32xf32>
    %375 = arith.addf %373, %374 : vector<16x32xf32>
    %c1_146 = arith.constant 1 : index
    %c0_147 = arith.constant 0 : index
    %c0_148 = arith.constant 0 : index
    %376 = vector.load %arg10[%c1_146, %c0_147, %c0_148] : memref<2x32x64xbf16, #tpu.memory_space<vmem>>, vector<1x32x64xbf16>
    %377 = vector.shape_cast %376 : vector<1x32x64xbf16> to vector<32x64xbf16>
    %c1_149 = arith.constant 1 : index
    %c0_150 = arith.constant 0 : index
    %c0_151 = arith.constant 0 : index
    %378 = vector.load %arg11[%c1_149, %c0_150, %c0_151] : memref<2x1x64xf32, #tpu.memory_space<vmem>>, vector<1x1x64xf32>
    %379 = vector.shape_cast %378 : vector<1x1x64xf32> to vector<1x64xf32>
    %c1_152 = arith.constant 1 : index
    %c0_153 = arith.constant 0 : index
    %c0_154 = arith.constant 0 : index
    %380 = vector.load %arg12[%c1_152, %c0_153, %c0_154] : memref<2x64x32xbf16, #tpu.memory_space<vmem>>, vector<1x64x32xbf16>
    %381 = vector.shape_cast %380 : vector<1x64x32xbf16> to vector<64x32xbf16>
    %c1_155 = arith.constant 1 : index
    %c0_156 = arith.constant 0 : index
    %c0_157 = arith.constant 0 : index
    %382 = vector.load %arg13[%c1_155, %c0_156, %c0_157] : memref<2x1x32xf32, #tpu.memory_space<vmem>>, vector<1x1x32xf32>
    %383 = vector.shape_cast %382 : vector<1x1x32xf32> to vector<1x32xf32>
    %384 = arith.truncf %375 : vector<16x32xf32> to vector<16x32xbf16>
    %cst_158 = arith.constant dense<0.000000e+00> : vector<16x64xf32>
    %385 = tpu.matmul %384, %377, %cst_158 {dimension_numbers = #tpu.dot_dimension_numbers<[1], [0], [0], [1], [0, 0, 1, 1], [], []>} : vector<16x32xbf16>, vector<32x64xbf16>, vector<16x64xf32> -> vector<16x64xf32>
    %386 = vector.broadcast %379 : vector<1x64xf32> to vector<16x64xf32>
    %387 = arith.addf %385, %386 : vector<16x64xf32>
    %cst_159 = arith.constant 0.000000e+00 : f32
    %388 = vector.broadcast %cst_159 : f32 to vector<16x64xf32>
    %389 = arith.maximumf %387, %388 : vector<16x64xf32>
    %390 = arith.truncf %389 : vector<16x64xf32> to vector<16x64xbf16>
    %cst_160 = arith.constant dense<0.000000e+00> : vector<16x32xf32>
    %391 = tpu.matmul %390, %381, %cst_160 {dimension_numbers = #tpu.dot_dimension_numbers<[1], [0], [0], [1], [0, 0, 1, 1], [], []>} : vector<16x64xbf16>, vector<64x32xbf16>, vector<16x32xf32> -> vector<16x32xf32>
    %392 = vector.broadcast %383 : vector<1x32xf32> to vector<16x32xf32>
    %393 = arith.addf %391, %392 : vector<16x32xf32>
    %394 = arith.addf %350, %393 : vector<16x32xf32>
    %c0_161 = arith.constant 0 : index
    %c0_162 = arith.constant 0 : index
    %c0_163 = arith.constant 0 : index
    %395 = vector.load %arg15[%c0_161, %c0_162, %c0_163] : memref<2x1x32xf32, #tpu.memory_space<vmem>>, vector<1x1x32xf32>
    %396 = vector.shape_cast %395 : vector<1x1x32xf32> to vector<1x32xf32>
    %c1_164 = arith.constant 1 : index
    %c0_165 = arith.constant 0 : index
    %c0_166 = arith.constant 0 : index
    %397 = vector.load %arg15[%c1_164, %c0_165, %c0_166] : memref<2x1x32xf32, #tpu.memory_space<vmem>>, vector<1x1x32xf32>
    %398 = vector.shape_cast %397 : vector<1x1x32xf32> to vector<1x32xf32>
    %cst_167 = arith.constant dense<0.000000e+00> : vector<16xf32>
    %399 = vector.multi_reduction <add>, %394, %cst_167 [1] : vector<16x32xf32> to vector<16xf32>
    %400 = vector.shape_cast %399 : vector<16xf32> to vector<16x1xf32>
    %cst_168 = arith.constant 3.200000e+01 : f32
    %401 = vector.broadcast %cst_168 : f32 to vector<16x1xf32>
    %402 = arith.divf %400, %401 : vector<16x1xf32>
    %403 = vector.broadcast %402 : vector<16x1xf32> to vector<16x32xf32>
    %404 = arith.subf %394, %403 : vector<16x32xf32>
    %405 = arith.mulf %404, %404 : vector<16x32xf32>
    %cst_169 = arith.constant dense<0.000000e+00> : vector<16xf32>
    %406 = vector.multi_reduction <add>, %405, %cst_169 [1] : vector<16x32xf32> to vector<16xf32>
    %407 = vector.shape_cast %406 : vector<16xf32> to vector<16x1xf32>
    %cst_170 = arith.constant 0.0322580636 : f32
    %408 = vector.broadcast %cst_170 : f32 to vector<16x1xf32>
    %409 = arith.mulf %407, %408 : vector<16x1xf32>
    %410 = math.sqrt %409 : vector<16x1xf32>
    %cst_171 = arith.constant 9.99999997E-7 : f32
    %411 = vector.broadcast %cst_171 : f32 to vector<16x1xf32>
    %412 = arith.addf %410, %411 : vector<16x1xf32>
    %413 = tpu.reciprocal %412 {approx = true} : vector<16x1xf32> -> vector<16x1xf32>
    %414 = vector.broadcast %396 : vector<1x32xf32> to vector<16x32xf32>
    %415 = arith.mulf %414, %404 : vector<16x32xf32>
    %416 = vector.broadcast %413 : vector<16x1xf32> to vector<16x32xf32>
    %417 = arith.mulf %415, %416 : vector<16x32xf32>
    %418 = vector.broadcast %398 : vector<1x32xf32> to vector<16x32xf32>
    %419 = arith.addf %417, %418 : vector<16x32xf32>
    %c0_172 = arith.constant 0 : index
    %c0_173 = arith.constant 0 : index
    %420 = vector.load %arg2[%c0_172, %c0_173] : memref<16x32xf32, #tpu.memory_space<vmem>>, vector<16x32xf32>
    %c0_174 = arith.constant 0 : index
    %c0_175 = arith.constant 0 : index
    %c0_176 = arith.constant 0 : index
    %c0_177 = arith.constant 0 : index
    %421 = vector.load %arg24[%c0_174, %c0_175, %c0_176, %c0_177] : memref<2x6x1x32xf32, #tpu.memory_space<vmem>>, vector<1x1x1x32xf32>
    %422 = vector.shape_cast %421 : vector<1x1x1x32xf32> to vector<1x32xf32>
    %c0_178 = arith.constant 0 : index
    %c1_179 = arith.constant 1 : index
    %c0_180 = arith.constant 0 : index
    %c0_181 = arith.constant 0 : index
    %423 = vector.load %arg24[%c0_178, %c1_179, %c0_180, %c0_181] : memref<2x6x1x32xf32, #tpu.memory_space<vmem>>, vector<1x1x1x32xf32>
    %424 = vector.shape_cast %423 : vector<1x1x1x32xf32> to vector<1x32xf32>
    %cst_182 = arith.constant dense<0.000000e+00> : vector<16xf32>
    %425 = vector.multi_reduction <add>, %420, %cst_182 [1] : vector<16x32xf32> to vector<16xf32>
    %426 = vector.shape_cast %425 : vector<16xf32> to vector<16x1xf32>
    %cst_183 = arith.constant 3.200000e+01 : f32
    %427 = vector.broadcast %cst_183 : f32 to vector<16x1xf32>
    %428 = arith.divf %426, %427 : vector<16x1xf32>
    %429 = vector.broadcast %428 : vector<16x1xf32> to vector<16x32xf32>
    %430 = arith.subf %420, %429 : vector<16x32xf32>
    %431 = arith.mulf %430, %430 : vector<16x32xf32>
    %cst_184 = arith.constant dense<0.000000e+00> : vector<16xf32>
    %432 = vector.multi_reduction <add>, %431, %cst_184 [1] : vector<16x32xf32> to vector<16xf32>
    %433 = vector.shape_cast %432 : vector<16xf32> to vector<16x1xf32>
    %cst_185 = arith.constant 0.0322580636 : f32
    %434 = vector.broadcast %cst_185 : f32 to vector<16x1xf32>
    %435 = arith.mulf %433, %434 : vector<16x1xf32>
    %436 = math.sqrt %435 : vector<16x1xf32>
    %cst_186 = arith.constant 9.99999997E-7 : f32
    %437 = vector.broadcast %cst_186 : f32 to vector<16x1xf32>
    %438 = arith.addf %436, %437 : vector<16x1xf32>
    %439 = tpu.reciprocal %438 {approx = true} : vector<16x1xf32> -> vector<16x1xf32>
    %440 = vector.broadcast %422 : vector<1x32xf32> to vector<16x32xf32>
    %441 = arith.mulf %440, %430 : vector<16x32xf32>
    %442 = vector.broadcast %439 : vector<16x1xf32> to vector<16x32xf32>
    %443 = arith.mulf %441, %442 : vector<16x32xf32>
    %444 = vector.broadcast %424 : vector<1x32xf32> to vector<16x32xf32>
    %445 = arith.addf %443, %444 : vector<16x32xf32>
    %c0_187 = arith.constant 0 : index
    %c0_188 = arith.constant 0 : index
    %c0_189 = arith.constant 0 : index
    %446 = vector.load %arg16[%c0_187, %c0_188, %c0_189] : memref<4x32x96xbf16, #tpu.memory_space<vmem>>, vector<1x32x96xbf16>
    %447 = vector.shape_cast %446 : vector<1x32x96xbf16> to vector<32x96xbf16>
    %c0_190 = arith.constant 0 : index
    %c0_191 = arith.constant 0 : index
    %c0_192 = arith.constant 0 : index
    %448 = vector.load %arg17[%c0_190, %c0_191, %c0_192] : memref<4x1x96xf32, #tpu.memory_space<vmem>>, vector<1x1x96xf32>
    %449 = vector.shape_cast %448 : vector<1x1x96xf32> to vector<1x96xf32>
    %c0_193 = arith.constant 0 : index
    %c0_194 = arith.constant 0 : index
    %c0_195 = arith.constant 0 : index
    %c0_196 = arith.constant 0 : index
    %450 = vector.load %arg18[%c0_193, %c0_194, %c0_195, %c0_196] : memref<4x4x8x32xbf16, #tpu.memory_space<vmem>>, vector<1x4x8x32xbf16>
    %451 = vector.shape_cast %450 : vector<1x4x8x32xbf16> to vector<4x8x32xbf16>
    %c0_197 = arith.constant 0 : index
    %c0_198 = arith.constant 0 : index
    %c0_199 = arith.constant 0 : index
    %452 = vector.load %arg19[%c0_197, %c0_198, %c0_199] : memref<4x1x32xf32, #tpu.memory_space<vmem>>, vector<1x1x32xf32>
    %453 = vector.shape_cast %452 : vector<1x1x32xf32> to vector<1x32xf32>
    %454 = arith.truncf %445 : vector<16x32xf32> to vector<16x32xbf16>
    %cst_200 = arith.constant dense<0.000000e+00> : vector<16x96xf32>
    %455 = tpu.matmul %454, %447, %cst_200 {dimension_numbers = #tpu.dot_dimension_numbers<[1], [0], [0], [1], [0, 0, 1, 1], [], []>} : vector<16x32xbf16>, vector<32x96xbf16>, vector<16x96xf32> -> vector<16x96xf32>
    %456 = vector.broadcast %449 : vector<1x96xf32> to vector<16x96xf32>
    %457 = arith.addf %455, %456 : vector<16x96xf32>
    %458 = vector.extract_strided_slice %457 {offsets = [0, 0], sizes = [16, 32], strides = [1, 1]} : vector<16x96xf32> to vector<16x32xf32>
    %459 = vector.extract_strided_slice %457 {offsets = [0, 32], sizes = [16, 32], strides = [1, 1]} : vector<16x96xf32> to vector<16x32xf32>
    %460 = vector.extract_strided_slice %457 {offsets = [0, 64], sizes = [16, 32], strides = [1, 1]} : vector<16x96xf32> to vector<16x32xf32>
    %461 = vector.extract_strided_slice %458 {offsets = [0, 0], sizes = [16, 8], strides = [1, 1]} : vector<16x32xf32> to vector<16x8xf32>
    %462 = arith.truncf %461 : vector<16x8xf32> to vector<16x8xbf16>
    %463 = vector.extract_strided_slice %459 {offsets = [0, 0], sizes = [16, 8], strides = [1, 1]} : vector<16x32xf32> to vector<16x8xf32>
    %464 = arith.truncf %463 : vector<16x8xf32> to vector<16x8xbf16>
    %465 = vector.extract_strided_slice %460 {offsets = [0, 0], sizes = [16, 8], strides = [1, 1]} : vector<16x32xf32> to vector<16x8xf32>
    %466 = arith.truncf %465 : vector<16x8xf32> to vector<16x8xbf16>
    %cst_201 = arith.constant dense<0.000000e+00> : vector<16x16xf32>
    %467 = tpu.matmul %462, %464, %cst_201 {dimension_numbers = #tpu.dot_dimension_numbers<[1], [1], [0], [0], [0, 0, 1, 0], [], []>} : vector<16x8xbf16>, vector<16x8xbf16>, vector<16x16xf32> -> vector<16x16xf32>
    %cst_202 = arith.constant 0.353553385 : f32
    %468 = vector.broadcast %cst_202 : f32 to vector<16x16xf32>
    %469 = arith.mulf %467, %468 : vector<16x16xf32>
    %470 = arith.addf %469, %3 : vector<16x16xf32>
    %cst_203 = arith.constant dense<0xFF800000> : vector<16xf32>
    %471 = vector.multi_reduction <maximumf>, %470, %cst_203 [1] : vector<16x16xf32> to vector<16xf32>
    %472 = vector.shape_cast %471 : vector<16xf32> to vector<16x1xf32>
    %473 = vector.broadcast %472 : vector<16x1xf32> to vector<16x16xf32>
    %474 = arith.subf %470, %473 : vector<16x16xf32>
    %475 = math.exp %474 : vector<16x16xf32>
    %cst_204 = arith.constant dense<0.000000e+00> : vector<16xf32>
    %476 = vector.multi_reduction <add>, %475, %cst_204 [1] : vector<16x16xf32> to vector<16xf32>
    %477 = vector.shape_cast %476 : vector<16xf32> to vector<16x1xf32>
    %478 = tpu.reciprocal %477 {approx = true} : vector<16x1xf32> -> vector<16x1xf32>
    %479 = vector.broadcast %478 : vector<16x1xf32> to vector<16x16xf32>
    %480 = arith.mulf %475, %479 : vector<16x16xf32>
    %481 = arith.truncf %480 : vector<16x16xf32> to vector<16x16xbf16>
    %cst_205 = arith.constant dense<0.000000e+00> : vector<16x8xf32>
    %482 = tpu.matmul %481, %466, %cst_205 {dimension_numbers = #tpu.dot_dimension_numbers<[1], [0], [0], [1], [0, 0, 1, 1], [], []>} : vector<16x16xbf16>, vector<16x8xbf16>, vector<16x8xf32> -> vector<16x8xf32>
    %483 = arith.truncf %482 : vector<16x8xf32> to vector<16x8xbf16>
    %484 = vector.extract_strided_slice %451 {offsets = [0, 0, 0], sizes = [1, 8, 32], strides = [1, 1, 1]} : vector<4x8x32xbf16> to vector<1x8x32xbf16>
    %485 = vector.shape_cast %484 : vector<1x8x32xbf16> to vector<8x32xbf16>
    %cst_206 = arith.constant dense<0.000000e+00> : vector<16x32xf32>
    %486 = tpu.matmul %483, %485, %cst_206 {dimension_numbers = #tpu.dot_dimension_numbers<[1], [0], [0], [1], [0, 0, 1, 1], [], []>} : vector<16x8xbf16>, vector<8x32xbf16>, vector<16x32xf32> -> vector<16x32xf32>
    %487 = vector.broadcast %453 : vector<1x32xf32> to vector<16x32xf32>
    %488 = arith.addf %487, %486 : vector<16x32xf32>
    %489 = vector.extract_strided_slice %458 {offsets = [0, 8], sizes = [16, 8], strides = [1, 1]} : vector<16x32xf32> to vector<16x8xf32>
    %490 = arith.truncf %489 : vector<16x8xf32> to vector<16x8xbf16>
    %491 = vector.extract_strided_slice %459 {offsets = [0, 8], sizes = [16, 8], strides = [1, 1]} : vector<16x32xf32> to vector<16x8xf32>
    %492 = arith.truncf %491 : vector<16x8xf32> to vector<16x8xbf16>
    %493 = vector.extract_strided_slice %460 {offsets = [0, 8], sizes = [16, 8], strides = [1, 1]} : vector<16x32xf32> to vector<16x8xf32>
    %494 = arith.truncf %493 : vector<16x8xf32> to vector<16x8xbf16>
    %cst_207 = arith.constant dense<0.000000e+00> : vector<16x16xf32>
    %495 = tpu.matmul %490, %492, %cst_207 {dimension_numbers = #tpu.dot_dimension_numbers<[1], [1], [0], [0], [0, 0, 1, 0], [], []>} : vector<16x8xbf16>, vector<16x8xbf16>, vector<16x16xf32> -> vector<16x16xf32>
    %cst_208 = arith.constant 0.353553385 : f32
    %496 = vector.broadcast %cst_208 : f32 to vector<16x16xf32>
    %497 = arith.mulf %495, %496 : vector<16x16xf32>
    %498 = arith.addf %497, %3 : vector<16x16xf32>
    %cst_209 = arith.constant dense<0xFF800000> : vector<16xf32>
    %499 = vector.multi_reduction <maximumf>, %498, %cst_209 [1] : vector<16x16xf32> to vector<16xf32>
    %500 = vector.shape_cast %499 : vector<16xf32> to vector<16x1xf32>
    %501 = vector.broadcast %500 : vector<16x1xf32> to vector<16x16xf32>
    %502 = arith.subf %498, %501 : vector<16x16xf32>
    %503 = math.exp %502 : vector<16x16xf32>
    %cst_210 = arith.constant dense<0.000000e+00> : vector<16xf32>
    %504 = vector.multi_reduction <add>, %503, %cst_210 [1] : vector<16x16xf32> to vector<16xf32>
    %505 = vector.shape_cast %504 : vector<16xf32> to vector<16x1xf32>
    %506 = tpu.reciprocal %505 {approx = true} : vector<16x1xf32> -> vector<16x1xf32>
    %507 = vector.broadcast %506 : vector<16x1xf32> to vector<16x16xf32>
    %508 = arith.mulf %503, %507 : vector<16x16xf32>
    %509 = arith.truncf %508 : vector<16x16xf32> to vector<16x16xbf16>
    %cst_211 = arith.constant dense<0.000000e+00> : vector<16x8xf32>
    %510 = tpu.matmul %509, %494, %cst_211 {dimension_numbers = #tpu.dot_dimension_numbers<[1], [0], [0], [1], [0, 0, 1, 1], [], []>} : vector<16x16xbf16>, vector<16x8xbf16>, vector<16x8xf32> -> vector<16x8xf32>
    %511 = arith.truncf %510 : vector<16x8xf32> to vector<16x8xbf16>
    %512 = vector.extract_strided_slice %451 {offsets = [1, 0, 0], sizes = [1, 8, 32], strides = [1, 1, 1]} : vector<4x8x32xbf16> to vector<1x8x32xbf16>
    %513 = vector.shape_cast %512 : vector<1x8x32xbf16> to vector<8x32xbf16>
    %cst_212 = arith.constant dense<0.000000e+00> : vector<16x32xf32>
    %514 = tpu.matmul %511, %513, %cst_212 {dimension_numbers = #tpu.dot_dimension_numbers<[1], [0], [0], [1], [0, 0, 1, 1], [], []>} : vector<16x8xbf16>, vector<8x32xbf16>, vector<16x32xf32> -> vector<16x32xf32>
    %515 = arith.addf %488, %514 : vector<16x32xf32>
    %516 = vector.extract_strided_slice %458 {offsets = [0, 16], sizes = [16, 8], strides = [1, 1]} : vector<16x32xf32> to vector<16x8xf32>
    %517 = arith.truncf %516 : vector<16x8xf32> to vector<16x8xbf16>
    %518 = vector.extract_strided_slice %459 {offsets = [0, 16], sizes = [16, 8], strides = [1, 1]} : vector<16x32xf32> to vector<16x8xf32>
    %519 = arith.truncf %518 : vector<16x8xf32> to vector<16x8xbf16>
    %520 = vector.extract_strided_slice %460 {offsets = [0, 16], sizes = [16, 8], strides = [1, 1]} : vector<16x32xf32> to vector<16x8xf32>
    %521 = arith.truncf %520 : vector<16x8xf32> to vector<16x8xbf16>
    %cst_213 = arith.constant dense<0.000000e+00> : vector<16x16xf32>
    %522 = tpu.matmul %517, %519, %cst_213 {dimension_numbers = #tpu.dot_dimension_numbers<[1], [1], [0], [0], [0, 0, 1, 0], [], []>} : vector<16x8xbf16>, vector<16x8xbf16>, vector<16x16xf32> -> vector<16x16xf32>
    %cst_214 = arith.constant 0.353553385 : f32
    %523 = vector.broadcast %cst_214 : f32 to vector<16x16xf32>
    %524 = arith.mulf %522, %523 : vector<16x16xf32>
    %525 = arith.addf %524, %3 : vector<16x16xf32>
    %cst_215 = arith.constant dense<0xFF800000> : vector<16xf32>
    %526 = vector.multi_reduction <maximumf>, %525, %cst_215 [1] : vector<16x16xf32> to vector<16xf32>
    %527 = vector.shape_cast %526 : vector<16xf32> to vector<16x1xf32>
    %528 = vector.broadcast %527 : vector<16x1xf32> to vector<16x16xf32>
    %529 = arith.subf %525, %528 : vector<16x16xf32>
    %530 = math.exp %529 : vector<16x16xf32>
    %cst_216 = arith.constant dense<0.000000e+00> : vector<16xf32>
    %531 = vector.multi_reduction <add>, %530, %cst_216 [1] : vector<16x16xf32> to vector<16xf32>
    %532 = vector.shape_cast %531 : vector<16xf32> to vector<16x1xf32>
    %533 = tpu.reciprocal %532 {approx = true} : vector<16x1xf32> -> vector<16x1xf32>
    %534 = vector.broadcast %533 : vector<16x1xf32> to vector<16x16xf32>
    %535 = arith.mulf %530, %534 : vector<16x16xf32>
    %536 = arith.truncf %535 : vector<16x16xf32> to vector<16x16xbf16>
    %cst_217 = arith.constant dense<0.000000e+00> : vector<16x8xf32>
    %537 = tpu.matmul %536, %521, %cst_217 {dimension_numbers = #tpu.dot_dimension_numbers<[1], [0], [0], [1], [0, 0, 1, 1], [], []>} : vector<16x16xbf16>, vector<16x8xbf16>, vector<16x8xf32> -> vector<16x8xf32>
    %538 = arith.truncf %537 : vector<16x8xf32> to vector<16x8xbf16>
    %539 = vector.extract_strided_slice %451 {offsets = [2, 0, 0], sizes = [1, 8, 32], strides = [1, 1, 1]} : vector<4x8x32xbf16> to vector<1x8x32xbf16>
    %540 = vector.shape_cast %539 : vector<1x8x32xbf16> to vector<8x32xbf16>
    %cst_218 = arith.constant dense<0.000000e+00> : vector<16x32xf32>
    %541 = tpu.matmul %538, %540, %cst_218 {dimension_numbers = #tpu.dot_dimension_numbers<[1], [0], [0], [1], [0, 0, 1, 1], [], []>} : vector<16x8xbf16>, vector<8x32xbf16>, vector<16x32xf32> -> vector<16x32xf32>
    %542 = arith.addf %515, %541 : vector<16x32xf32>
    %543 = vector.extract_strided_slice %458 {offsets = [0, 24], sizes = [16, 8], strides = [1, 1]} : vector<16x32xf32> to vector<16x8xf32>
    %544 = arith.truncf %543 : vector<16x8xf32> to vector<16x8xbf16>
    %545 = vector.extract_strided_slice %459 {offsets = [0, 24], sizes = [16, 8], strides = [1, 1]} : vector<16x32xf32> to vector<16x8xf32>
    %546 = arith.truncf %545 : vector<16x8xf32> to vector<16x8xbf16>
    %547 = vector.extract_strided_slice %460 {offsets = [0, 24], sizes = [16, 8], strides = [1, 1]} : vector<16x32xf32> to vector<16x8xf32>
    %548 = arith.truncf %547 : vector<16x8xf32> to vector<16x8xbf16>
    %cst_219 = arith.constant dense<0.000000e+00> : vector<16x16xf32>
    %549 = tpu.matmul %544, %546, %cst_219 {dimension_numbers = #tpu.dot_dimension_numbers<[1], [1], [0], [0], [0, 0, 1, 0], [], []>} : vector<16x8xbf16>, vector<16x8xbf16>, vector<16x16xf32> -> vector<16x16xf32>
    %cst_220 = arith.constant 0.353553385 : f32
    %550 = vector.broadcast %cst_220 : f32 to vector<16x16xf32>
    %551 = arith.mulf %549, %550 : vector<16x16xf32>
    %552 = arith.addf %551, %3 : vector<16x16xf32>
    %cst_221 = arith.constant dense<0xFF800000> : vector<16xf32>
    %553 = vector.multi_reduction <maximumf>, %552, %cst_221 [1] : vector<16x16xf32> to vector<16xf32>
    %554 = vector.shape_cast %553 : vector<16xf32> to vector<16x1xf32>
    %555 = vector.broadcast %554 : vector<16x1xf32> to vector<16x16xf32>
    %556 = arith.subf %552, %555 : vector<16x16xf32>
    %557 = math.exp %556 : vector<16x16xf32>
    %cst_222 = arith.constant dense<0.000000e+00> : vector<16xf32>
    %558 = vector.multi_reduction <add>, %557, %cst_222 [1] : vector<16x16xf32> to vector<16xf32>
    %559 = vector.shape_cast %558 : vector<16xf32> to vector<16x1xf32>
    %560 = tpu.reciprocal %559 {approx = true} : vector<16x1xf32> -> vector<16x1xf32>
    %561 = vector.broadcast %560 : vector<16x1xf32> to vector<16x16xf32>
    %562 = arith.mulf %557, %561 : vector<16x16xf32>
    %563 = arith.truncf %562 : vector<16x16xf32> to vector<16x16xbf16>
    %cst_223 = arith.constant dense<0.000000e+00> : vector<16x8xf32>
    %564 = tpu.matmul %563, %548, %cst_223 {dimension_numbers = #tpu.dot_dimension_numbers<[1], [0], [0], [1], [0, 0, 1, 1], [], []>} : vector<16x16xbf16>, vector<16x8xbf16>, vector<16x8xf32> -> vector<16x8xf32>
    %565 = arith.truncf %564 : vector<16x8xf32> to vector<16x8xbf16>
    %566 = vector.extract_strided_slice %451 {offsets = [3, 0, 0], sizes = [1, 8, 32], strides = [1, 1, 1]} : vector<4x8x32xbf16> to vector<1x8x32xbf16>
    %567 = vector.shape_cast %566 : vector<1x8x32xbf16> to vector<8x32xbf16>
    %cst_224 = arith.constant dense<0.000000e+00> : vector<16x32xf32>
    %568 = tpu.matmul %565, %567, %cst_224 {dimension_numbers = #tpu.dot_dimension_numbers<[1], [0], [0], [1], [0, 0, 1, 1], [], []>} : vector<16x8xbf16>, vector<8x32xbf16>, vector<16x32xf32> -> vector<16x32xf32>
    %569 = arith.addf %542, %568 : vector<16x32xf32>
    %570 = arith.addf %420, %569 : vector<16x32xf32>
    %c0_225 = arith.constant 0 : index
    %c2_226 = arith.constant 2 : index
    %c0_227 = arith.constant 0 : index
    %c0_228 = arith.constant 0 : index
    %571 = vector.load %arg24[%c0_225, %c2_226, %c0_227, %c0_228] : memref<2x6x1x32xf32, #tpu.memory_space<vmem>>, vector<1x1x1x32xf32>
    %572 = vector.shape_cast %571 : vector<1x1x1x32xf32> to vector<1x32xf32>
    %c0_229 = arith.constant 0 : index
    %c3_230 = arith.constant 3 : index
    %c0_231 = arith.constant 0 : index
    %c0_232 = arith.constant 0 : index
    %573 = vector.load %arg24[%c0_229, %c3_230, %c0_231, %c0_232] : memref<2x6x1x32xf32, #tpu.memory_space<vmem>>, vector<1x1x1x32xf32>
    %574 = vector.shape_cast %573 : vector<1x1x1x32xf32> to vector<1x32xf32>
    %cst_233 = arith.constant dense<0.000000e+00> : vector<16xf32>
    %575 = vector.multi_reduction <add>, %570, %cst_233 [1] : vector<16x32xf32> to vector<16xf32>
    %576 = vector.shape_cast %575 : vector<16xf32> to vector<16x1xf32>
    %cst_234 = arith.constant 3.200000e+01 : f32
    %577 = vector.broadcast %cst_234 : f32 to vector<16x1xf32>
    %578 = arith.divf %576, %577 : vector<16x1xf32>
    %579 = vector.broadcast %578 : vector<16x1xf32> to vector<16x32xf32>
    %580 = arith.subf %570, %579 : vector<16x32xf32>
    %581 = arith.mulf %580, %580 : vector<16x32xf32>
    %cst_235 = arith.constant dense<0.000000e+00> : vector<16xf32>
    %582 = vector.multi_reduction <add>, %581, %cst_235 [1] : vector<16x32xf32> to vector<16xf32>
    %583 = vector.shape_cast %582 : vector<16xf32> to vector<16x1xf32>
    %cst_236 = arith.constant 0.0322580636 : f32
    %584 = vector.broadcast %cst_236 : f32 to vector<16x1xf32>
    %585 = arith.mulf %583, %584 : vector<16x1xf32>
    %586 = math.sqrt %585 : vector<16x1xf32>
    %cst_237 = arith.constant 9.99999997E-7 : f32
    %587 = vector.broadcast %cst_237 : f32 to vector<16x1xf32>
    %588 = arith.addf %586, %587 : vector<16x1xf32>
    %589 = tpu.reciprocal %588 {approx = true} : vector<16x1xf32> -> vector<16x1xf32>
    %590 = vector.broadcast %572 : vector<1x32xf32> to vector<16x32xf32>
    %591 = arith.mulf %590, %580 : vector<16x32xf32>
    %592 = vector.broadcast %589 : vector<16x1xf32> to vector<16x32xf32>
    %593 = arith.mulf %591, %592 : vector<16x32xf32>
    %594 = vector.broadcast %574 : vector<1x32xf32> to vector<16x32xf32>
    %595 = arith.addf %593, %594 : vector<16x32xf32>
    %c1_238 = arith.constant 1 : index
    %c0_239 = arith.constant 0 : index
    %c0_240 = arith.constant 0 : index
    %596 = vector.load %arg16[%c1_238, %c0_239, %c0_240] : memref<4x32x96xbf16, #tpu.memory_space<vmem>>, vector<1x32x96xbf16>
    %597 = vector.shape_cast %596 : vector<1x32x96xbf16> to vector<32x96xbf16>
    %c1_241 = arith.constant 1 : index
    %c0_242 = arith.constant 0 : index
    %c0_243 = arith.constant 0 : index
    %598 = vector.load %arg17[%c1_241, %c0_242, %c0_243] : memref<4x1x96xf32, #tpu.memory_space<vmem>>, vector<1x1x96xf32>
    %599 = vector.shape_cast %598 : vector<1x1x96xf32> to vector<1x96xf32>
    %c1_244 = arith.constant 1 : index
    %c0_245 = arith.constant 0 : index
    %c0_246 = arith.constant 0 : index
    %c0_247 = arith.constant 0 : index
    %600 = vector.load %arg18[%c1_244, %c0_245, %c0_246, %c0_247] : memref<4x4x8x32xbf16, #tpu.memory_space<vmem>>, vector<1x4x8x32xbf16>
    %601 = vector.shape_cast %600 : vector<1x4x8x32xbf16> to vector<4x8x32xbf16>
    %c1_248 = arith.constant 1 : index
    %c0_249 = arith.constant 0 : index
    %c0_250 = arith.constant 0 : index
    %602 = vector.load %arg19[%c1_248, %c0_249, %c0_250] : memref<4x1x32xf32, #tpu.memory_space<vmem>>, vector<1x1x32xf32>
    %603 = vector.shape_cast %602 : vector<1x1x32xf32> to vector<1x32xf32>
    %604 = arith.truncf %595 : vector<16x32xf32> to vector<16x32xbf16>
    %605 = vector.extract_strided_slice %597 {offsets = [0, 0], sizes = [32, 32], strides = [1, 1]} : vector<32x96xbf16> to vector<32x32xbf16>
    %cst_251 = arith.constant dense<0.000000e+00> : vector<16x32xf32>
    %606 = tpu.matmul %604, %605, %cst_251 {dimension_numbers = #tpu.dot_dimension_numbers<[1], [0], [0], [1], [0, 0, 1, 1], [], []>} : vector<16x32xbf16>, vector<32x32xbf16>, vector<16x32xf32> -> vector<16x32xf32>
    %607 = vector.extract_strided_slice %599 {offsets = [0, 0], sizes = [1, 32], strides = [1, 1]} : vector<1x96xf32> to vector<1x32xf32>
    %608 = vector.broadcast %607 : vector<1x32xf32> to vector<16x32xf32>
    %609 = arith.addf %606, %608 : vector<16x32xf32>
    %610 = arith.truncf %419 : vector<16x32xf32> to vector<16x32xbf16>
    %611 = vector.extract_strided_slice %597 {offsets = [0, 32], sizes = [32, 64], strides = [1, 1]} : vector<32x96xbf16> to vector<32x64xbf16>
    %cst_252 = arith.constant dense<0.000000e+00> : vector<16x64xf32>
    %612 = tpu.matmul %610, %611, %cst_252 {dimension_numbers = #tpu.dot_dimension_numbers<[1], [0], [0], [1], [0, 0, 1, 1], [], []>} : vector<16x32xbf16>, vector<32x64xbf16>, vector<16x64xf32> -> vector<16x64xf32>
    %613 = vector.extract_strided_slice %599 {offsets = [0, 32], sizes = [1, 64], strides = [1, 1]} : vector<1x96xf32> to vector<1x64xf32>
    %614 = vector.broadcast %613 : vector<1x64xf32> to vector<16x64xf32>
    %615 = arith.addf %612, %614 : vector<16x64xf32>
    %616 = vector.extract_strided_slice %615 {offsets = [0, 0], sizes = [16, 32], strides = [1, 1]} : vector<16x64xf32> to vector<16x32xf32>
    %617 = vector.extract_strided_slice %615 {offsets = [0, 32], sizes = [16, 32], strides = [1, 1]} : vector<16x64xf32> to vector<16x32xf32>
    %618 = vector.extract_strided_slice %609 {offsets = [0, 0], sizes = [16, 8], strides = [1, 1]} : vector<16x32xf32> to vector<16x8xf32>
    %619 = arith.truncf %618 : vector<16x8xf32> to vector<16x8xbf16>
    %620 = vector.extract_strided_slice %616 {offsets = [0, 0], sizes = [16, 8], strides = [1, 1]} : vector<16x32xf32> to vector<16x8xf32>
    %621 = arith.truncf %620 : vector<16x8xf32> to vector<16x8xbf16>
    %622 = vector.extract_strided_slice %617 {offsets = [0, 0], sizes = [16, 8], strides = [1, 1]} : vector<16x32xf32> to vector<16x8xf32>
    %623 = arith.truncf %622 : vector<16x8xf32> to vector<16x8xbf16>
    %cst_253 = arith.constant dense<0.000000e+00> : vector<16x16xf32>
    %624 = tpu.matmul %619, %621, %cst_253 {dimension_numbers = #tpu.dot_dimension_numbers<[1], [1], [0], [0], [0, 0, 1, 0], [], []>} : vector<16x8xbf16>, vector<16x8xbf16>, vector<16x16xf32> -> vector<16x16xf32>
    %cst_254 = arith.constant 0.353553385 : f32
    %625 = vector.broadcast %cst_254 : f32 to vector<16x16xf32>
    %626 = arith.mulf %624, %625 : vector<16x16xf32>
    %627 = arith.addf %626, %5 : vector<16x16xf32>
    %cst_255 = arith.constant dense<0xFF800000> : vector<16xf32>
    %628 = vector.multi_reduction <maximumf>, %627, %cst_255 [1] : vector<16x16xf32> to vector<16xf32>
    %629 = vector.shape_cast %628 : vector<16xf32> to vector<16x1xf32>
    %630 = vector.broadcast %629 : vector<16x1xf32> to vector<16x16xf32>
    %631 = arith.subf %627, %630 : vector<16x16xf32>
    %632 = math.exp %631 : vector<16x16xf32>
    %cst_256 = arith.constant dense<0.000000e+00> : vector<16xf32>
    %633 = vector.multi_reduction <add>, %632, %cst_256 [1] : vector<16x16xf32> to vector<16xf32>
    %634 = vector.shape_cast %633 : vector<16xf32> to vector<16x1xf32>
    %635 = tpu.reciprocal %634 {approx = true} : vector<16x1xf32> -> vector<16x1xf32>
    %636 = vector.broadcast %635 : vector<16x1xf32> to vector<16x16xf32>
    %637 = arith.mulf %632, %636 : vector<16x16xf32>
    %638 = arith.truncf %637 : vector<16x16xf32> to vector<16x16xbf16>
    %cst_257 = arith.constant dense<0.000000e+00> : vector<16x8xf32>
    %639 = tpu.matmul %638, %623, %cst_257 {dimension_numbers = #tpu.dot_dimension_numbers<[1], [0], [0], [1], [0, 0, 1, 1], [], []>} : vector<16x16xbf16>, vector<16x8xbf16>, vector<16x8xf32> -> vector<16x8xf32>
    %640 = arith.truncf %639 : vector<16x8xf32> to vector<16x8xbf16>
    %641 = vector.extract_strided_slice %601 {offsets = [0, 0, 0], sizes = [1, 8, 32], strides = [1, 1, 1]} : vector<4x8x32xbf16> to vector<1x8x32xbf16>
    %642 = vector.shape_cast %641 : vector<1x8x32xbf16> to vector<8x32xbf16>
    %cst_258 = arith.constant dense<0.000000e+00> : vector<16x32xf32>
    %643 = tpu.matmul %640, %642, %cst_258 {dimension_numbers = #tpu.dot_dimension_numbers<[1], [0], [0], [1], [0, 0, 1, 1], [], []>} : vector<16x8xbf16>, vector<8x32xbf16>, vector<16x32xf32> -> vector<16x32xf32>
    %644 = vector.broadcast %603 : vector<1x32xf32> to vector<16x32xf32>
    %645 = arith.addf %644, %643 : vector<16x32xf32>
    %646 = vector.extract_strided_slice %609 {offsets = [0, 8], sizes = [16, 8], strides = [1, 1]} : vector<16x32xf32> to vector<16x8xf32>
    %647 = arith.truncf %646 : vector<16x8xf32> to vector<16x8xbf16>
    %648 = vector.extract_strided_slice %616 {offsets = [0, 8], sizes = [16, 8], strides = [1, 1]} : vector<16x32xf32> to vector<16x8xf32>
    %649 = arith.truncf %648 : vector<16x8xf32> to vector<16x8xbf16>
    %650 = vector.extract_strided_slice %617 {offsets = [0, 8], sizes = [16, 8], strides = [1, 1]} : vector<16x32xf32> to vector<16x8xf32>
    %651 = arith.truncf %650 : vector<16x8xf32> to vector<16x8xbf16>
    %cst_259 = arith.constant dense<0.000000e+00> : vector<16x16xf32>
    %652 = tpu.matmul %647, %649, %cst_259 {dimension_numbers = #tpu.dot_dimension_numbers<[1], [1], [0], [0], [0, 0, 1, 0], [], []>} : vector<16x8xbf16>, vector<16x8xbf16>, vector<16x16xf32> -> vector<16x16xf32>
    %cst_260 = arith.constant 0.353553385 : f32
    %653 = vector.broadcast %cst_260 : f32 to vector<16x16xf32>
    %654 = arith.mulf %652, %653 : vector<16x16xf32>
    %655 = arith.addf %654, %5 : vector<16x16xf32>
    %cst_261 = arith.constant dense<0xFF800000> : vector<16xf32>
    %656 = vector.multi_reduction <maximumf>, %655, %cst_261 [1] : vector<16x16xf32> to vector<16xf32>
    %657 = vector.shape_cast %656 : vector<16xf32> to vector<16x1xf32>
    %658 = vector.broadcast %657 : vector<16x1xf32> to vector<16x16xf32>
    %659 = arith.subf %655, %658 : vector<16x16xf32>
    %660 = math.exp %659 : vector<16x16xf32>
    %cst_262 = arith.constant dense<0.000000e+00> : vector<16xf32>
    %661 = vector.multi_reduction <add>, %660, %cst_262 [1] : vector<16x16xf32> to vector<16xf32>
    %662 = vector.shape_cast %661 : vector<16xf32> to vector<16x1xf32>
    %663 = tpu.reciprocal %662 {approx = true} : vector<16x1xf32> -> vector<16x1xf32>
    %664 = vector.broadcast %663 : vector<16x1xf32> to vector<16x16xf32>
    %665 = arith.mulf %660, %664 : vector<16x16xf32>
    %666 = arith.truncf %665 : vector<16x16xf32> to vector<16x16xbf16>
    %cst_263 = arith.constant dense<0.000000e+00> : vector<16x8xf32>
    %667 = tpu.matmul %666, %651, %cst_263 {dimension_numbers = #tpu.dot_dimension_numbers<[1], [0], [0], [1], [0, 0, 1, 1], [], []>} : vector<16x16xbf16>, vector<16x8xbf16>, vector<16x8xf32> -> vector<16x8xf32>
    %668 = arith.truncf %667 : vector<16x8xf32> to vector<16x8xbf16>
    %669 = vector.extract_strided_slice %601 {offsets = [1, 0, 0], sizes = [1, 8, 32], strides = [1, 1, 1]} : vector<4x8x32xbf16> to vector<1x8x32xbf16>
    %670 = vector.shape_cast %669 : vector<1x8x32xbf16> to vector<8x32xbf16>
    %cst_264 = arith.constant dense<0.000000e+00> : vector<16x32xf32>
    %671 = tpu.matmul %668, %670, %cst_264 {dimension_numbers = #tpu.dot_dimension_numbers<[1], [0], [0], [1], [0, 0, 1, 1], [], []>} : vector<16x8xbf16>, vector<8x32xbf16>, vector<16x32xf32> -> vector<16x32xf32>
    %672 = arith.addf %645, %671 : vector<16x32xf32>
    %673 = vector.extract_strided_slice %609 {offsets = [0, 16], sizes = [16, 8], strides = [1, 1]} : vector<16x32xf32> to vector<16x8xf32>
    %674 = arith.truncf %673 : vector<16x8xf32> to vector<16x8xbf16>
    %675 = vector.extract_strided_slice %616 {offsets = [0, 16], sizes = [16, 8], strides = [1, 1]} : vector<16x32xf32> to vector<16x8xf32>
    %676 = arith.truncf %675 : vector<16x8xf32> to vector<16x8xbf16>
    %677 = vector.extract_strided_slice %617 {offsets = [0, 16], sizes = [16, 8], strides = [1, 1]} : vector<16x32xf32> to vector<16x8xf32>
    %678 = arith.truncf %677 : vector<16x8xf32> to vector<16x8xbf16>
    %cst_265 = arith.constant dense<0.000000e+00> : vector<16x16xf32>
    %679 = tpu.matmul %674, %676, %cst_265 {dimension_numbers = #tpu.dot_dimension_numbers<[1], [1], [0], [0], [0, 0, 1, 0], [], []>} : vector<16x8xbf16>, vector<16x8xbf16>, vector<16x16xf32> -> vector<16x16xf32>
    %cst_266 = arith.constant 0.353553385 : f32
    %680 = vector.broadcast %cst_266 : f32 to vector<16x16xf32>
    %681 = arith.mulf %679, %680 : vector<16x16xf32>
    %682 = arith.addf %681, %5 : vector<16x16xf32>
    %cst_267 = arith.constant dense<0xFF800000> : vector<16xf32>
    %683 = vector.multi_reduction <maximumf>, %682, %cst_267 [1] : vector<16x16xf32> to vector<16xf32>
    %684 = vector.shape_cast %683 : vector<16xf32> to vector<16x1xf32>
    %685 = vector.broadcast %684 : vector<16x1xf32> to vector<16x16xf32>
    %686 = arith.subf %682, %685 : vector<16x16xf32>
    %687 = math.exp %686 : vector<16x16xf32>
    %cst_268 = arith.constant dense<0.000000e+00> : vector<16xf32>
    %688 = vector.multi_reduction <add>, %687, %cst_268 [1] : vector<16x16xf32> to vector<16xf32>
    %689 = vector.shape_cast %688 : vector<16xf32> to vector<16x1xf32>
    %690 = tpu.reciprocal %689 {approx = true} : vector<16x1xf32> -> vector<16x1xf32>
    %691 = vector.broadcast %690 : vector<16x1xf32> to vector<16x16xf32>
    %692 = arith.mulf %687, %691 : vector<16x16xf32>
    %693 = arith.truncf %692 : vector<16x16xf32> to vector<16x16xbf16>
    %cst_269 = arith.constant dense<0.000000e+00> : vector<16x8xf32>
    %694 = tpu.matmul %693, %678, %cst_269 {dimension_numbers = #tpu.dot_dimension_numbers<[1], [0], [0], [1], [0, 0, 1, 1], [], []>} : vector<16x16xbf16>, vector<16x8xbf16>, vector<16x8xf32> -> vector<16x8xf32>
    %695 = arith.truncf %694 : vector<16x8xf32> to vector<16x8xbf16>
    %696 = vector.extract_strided_slice %601 {offsets = [2, 0, 0], sizes = [1, 8, 32], strides = [1, 1, 1]} : vector<4x8x32xbf16> to vector<1x8x32xbf16>
    %697 = vector.shape_cast %696 : vector<1x8x32xbf16> to vector<8x32xbf16>
    %cst_270 = arith.constant dense<0.000000e+00> : vector<16x32xf32>
    %698 = tpu.matmul %695, %697, %cst_270 {dimension_numbers = #tpu.dot_dimension_numbers<[1], [0], [0], [1], [0, 0, 1, 1], [], []>} : vector<16x8xbf16>, vector<8x32xbf16>, vector<16x32xf32> -> vector<16x32xf32>
    %699 = arith.addf %672, %698 : vector<16x32xf32>
    %700 = vector.extract_strided_slice %609 {offsets = [0, 24], sizes = [16, 8], strides = [1, 1]} : vector<16x32xf32> to vector<16x8xf32>
    %701 = arith.truncf %700 : vector<16x8xf32> to vector<16x8xbf16>
    %702 = vector.extract_strided_slice %616 {offsets = [0, 24], sizes = [16, 8], strides = [1, 1]} : vector<16x32xf32> to vector<16x8xf32>
    %703 = arith.truncf %702 : vector<16x8xf32> to vector<16x8xbf16>
    %704 = vector.extract_strided_slice %617 {offsets = [0, 24], sizes = [16, 8], strides = [1, 1]} : vector<16x32xf32> to vector<16x8xf32>
    %705 = arith.truncf %704 : vector<16x8xf32> to vector<16x8xbf16>
    %cst_271 = arith.constant dense<0.000000e+00> : vector<16x16xf32>
    %706 = tpu.matmul %701, %703, %cst_271 {dimension_numbers = #tpu.dot_dimension_numbers<[1], [1], [0], [0], [0, 0, 1, 0], [], []>} : vector<16x8xbf16>, vector<16x8xbf16>, vector<16x16xf32> -> vector<16x16xf32>
    %cst_272 = arith.constant 0.353553385 : f32
    %707 = vector.broadcast %cst_272 : f32 to vector<16x16xf32>
    %708 = arith.mulf %706, %707 : vector<16x16xf32>
    %709 = arith.addf %708, %5 : vector<16x16xf32>
    %cst_273 = arith.constant dense<0xFF800000> : vector<16xf32>
    %710 = vector.multi_reduction <maximumf>, %709, %cst_273 [1] : vector<16x16xf32> to vector<16xf32>
    %711 = vector.shape_cast %710 : vector<16xf32> to vector<16x1xf32>
    %712 = vector.broadcast %711 : vector<16x1xf32> to vector<16x16xf32>
    %713 = arith.subf %709, %712 : vector<16x16xf32>
    %714 = math.exp %713 : vector<16x16xf32>
    %cst_274 = arith.constant dense<0.000000e+00> : vector<16xf32>
    %715 = vector.multi_reduction <add>, %714, %cst_274 [1] : vector<16x16xf32> to vector<16xf32>
    %716 = vector.shape_cast %715 : vector<16xf32> to vector<16x1xf32>
    %717 = tpu.reciprocal %716 {approx = true} : vector<16x1xf32> -> vector<16x1xf32>
    %718 = vector.broadcast %717 : vector<16x1xf32> to vector<16x16xf32>
    %719 = arith.mulf %714, %718 : vector<16x16xf32>
    %720 = arith.truncf %719 : vector<16x16xf32> to vector<16x16xbf16>
    %cst_275 = arith.constant dense<0.000000e+00> : vector<16x8xf32>
    %721 = tpu.matmul %720, %705, %cst_275 {dimension_numbers = #tpu.dot_dimension_numbers<[1], [0], [0], [1], [0, 0, 1, 1], [], []>} : vector<16x16xbf16>, vector<16x8xbf16>, vector<16x8xf32> -> vector<16x8xf32>
    %722 = arith.truncf %721 : vector<16x8xf32> to vector<16x8xbf16>
    %723 = vector.extract_strided_slice %601 {offsets = [3, 0, 0], sizes = [1, 8, 32], strides = [1, 1, 1]} : vector<4x8x32xbf16> to vector<1x8x32xbf16>
    %724 = vector.shape_cast %723 : vector<1x8x32xbf16> to vector<8x32xbf16>
    %cst_276 = arith.constant dense<0.000000e+00> : vector<16x32xf32>
    %725 = tpu.matmul %722, %724, %cst_276 {dimension_numbers = #tpu.dot_dimension_numbers<[1], [0], [0], [1], [0, 0, 1, 1], [], []>} : vector<16x8xbf16>, vector<8x32xbf16>, vector<16x32xf32> -> vector<16x32xf32>
    %726 = arith.addf %699, %725 : vector<16x32xf32>
    %727 = arith.addf %570, %726 : vector<16x32xf32>
    %c0_277 = arith.constant 0 : index
    %c4 = arith.constant 4 : index
    %c0_278 = arith.constant 0 : index
    %c0_279 = arith.constant 0 : index
    %728 = vector.load %arg24[%c0_277, %c4, %c0_278, %c0_279] : memref<2x6x1x32xf32, #tpu.memory_space<vmem>>, vector<1x1x1x32xf32>
    %729 = vector.shape_cast %728 : vector<1x1x1x32xf32> to vector<1x32xf32>
    %c0_280 = arith.constant 0 : index
    %c5 = arith.constant 5 : index
    %c0_281 = arith.constant 0 : index
    %c0_282 = arith.constant 0 : index
    %730 = vector.load %arg24[%c0_280, %c5, %c0_281, %c0_282] : memref<2x6x1x32xf32, #tpu.memory_space<vmem>>, vector<1x1x1x32xf32>
    %731 = vector.shape_cast %730 : vector<1x1x1x32xf32> to vector<1x32xf32>
    %cst_283 = arith.constant dense<0.000000e+00> : vector<16xf32>
    %732 = vector.multi_reduction <add>, %727, %cst_283 [1] : vector<16x32xf32> to vector<16xf32>
    %733 = vector.shape_cast %732 : vector<16xf32> to vector<16x1xf32>
    %cst_284 = arith.constant 3.200000e+01 : f32
    %734 = vector.broadcast %cst_284 : f32 to vector<16x1xf32>
    %735 = arith.divf %733, %734 : vector<16x1xf32>
    %736 = vector.broadcast %735 : vector<16x1xf32> to vector<16x32xf32>
    %737 = arith.subf %727, %736 : vector<16x32xf32>
    %738 = arith.mulf %737, %737 : vector<16x32xf32>
    %cst_285 = arith.constant dense<0.000000e+00> : vector<16xf32>
    %739 = vector.multi_reduction <add>, %738, %cst_285 [1] : vector<16x32xf32> to vector<16xf32>
    %740 = vector.shape_cast %739 : vector<16xf32> to vector<16x1xf32>
    %cst_286 = arith.constant 0.0322580636 : f32
    %741 = vector.broadcast %cst_286 : f32 to vector<16x1xf32>
    %742 = arith.mulf %740, %741 : vector<16x1xf32>
    %743 = math.sqrt %742 : vector<16x1xf32>
    %cst_287 = arith.constant 9.99999997E-7 : f32
    %744 = vector.broadcast %cst_287 : f32 to vector<16x1xf32>
    %745 = arith.addf %743, %744 : vector<16x1xf32>
    %746 = tpu.reciprocal %745 {approx = true} : vector<16x1xf32> -> vector<16x1xf32>
    %747 = vector.broadcast %729 : vector<1x32xf32> to vector<16x32xf32>
    %748 = arith.mulf %747, %737 : vector<16x32xf32>
    %749 = vector.broadcast %746 : vector<16x1xf32> to vector<16x32xf32>
    %750 = arith.mulf %748, %749 : vector<16x32xf32>
    %751 = vector.broadcast %731 : vector<1x32xf32> to vector<16x32xf32>
    %752 = arith.addf %750, %751 : vector<16x32xf32>
    %c0_288 = arith.constant 0 : index
    %c0_289 = arith.constant 0 : index
    %c0_290 = arith.constant 0 : index
    %753 = vector.load %arg20[%c0_288, %c0_289, %c0_290] : memref<2x32x64xbf16, #tpu.memory_space<vmem>>, vector<1x32x64xbf16>
    %754 = vector.shape_cast %753 : vector<1x32x64xbf16> to vector<32x64xbf16>
    %c0_291 = arith.constant 0 : index
    %c0_292 = arith.constant 0 : index
    %c0_293 = arith.constant 0 : index
    %755 = vector.load %arg21[%c0_291, %c0_292, %c0_293] : memref<2x1x64xf32, #tpu.memory_space<vmem>>, vector<1x1x64xf32>
    %756 = vector.shape_cast %755 : vector<1x1x64xf32> to vector<1x64xf32>
    %c0_294 = arith.constant 0 : index
    %c0_295 = arith.constant 0 : index
    %c0_296 = arith.constant 0 : index
    %757 = vector.load %arg22[%c0_294, %c0_295, %c0_296] : memref<2x64x32xbf16, #tpu.memory_space<vmem>>, vector<1x64x32xbf16>
    %758 = vector.shape_cast %757 : vector<1x64x32xbf16> to vector<64x32xbf16>
    %c0_297 = arith.constant 0 : index
    %c0_298 = arith.constant 0 : index
    %c0_299 = arith.constant 0 : index
    %759 = vector.load %arg23[%c0_297, %c0_298, %c0_299] : memref<2x1x32xf32, #tpu.memory_space<vmem>>, vector<1x1x32xf32>
    %760 = vector.shape_cast %759 : vector<1x1x32xf32> to vector<1x32xf32>
    %761 = arith.truncf %752 : vector<16x32xf32> to vector<16x32xbf16>
    %cst_300 = arith.constant dense<0.000000e+00> : vector<16x64xf32>
    %762 = tpu.matmul %761, %754, %cst_300 {dimension_numbers = #tpu.dot_dimension_numbers<[1], [0], [0], [1], [0, 0, 1, 1], [], []>} : vector<16x32xbf16>, vector<32x64xbf16>, vector<16x64xf32> -> vector<16x64xf32>
    %763 = vector.broadcast %756 : vector<1x64xf32> to vector<16x64xf32>
    %764 = arith.addf %762, %763 : vector<16x64xf32>
    %cst_301 = arith.constant 0.000000e+00 : f32
    %765 = vector.broadcast %cst_301 : f32 to vector<16x64xf32>
    %766 = arith.maximumf %764, %765 : vector<16x64xf32>
    %767 = arith.truncf %766 : vector<16x64xf32> to vector<16x64xbf16>
    %cst_302 = arith.constant dense<0.000000e+00> : vector<16x32xf32>
    %768 = tpu.matmul %767, %758, %cst_302 {dimension_numbers = #tpu.dot_dimension_numbers<[1], [0], [0], [1], [0, 0, 1, 1], [], []>} : vector<16x64xbf16>, vector<64x32xbf16>, vector<16x32xf32> -> vector<16x32xf32>
    %769 = vector.broadcast %760 : vector<1x32xf32> to vector<16x32xf32>
    %770 = arith.addf %768, %769 : vector<16x32xf32>
    %771 = arith.addf %727, %770 : vector<16x32xf32>
    %c1_303 = arith.constant 1 : index
    %c0_304 = arith.constant 0 : index
    %c0_305 = arith.constant 0 : index
    %c0_306 = arith.constant 0 : index
    %772 = vector.load %arg24[%c1_303, %c0_304, %c0_305, %c0_306] : memref<2x6x1x32xf32, #tpu.memory_space<vmem>>, vector<1x1x1x32xf32>
    %773 = vector.shape_cast %772 : vector<1x1x1x32xf32> to vector<1x32xf32>
    %c1_307 = arith.constant 1 : index
    %c1_308 = arith.constant 1 : index
    %c0_309 = arith.constant 0 : index
    %c0_310 = arith.constant 0 : index
    %774 = vector.load %arg24[%c1_307, %c1_308, %c0_309, %c0_310] : memref<2x6x1x32xf32, #tpu.memory_space<vmem>>, vector<1x1x1x32xf32>
    %775 = vector.shape_cast %774 : vector<1x1x1x32xf32> to vector<1x32xf32>
    %cst_311 = arith.constant dense<0.000000e+00> : vector<16xf32>
    %776 = vector.multi_reduction <add>, %771, %cst_311 [1] : vector<16x32xf32> to vector<16xf32>
    %777 = vector.shape_cast %776 : vector<16xf32> to vector<16x1xf32>
    %cst_312 = arith.constant 3.200000e+01 : f32
    %778 = vector.broadcast %cst_312 : f32 to vector<16x1xf32>
    %779 = arith.divf %777, %778 : vector<16x1xf32>
    %780 = vector.broadcast %779 : vector<16x1xf32> to vector<16x32xf32>
    %781 = arith.subf %771, %780 : vector<16x32xf32>
    %782 = arith.mulf %781, %781 : vector<16x32xf32>
    %cst_313 = arith.constant dense<0.000000e+00> : vector<16xf32>
    %783 = vector.multi_reduction <add>, %782, %cst_313 [1] : vector<16x32xf32> to vector<16xf32>
    %784 = vector.shape_cast %783 : vector<16xf32> to vector<16x1xf32>
    %cst_314 = arith.constant 0.0322580636 : f32
    %785 = vector.broadcast %cst_314 : f32 to vector<16x1xf32>
    %786 = arith.mulf %784, %785 : vector<16x1xf32>
    %787 = math.sqrt %786 : vector<16x1xf32>
    %cst_315 = arith.constant 9.99999997E-7 : f32
    %788 = vector.broadcast %cst_315 : f32 to vector<16x1xf32>
    %789 = arith.addf %787, %788 : vector<16x1xf32>
    %790 = tpu.reciprocal %789 {approx = true} : vector<16x1xf32> -> vector<16x1xf32>
    %791 = vector.broadcast %773 : vector<1x32xf32> to vector<16x32xf32>
    %792 = arith.mulf %791, %781 : vector<16x32xf32>
    %793 = vector.broadcast %790 : vector<16x1xf32> to vector<16x32xf32>
    %794 = arith.mulf %792, %793 : vector<16x32xf32>
    %795 = vector.broadcast %775 : vector<1x32xf32> to vector<16x32xf32>
    %796 = arith.addf %794, %795 : vector<16x32xf32>
    %c2_316 = arith.constant 2 : index
    %c0_317 = arith.constant 0 : index
    %c0_318 = arith.constant 0 : index
    %797 = vector.load %arg16[%c2_316, %c0_317, %c0_318] : memref<4x32x96xbf16, #tpu.memory_space<vmem>>, vector<1x32x96xbf16>
    %798 = vector.shape_cast %797 : vector<1x32x96xbf16> to vector<32x96xbf16>
    %c2_319 = arith.constant 2 : index
    %c0_320 = arith.constant 0 : index
    %c0_321 = arith.constant 0 : index
    %799 = vector.load %arg17[%c2_319, %c0_320, %c0_321] : memref<4x1x96xf32, #tpu.memory_space<vmem>>, vector<1x1x96xf32>
    %800 = vector.shape_cast %799 : vector<1x1x96xf32> to vector<1x96xf32>
    %c2_322 = arith.constant 2 : index
    %c0_323 = arith.constant 0 : index
    %c0_324 = arith.constant 0 : index
    %c0_325 = arith.constant 0 : index
    %801 = vector.load %arg18[%c2_322, %c0_323, %c0_324, %c0_325] : memref<4x4x8x32xbf16, #tpu.memory_space<vmem>>, vector<1x4x8x32xbf16>
    %802 = vector.shape_cast %801 : vector<1x4x8x32xbf16> to vector<4x8x32xbf16>
    %c2_326 = arith.constant 2 : index
    %c0_327 = arith.constant 0 : index
    %c0_328 = arith.constant 0 : index
    %803 = vector.load %arg19[%c2_326, %c0_327, %c0_328] : memref<4x1x32xf32, #tpu.memory_space<vmem>>, vector<1x1x32xf32>
    %804 = vector.shape_cast %803 : vector<1x1x32xf32> to vector<1x32xf32>
    %805 = arith.truncf %796 : vector<16x32xf32> to vector<16x32xbf16>
    %cst_329 = arith.constant dense<0.000000e+00> : vector<16x96xf32>
    %806 = tpu.matmul %805, %798, %cst_329 {dimension_numbers = #tpu.dot_dimension_numbers<[1], [0], [0], [1], [0, 0, 1, 1], [], []>} : vector<16x32xbf16>, vector<32x96xbf16>, vector<16x96xf32> -> vector<16x96xf32>
    %807 = vector.broadcast %800 : vector<1x96xf32> to vector<16x96xf32>
    %808 = arith.addf %806, %807 : vector<16x96xf32>
    %809 = vector.extract_strided_slice %808 {offsets = [0, 0], sizes = [16, 32], strides = [1, 1]} : vector<16x96xf32> to vector<16x32xf32>
    %810 = vector.extract_strided_slice %808 {offsets = [0, 32], sizes = [16, 32], strides = [1, 1]} : vector<16x96xf32> to vector<16x32xf32>
    %811 = vector.extract_strided_slice %808 {offsets = [0, 64], sizes = [16, 32], strides = [1, 1]} : vector<16x96xf32> to vector<16x32xf32>
    %812 = vector.extract_strided_slice %809 {offsets = [0, 0], sizes = [16, 8], strides = [1, 1]} : vector<16x32xf32> to vector<16x8xf32>
    %813 = arith.truncf %812 : vector<16x8xf32> to vector<16x8xbf16>
    %814 = vector.extract_strided_slice %810 {offsets = [0, 0], sizes = [16, 8], strides = [1, 1]} : vector<16x32xf32> to vector<16x8xf32>
    %815 = arith.truncf %814 : vector<16x8xf32> to vector<16x8xbf16>
    %816 = vector.extract_strided_slice %811 {offsets = [0, 0], sizes = [16, 8], strides = [1, 1]} : vector<16x32xf32> to vector<16x8xf32>
    %817 = arith.truncf %816 : vector<16x8xf32> to vector<16x8xbf16>
    %cst_330 = arith.constant dense<0.000000e+00> : vector<16x16xf32>
    %818 = tpu.matmul %813, %815, %cst_330 {dimension_numbers = #tpu.dot_dimension_numbers<[1], [1], [0], [0], [0, 0, 1, 0], [], []>} : vector<16x8xbf16>, vector<16x8xbf16>, vector<16x16xf32> -> vector<16x16xf32>
    %cst_331 = arith.constant 0.353553385 : f32
    %819 = vector.broadcast %cst_331 : f32 to vector<16x16xf32>
    %820 = arith.mulf %818, %819 : vector<16x16xf32>
    %821 = arith.addf %820, %3 : vector<16x16xf32>
    %cst_332 = arith.constant dense<0xFF800000> : vector<16xf32>
    %822 = vector.multi_reduction <maximumf>, %821, %cst_332 [1] : vector<16x16xf32> to vector<16xf32>
    %823 = vector.shape_cast %822 : vector<16xf32> to vector<16x1xf32>
    %824 = vector.broadcast %823 : vector<16x1xf32> to vector<16x16xf32>
    %825 = arith.subf %821, %824 : vector<16x16xf32>
    %826 = math.exp %825 : vector<16x16xf32>
    %cst_333 = arith.constant dense<0.000000e+00> : vector<16xf32>
    %827 = vector.multi_reduction <add>, %826, %cst_333 [1] : vector<16x16xf32> to vector<16xf32>
    %828 = vector.shape_cast %827 : vector<16xf32> to vector<16x1xf32>
    %829 = tpu.reciprocal %828 {approx = true} : vector<16x1xf32> -> vector<16x1xf32>
    %830 = vector.broadcast %829 : vector<16x1xf32> to vector<16x16xf32>
    %831 = arith.mulf %826, %830 : vector<16x16xf32>
    %832 = arith.truncf %831 : vector<16x16xf32> to vector<16x16xbf16>
    %cst_334 = arith.constant dense<0.000000e+00> : vector<16x8xf32>
    %833 = tpu.matmul %832, %817, %cst_334 {dimension_numbers = #tpu.dot_dimension_numbers<[1], [0], [0], [1], [0, 0, 1, 1], [], []>} : vector<16x16xbf16>, vector<16x8xbf16>, vector<16x8xf32> -> vector<16x8xf32>
    %834 = arith.truncf %833 : vector<16x8xf32> to vector<16x8xbf16>
    %835 = vector.extract_strided_slice %802 {offsets = [0, 0, 0], sizes = [1, 8, 32], strides = [1, 1, 1]} : vector<4x8x32xbf16> to vector<1x8x32xbf16>
    %836 = vector.shape_cast %835 : vector<1x8x32xbf16> to vector<8x32xbf16>
    %cst_335 = arith.constant dense<0.000000e+00> : vector<16x32xf32>
    %837 = tpu.matmul %834, %836, %cst_335 {dimension_numbers = #tpu.dot_dimension_numbers<[1], [0], [0], [1], [0, 0, 1, 1], [], []>} : vector<16x8xbf16>, vector<8x32xbf16>, vector<16x32xf32> -> vector<16x32xf32>
    %838 = vector.broadcast %804 : vector<1x32xf32> to vector<16x32xf32>
    %839 = arith.addf %838, %837 : vector<16x32xf32>
    %840 = vector.extract_strided_slice %809 {offsets = [0, 8], sizes = [16, 8], strides = [1, 1]} : vector<16x32xf32> to vector<16x8xf32>
    %841 = arith.truncf %840 : vector<16x8xf32> to vector<16x8xbf16>
    %842 = vector.extract_strided_slice %810 {offsets = [0, 8], sizes = [16, 8], strides = [1, 1]} : vector<16x32xf32> to vector<16x8xf32>
    %843 = arith.truncf %842 : vector<16x8xf32> to vector<16x8xbf16>
    %844 = vector.extract_strided_slice %811 {offsets = [0, 8], sizes = [16, 8], strides = [1, 1]} : vector<16x32xf32> to vector<16x8xf32>
    %845 = arith.truncf %844 : vector<16x8xf32> to vector<16x8xbf16>
    %cst_336 = arith.constant dense<0.000000e+00> : vector<16x16xf32>
    %846 = tpu.matmul %841, %843, %cst_336 {dimension_numbers = #tpu.dot_dimension_numbers<[1], [1], [0], [0], [0, 0, 1, 0], [], []>} : vector<16x8xbf16>, vector<16x8xbf16>, vector<16x16xf32> -> vector<16x16xf32>
    %cst_337 = arith.constant 0.353553385 : f32
    %847 = vector.broadcast %cst_337 : f32 to vector<16x16xf32>
    %848 = arith.mulf %846, %847 : vector<16x16xf32>
    %849 = arith.addf %848, %3 : vector<16x16xf32>
    %cst_338 = arith.constant dense<0xFF800000> : vector<16xf32>
    %850 = vector.multi_reduction <maximumf>, %849, %cst_338 [1] : vector<16x16xf32> to vector<16xf32>
    %851 = vector.shape_cast %850 : vector<16xf32> to vector<16x1xf32>
    %852 = vector.broadcast %851 : vector<16x1xf32> to vector<16x16xf32>
    %853 = arith.subf %849, %852 : vector<16x16xf32>
    %854 = math.exp %853 : vector<16x16xf32>
    %cst_339 = arith.constant dense<0.000000e+00> : vector<16xf32>
    %855 = vector.multi_reduction <add>, %854, %cst_339 [1] : vector<16x16xf32> to vector<16xf32>
    %856 = vector.shape_cast %855 : vector<16xf32> to vector<16x1xf32>
    %857 = tpu.reciprocal %856 {approx = true} : vector<16x1xf32> -> vector<16x1xf32>
    %858 = vector.broadcast %857 : vector<16x1xf32> to vector<16x16xf32>
    %859 = arith.mulf %854, %858 : vector<16x16xf32>
    %860 = arith.truncf %859 : vector<16x16xf32> to vector<16x16xbf16>
    %cst_340 = arith.constant dense<0.000000e+00> : vector<16x8xf32>
    %861 = tpu.matmul %860, %845, %cst_340 {dimension_numbers = #tpu.dot_dimension_numbers<[1], [0], [0], [1], [0, 0, 1, 1], [], []>} : vector<16x16xbf16>, vector<16x8xbf16>, vector<16x8xf32> -> vector<16x8xf32>
    %862 = arith.truncf %861 : vector<16x8xf32> to vector<16x8xbf16>
    %863 = vector.extract_strided_slice %802 {offsets = [1, 0, 0], sizes = [1, 8, 32], strides = [1, 1, 1]} : vector<4x8x32xbf16> to vector<1x8x32xbf16>
    %864 = vector.shape_cast %863 : vector<1x8x32xbf16> to vector<8x32xbf16>
    %cst_341 = arith.constant dense<0.000000e+00> : vector<16x32xf32>
    %865 = tpu.matmul %862, %864, %cst_341 {dimension_numbers = #tpu.dot_dimension_numbers<[1], [0], [0], [1], [0, 0, 1, 1], [], []>} : vector<16x8xbf16>, vector<8x32xbf16>, vector<16x32xf32> -> vector<16x32xf32>
    %866 = arith.addf %839, %865 : vector<16x32xf32>
    %867 = vector.extract_strided_slice %809 {offsets = [0, 16], sizes = [16, 8], strides = [1, 1]} : vector<16x32xf32> to vector<16x8xf32>
    %868 = arith.truncf %867 : vector<16x8xf32> to vector<16x8xbf16>
    %869 = vector.extract_strided_slice %810 {offsets = [0, 16], sizes = [16, 8], strides = [1, 1]} : vector<16x32xf32> to vector<16x8xf32>
    %870 = arith.truncf %869 : vector<16x8xf32> to vector<16x8xbf16>
    %871 = vector.extract_strided_slice %811 {offsets = [0, 16], sizes = [16, 8], strides = [1, 1]} : vector<16x32xf32> to vector<16x8xf32>
    %872 = arith.truncf %871 : vector<16x8xf32> to vector<16x8xbf16>
    %cst_342 = arith.constant dense<0.000000e+00> : vector<16x16xf32>
    %873 = tpu.matmul %868, %870, %cst_342 {dimension_numbers = #tpu.dot_dimension_numbers<[1], [1], [0], [0], [0, 0, 1, 0], [], []>} : vector<16x8xbf16>, vector<16x8xbf16>, vector<16x16xf32> -> vector<16x16xf32>
    %cst_343 = arith.constant 0.353553385 : f32
    %874 = vector.broadcast %cst_343 : f32 to vector<16x16xf32>
    %875 = arith.mulf %873, %874 : vector<16x16xf32>
    %876 = arith.addf %875, %3 : vector<16x16xf32>
    %cst_344 = arith.constant dense<0xFF800000> : vector<16xf32>
    %877 = vector.multi_reduction <maximumf>, %876, %cst_344 [1] : vector<16x16xf32> to vector<16xf32>
    %878 = vector.shape_cast %877 : vector<16xf32> to vector<16x1xf32>
    %879 = vector.broadcast %878 : vector<16x1xf32> to vector<16x16xf32>
    %880 = arith.subf %876, %879 : vector<16x16xf32>
    %881 = math.exp %880 : vector<16x16xf32>
    %cst_345 = arith.constant dense<0.000000e+00> : vector<16xf32>
    %882 = vector.multi_reduction <add>, %881, %cst_345 [1] : vector<16x16xf32> to vector<16xf32>
    %883 = vector.shape_cast %882 : vector<16xf32> to vector<16x1xf32>
    %884 = tpu.reciprocal %883 {approx = true} : vector<16x1xf32> -> vector<16x1xf32>
    %885 = vector.broadcast %884 : vector<16x1xf32> to vector<16x16xf32>
    %886 = arith.mulf %881, %885 : vector<16x16xf32>
    %887 = arith.truncf %886 : vector<16x16xf32> to vector<16x16xbf16>
    %cst_346 = arith.constant dense<0.000000e+00> : vector<16x8xf32>
    %888 = tpu.matmul %887, %872, %cst_346 {dimension_numbers = #tpu.dot_dimension_numbers<[1], [0], [0], [1], [0, 0, 1, 1], [], []>} : vector<16x16xbf16>, vector<16x8xbf16>, vector<16x8xf32> -> vector<16x8xf32>
    %889 = arith.truncf %888 : vector<16x8xf32> to vector<16x8xbf16>
    %890 = vector.extract_strided_slice %802 {offsets = [2, 0, 0], sizes = [1, 8, 32], strides = [1, 1, 1]} : vector<4x8x32xbf16> to vector<1x8x32xbf16>
    %891 = vector.shape_cast %890 : vector<1x8x32xbf16> to vector<8x32xbf16>
    %cst_347 = arith.constant dense<0.000000e+00> : vector<16x32xf32>
    %892 = tpu.matmul %889, %891, %cst_347 {dimension_numbers = #tpu.dot_dimension_numbers<[1], [0], [0], [1], [0, 0, 1, 1], [], []>} : vector<16x8xbf16>, vector<8x32xbf16>, vector<16x32xf32> -> vector<16x32xf32>
    %893 = arith.addf %866, %892 : vector<16x32xf32>
    %894 = vector.extract_strided_slice %809 {offsets = [0, 24], sizes = [16, 8], strides = [1, 1]} : vector<16x32xf32> to vector<16x8xf32>
    %895 = arith.truncf %894 : vector<16x8xf32> to vector<16x8xbf16>
    %896 = vector.extract_strided_slice %810 {offsets = [0, 24], sizes = [16, 8], strides = [1, 1]} : vector<16x32xf32> to vector<16x8xf32>
    %897 = arith.truncf %896 : vector<16x8xf32> to vector<16x8xbf16>
    %898 = vector.extract_strided_slice %811 {offsets = [0, 24], sizes = [16, 8], strides = [1, 1]} : vector<16x32xf32> to vector<16x8xf32>
    %899 = arith.truncf %898 : vector<16x8xf32> to vector<16x8xbf16>
    %cst_348 = arith.constant dense<0.000000e+00> : vector<16x16xf32>
    %900 = tpu.matmul %895, %897, %cst_348 {dimension_numbers = #tpu.dot_dimension_numbers<[1], [1], [0], [0], [0, 0, 1, 0], [], []>} : vector<16x8xbf16>, vector<16x8xbf16>, vector<16x16xf32> -> vector<16x16xf32>
    %cst_349 = arith.constant 0.353553385 : f32
    %901 = vector.broadcast %cst_349 : f32 to vector<16x16xf32>
    %902 = arith.mulf %900, %901 : vector<16x16xf32>
    %903 = arith.addf %902, %3 : vector<16x16xf32>
    %cst_350 = arith.constant dense<0xFF800000> : vector<16xf32>
    %904 = vector.multi_reduction <maximumf>, %903, %cst_350 [1] : vector<16x16xf32> to vector<16xf32>
    %905 = vector.shape_cast %904 : vector<16xf32> to vector<16x1xf32>
    %906 = vector.broadcast %905 : vector<16x1xf32> to vector<16x16xf32>
    %907 = arith.subf %903, %906 : vector<16x16xf32>
    %908 = math.exp %907 : vector<16x16xf32>
    %cst_351 = arith.constant dense<0.000000e+00> : vector<16xf32>
    %909 = vector.multi_reduction <add>, %908, %cst_351 [1] : vector<16x16xf32> to vector<16xf32>
    %910 = vector.shape_cast %909 : vector<16xf32> to vector<16x1xf32>
    %911 = tpu.reciprocal %910 {approx = true} : vector<16x1xf32> -> vector<16x1xf32>
    %912 = vector.broadcast %911 : vector<16x1xf32> to vector<16x16xf32>
    %913 = arith.mulf %908, %912 : vector<16x16xf32>
    %914 = arith.truncf %913 : vector<16x16xf32> to vector<16x16xbf16>
    %cst_352 = arith.constant dense<0.000000e+00> : vector<16x8xf32>
    %915 = tpu.matmul %914, %899, %cst_352 {dimension_numbers = #tpu.dot_dimension_numbers<[1], [0], [0], [1], [0, 0, 1, 1], [], []>} : vector<16x16xbf16>, vector<16x8xbf16>, vector<16x8xf32> -> vector<16x8xf32>
    %916 = arith.truncf %915 : vector<16x8xf32> to vector<16x8xbf16>
    %917 = vector.extract_strided_slice %802 {offsets = [3, 0, 0], sizes = [1, 8, 32], strides = [1, 1, 1]} : vector<4x8x32xbf16> to vector<1x8x32xbf16>
    %918 = vector.shape_cast %917 : vector<1x8x32xbf16> to vector<8x32xbf16>
    %cst_353 = arith.constant dense<0.000000e+00> : vector<16x32xf32>
    %919 = tpu.matmul %916, %918, %cst_353 {dimension_numbers = #tpu.dot_dimension_numbers<[1], [0], [0], [1], [0, 0, 1, 1], [], []>} : vector<16x8xbf16>, vector<8x32xbf16>, vector<16x32xf32> -> vector<16x32xf32>
    %920 = arith.addf %893, %919 : vector<16x32xf32>
    %921 = arith.addf %771, %920 : vector<16x32xf32>
    %c1_354 = arith.constant 1 : index
    %c2_355 = arith.constant 2 : index
    %c0_356 = arith.constant 0 : index
    %c0_357 = arith.constant 0 : index
    %922 = vector.load %arg24[%c1_354, %c2_355, %c0_356, %c0_357] : memref<2x6x1x32xf32, #tpu.memory_space<vmem>>, vector<1x1x1x32xf32>
    %923 = vector.shape_cast %922 : vector<1x1x1x32xf32> to vector<1x32xf32>
    %c1_358 = arith.constant 1 : index
    %c3_359 = arith.constant 3 : index
    %c0_360 = arith.constant 0 : index
    %c0_361 = arith.constant 0 : index
    %924 = vector.load %arg24[%c1_358, %c3_359, %c0_360, %c0_361] : memref<2x6x1x32xf32, #tpu.memory_space<vmem>>, vector<1x1x1x32xf32>
    %925 = vector.shape_cast %924 : vector<1x1x1x32xf32> to vector<1x32xf32>
    %cst_362 = arith.constant dense<0.000000e+00> : vector<16xf32>
    %926 = vector.multi_reduction <add>, %921, %cst_362 [1] : vector<16x32xf32> to vector<16xf32>
    %927 = vector.shape_cast %926 : vector<16xf32> to vector<16x1xf32>
    %cst_363 = arith.constant 3.200000e+01 : f32
    %928 = vector.broadcast %cst_363 : f32 to vector<16x1xf32>
    %929 = arith.divf %927, %928 : vector<16x1xf32>
    %930 = vector.broadcast %929 : vector<16x1xf32> to vector<16x32xf32>
    %931 = arith.subf %921, %930 : vector<16x32xf32>
    %932 = arith.mulf %931, %931 : vector<16x32xf32>
    %cst_364 = arith.constant dense<0.000000e+00> : vector<16xf32>
    %933 = vector.multi_reduction <add>, %932, %cst_364 [1] : vector<16x32xf32> to vector<16xf32>
    %934 = vector.shape_cast %933 : vector<16xf32> to vector<16x1xf32>
    %cst_365 = arith.constant 0.0322580636 : f32
    %935 = vector.broadcast %cst_365 : f32 to vector<16x1xf32>
    %936 = arith.mulf %934, %935 : vector<16x1xf32>
    %937 = math.sqrt %936 : vector<16x1xf32>
    %cst_366 = arith.constant 9.99999997E-7 : f32
    %938 = vector.broadcast %cst_366 : f32 to vector<16x1xf32>
    %939 = arith.addf %937, %938 : vector<16x1xf32>
    %940 = tpu.reciprocal %939 {approx = true} : vector<16x1xf32> -> vector<16x1xf32>
    %941 = vector.broadcast %923 : vector<1x32xf32> to vector<16x32xf32>
    %942 = arith.mulf %941, %931 : vector<16x32xf32>
    %943 = vector.broadcast %940 : vector<16x1xf32> to vector<16x32xf32>
    %944 = arith.mulf %942, %943 : vector<16x32xf32>
    %945 = vector.broadcast %925 : vector<1x32xf32> to vector<16x32xf32>
    %946 = arith.addf %944, %945 : vector<16x32xf32>
    %c3_367 = arith.constant 3 : index
    %c0_368 = arith.constant 0 : index
    %c0_369 = arith.constant 0 : index
    %947 = vector.load %arg16[%c3_367, %c0_368, %c0_369] : memref<4x32x96xbf16, #tpu.memory_space<vmem>>, vector<1x32x96xbf16>
    %948 = vector.shape_cast %947 : vector<1x32x96xbf16> to vector<32x96xbf16>
    %c3_370 = arith.constant 3 : index
    %c0_371 = arith.constant 0 : index
    %c0_372 = arith.constant 0 : index
    %949 = vector.load %arg17[%c3_370, %c0_371, %c0_372] : memref<4x1x96xf32, #tpu.memory_space<vmem>>, vector<1x1x96xf32>
    %950 = vector.shape_cast %949 : vector<1x1x96xf32> to vector<1x96xf32>
    %c3_373 = arith.constant 3 : index
    %c0_374 = arith.constant 0 : index
    %c0_375 = arith.constant 0 : index
    %c0_376 = arith.constant 0 : index
    %951 = vector.load %arg18[%c3_373, %c0_374, %c0_375, %c0_376] : memref<4x4x8x32xbf16, #tpu.memory_space<vmem>>, vector<1x4x8x32xbf16>
    %952 = vector.shape_cast %951 : vector<1x4x8x32xbf16> to vector<4x8x32xbf16>
    %c3_377 = arith.constant 3 : index
    %c0_378 = arith.constant 0 : index
    %c0_379 = arith.constant 0 : index
    %953 = vector.load %arg19[%c3_377, %c0_378, %c0_379] : memref<4x1x32xf32, #tpu.memory_space<vmem>>, vector<1x1x32xf32>
    %954 = vector.shape_cast %953 : vector<1x1x32xf32> to vector<1x32xf32>
    %955 = arith.truncf %946 : vector<16x32xf32> to vector<16x32xbf16>
    %956 = vector.extract_strided_slice %948 {offsets = [0, 0], sizes = [32, 32], strides = [1, 1]} : vector<32x96xbf16> to vector<32x32xbf16>
    %cst_380 = arith.constant dense<0.000000e+00> : vector<16x32xf32>
    %957 = tpu.matmul %955, %956, %cst_380 {dimension_numbers = #tpu.dot_dimension_numbers<[1], [0], [0], [1], [0, 0, 1, 1], [], []>} : vector<16x32xbf16>, vector<32x32xbf16>, vector<16x32xf32> -> vector<16x32xf32>
    %958 = vector.extract_strided_slice %950 {offsets = [0, 0], sizes = [1, 32], strides = [1, 1]} : vector<1x96xf32> to vector<1x32xf32>
    %959 = vector.broadcast %958 : vector<1x32xf32> to vector<16x32xf32>
    %960 = arith.addf %957, %959 : vector<16x32xf32>
    %961 = arith.truncf %419 : vector<16x32xf32> to vector<16x32xbf16>
    %962 = vector.extract_strided_slice %948 {offsets = [0, 32], sizes = [32, 64], strides = [1, 1]} : vector<32x96xbf16> to vector<32x64xbf16>
    %cst_381 = arith.constant dense<0.000000e+00> : vector<16x64xf32>
    %963 = tpu.matmul %961, %962, %cst_381 {dimension_numbers = #tpu.dot_dimension_numbers<[1], [0], [0], [1], [0, 0, 1, 1], [], []>} : vector<16x32xbf16>, vector<32x64xbf16>, vector<16x64xf32> -> vector<16x64xf32>
    %964 = vector.extract_strided_slice %950 {offsets = [0, 32], sizes = [1, 64], strides = [1, 1]} : vector<1x96xf32> to vector<1x64xf32>
    %965 = vector.broadcast %964 : vector<1x64xf32> to vector<16x64xf32>
    %966 = arith.addf %963, %965 : vector<16x64xf32>
    %967 = vector.extract_strided_slice %966 {offsets = [0, 0], sizes = [16, 32], strides = [1, 1]} : vector<16x64xf32> to vector<16x32xf32>
    %968 = vector.extract_strided_slice %966 {offsets = [0, 32], sizes = [16, 32], strides = [1, 1]} : vector<16x64xf32> to vector<16x32xf32>
    %969 = vector.extract_strided_slice %960 {offsets = [0, 0], sizes = [16, 8], strides = [1, 1]} : vector<16x32xf32> to vector<16x8xf32>
    %970 = arith.truncf %969 : vector<16x8xf32> to vector<16x8xbf16>
    %971 = vector.extract_strided_slice %967 {offsets = [0, 0], sizes = [16, 8], strides = [1, 1]} : vector<16x32xf32> to vector<16x8xf32>
    %972 = arith.truncf %971 : vector<16x8xf32> to vector<16x8xbf16>
    %973 = vector.extract_strided_slice %968 {offsets = [0, 0], sizes = [16, 8], strides = [1, 1]} : vector<16x32xf32> to vector<16x8xf32>
    %974 = arith.truncf %973 : vector<16x8xf32> to vector<16x8xbf16>
    %cst_382 = arith.constant dense<0.000000e+00> : vector<16x16xf32>
    %975 = tpu.matmul %970, %972, %cst_382 {dimension_numbers = #tpu.dot_dimension_numbers<[1], [1], [0], [0], [0, 0, 1, 0], [], []>} : vector<16x8xbf16>, vector<16x8xbf16>, vector<16x16xf32> -> vector<16x16xf32>
    %cst_383 = arith.constant 0.353553385 : f32
    %976 = vector.broadcast %cst_383 : f32 to vector<16x16xf32>
    %977 = arith.mulf %975, %976 : vector<16x16xf32>
    %978 = arith.addf %977, %5 : vector<16x16xf32>
    %cst_384 = arith.constant dense<0xFF800000> : vector<16xf32>
    %979 = vector.multi_reduction <maximumf>, %978, %cst_384 [1] : vector<16x16xf32> to vector<16xf32>
    %980 = vector.shape_cast %979 : vector<16xf32> to vector<16x1xf32>
    %981 = vector.broadcast %980 : vector<16x1xf32> to vector<16x16xf32>
    %982 = arith.subf %978, %981 : vector<16x16xf32>
    %983 = math.exp %982 : vector<16x16xf32>
    %cst_385 = arith.constant dense<0.000000e+00> : vector<16xf32>
    %984 = vector.multi_reduction <add>, %983, %cst_385 [1] : vector<16x16xf32> to vector<16xf32>
    %985 = vector.shape_cast %984 : vector<16xf32> to vector<16x1xf32>
    %986 = tpu.reciprocal %985 {approx = true} : vector<16x1xf32> -> vector<16x1xf32>
    %987 = vector.broadcast %986 : vector<16x1xf32> to vector<16x16xf32>
    %988 = arith.mulf %983, %987 : vector<16x16xf32>
    %989 = arith.truncf %988 : vector<16x16xf32> to vector<16x16xbf16>
    %cst_386 = arith.constant dense<0.000000e+00> : vector<16x8xf32>
    %990 = tpu.matmul %989, %974, %cst_386 {dimension_numbers = #tpu.dot_dimension_numbers<[1], [0], [0], [1], [0, 0, 1, 1], [], []>} : vector<16x16xbf16>, vector<16x8xbf16>, vector<16x8xf32> -> vector<16x8xf32>
    %991 = arith.truncf %990 : vector<16x8xf32> to vector<16x8xbf16>
    %992 = vector.extract_strided_slice %952 {offsets = [0, 0, 0], sizes = [1, 8, 32], strides = [1, 1, 1]} : vector<4x8x32xbf16> to vector<1x8x32xbf16>
    %993 = vector.shape_cast %992 : vector<1x8x32xbf16> to vector<8x32xbf16>
    %cst_387 = arith.constant dense<0.000000e+00> : vector<16x32xf32>
    %994 = tpu.matmul %991, %993, %cst_387 {dimension_numbers = #tpu.dot_dimension_numbers<[1], [0], [0], [1], [0, 0, 1, 1], [], []>} : vector<16x8xbf16>, vector<8x32xbf16>, vector<16x32xf32> -> vector<16x32xf32>
    %995 = vector.broadcast %954 : vector<1x32xf32> to vector<16x32xf32>
    %996 = arith.addf %995, %994 : vector<16x32xf32>
    %997 = vector.extract_strided_slice %960 {offsets = [0, 8], sizes = [16, 8], strides = [1, 1]} : vector<16x32xf32> to vector<16x8xf32>
    %998 = arith.truncf %997 : vector<16x8xf32> to vector<16x8xbf16>
    %999 = vector.extract_strided_slice %967 {offsets = [0, 8], sizes = [16, 8], strides = [1, 1]} : vector<16x32xf32> to vector<16x8xf32>
    %1000 = arith.truncf %999 : vector<16x8xf32> to vector<16x8xbf16>
    %1001 = vector.extract_strided_slice %968 {offsets = [0, 8], sizes = [16, 8], strides = [1, 1]} : vector<16x32xf32> to vector<16x8xf32>
    %1002 = arith.truncf %1001 : vector<16x8xf32> to vector<16x8xbf16>
    %cst_388 = arith.constant dense<0.000000e+00> : vector<16x16xf32>
    %1003 = tpu.matmul %998, %1000, %cst_388 {dimension_numbers = #tpu.dot_dimension_numbers<[1], [1], [0], [0], [0, 0, 1, 0], [], []>} : vector<16x8xbf16>, vector<16x8xbf16>, vector<16x16xf32> -> vector<16x16xf32>
    %cst_389 = arith.constant 0.353553385 : f32
    %1004 = vector.broadcast %cst_389 : f32 to vector<16x16xf32>
    %1005 = arith.mulf %1003, %1004 : vector<16x16xf32>
    %1006 = arith.addf %1005, %5 : vector<16x16xf32>
    %cst_390 = arith.constant dense<0xFF800000> : vector<16xf32>
    %1007 = vector.multi_reduction <maximumf>, %1006, %cst_390 [1] : vector<16x16xf32> to vector<16xf32>
    %1008 = vector.shape_cast %1007 : vector<16xf32> to vector<16x1xf32>
    %1009 = vector.broadcast %1008 : vector<16x1xf32> to vector<16x16xf32>
    %1010 = arith.subf %1006, %1009 : vector<16x16xf32>
    %1011 = math.exp %1010 : vector<16x16xf32>
    %cst_391 = arith.constant dense<0.000000e+00> : vector<16xf32>
    %1012 = vector.multi_reduction <add>, %1011, %cst_391 [1] : vector<16x16xf32> to vector<16xf32>
    %1013 = vector.shape_cast %1012 : vector<16xf32> to vector<16x1xf32>
    %1014 = tpu.reciprocal %1013 {approx = true} : vector<16x1xf32> -> vector<16x1xf32>
    %1015 = vector.broadcast %1014 : vector<16x1xf32> to vector<16x16xf32>
    %1016 = arith.mulf %1011, %1015 : vector<16x16xf32>
    %1017 = arith.truncf %1016 : vector<16x16xf32> to vector<16x16xbf16>
    %cst_392 = arith.constant dense<0.000000e+00> : vector<16x8xf32>
    %1018 = tpu.matmul %1017, %1002, %cst_392 {dimension_numbers = #tpu.dot_dimension_numbers<[1], [0], [0], [1], [0, 0, 1, 1], [], []>} : vector<16x16xbf16>, vector<16x8xbf16>, vector<16x8xf32> -> vector<16x8xf32>
    %1019 = arith.truncf %1018 : vector<16x8xf32> to vector<16x8xbf16>
    %1020 = vector.extract_strided_slice %952 {offsets = [1, 0, 0], sizes = [1, 8, 32], strides = [1, 1, 1]} : vector<4x8x32xbf16> to vector<1x8x32xbf16>
    %1021 = vector.shape_cast %1020 : vector<1x8x32xbf16> to vector<8x32xbf16>
    %cst_393 = arith.constant dense<0.000000e+00> : vector<16x32xf32>
    %1022 = tpu.matmul %1019, %1021, %cst_393 {dimension_numbers = #tpu.dot_dimension_numbers<[1], [0], [0], [1], [0, 0, 1, 1], [], []>} : vector<16x8xbf16>, vector<8x32xbf16>, vector<16x32xf32> -> vector<16x32xf32>
    %1023 = arith.addf %996, %1022 : vector<16x32xf32>
    %1024 = vector.extract_strided_slice %960 {offsets = [0, 16], sizes = [16, 8], strides = [1, 1]} : vector<16x32xf32> to vector<16x8xf32>
    %1025 = arith.truncf %1024 : vector<16x8xf32> to vector<16x8xbf16>
    %1026 = vector.extract_strided_slice %967 {offsets = [0, 16], sizes = [16, 8], strides = [1, 1]} : vector<16x32xf32> to vector<16x8xf32>
    %1027 = arith.truncf %1026 : vector<16x8xf32> to vector<16x8xbf16>
    %1028 = vector.extract_strided_slice %968 {offsets = [0, 16], sizes = [16, 8], strides = [1, 1]} : vector<16x32xf32> to vector<16x8xf32>
    %1029 = arith.truncf %1028 : vector<16x8xf32> to vector<16x8xbf16>
    %cst_394 = arith.constant dense<0.000000e+00> : vector<16x16xf32>
    %1030 = tpu.matmul %1025, %1027, %cst_394 {dimension_numbers = #tpu.dot_dimension_numbers<[1], [1], [0], [0], [0, 0, 1, 0], [], []>} : vector<16x8xbf16>, vector<16x8xbf16>, vector<16x16xf32> -> vector<16x16xf32>
    %cst_395 = arith.constant 0.353553385 : f32
    %1031 = vector.broadcast %cst_395 : f32 to vector<16x16xf32>
    %1032 = arith.mulf %1030, %1031 : vector<16x16xf32>
    %1033 = arith.addf %1032, %5 : vector<16x16xf32>
    %cst_396 = arith.constant dense<0xFF800000> : vector<16xf32>
    %1034 = vector.multi_reduction <maximumf>, %1033, %cst_396 [1] : vector<16x16xf32> to vector<16xf32>
    %1035 = vector.shape_cast %1034 : vector<16xf32> to vector<16x1xf32>
    %1036 = vector.broadcast %1035 : vector<16x1xf32> to vector<16x16xf32>
    %1037 = arith.subf %1033, %1036 : vector<16x16xf32>
    %1038 = math.exp %1037 : vector<16x16xf32>
    %cst_397 = arith.constant dense<0.000000e+00> : vector<16xf32>
    %1039 = vector.multi_reduction <add>, %1038, %cst_397 [1] : vector<16x16xf32> to vector<16xf32>
    %1040 = vector.shape_cast %1039 : vector<16xf32> to vector<16x1xf32>
    %1041 = tpu.reciprocal %1040 {approx = true} : vector<16x1xf32> -> vector<16x1xf32>
    %1042 = vector.broadcast %1041 : vector<16x1xf32> to vector<16x16xf32>
    %1043 = arith.mulf %1038, %1042 : vector<16x16xf32>
    %1044 = arith.truncf %1043 : vector<16x16xf32> to vector<16x16xbf16>
    %cst_398 = arith.constant dense<0.000000e+00> : vector<16x8xf32>
    %1045 = tpu.matmul %1044, %1029, %cst_398 {dimension_numbers = #tpu.dot_dimension_numbers<[1], [0], [0], [1], [0, 0, 1, 1], [], []>} : vector<16x16xbf16>, vector<16x8xbf16>, vector<16x8xf32> -> vector<16x8xf32>
    %1046 = arith.truncf %1045 : vector<16x8xf32> to vector<16x8xbf16>
    %1047 = vector.extract_strided_slice %952 {offsets = [2, 0, 0], sizes = [1, 8, 32], strides = [1, 1, 1]} : vector<4x8x32xbf16> to vector<1x8x32xbf16>
    %1048 = vector.shape_cast %1047 : vector<1x8x32xbf16> to vector<8x32xbf16>
    %cst_399 = arith.constant dense<0.000000e+00> : vector<16x32xf32>
    %1049 = tpu.matmul %1046, %1048, %cst_399 {dimension_numbers = #tpu.dot_dimension_numbers<[1], [0], [0], [1], [0, 0, 1, 1], [], []>} : vector<16x8xbf16>, vector<8x32xbf16>, vector<16x32xf32> -> vector<16x32xf32>
    %1050 = arith.addf %1023, %1049 : vector<16x32xf32>
    %1051 = vector.extract_strided_slice %960 {offsets = [0, 24], sizes = [16, 8], strides = [1, 1]} : vector<16x32xf32> to vector<16x8xf32>
    %1052 = arith.truncf %1051 : vector<16x8xf32> to vector<16x8xbf16>
    %1053 = vector.extract_strided_slice %967 {offsets = [0, 24], sizes = [16, 8], strides = [1, 1]} : vector<16x32xf32> to vector<16x8xf32>
    %1054 = arith.truncf %1053 : vector<16x8xf32> to vector<16x8xbf16>
    %1055 = vector.extract_strided_slice %968 {offsets = [0, 24], sizes = [16, 8], strides = [1, 1]} : vector<16x32xf32> to vector<16x8xf32>
    %1056 = arith.truncf %1055 : vector<16x8xf32> to vector<16x8xbf16>
    %cst_400 = arith.constant dense<0.000000e+00> : vector<16x16xf32>
    %1057 = tpu.matmul %1052, %1054, %cst_400 {dimension_numbers = #tpu.dot_dimension_numbers<[1], [1], [0], [0], [0, 0, 1, 0], [], []>} : vector<16x8xbf16>, vector<16x8xbf16>, vector<16x16xf32> -> vector<16x16xf32>
    %cst_401 = arith.constant 0.353553385 : f32
    %1058 = vector.broadcast %cst_401 : f32 to vector<16x16xf32>
    %1059 = arith.mulf %1057, %1058 : vector<16x16xf32>
    %1060 = arith.addf %1059, %5 : vector<16x16xf32>
    %cst_402 = arith.constant dense<0xFF800000> : vector<16xf32>
    %1061 = vector.multi_reduction <maximumf>, %1060, %cst_402 [1] : vector<16x16xf32> to vector<16xf32>
    %1062 = vector.shape_cast %1061 : vector<16xf32> to vector<16x1xf32>
    %1063 = vector.broadcast %1062 : vector<16x1xf32> to vector<16x16xf32>
    %1064 = arith.subf %1060, %1063 : vector<16x16xf32>
    %1065 = math.exp %1064 : vector<16x16xf32>
    %cst_403 = arith.constant dense<0.000000e+00> : vector<16xf32>
    %1066 = vector.multi_reduction <add>, %1065, %cst_403 [1] : vector<16x16xf32> to vector<16xf32>
    %1067 = vector.shape_cast %1066 : vector<16xf32> to vector<16x1xf32>
    %1068 = tpu.reciprocal %1067 {approx = true} : vector<16x1xf32> -> vector<16x1xf32>
    %1069 = vector.broadcast %1068 : vector<16x1xf32> to vector<16x16xf32>
    %1070 = arith.mulf %1065, %1069 : vector<16x16xf32>
    %1071 = arith.truncf %1070 : vector<16x16xf32> to vector<16x16xbf16>
    %cst_404 = arith.constant dense<0.000000e+00> : vector<16x8xf32>
    %1072 = tpu.matmul %1071, %1056, %cst_404 {dimension_numbers = #tpu.dot_dimension_numbers<[1], [0], [0], [1], [0, 0, 1, 1], [], []>} : vector<16x16xbf16>, vector<16x8xbf16>, vector<16x8xf32> -> vector<16x8xf32>
    %1073 = arith.truncf %1072 : vector<16x8xf32> to vector<16x8xbf16>
    %1074 = vector.extract_strided_slice %952 {offsets = [3, 0, 0], sizes = [1, 8, 32], strides = [1, 1, 1]} : vector<4x8x32xbf16> to vector<1x8x32xbf16>
    %1075 = vector.shape_cast %1074 : vector<1x8x32xbf16> to vector<8x32xbf16>
    %cst_405 = arith.constant dense<0.000000e+00> : vector<16x32xf32>
    %1076 = tpu.matmul %1073, %1075, %cst_405 {dimension_numbers = #tpu.dot_dimension_numbers<[1], [0], [0], [1], [0, 0, 1, 1], [], []>} : vector<16x8xbf16>, vector<8x32xbf16>, vector<16x32xf32> -> vector<16x32xf32>
    %1077 = arith.addf %1050, %1076 : vector<16x32xf32>
    %1078 = arith.addf %921, %1077 : vector<16x32xf32>
    %c1_406 = arith.constant 1 : index
    %c4_407 = arith.constant 4 : index
    %c0_408 = arith.constant 0 : index
    %c0_409 = arith.constant 0 : index
    %1079 = vector.load %arg24[%c1_406, %c4_407, %c0_408, %c0_409] : memref<2x6x1x32xf32, #tpu.memory_space<vmem>>, vector<1x1x1x32xf32>
    %1080 = vector.shape_cast %1079 : vector<1x1x1x32xf32> to vector<1x32xf32>
    %c1_410 = arith.constant 1 : index
    %c5_411 = arith.constant 5 : index
    %c0_412 = arith.constant 0 : index
    %c0_413 = arith.constant 0 : index
    %1081 = vector.load %arg24[%c1_410, %c5_411, %c0_412, %c0_413] : memref<2x6x1x32xf32, #tpu.memory_space<vmem>>, vector<1x1x1x32xf32>
    %1082 = vector.shape_cast %1081 : vector<1x1x1x32xf32> to vector<1x32xf32>
    %cst_414 = arith.constant dense<0.000000e+00> : vector<16xf32>
    %1083 = vector.multi_reduction <add>, %1078, %cst_414 [1] : vector<16x32xf32> to vector<16xf32>
    %1084 = vector.shape_cast %1083 : vector<16xf32> to vector<16x1xf32>
    %cst_415 = arith.constant 3.200000e+01 : f32
    %1085 = vector.broadcast %cst_415 : f32 to vector<16x1xf32>
    %1086 = arith.divf %1084, %1085 : vector<16x1xf32>
    %1087 = vector.broadcast %1086 : vector<16x1xf32> to vector<16x32xf32>
    %1088 = arith.subf %1078, %1087 : vector<16x32xf32>
    %1089 = arith.mulf %1088, %1088 : vector<16x32xf32>
    %cst_416 = arith.constant dense<0.000000e+00> : vector<16xf32>
    %1090 = vector.multi_reduction <add>, %1089, %cst_416 [1] : vector<16x32xf32> to vector<16xf32>
    %1091 = vector.shape_cast %1090 : vector<16xf32> to vector<16x1xf32>
    %cst_417 = arith.constant 0.0322580636 : f32
    %1092 = vector.broadcast %cst_417 : f32 to vector<16x1xf32>
    %1093 = arith.mulf %1091, %1092 : vector<16x1xf32>
    %1094 = math.sqrt %1093 : vector<16x1xf32>
    %cst_418 = arith.constant 9.99999997E-7 : f32
    %1095 = vector.broadcast %cst_418 : f32 to vector<16x1xf32>
    %1096 = arith.addf %1094, %1095 : vector<16x1xf32>
    %1097 = tpu.reciprocal %1096 {approx = true} : vector<16x1xf32> -> vector<16x1xf32>
    %1098 = vector.broadcast %1080 : vector<1x32xf32> to vector<16x32xf32>
    %1099 = arith.mulf %1098, %1088 : vector<16x32xf32>
    %1100 = vector.broadcast %1097 : vector<16x1xf32> to vector<16x32xf32>
    %1101 = arith.mulf %1099, %1100 : vector<16x32xf32>
    %1102 = vector.broadcast %1082 : vector<1x32xf32> to vector<16x32xf32>
    %1103 = arith.addf %1101, %1102 : vector<16x32xf32>
    %c1_419 = arith.constant 1 : index
    %c0_420 = arith.constant 0 : index
    %c0_421 = arith.constant 0 : index
    %1104 = vector.load %arg20[%c1_419, %c0_420, %c0_421] : memref<2x32x64xbf16, #tpu.memory_space<vmem>>, vector<1x32x64xbf16>
    %1105 = vector.shape_cast %1104 : vector<1x32x64xbf16> to vector<32x64xbf16>
    %c1_422 = arith.constant 1 : index
    %c0_423 = arith.constant 0 : index
    %c0_424 = arith.constant 0 : index
    %1106 = vector.load %arg21[%c1_422, %c0_423, %c0_424] : memref<2x1x64xf32, #tpu.memory_space<vmem>>, vector<1x1x64xf32>
    %1107 = vector.shape_cast %1106 : vector<1x1x64xf32> to vector<1x64xf32>
    %c1_425 = arith.constant 1 : index
    %c0_426 = arith.constant 0 : index
    %c0_427 = arith.constant 0 : index
    %1108 = vector.load %arg22[%c1_425, %c0_426, %c0_427] : memref<2x64x32xbf16, #tpu.memory_space<vmem>>, vector<1x64x32xbf16>
    %1109 = vector.shape_cast %1108 : vector<1x64x32xbf16> to vector<64x32xbf16>
    %c1_428 = arith.constant 1 : index
    %c0_429 = arith.constant 0 : index
    %c0_430 = arith.constant 0 : index
    %1110 = vector.load %arg23[%c1_428, %c0_429, %c0_430] : memref<2x1x32xf32, #tpu.memory_space<vmem>>, vector<1x1x32xf32>
    %1111 = vector.shape_cast %1110 : vector<1x1x32xf32> to vector<1x32xf32>
    %1112 = arith.truncf %1103 : vector<16x32xf32> to vector<16x32xbf16>
    %cst_431 = arith.constant dense<0.000000e+00> : vector<16x64xf32>
    %1113 = tpu.matmul %1112, %1105, %cst_431 {dimension_numbers = #tpu.dot_dimension_numbers<[1], [0], [0], [1], [0, 0, 1, 1], [], []>} : vector<16x32xbf16>, vector<32x64xbf16>, vector<16x64xf32> -> vector<16x64xf32>
    %1114 = vector.broadcast %1107 : vector<1x64xf32> to vector<16x64xf32>
    %1115 = arith.addf %1113, %1114 : vector<16x64xf32>
    %cst_432 = arith.constant 0.000000e+00 : f32
    %1116 = vector.broadcast %cst_432 : f32 to vector<16x64xf32>
    %1117 = arith.maximumf %1115, %1116 : vector<16x64xf32>
    %1118 = arith.truncf %1117 : vector<16x64xf32> to vector<16x64xbf16>
    %cst_433 = arith.constant dense<0.000000e+00> : vector<16x32xf32>
    %1119 = tpu.matmul %1118, %1109, %cst_433 {dimension_numbers = #tpu.dot_dimension_numbers<[1], [0], [0], [1], [0, 0, 1, 1], [], []>} : vector<16x64xbf16>, vector<64x32xbf16>, vector<16x32xf32> -> vector<16x32xf32>
    %1120 = vector.broadcast %1111 : vector<1x32xf32> to vector<16x32xf32>
    %1121 = arith.addf %1119, %1120 : vector<16x32xf32>
    %1122 = arith.addf %1078, %1121 : vector<16x32xf32>
    %c0_434 = arith.constant 0 : index
    %c0_435 = arith.constant 0 : index
    %c0_436 = arith.constant 0 : index
    %1123 = vector.load %arg25[%c0_434, %c0_435, %c0_436] : memref<2x1x32xf32, #tpu.memory_space<vmem>>, vector<1x1x32xf32>
    %1124 = vector.shape_cast %1123 : vector<1x1x32xf32> to vector<1x32xf32>
    %c1_437 = arith.constant 1 : index
    %c0_438 = arith.constant 0 : index
    %c0_439 = arith.constant 0 : index
    %1125 = vector.load %arg25[%c1_437, %c0_438, %c0_439] : memref<2x1x32xf32, #tpu.memory_space<vmem>>, vector<1x1x32xf32>
    %1126 = vector.shape_cast %1125 : vector<1x1x32xf32> to vector<1x32xf32>
    %cst_440 = arith.constant dense<0.000000e+00> : vector<16xf32>
    %1127 = vector.multi_reduction <add>, %1122, %cst_440 [1] : vector<16x32xf32> to vector<16xf32>
    %1128 = vector.shape_cast %1127 : vector<16xf32> to vector<16x1xf32>
    %cst_441 = arith.constant 3.200000e+01 : f32
    %1129 = vector.broadcast %cst_441 : f32 to vector<16x1xf32>
    %1130 = arith.divf %1128, %1129 : vector<16x1xf32>
    %1131 = vector.broadcast %1130 : vector<16x1xf32> to vector<16x32xf32>
    %1132 = arith.subf %1122, %1131 : vector<16x32xf32>
    %1133 = arith.mulf %1132, %1132 : vector<16x32xf32>
    %cst_442 = arith.constant dense<0.000000e+00> : vector<16xf32>
    %1134 = vector.multi_reduction <add>, %1133, %cst_442 [1] : vector<16x32xf32> to vector<16xf32>
    %1135 = vector.shape_cast %1134 : vector<16xf32> to vector<16x1xf32>
    %cst_443 = arith.constant 0.0322580636 : f32
    %1136 = vector.broadcast %cst_443 : f32 to vector<16x1xf32>
    %1137 = arith.mulf %1135, %1136 : vector<16x1xf32>
    %1138 = math.sqrt %1137 : vector<16x1xf32>
    %cst_444 = arith.constant 9.99999997E-7 : f32
    %1139 = vector.broadcast %cst_444 : f32 to vector<16x1xf32>
    %1140 = arith.addf %1138, %1139 : vector<16x1xf32>
    %1141 = tpu.reciprocal %1140 {approx = true} : vector<16x1xf32> -> vector<16x1xf32>
    %1142 = vector.broadcast %1124 : vector<1x32xf32> to vector<16x32xf32>
    %1143 = arith.mulf %1142, %1132 : vector<16x32xf32>
    %1144 = vector.broadcast %1141 : vector<16x1xf32> to vector<16x32xf32>
    %1145 = arith.mulf %1143, %1144 : vector<16x32xf32>
    %1146 = vector.broadcast %1126 : vector<1x32xf32> to vector<16x32xf32>
    %1147 = arith.addf %1145, %1146 : vector<16x32xf32>
    %c0_445 = arith.constant 0 : index
    %c0_446 = arith.constant 0 : index
    %1148 = vector.load %arg26[%c0_445, %c0_446] : memref<16x32xf32, #tpu.memory_space<vmem>>, vector<16x32xf32>
    tpu.vector_store %arg26[%c0_445, %c0_446], %1147 {strides = array<i32>} : memref<16x32xf32, #tpu.memory_space<vmem>>, vector<16x32xf32>,
    return
  }
  func.func @transform_0(%arg0: i32) -> (i32, i32) {
    %c0_i32 = arith.constant 0 : i32
    %c0_i32_0 = arith.constant 0 : i32
    %c0_i32_1 = arith.constant 0 : i32
    return %c0_i32, %c0_i32_0 : i32, i32
  }
  func.func @transform_1(%arg0: i32) -> (i32, i32) {
    %c0_i32 = arith.constant 0 : i32
    %c0_i32_0 = arith.constant 0 : i32
    %c0_i32_1 = arith.constant 0 : i32
    return %c0_i32, %c0_i32_0 : i32, i32
  }
  func.func @transform_2(%arg0: i32) -> (i32, i32) {
    %c0_i32 = arith.constant 0 : i32
    %c0_i32_0 = arith.constant 0 : i32
    %c0_i32_1 = arith.constant 0 : i32
    return %c0_i32, %c0_i32_0 : i32, i32
  }
  func.func @transform_3(%arg0: i32) -> (i32, i32) {
    %c0_i32 = arith.constant 0 : i32
    %c0_i32_0 = arith.constant 0 : i32
    %c0_i32_1 = arith.constant 0 : i32
    return %c0_i32, %c0_i32_0 : i32, i32
  }
  func.func @transform_4(%arg0: i32) -> (i32, i32) {
    %c0_i32 = arith.constant 0 : i32
    %c0_i32_0 = arith.constant 0 : i32
    %c0_i32_1 = arith.constant 0 : i32
    return %c0_i32, %c0_i32_0 : i32, i32
  }
  func.func @transform_5(%arg0: i32) -> (i32, i32, i32) {
    %c0_i32 = arith.constant 0 : i32
    %c0_i32_0 = arith.constant 0 : i32
    %c0_i32_1 = arith.constant 0 : i32
    %c0_i32_2 = arith.constant 0 : i32
    return %c0_i32, %c0_i32_0, %c0_i32_1 : i32, i32, i32
  }
  func.func @transform_6(%arg0: i32) -> (i32, i32, i32) {
    %c0_i32 = arith.constant 0 : i32
    %c0_i32_0 = arith.constant 0 : i32
    %c0_i32_1 = arith.constant 0 : i32
    %c0_i32_2 = arith.constant 0 : i32
    return %c0_i32, %c0_i32_0, %c0_i32_1 : i32, i32, i32
  }
  func.func @transform_7(%arg0: i32) -> (i32, i32, i32, i32) {
    %c0_i32 = arith.constant 0 : i32
    %c0_i32_0 = arith.constant 0 : i32
    %c0_i32_1 = arith.constant 0 : i32
    %c0_i32_2 = arith.constant 0 : i32
    %c0_i32_3 = arith.constant 0 : i32
    return %c0_i32, %c0_i32_0, %c0_i32_1, %c0_i32_2 : i32, i32, i32, i32
  }
  func.func @transform_8(%arg0: i32) -> (i32, i32, i32) {
    %c0_i32 = arith.constant 0 : i32
    %c0_i32_0 = arith.constant 0 : i32
    %c0_i32_1 = arith.constant 0 : i32
    %c0_i32_2 = arith.constant 0 : i32
    return %c0_i32, %c0_i32_0, %c0_i32_1 : i32, i32, i32
  }
  func.func @transform_9(%arg0: i32) -> (i32, i32, i32) {
    %c0_i32 = arith.constant 0 : i32
    %c0_i32_0 = arith.constant 0 : i32
    %c0_i32_1 = arith.constant 0 : i32
    %c0_i32_2 = arith.constant 0 : i32
    return %c0_i32, %c0_i32_0, %c0_i32_1 : i32, i32, i32
  }
  func.func @transform_10(%arg0: i32) -> (i32, i32, i32) {
    %c0_i32 = arith.constant 0 : i32
    %c0_i32_0 = arith.constant 0 : i32
    %c0_i32_1 = arith.constant 0 : i32
    %c0_i32_2 = arith.constant 0 : i32
    return %c0_i32, %c0_i32_0, %c0_i32_1 : i32, i32, i32
  }
  func.func @transform_11(%arg0: i32) -> (i32, i32, i32) {
    %c0_i32 = arith.constant 0 : i32
    %c0_i32_0 = arith.constant 0 : i32
    %c0_i32_1 = arith.constant 0 : i32
    %c0_i32_2 = arith.constant 0 : i32
    return %c0_i32, %c0_i32_0, %c0_i32_1 : i32, i32, i32
  }
  func.func @transform_12(%arg0: i32) -> (i32, i32, i32) {
    %c0_i32 = arith.constant 0 : i32
    %c0_i32_0 = arith.constant 0 : i32
    %c0_i32_1 = arith.constant 0 : i32
    %c0_i32_2 = arith.constant 0 : i32
    return %c0_i32, %c0_i32_0, %c0_i32_1 : i32, i32, i32
  }
  func.func @transform_13(%arg0: i32) -> (i32, i32, i32, i32) {
    %c0_i32 = arith.constant 0 : i32
    %c0_i32_0 = arith.constant 0 : i32
    %c0_i32_1 = arith.constant 0 : i32
    %c0_i32_2 = arith.constant 0 : i32
    %c0_i32_3 = arith.constant 0 : i32
    return %c0_i32, %c0_i32_0, %c0_i32_1, %c0_i32_2 : i32, i32, i32, i32
  }
  func.func @transform_14(%arg0: i32) -> (i32, i32, i32) {
    %c0_i32 = arith.constant 0 : i32
    %c0_i32_0 = arith.constant 0 : i32
    %c0_i32_1 = arith.constant 0 : i32
    %c0_i32_2 = arith.constant 0 : i32
    return %c0_i32, %c0_i32_0, %c0_i32_1 : i32, i32, i32
  }
  func.func @transform_15(%arg0: i32) -> (i32, i32, i32) {
    %c0_i32 = arith.constant 0 : i32
    %c0_i32_0 = arith.constant 0 : i32
    %c0_i32_1 = arith.constant 0 : i32
    %c0_i32_2 = arith.constant 0 : i32
    return %c0_i32, %c0_i32_0, %c0_i32_1 : i32, i32, i32
  }
  func.func @transform_16(%arg0: i32) -> (i32, i32, i32) {
    %c0_i32 = arith.constant 0 : i32
    %c0_i32_0 = arith.constant 0 : i32
    %c0_i32_1 = arith.constant 0 : i32
    %c0_i32_2 = arith.constant 0 : i32
    return %c0_i32, %c0_i32_0, %c0_i32_1 : i32, i32, i32
  }
  func.func @transform_17(%arg0: i32) -> (i32, i32, i32, i32) {
    %c0_i32 = arith.constant 0 : i32
    %c0_i32_0 = arith.constant 0 : i32
    %c0_i32_1 = arith.constant 0 : i32
    %c0_i32_2 = arith.constant 0 : i32
    %c0_i32_3 = arith.constant 0 : i32
    return %c0_i32, %c0_i32_0, %c0_i32_1, %c0_i32_2 : i32, i32, i32, i32
  }
  func.func @transform_18(%arg0: i32) -> (i32, i32, i32) {
    %c0_i32 = arith.constant 0 : i32
    %c0_i32_0 = arith.constant 0 : i32
    %c0_i32_1 = arith.constant 0 : i32
    %c0_i32_2 = arith.constant 0 : i32
    return %c0_i32, %c0_i32_0, %c0_i32_1 : i32, i32, i32
  }
  func.func @transform_19(%arg0: i32) -> (i32, i32, i32) {
    %c0_i32 = arith.constant 0 : i32
    %c0_i32_0 = arith.constant 0 : i32
    %c0_i32_1 = arith.constant 0 : i32
    %c0_i32_2 = arith.constant 0 : i32
    return %c0_i32, %c0_i32_0, %c0_i32_1 : i32, i32, i32
  }
  func.func @transform_20(%arg0: i32) -> (i32, i32, i32) {
    %c0_i32 = arith.constant 0 : i32
    %c0_i32_0 = arith.constant 0 : i32
    %c0_i32_1 = arith.constant 0 : i32
    %c0_i32_2 = arith.constant 0 : i32
    return %c0_i32, %c0_i32_0, %c0_i32_1 : i32, i32, i32
  }
  func.func @transform_21(%arg0: i32) -> (i32, i32, i32) {
    %c0_i32 = arith.constant 0 : i32
    %c0_i32_0 = arith.constant 0 : i32
    %c0_i32_1 = arith.constant 0 : i32
    %c0_i32_2 = arith.constant 0 : i32
    return %c0_i32, %c0_i32_0, %c0_i32_1 : i32, i32, i32
  }
  func.func @transform_22(%arg0: i32) -> (i32, i32, i32) {
    %c0_i32 = arith.constant 0 : i32
    %c0_i32_0 = arith.constant 0 : i32
    %c0_i32_1 = arith.constant 0 : i32
    %c0_i32_2 = arith.constant 0 : i32
    return %c0_i32, %c0_i32_0, %c0_i32_1 : i32, i32, i32
  }
  func.func @transform_23(%arg0: i32) -> (i32, i32, i32, i32) {
    %c0_i32 = arith.constant 0 : i32
    %c0_i32_0 = arith.constant 0 : i32
    %c0_i32_1 = arith.constant 0 : i32
    %c0_i32_2 = arith.constant 0 : i32
    %c0_i32_3 = arith.constant 0 : i32
    return %c0_i32, %c0_i32_0, %c0_i32_1, %c0_i32_2 : i32, i32, i32, i32
  }
  func.func @transform_24(%arg0: i32) -> (i32, i32, i32) {
    %c0_i32 = arith.constant 0 : i32
    %c0_i32_0 = arith.constant 0 : i32
    %c0_i32_1 = arith.constant 0 : i32
    %c0_i32_2 = arith.constant 0 : i32
    return %c0_i32, %c0_i32_0, %c0_i32_1 : i32, i32, i32
  }
  func.func @transform_25(%arg0: i32) -> (i32, i32) {
    %c0_i32 = arith.constant 0 : i32
    %c0_i32_0 = arith.constant 0 : i32
    %c0_i32_1 = arith.constant 0 : i32
    return %c0_i32, %c0_i32_0 : i32, i32
  }
}

</mosaic_0001>

<llo_original>
// kernel: encoder_decoder_forward.1
$region0: #{encoder_decoder_forward.1}
  #allocation0 [shape = 'u32[]', space=smem, size = 0x4, offset = 0x4, fixed_abs, tag = 'smem constant byte address 0x4 - core index']
  #allocation1 [shape = 'u32[144,128]{1,0:T(1,128)}', space=vmem, size = 0x12000, scoped, tag = 'internal scratch']
  %s0 = inlined_call_operand.vmem [shape: f32[16,32], index: 0, kind: input, shape index: {}]
  %s1 = inlined_call_operand.vmem [shape: f32[16,32], index: 1, kind: input, shape index: {}]
  %s2 = inlined_call_operand.vmem [shape: f32[16,16], index: 2, kind: input, shape index: {}, may-alias: {2,4}]
  %s3 = inlined_call_operand.vmem [shape: f32[16,16], index: 3, kind: input, shape index: {}]
  %s4 = inlined_call_operand.vmem [shape: f32[16,16], index: 4, kind: input, shape index: {}, may-alias: {2,4}]
  %s5 = inlined_call_operand.vmem [shape: bf16[2,32,96], index: 5, kind: input, shape index: {}]
  %s6 = inlined_call_operand.vmem [shape: f32[2,1,96], index: 6, kind: input, shape index: {}]
  %s7 = inlined_call_operand.vmem [shape: bf16[2,4,8,32], index: 7, kind: input, shape index: {}]
  %s8 = inlined_call_operand.vmem [shape: f32[2,1,32], index: 8, kind: input, shape index: {}]
  %s9 = inlined_call_operand.vmem [shape: bf16[2,32,64], index: 9, kind: input, shape index: {}]
  %s10 = inlined_call_operand.vmem [shape: f32[2,1,64], index: 10, kind: input, shape index: {}]
  %s11 = inlined_call_operand.vmem [shape: bf16[2,64,32], index: 11, kind: input, shape index: {}]
  %s12 = inlined_call_operand.vmem [shape: f32[2,1,32], index: 12, kind: input, shape index: {}]
  %s13 = inlined_call_operand.vmem [shape: f32[2,4,1,32], index: 13, kind: input, shape index: {}]
  %s14 = inlined_call_operand.vmem [shape: f32[2,1,32], index: 14, kind: input, shape index: {}]
  %s15 = inlined_call_operand.vmem [shape: bf16[4,32,96], index: 15, kind: input, shape index: {}]
  %s16 = inlined_call_operand.vmem [shape: f32[4,1,96], index: 16, kind: input, shape index: {}]
  %s17 = inlined_call_operand.vmem [shape: bf16[4,4,8,32], index: 17, kind: input, shape index: {}]
  %s18 = inlined_call_operand.vmem [shape: f32[4,1,32], index: 18, kind: input, shape index: {}]
  %s19 = inlined_call_operand.vmem [shape: bf16[2,32,64], index: 19, kind: input, shape index: {}]
  %s20 = inlined_call_operand.vmem [shape: f32[2,1,64], index: 20, kind: input, shape index: {}]
  %s21 = inlined_call_operand.vmem [shape: bf16[2,64,32], index: 21, kind: input, shape index: {}]
  %s22 = inlined_call_operand.hbm [shape: f32[2,1,32], index: 22, kind: input, shape index: {}]
  %s23 = inlined_call_operand.vmem [shape: f32[2,6,1,32], index: 23, kind: input, shape index: {}]
  %s24 = inlined_call_operand.hbm [shape: f32[2,1,32], index: 24, kind: input, shape index: {}]
  %s25 = inlined_call_operand.hbm [shape: f32[16,32], index: 25, kind: output, shape index: {}]
  %s26 = sld [smem:[#allocation0]]
  $region118: #{encoder_decoder_forward.1} parent=0
    _
  %s28 = ssub.s32 1, %s26
  %s29 = scalar_select 0, %s28, %s26
  $region1: #{encoder_decoder_forward.1} parent=0
    #allocation2 [shape = 'u8[1024]{0}', space=vmem, size = 0x400, scoped, tag = 'input window, operand 22, single buffered']
    #allocation3 [shape = 's32[1]{0}', space=sflag, size = 0x4, scoped, tag = 'scoped memory for encoder_decoder_forward.1']
    #allocation4 [shape = 's32[1]{0}', space=sflag, size = 0x4, scoped, tag = 'scoped memory for encoder_decoder_forward.1']
    #allocation5 [shape = 'u8[1024]{0}', space=vmem, size = 0x400, scoped, tag = 'input window, operand 24, single buffered']
    #allocation6 [shape = 's32[1]{0}', space=sflag, size = 0x4, scoped, tag = 'scoped memory for encoder_decoder_forward.1']
    #allocation7 [shape = 'u8[8192]{0}', space=vmem, size = 0x2000, scoped, tag = 'output window, operand 0, single buffered']
    %30 = vsyncpa [#allocation3], 0
    %31 = vsyncpa [#allocation6], 0
    %32 = vsyncpa [#allocation4], 0
    // Predicated region
    $region2: #{encoder_decoder_forward.1} parent=1 // pred_check
      _
    $region3: #{encoder_decoder_forward.1} parent=1 // pred_check_branch
      %34 = sbr.rel (0) target = $region5
    $region4: #{encoder_decoder_forward.1} parent=1 // pred_region
      _
    $region5: #{encoder_decoder_forward.1} parent=1 // pred_fallthru
      _
    // Predicated region
    $region6: #{encoder_decoder_forward.1} parent=1 // pred_check
      _
    $region7: #{encoder_decoder_forward.1} parent=1 // pred_check_branch
      %36 = sbr.rel (0) target = $region9
    $region8: #{encoder_decoder_forward.1} parent=1 // pred_region
      _
    $region9: #{encoder_decoder_forward.1} parent=1 // pred_fallthru
      _
    // Predicated region
    $region10: #{encoder_decoder_forward.1} parent=1 // pred_check
      _
    $region11: #{encoder_decoder_forward.1} parent=1 // pred_check_branch
      %38 = sbr.rel (0) target = $region13
    $region12: #{encoder_decoder_forward.1} parent=1 // pred_region
      _
    $region13: #{encoder_decoder_forward.1} parent=1 // pred_fallthru
      _
    // Predicated region
    $region14: #{encoder_decoder_forward.1} parent=1 // pred_check
      _
    $region15: #{encoder_decoder_forward.1} parent=1 // pred_check_branch
      %40 = sbr.rel (0) target = $region17
    $region16: #{encoder_decoder_forward.1} parent=1 // pred_region
      _
    $region17: #{encoder_decoder_forward.1} parent=1 // pred_fallthru
      _
    // Predicated region
    $region18: #{encoder_decoder_forward.1} parent=1 // pred_check
      _
    $region19: #{encoder_decoder_forward.1} parent=1 // pred_check_branch
      %42 = sbr.rel (0) target = $region21
    $region20: #{encoder_decoder_forward.1} parent=1 // pred_region
      _
    $region21: #{encoder_decoder_forward.1} parent=1 // pred_fallthru
      _
    // Predicated region
    $region22: #{encoder_decoder_forward.1} parent=1 // pred_check
      _
    $region23: #{encoder_decoder_forward.1} parent=1 // pred_check_branch
      %44 = sbr.rel (0) target = $region25
    $region24: #{encoder_decoder_forward.1} parent=1 // pred_region
      _
    $region25: #{encoder_decoder_forward.1} parent=1 // pred_fallthru
      _
    // Predicated region
    $region26: #{encoder_decoder_forward.1} parent=1 // pred_check
      _
    $region27: #{encoder_decoder_forward.1} parent=1 // pred_check_branch
      %46 = sbr.rel (0) target = $region29
    $region28: #{encoder_decoder_forward.1} parent=1 // pred_region
      _
    $region29: #{encoder_decoder_forward.1} parent=1 // pred_fallthru
      _
    // Predicated region
    $region30: #{encoder_decoder_forward.1} parent=1 // pred_check
      _
    $region31: #{encoder_decoder_forward.1} parent=1 // pred_check_branch
      %48 = sbr.rel (0) target = $region33
    $region32: #{encoder_decoder_forward.1} parent=1 // pred_region
      _
    $region33: #{encoder_decoder_forward.1} parent=1 // pred_fallthru
      _
    // Predicated region
    $region34: #{encoder_decoder_forward.1} parent=1 // pred_check
      _
    $region35: #{encoder_decoder_forward.1} parent=1 // pred_check_branch
      %50 = sbr.rel (0) target = $region37
    $region36: #{encoder_decoder_forward.1} parent=1 // pred_region
      _
    $region37: #{encoder_decoder_forward.1} parent=1 // pred_fallthru
      _
    // Predicated region
    $region38: #{encoder_decoder_forward.1} parent=1 // pred_check
      _
    $region39: #{encoder_decoder_forward.1} parent=1 // pred_check_branch
      %52 = sbr.rel (0) target = $region41
    $region40: #{encoder_decoder_forward.1} parent=1 // pred_region
      _
    $region41: #{encoder_decoder_forward.1} parent=1 // pred_fallthru
      _
    // Predicated region
    $region42: #{encoder_decoder_forward.1} parent=1 // pred_check
      _
    $region43: #{encoder_decoder_forward.1} parent=1 // pred_check_branch
      %54 = sbr.rel (0) target = $region45
    $region44: #{encoder_decoder_forward.1} parent=1 // pred_region
      _
    $region45: #{encoder_decoder_forward.1} parent=1 // pred_fallthru
      _
    // Predicated region
    $region46: #{encoder_decoder_forward.1} parent=1 // pred_check
      _
    $region47: #{encoder_decoder_forward.1} parent=1 // pred_check_branch
      %56 = sbr.rel (0) target = $region49
    $region48: #{encoder_decoder_forward.1} parent=1 // pred_region
      _
    $region49: #{encoder_decoder_forward.1} parent=1 // pred_fallthru
      _
    // Predicated region
    $region50: #{encoder_decoder_forward.1} parent=1 // pred_check
      _
    $region51: #{encoder_decoder_forward.1} parent=1 // pred_check_branch
      %58 = sbr.rel (0) target = $region53
    $region52: #{encoder_decoder_forward.1} parent=1 // pred_region
      _
    $region53: #{encoder_decoder_forward.1} parent=1 // pred_fallthru
      _
    // Predicated region
    $region54: #{encoder_decoder_forward.1} parent=1 // pred_check
      _
    $region55: #{encoder_decoder_forward.1} parent=1 // pred_check_branch
      %60 = sbr.rel (0) target = $region57
    $region56: #{encoder_decoder_forward.1} parent=1 // pred_region
      _
    $region57: #{encoder_decoder_forward.1} parent=1 // pred_fallthru
      _
    // Predicated region
    $region58: #{encoder_decoder_forward.1} parent=1 // pred_check
      _
    $region59: #{encoder_decoder_forward.1} parent=1 // pred_check_branch
      %62 = sbr.rel (0) target = $region61
    $region60: #{encoder_decoder_forward.1} parent=1 // pred_region
      _
    $region61: #{encoder_decoder_forward.1} parent=1 // pred_fallthru
      _
    // Predicated region
    $region62: #{encoder_decoder_forward.1} parent=1 // pred_check
      _
    $region63: #{encoder_decoder_forward.1} parent=1 // pred_check_branch
      %64 = sbr.rel (0) target = $region65
    $region64: #{encoder_decoder_forward.1} parent=1 // pred_region
      _
    $region65: #{encoder_decoder_forward.1} parent=1 // pred_fallthru
      _
    // Predicated region
    $region66: #{encoder_decoder_forward.1} parent=1 // pred_check
      _
    $region67: #{encoder_decoder_forward.1} parent=1 // pred_check_branch
      %66 = sbr.rel (0) target = $region69
    $region68: #{encoder_decoder_forward.1} parent=1 // pred_region
      _
    $region69: #{encoder_decoder_forward.1} parent=1 // pred_fallthru
      _
    // Predicated region
    $region70: #{encoder_decoder_forward.1} parent=1 // pred_check
      _
    $region71: #{encoder_decoder_forward.1} parent=1 // pred_check_branch
      %68 = sbr.rel (0) target = $region73
    $region72: #{encoder_decoder_forward.1} parent=1 // pred_region
      _
    $region73: #{encoder_decoder_forward.1} parent=1 // pred_fallthru
      _
    // Predicated region
    $region74: #{encoder_decoder_forward.1} parent=1 // pred_check
      _
    $region75: #{encoder_decoder_forward.1} parent=1 // pred_check_branch
      %70 = sbr.rel (0) target = $region77
    $region76: #{encoder_decoder_forward.1} parent=1 // pred_region
      _
    $region77: #{encoder_decoder_forward.1} parent=1 // pred_fallthru
      _
    // Predicated region
    $region78: #{encoder_decoder_forward.1} parent=1 // pred_check
      _
    $region79: #{encoder_decoder_forward.1} parent=1 // pred_check_branch
      %72 = sbr.rel (0) target = $region81
    $region80: #{encoder_decoder_forward.1} parent=1 // pred_region
      _
    $region81: #{encoder_decoder_forward.1} parent=1 // pred_fallthru
      _
    // Predicated region
    $region82: #{encoder_decoder_forward.1} parent=1 // pred_check
      _
    $region83: #{encoder_decoder_forward.1} parent=1 // pred_check_branch
      %74 = sbr.rel (0) target = $region85
    $region84: #{encoder_decoder_forward.1} parent=1 // pred_region
      _
    $region85: #{encoder_decoder_forward.1} parent=1 // pred_fallthru
      _
    // Predicated region
    $region86: #{encoder_decoder_forward.1} parent=1 // pred_check
      _
    $region87: #{encoder_decoder_forward.1} parent=1 // pred_check_branch
      %76 = sbr.rel (0) target = $region89
    $region88: #{encoder_decoder_forward.1} parent=1 // pred_region
      _
    $region89: #{encoder_decoder_forward.1} parent=1 // pred_fallthru
      _
    // Predicated region
    $region90: #{encoder_decoder_forward.1} parent=1 // pred_check
      _
    $region91: #{encoder_decoder_forward.1} parent=1 // pred_check_branch
      %78 = sbr.rel (0) target = $region93
    $region92: #{encoder_decoder_forward.1} parent=1 // pred_region
      %s80 = ssub.s32 32, 32
      %81 = vsyncadd [#allocation3], %s80
      %s82 = sshll.u32 [#allocation2], 4
      %s83 = int_to_ptr.vmem [resolvable:$true] %s82
      %88 = dma.hbm_to_vmem [thread:$0]  %s22, 32, %s83, [#allocation3], 16, 16, 1
    $region93: #{encoder_decoder_forward.1} parent=1 // pred_fallthru
      _
    // Predicated region
    $region94: #{encoder_decoder_forward.1} parent=1 // pred_check
      _
    $region95: #{encoder_decoder_forward.1} parent=1 // pred_check_branch
      %90 = sbr.rel (0) target = $region97
    $region96: #{encoder_decoder_forward.1} parent=1 // pred_region
      _
    $region97: #{encoder_decoder_forward.1} parent=1 // pred_fallthru
      _
    // Predicated region
    $region98: #{encoder_decoder_forward.1} parent=1 // pred_check
      _
    $region99: #{encoder_decoder_forward.1} parent=1 // pred_check_branch
      %92 = sbr.rel (0) target = $region101
    $region100: #{encoder_decoder_forward.1} parent=1 // pred_region
      %s94 = ssub.s32 32, 32
      %95 = vsyncadd [#allocation6], %s94
      %s96 = sshll.u32 [#allocation5], 4
      %s97 = int_to_ptr.vmem [resolvable:$true] %s96
      %102 = dma.hbm_to_vmem [thread:$0]  %s24, 32, %s97, [#allocation6], 16, 16, 1
    $region101: #{encoder_decoder_forward.1} parent=1 // pred_fallthru
      _
    // Predicated region
    $region102: #{encoder_decoder_forward.1} parent=1 // pred_check
      _
    $region103: #{encoder_decoder_forward.1} parent=1 // pred_check_branch
      %104 = sbr.rel (0) target = $region105
    $region104: #{encoder_decoder_forward.1} parent=1 // pred_region
      %105 = dma.done [#allocation3], 32
    $region105: #{encoder_decoder_forward.1} parent=1 // pred_fallthru
      _
    // Predicated region
    $region106: #{encoder_decoder_forward.1} parent=1 // pred_check
      _
    $region107: #{encoder_decoder_forward.1} parent=1 // pred_check_branch
      %107 = sbr.rel (0) target = $region109
    $region108: #{encoder_decoder_forward.1} parent=1 // pred_region
      %108 = dma.done [#allocation6], 32
    $region109: #{encoder_decoder_forward.1} parent=1 // pred_fallthru
      _
    %v110 = vld [vmem:[%s2] sm:$0xff]
    %v111 = vld [vmem:[%s2 + $0x8] sm:$0xff]
    %v112 = vld [vmem:[%s3] sm:$0xff]
    %v113 = vld [vmem:[%s3 + $0x8] sm:$0xff]
    %v114 = vld [vmem:[%s4] sm:$0xff]
    %v115 = vld [vmem:[%s4 + $0x8] sm:$0xff]
    %v116 = vld [vmem:[%s0] sm:$0xff]
    %v117 = vld [vmem:[%s0 + $0x8] sm:$0xff]
    %v118 = vld [vmem:[%s13] sm:$0x1]
    %s119 = scalar_lea.vmem %s13, 1
    %v120 = vld [vmem:[%s119] sm:$0x1]
    %vm121 = vcmask 261120
    %v122 = vsel %vm121, %v116, 0.0
    %123 = vadd.xlane.f32.xlu0 %v122
    %v124 = vpop.xlane.xlu0 %123
    %v125 = vsel %vm121, %v117, 0.0
    %126 = vadd.xlane.f32.xlu0 %v125
    %v127 = vpop.xlane.xlu0 %126
    %v128 = vrcp.pop 32.0
    %v129 = vmul.f32 %v124, %v128
    %v130 = vmul.f32 %v127, %v128
    %v131 = vsub.f32 %v116, %v129
    %v132 = vsub.f32 %v117, %v130
    %v133 = vmul.f32 %v131, %v131
    %v134 = vmul.f32 %v132, %v132
    %v135 = vsel %vm121, %v133, 0.0
    %136 = vadd.xlane.f32.xlu0 %v135
    %v137 = vpop.xlane.xlu0 %136
    %v138 = vsel %vm121, %v134, 0.0
    %139 = vadd.xlane.f32.xlu0 %v138
    %v140 = vpop.xlane.xlu0 %139
    %v141 = vmul.f32 %v137, 0.032258064
    %v142 = vmul.f32 %v140, 0.032258064
    %v143 = vrsqrt.pop %v141
    %v144 = vmul.f32 %v141, %v143
    %vm145 = vcmp.eq.f32.partialorder %v141, inf
    %v146 = vsel %vm145, %v141, %v144
    %vm147 = vcmp.eq.f32.partialorder %v141, 0.0
    %v148 = vand.u32 %v141, 2147483648
    %v149 = vsel %vm147, %v148, %v146
    %v150 = vrsqrt.pop %v142
    %v151 = vmul.f32 %v142, %v150
    %vm152 = vcmp.eq.f32.partialorder %v142, inf
    %v153 = vsel %vm152, %v142, %v151
    %vm154 = vcmp.eq.f32.partialorder %v142, 0.0
    %v155 = vand.u32 %v142, 2147483648
    %v156 = vsel %vm154, %v155, %v153
    %v157 = vadd.f32 %v149, 1e-06
    %v158 = vadd.f32 %v156, 1e-06
    %v159 = vrcp.pop %v157
    %v160 = vrcp.pop %v158
    %v162 = vlaneseq
    %v163 = vshrl.u32 %v162, 7
    %v164 = vsub.s32 0, %v163
    %v165 = vrot.slane %v118, %v164
    %v167 = vmul.f32 %v165, %v131
    %v168 = vmul.f32 %v165, %v132
    %v169 = vmul.f32 %v167, %v159
    %v170 = vmul.f32 %v168, %v160
    %v172 = vlaneseq
    %v173 = vshrl.u32 %v172, 7
    %v174 = vsub.s32 0, %v173
    %v175 = vrot.slane %v120, %v174
    %v177 = vadd.f32 %v169, %v175
    %v178 = vadd.f32 %v170, %v175
    %v179 = vld [vmem:[%s5] sm:$0xf]
    %v180 = vld [vmem:[%s5 + $0x4] sm:$0xf]
    %v181 = vld [vmem:[%s5 + $0x8] sm:$0xf]
    %v182 = vld [vmem:[%s5 + $0xc] sm:$0xf]
    %v183 = vld [vmem:[%s6] sm:$0x1]
    %v184 = vld [vmem:[%s7] sm:$0xf]
    %v185 = vld [vmem:[%s7 + $0x4] sm:$0xf]
    %v186 = vld [vmem:[%s7 + $0x8] sm:$0xf]
    %v187 = vld [vmem:[%s7 + $0xc] sm:$0xf]
    %v188 = vld [vmem:[%s8] sm:$0x1]
    %v189 = vpack.c.bf16 %v178, %v177
    %v191 = vlaneseq
    %v192 = vshrl.u32 %v191, 7
    %v193 = vsub.s32 0, %v192
    %v194 = vrot.slane %v183, %v193
    %v200 = vunpack.c.l.b16 %v179
    %v201 = vunpack.c.l.b16 %v180
    %v202 = vunpack.c.l.b16 %v181
    %v203 = vunpack.c.l.b16 %v182
    %v204 = vpack.c.b16 %v201, %v200
    %v205 = vpack.c.b16 %v203, %v202
    %v209 = vsel %vm121, %v189, 0
    %211 = vmatprep.subr.bf16.mxu0 0
    %212 = vmatpush1.bf16.msra.mxu0 %v204
    %213 = vmatprep.subr.bf16.mxu0 0
    %214 = vmatpush1.bf16.msra.mxu0 %v205
    %215 = vmatprep.subr.bf16.mxu0 0
    %216 = vmatpush1.bf16.msra.mxu0 0
    %217 = vmatprep.subr.bf16.mxu0 0
    %218 = vmatpush1.bf16.msra.mxu0 0
    %219 = vmatprep.subr.bf16.mxu0 0
    %220 = vmatpush1.bf16.msra.mxu0 0
    %221 = vmatprep.subr.bf16.mxu0 0
    %222 = vmatpush1.bf16.msra.mxu0 0
    %223 = vmatprep.subr.bf16.mxu0 0
    %224 = vmatpush1.bf16.msra.mxu0 0
    %225 = vmatprep.subr.bf16.mxu0 0
    %226 = vmatpush1.bf16.msra.mxu0 0
    %227 = vmatprep.subr.bf16.mxu0 0
    %228 = vmatpush1.bf16.msra.mxu0 0
    %229 = vmatprep.subr.bf16.mxu0 0
    %230 = vmatpush1.bf16.msra.mxu0 0
    %231 = vmatprep.subr.bf16.mxu0 0
    %232 = vmatpush1.bf16.msra.mxu0 0
    %233 = vmatprep.subr.bf16.mxu0 0
    %234 = vmatpush1.bf16.msra.mxu0 0
    %235 = vmatprep.subr.bf16.mxu0 0
    %236 = vmatpush1.bf16.msra.mxu0 0
    %237 = vmatprep.subr.bf16.mxu0 0
    %238 = vmatpush1.bf16.msra.mxu0 0
    %239 = vmatprep.subr.bf16.mxu0 0
    %240 = vmatpush1.bf16.msra.mxu0 0
    %241 = vmatprep.subr.bf16.mxu0 0
    %242 = vmatpush1.bf16.msra.mxu0 0
    %243 = vmatprep.mubr.bf16.mxu0 0
    %244 = vmatmul.mubr.bf16.gmra.mrb[0].mxu0 %v209
    %v245 = vpop.f32.mrb[0].mxu0
    %v246 = vadd.f32 %v194, %v245
    %v247 = vpop.f32.mrb[0].mxu0
    %v248 = vpop.f32.mrb[0].mxu0
    %v249 = vadd.f32 %v194, %v248
    %v250 = vpop.f32.mrb[0].mxu0
    %251 = vdwg.mxu0
    %v252 = vpack.c.bf16 %v249, %v246
    %254 = vrot.lane.b32.xlu0 %v252, 96
    %v255 = vpop.permute.xlu0 %254
    %vm256 = vcmask 64512
    %v258 = vsel %vm256, %v252, 0
    %v261 = vsel %vm256, %v255, 0
    %263 = vmatprep.subr.bf16.mxu0 0
    %264 = vmatpush1.bf16.xpose.msra.mxu0 %v261
    %265 = vmatprep.subr.bf16.mxu0 0
    %266 = vmatpush1.bf16.xpose.msra.mxu0 0
    %267 = vmatprep.subr.bf16.mxu0 0
    %268 = vmatpush1.bf16.xpose.msra.mxu0 0
    %269 = vmatprep.subr.bf16.mxu0 0
    %270 = vmatpush1.bf16.xpose.msra.mxu0 0
    %271 = vmatprep.subr.bf16.mxu0 0
    %272 = vmatpush1.bf16.xpose.msra.mxu0 0
    %273 = vmatprep.subr.bf16.mxu0 0
    %274 = vmatpush1.bf16.xpose.msra.mxu0 0
    %275 = vmatprep.subr.bf16.mxu0 0
    %276 = vmatpush1.bf16.xpose.msra.mxu0 0
    %277 = vmatprep.subr.bf16.mxu0 0
    %278 = vmatpush1.bf16.xpose.msra.mxu0 0
    %279 = vmatprep.subr.bf16.mxu0 0
    %280 = vmatpush1.bf16.xpose.msra.mxu0 0
    %281 = vmatprep.subr.bf16.mxu0 0
    %282 = vmatpush1.bf16.xpose.msra.mxu0 0
    %283 = vmatprep.subr.bf16.mxu0 0
    %284 = vmatpush1.bf16.xpose.msra.mxu0 0
    %285 = vmatprep.subr.bf16.mxu0 0
    %286 = vmatpush1.bf16.xpose.msra.mxu0 0
    %287 = vmatprep.subr.bf16.mxu0 0
    %288 = vmatpush1.bf16.xpose.msra.mxu0 0
    %289 = vmatprep.subr.bf16.mxu0 0
    %290 = vmatpush1.bf16.xpose.msra.mxu0 0
    %291 = vmatprep.subr.bf16.mxu0 0
    %292 = vmatpush1.bf16.xpose.msra.mxu0 0
    %293 = vmatprep.subr.bf16.mxu0 0
    %294 = vmatpush1.bf16.xpose.msra.mxu0 0
    %295 = vmatprep.mubr.bf16.mxu0 0
    %296 = vmatmul.mubr.bf16.gmra.mrb[0].mxu0 %v258
    %v297 = vpop.f32.mrb[0].mxu0
    %v298 = vadd.f32 0.0, %v297
    %v299 = vpop.f32.mrb[0].mxu0
    %v300 = vpop.f32.mrb[0].mxu0
    %v301 = vadd.f32 0.0, %v300
    %v302 = vpop.f32.mrb[0].mxu0
    %303 = vdwg.mxu0
    %v304 = vmul.f32 %v298, 0.35355338
    %v305 = vmul.f32 %v301, 0.35355338
    %v306 = vadd.f32 %v304, %v110
    %v307 = vadd.f32 %v305, %v111
    %vm308 = vcmask 130048
    %v309 = vsel %vm308, %v306, -inf
    %310 = vmax.xlane.f32.xlu0 %v309
    %v311 = vpop.xlane.xlu0 %310
    %v312 = vsel %vm308, %v307, -inf
    %313 = vmax.xlane.f32.xlu0 %v312
    %v314 = vpop.xlane.xlu0 %313
    %v315 = vsub.f32 %v306, %v311
    %v316 = vsub.f32 %v307, %v314
    %v317 = vmul.f32 %v315, 1.442695
    %v318 = vpow.pop %v317
    %v319 = vmul.f32 %v316, 1.442695
    %v320 = vpow.pop %v319
    %v321 = vsel %vm308, %v318, 0.0
    %322 = vadd.xlane.f32.xlu0 %v321
    %v323 = vpop.xlane.xlu0 %322
    %v324 = vsel %vm308, %v320, 0.0
    %325 = vadd.xlane.f32.xlu0 %v324
    %v326 = vpop.xlane.xlu0 %325
    %v327 = vrcp.pop %v323
    %v328 = vrcp.pop %v326
    %v329 = vmul.f32 %v318, %v327
    %v330 = vmul.f32 %v320, %v328
    %v331 = vpack.c.bf16 %v330, %v329
    %332 = vrot.lane.b32.xlu0 %v252, 64
    %v333 = vpop.permute.xlu0 %332
    %v336 = vsel %vm308, %v331, 0
    %338 = vmatprep.subr.bf16.mxu0 0
    %339 = vmatpush1.bf16.msra.mxu0 %v333
    %340 = vmatprep.subr.bf16.mxu0 0
    %341 = vmatpush1.bf16.msra.mxu0 0
    %342 = vmatprep.subr.bf16.mxu0 0
    %343 = vmatpush1.bf16.msra.mxu0 0
    %344 = vmatprep.subr.bf16.mxu0 0
    %345 = vmatpush1.bf16.msra.mxu0 0
    %346 = vmatprep.subr.bf16.mxu0 0
    %347 = vmatpush1.bf16.msra.mxu0 0
    %348 = vmatprep.subr.bf16.mxu0 0
    %349 = vmatpush1.bf16.msra.mxu0 0
    %350 = vmatprep.subr.bf16.mxu0 0
    %351 = vmatpush1.bf16.msra.mxu0 0
    %352 = vmatprep.subr.bf16.mxu0 0
    %353 = vmatpush1.bf16.msra.mxu0 0
    %354 = vmatprep.subr.bf16.mxu0 0
    %355 = vmatpush1.bf16.msra.mxu0 0
    %356 = vmatprep.subr.bf16.mxu0 0
    %357 = vmatpush1.bf16.msra.mxu0 0
    %358 = vmatprep.subr.bf16.mxu0 0
    %359 = vmatpush1.bf16.msra.mxu0 0
    %360 = vmatprep.subr.bf16.mxu0 0
    %361 = vmatpush1.bf16.msra.mxu0 0
    %362 = vmatprep.subr.bf16.mxu0 0
    %363 = vmatpush1.bf16.msra.mxu0 0
    %364 = vmatprep.subr.bf16.mxu0 0
    %365 = vmatpush1.bf16.msra.mxu0 0
    %366 = vmatprep.subr.bf16.mxu0 0
    %367 = vmatpush1.bf16.msra.mxu0 0
    %368 = vmatprep.subr.bf16.mxu0 0
    %369 = vmatpush1.bf16.msra.mxu0 0
    %370 = vmatprep.mubr.bf16.mxu0 0
    %371 = vmatmul.mubr.bf16.gmra.mrb[0].mxu0 %v336
    %v372 = vpop.f32.mrb[0].mxu0
    %v373 = vadd.f32 0.0, %v372
    %v374 = vpop.f32.mrb[0].mxu0
    %v375 = vpop.f32.mrb[0].mxu0
    %v376 = vadd.f32 0.0, %v375
    %v377 = vpop.f32.mrb[0].mxu0
    %378 = vdwg.mxu0
    %v379 = vpack.c.bf16 %v376, %v373
    %v381 = vsel %vm256, %v379, 0
    %vm383 = vcmask 1043456
    %v385 = vsel %vm383, %v184, 0
    %387 = vmatprep.subr.bf16.mxu0 0
    %388 = vmatpush1.bf16.msra.mxu0 %v385
    %389 = vmatprep.subr.bf16.mxu0 0
    %390 = vmatpush1.bf16.msra.mxu0 0
    %391 = vmatprep.subr.bf16.mxu0 0
    %392 = vmatpush1.bf16.msra.mxu0 0
    %393 = vmatprep.subr.bf16.mxu0 0
    %394 = vmatpush1.bf16.msra.mxu0 0
    %395 = vmatprep.subr.bf16.mxu0 0
    %396 = vmatpush1.bf16.msra.mxu0 0
    %397 = vmatprep.subr.bf16.mxu0 0
    %398 = vmatpush1.bf16.msra.mxu0 0
    %399 = vmatprep.subr.bf16.mxu0 0
    %400 = vmatpush1.bf16.msra.mxu0 0
    %401 = vmatprep.subr.bf16.mxu0 0
    %402 = vmatpush1.bf16.msra.mxu0 0
    %403 = vmatprep.subr.bf16.mxu0 0
    %404 = vmatpush1.bf16.msra.mxu0 0
    %405 = vmatprep.subr.bf16.mxu0 0
    %406 = vmatpush1.bf16.msra.mxu0 0
    %407 = vmatprep.subr.bf16.mxu0 0
    %408 = vmatpush1.bf16.msra.mxu0 0
    %409 = vmatprep.subr.bf16.mxu0 0
    %410 = vmatpush1.bf16.msra.mxu0 0
    %411 = vmatprep.subr.bf16.mxu0 0
    %412 = vmatpush1.bf16.msra.mxu0 0
    %413 = vmatprep.subr.bf16.mxu0 0
    %414 = vmatpush1.bf16.msra.mxu0 0
    %415 = vmatprep.subr.bf16.mxu0 0
    %416 = vmatpush1.bf16.msra.mxu0 0
    %417 = vmatprep.subr.bf16.mxu0 0
    %418 = vmatpush1.bf16.msra.mxu0 0
    %419 = vmatprep.mubr.bf16.mxu0 0
    %420 = vmatmul.mubr.bf16.gmra.mrb[0].mxu0 %v381
    %v421 = vpop.f32.mrb[0].mxu0
    %v422 = vadd.f32 0.0, %v421
    %v423 = vpop.f32.mrb[0].mxu0
    %v424 = vpop.f32.mrb[0].mxu0
    %v425 = vadd.f32 0.0, %v424
    %v426 = vpop.f32.mrb[0].mxu0
    %427 = vdwg.mxu0
    %v429 = vlaneseq
    %v430 = vshrl.u32 %v429, 7
    %v431 = vsub.s32 0, %v430
    %v432 = vrot.slane %v188, %v431
    %v434 = vadd.f32 %v432, %v422
    %v435 = vadd.f32 %v432, %v425
    %436 = vrot.lane.b32.xlu0 %v252, 120
    %v437 = vpop.permute.xlu0 %436
    %438 = vrot.lane.b32.xlu0 %v252, 88
    %v439 = vpop.permute.xlu0 %438
    %v441 = vsel %vm256, %v437, 0
    %v444 = vsel %vm256, %v439, 0
    %446 = vmatprep.subr.bf16.mxu0 0
    %447 = vmatpush1.bf16.xpose.msra.mxu0 %v444
    %448 = vmatprep.subr.bf16.mxu0 0
    %449 = vmatpush1.bf16.xpose.msra.mxu0 0
    %450 = vmatprep.subr.bf16.mxu0 0
    %451 = vmatpush1.bf16.xpose.msra.mxu0 0
    %452 = vmatprep.subr.bf16.mxu0 0
    %453 = vmatpush1.bf16.xpose.msra.mxu0 0
    %454 = vmatprep.subr.bf16.mxu0 0
    %455 = vmatpush1.bf16.xpose.msra.mxu0 0
    %456 = vmatprep.subr.bf16.mxu0 0
    %457 = vmatpush1.bf16.xpose.msra.mxu0 0
    %458 = vmatprep.subr.bf16.mxu0 0
    %459 = vmatpush1.bf16.xpose.msra.mxu0 0
    %460 = vmatprep.subr.bf16.mxu0 0
    %461 = vmatpush1.bf16.xpose.msra.mxu0 0
    %462 = vmatprep.subr.bf16.mxu0 0
    %463 = vmatpush1.bf16.xpose.msra.mxu0 0
    %464 = vmatprep.subr.bf16.mxu0 0
    %465 = vmatpush1.bf16.xpose.msra.mxu0 0
    %466 = vmatprep.subr.bf16.mxu0 0
    %467 = vmatpush1.bf16.xpose.msra.mxu0 0
    %468 = vmatprep.subr.bf16.mxu0 0
    %469 = vmatpush1.bf16.xpose.msra.mxu0 0
    %470 = vmatprep.subr.bf16.mxu0 0
    %471 = vmatpush1.bf16.xpose.msra.mxu0 0
    %472 = vmatprep.subr.bf16.mxu0 0
    %473 = vmatpush1.bf16.xpose.msra.mxu0 0
    %474 = vmatprep.subr.bf16.mxu0 0
    %475 = vmatpush1.bf16.xpose.msra.mxu0 0
    %476 = vmatprep.subr.bf16.mxu0 0
    %477 = vmatpush1.bf16.xpose.msra.mxu0 0
    %478 = vmatprep.mubr.bf16.mxu0 0
    %479 = vmatmul.mubr.bf16.gmra.mrb[0].mxu0 %v441
    %v480 = vpop.f32.mrb[0].mxu0
    %v481 = vadd.f32 0.0, %v480
    %v482 = vpop.f32.mrb[0].mxu0
    %v483 = vpop.f32.mrb[0].mxu0
    %v484 = vadd.f32 0.0, %v483
    %v485 = vpop.f32.mrb[0].mxu0
    %486 = vdwg.mxu0
    %v487 = vmul.f32 %v481, 0.35355338
    %v488 = vmul.f32 %v484, 0.35355338
    %v489 = vadd.f32 %v487, %v110
    %v490 = vadd.f32 %v488, %v111
    %v491 = vsel %vm308, %v489, -inf
    %492 = vmax.xlane.f32.xlu0 %v491
    %v493 = vpop.xlane.xlu0 %492
    %v494 = vsel %vm308, %v490, -inf
    %495 = vmax.xlane.f32.xlu0 %v494
    %v496 = vpop.xlane.xlu0 %495
    %v497 = vsub.f32 %v489, %v493
    %v498 = vsub.f32 %v490, %v496
    %v499 = vmul.f32 %v497, 1.442695
    %v500 = vpow.pop %v499
    %v501 = vmul.f32 %v498, 1.442695
    %v502 = vpow.pop %v501
    %v503 = vsel %vm308, %v500, 0.0
    %504 = vadd.xlane.f32.xlu0 %v503
    %v505 = vpop.xlane.xlu0 %504
    %v506 = vsel %vm308, %v502, 0.0
    %507 = vadd.xlane.f32.xlu0 %v506
    %v508 = vpop.xlane.xlu0 %507
    %v509 = vrcp.pop %v505
    %v510 = vrcp.pop %v508
    %v511 = vmul.f32 %v500, %v509
    %v512 = vmul.f32 %v502, %v510
    %v513 = vpack.c.bf16 %v512, %v511
    %514 = vrot.lane.b32.xlu0 %v252, 56
    %v515 = vpop.permute.xlu0 %514
    %v518 = vsel %vm308, %v513, 0
    %520 = vmatprep.subr.bf16.mxu0 0
    %521 = vmatpush1.bf16.msra.mxu0 %v515
    %522 = vmatprep.subr.bf16.mxu0 0
    %523 = vmatpush1.bf16.msra.mxu0 0
    %524 = vmatprep.subr.bf16.mxu0 0
    %525 = vmatpush1.bf16.msra.mxu0 0
    %526 = vmatprep.subr.bf16.mxu0 0
    %527 = vmatpush1.bf16.msra.mxu0 0
    %528 = vmatprep.subr.bf16.mxu0 0
    %529 = vmatpush1.bf16.msra.mxu0 0
    %530 = vmatprep.subr.bf16.mxu0 0
    %531 = vmatpush1.bf16.msra.mxu0 0
    %532 = vmatprep.subr.bf16.mxu0 0
    %533 = vmatpush1.bf16.msra.mxu0 0
    %534 = vmatprep.subr.bf16.mxu0 0
    %535 = vmatpush1.bf16.msra.mxu0 0
    %536 = vmatprep.subr.bf16.mxu0 0
    %537 = vmatpush1.bf16.msra.mxu0 0
    %538 = vmatprep.subr.bf16.mxu0 0
    %539 = vmatpush1.bf16.msra.mxu0 0
    %540 = vmatprep.subr.bf16.mxu0 0
    %541 = vmatpush1.bf16.msra.mxu0 0
    %542 = vmatprep.subr.bf16.mxu0 0
    %543 = vmatpush1.bf16.msra.mxu0 0
    %544 = vmatprep.subr.bf16.mxu0 0
    %545 = vmatpush1.bf16.msra.mxu0 0
    %546 = vmatprep.subr.bf16.mxu0 0
    %547 = vmatpush1.bf16.msra.mxu0 0
    %548 = vmatprep.subr.bf16.mxu0 0
    %549 = vmatpush1.bf16.msra.mxu0 0
    %550 = vmatprep.subr.bf16.mxu0 0
    %551 = vmatpush1.bf16.msra.mxu0 0
    %552 = vmatprep.mubr.bf16.mxu0 0
    %553 = vmatmul.mubr.bf16.gmra.mrb[0].mxu0 %v518
    %v554 = vpop.f32.mrb[0].mxu0
    %v555 = vadd.f32 0.0, %v554
    %v556 = vpop.f32.mrb[0].mxu0
    %v557 = vpop.f32.mrb[0].mxu0
    %v558 = vadd.f32 0.0, %v557
    %v559 = vpop.f32.mrb[0].mxu0
    %560 = vdwg.mxu0
    %v561 = vpack.c.bf16 %v558, %v555
    %v563 = vsel %vm256, %v561, 0
    %v566 = vsel %vm383, %v185, 0
    %568 = vmatprep.subr.bf16.mxu0 0
    %569 = vmatpush1.bf16.msra.mxu0 %v566
    %570 = vmatprep.subr.bf16.mxu0 0
    %571 = vmatpush1.bf16.msra.mxu0 0
    %572 = vmatprep.subr.bf16.mxu0 0
    %573 = vmatpush1.bf16.msra.mxu0 0
    %574 = vmatprep.subr.bf16.mxu0 0
    %575 = vmatpush1.bf16.msra.mxu0 0
    %576 = vmatprep.subr.bf16.mxu0 0
    %577 = vmatpush1.bf16.msra.mxu0 0
    %578 = vmatprep.subr.bf16.mxu0 0
    %579 = vmatpush1.bf16.msra.mxu0 0
    %580 = vmatprep.subr.bf16.mxu0 0
    %581 = vmatpush1.bf16.msra.mxu0 0
    %582 = vmatprep.subr.bf16.mxu0 0
    %583 = vmatpush1.bf16.msra.mxu0 0
    %584 = vmatprep.subr.bf16.mxu0 0
    %585 = vmatpush1.bf16.msra.mxu0 0
    %586 = vmatprep.subr.bf16.mxu0 0
    %587 = vmatpush1.bf16.msra.mxu0 0
    %588 = vmatprep.subr.bf16.mxu0 0
    %589 = vmatpush1.bf16.msra.mxu0 0
    %590 = vmatprep.subr.bf16.mxu0 0
    %591 = vmatpush1.bf16.msra.mxu0 0
    %592 = vmatprep.subr.bf16.mxu0 0
    %593 = vmatpush1.bf16.msra.mxu0 0
    %594 = vmatprep.subr.bf16.mxu0 0
    %595 = vmatpush1.bf16.msra.mxu0 0
    %596 = vmatprep.subr.bf16.mxu0 0
    %597 = vmatpush1.bf16.msra.mxu0 0
    %598 = vmatprep.subr.bf16.mxu0 0
    %599 = vmatpush1.bf16.msra.mxu0 0
    %600 = vmatprep.mubr.bf16.mxu0 0
    %601 = vmatmul.mubr.bf16.gmra.mrb[0].mxu0 %v563
    %v602 = vpop.f32.mrb[0].mxu0
    %v603 = vadd.f32 0.0, %v602
    %v604 = vpop.f32.mrb[0].mxu0
    %v605 = vpop.f32.mrb[0].mxu0
    %v606 = vadd.f32 0.0, %v605
    %v607 = vpop.f32.mrb[0].mxu0
    %608 = vdwg.mxu0
    %v609 = vadd.f32 %v434, %v603
    %v610 = vadd.f32 %v435, %v606
    %611 = vrot.lane.b32.xlu0 %v252, 112
    %v612 = vpop.permute.xlu0 %611
    %613 = vrot.lane.b32.xlu0 %v252, 80
    %v614 = vpop.permute.xlu0 %613
    %v616 = vsel %vm256, %v612, 0
    %v619 = vsel %vm256, %v614, 0
    %621 = vmatprep.subr.bf16.mxu0 0
    %622 = vmatpush1.bf16.xpose.msra.mxu0 %v619
    %623 = vmatprep.subr.bf16.mxu0 0
    %624 = vmatpush1.bf16.xpose.msra.mxu0 0
    %625 = vmatprep.subr.bf16.mxu0 0
    %626 = vmatpush1.bf16.xpose.msra.mxu0 0
    %627 = vmatprep.subr.bf16.mxu0 0
    %628 = vmatpush1.bf16.xpose.msra.mxu0 0
    %629 = vmatprep.subr.bf16.mxu0 0
    %630 = vmatpush1.bf16.xpose.msra.mxu0 0
    %631 = vmatprep.subr.bf16.mxu0 0
    %632 = vmatpush1.bf16.xpose.msra.mxu0 0
    %633 = vmatprep.subr.bf16.mxu0 0
    %634 = vmatpush1.bf16.xpose.msra.mxu0 0
    %635 = vmatprep.subr.bf16.mxu0 0
    %636 = vmatpush1.bf16.xpose.msra.mxu0 0
    %637 = vmatprep.subr.bf16.mxu0 0
    %638 = vmatpush1.bf16.xpose.msra.mxu0 0
    %639 = vmatprep.subr.bf16.mxu0 0
    %640 = vmatpush1.bf16.xpose.msra.mxu0 0
    %641 = vmatprep.subr.bf16.mxu0 0
    %642 = vmatpush1.bf16.xpose.msra.mxu0 0
    %643 = vmatprep.subr.bf16.mxu0 0
    %644 = vmatpush1.bf16.xpose.msra.mxu0 0
    %645 = vmatprep.subr.bf16.mxu0 0
    %646 = vmatpush1.bf16.xpose.msra.mxu0 0
    %647 = vmatprep.subr.bf16.mxu0 0
    %648 = vmatpush1.bf16.xpose.msra.mxu0 0
    %649 = vmatprep.subr.bf16.mxu0 0
    %650 = vmatpush1.bf16.xpose.msra.mxu0 0
    %651 = vmatprep.subr.bf16.mxu0 0
    %652 = vmatpush1.bf16.xpose.msra.mxu0 0
    %653 = vmatprep.mubr.bf16.mxu0 0
    %654 = vmatmul.mubr.bf16.gmra.mrb[0].mxu0 %v616
    %v655 = vpop.f32.mrb[0].mxu0
    %v656 = vadd.f32 0.0, %v655
    %v657 = vpop.f32.mrb[0].mxu0
    %v658 = vpop.f32.mrb[0].mxu0
    %v659 = vadd.f32 0.0, %v658
    %v660 = vpop.f32.mrb[0].mxu0
    %661 = vdwg.mxu0
    %v662 = vmul.f32 %v656, 0.35355338
    %v663 = vmul.f32 %v659, 0.35355338
    %v664 = vadd.f32 %v662, %v110
    %v665 = vadd.f32 %v663, %v111
    %v666 = vsel %vm308, %v664, -inf
    %667 = vmax.xlane.f32.xlu0 %v666
    %v668 = vpop.xlane.xlu0 %667
    %v669 = vsel %vm308, %v665, -inf
    %670 = vmax.xlane.f32.xlu0 %v669
    %v671 = vpop.xlane.xlu0 %670
    %v672 = vsub.f32 %v664, %v668
    %v673 = vsub.f32 %v665, %v671
    %v674 = vmul.f32 %v672, 1.442695
    %v675 = vpow.pop %v674
    %v676 = vmul.f32 %v673, 1.442695
    %v677 = vpow.pop %v676
    %v678 = vsel %vm308, %v675, 0.0
    %679 = vadd.xlane.f32.xlu0 %v678
    %v680 = vpop.xlane.xlu0 %679
    %v681 = vsel %vm308, %v677, 0.0
    %682 = vadd.xlane.f32.xlu0 %v681
    %v683 = vpop.xlane.xlu0 %682
    %v684 = vrcp.pop %v680
    %v685 = vrcp.pop %v683
    %v686 = vmul.f32 %v675, %v684
    %v687 = vmul.f32 %v677, %v685
    %v688 = vpack.c.bf16 %v687, %v686
    %689 = vrot.lane.b32.xlu0 %v252, 48
    %v690 = vpop.permute.xlu0 %689
    %v693 = vsel %vm308, %v688, 0
    %695 = vmatprep.subr.bf16.mxu0 0
    %696 = vmatpush1.bf16.msra.mxu0 %v690
    %697 = vmatprep.subr.bf16.mxu0 0
    %698 = vmatpush1.bf16.msra.mxu0 0
    %699 = vmatprep.subr.bf16.mxu0 0
    %700 = vmatpush1.bf16.msra.mxu0 0
    %701 = vmatprep.subr.bf16.mxu0 0
    %702 = vmatpush1.bf16.msra.mxu0 0
    %703 = vmatprep.subr.bf16.mxu0 0
    %704 = vmatpush1.bf16.msra.mxu0 0
    %705 = vmatprep.subr.bf16.mxu0 0
    %706 = vmatpush1.bf16.msra.mxu0 0
    %707 = vmatprep.subr.bf16.mxu0 0
    %708 = vmatpush1.bf16.msra.mxu0 0
    %709 = vmatprep.subr.bf16.mxu0 0
    %710 = vmatpush1.bf16.msra.mxu0 0
    %711 = vmatprep.subr.bf16.mxu0 0
    %712 = vmatpush1.bf16.msra.mxu0 0
    %713 = vmatprep.subr.bf16.mxu0 0
    %714 = vmatpush1.bf16.msra.mxu0 0
    %715 = vmatprep.subr.bf16.mxu0 0
    %716 = vmatpush1.bf16.msra.mxu0 0
    %717 = vmatprep.subr.bf16.mxu0 0
    %718 = vmatpush1.bf16.msra.mxu0 0
    %719 = vmatprep.subr.bf16.mxu0 0
    %720 = vmatpush1.bf16.msra.mxu0 0
    %721 = vmatprep.subr.bf16.mxu0 0
    %722 = vmatpush1.bf16.msra.mxu0 0
    %723 = vmatprep.subr.bf16.mxu0 0
    %724 = vmatpush1.bf16.msra.mxu0 0
    %725 = vmatprep.subr.bf16.mxu0 0
    %726 = vmatpush1.bf16.msra.mxu0 0
    %727 = vmatprep.mubr.bf16.mxu0 0
    %728 = vmatmul.mubr.bf16.gmra.mrb[0].mxu0 %v693
    %v729 = vpop.f32.mrb[0].mxu0
    %v730 = vadd.f32 0.0, %v729
    %v731 = vpop.f32.mrb[0].mxu0
    %v732 = vpop.f32.mrb[0].mxu0
    %v733 = vadd.f32 0.0, %v732
    %v734 = vpop.f32.mrb[0].mxu0
    %735 = vdwg.mxu0
    %v736 = vpack.c.bf16 %v733, %v730
    %v738 = vsel %vm256, %v736, 0
    %v741 = vsel %vm383, %v186, 0
    %743 = vmatprep.subr.bf16.mxu0 0
    %744 = vmatpush1.bf16.msra.mxu0 %v741
    %745 = vmatprep.subr.bf16.mxu0 0
    %746 = vmatpush1.bf16.msra.mxu0 0
    %747 = vmatprep.subr.bf16.mxu0 0
    %748 = vmatpush1.bf16.msra.mxu0 0
    %749 = vmatprep.subr.bf16.mxu0 0
    %750 = vmatpush1.bf16.msra.mxu0 0
    %751 = vmatprep.subr.bf16.mxu0 0
    %752 = vmatpush1.bf16.msra.mxu0 0
    %753 = vmatprep.subr.bf16.mxu0 0
    %754 = vmatpush1.bf16.msra.mxu0 0
    %755 = vmatprep.subr.bf16.mxu0 0
    %756 = vmatpush1.bf16.msra.mxu0 0
    %757 = vmatprep.subr.bf16.mxu0 0
    %758 = vmatpush1.bf16.msra.mxu0 0
    %759 = vmatprep.subr.bf16.mxu0 0
    %760 = vmatpush1.bf16.msra.mxu0 0
    %761 = vmatprep.subr.bf16.mxu0 0
    %762 = vmatpush1.bf16.msra.mxu0 0
    %763 = vmatprep.subr.bf16.mxu0 0
    %764 = vmatpush1.bf16.msra.mxu0 0
    %765 = vmatprep.subr.bf16.mxu0 0
    %766 = vmatpush1.bf16.msra.mxu0 0
    %767 = vmatprep.subr.bf16.mxu0 0
    %768 = vmatpush1.bf16.msra.mxu0 0
    %769 = vmatprep.subr.bf16.mxu0 0
    %770 = vmatpush1.bf16.msra.mxu0 0
    %771 = vmatprep.subr.bf16.mxu0 0
    %772 = vmatpush1.bf16.msra.mxu0 0
    %773 = vmatprep.subr.bf16.mxu0 0
    %774 = vmatpush1.bf16.msra.mxu0 0
    %775 = vmatprep.mubr.bf16.mxu0 0
    %776 = vmatmul.mubr.bf16.gmra.mrb[0].mxu0 %v738
    %v777 = vpop.f32.mrb[0].mxu0
    %v778 = vadd.f32 0.0, %v777
    %v779 = vpop.f32.mrb[0].mxu0
    %v780 = vpop.f32.mrb[0].mxu0
    %v781 = vadd.f32 0.0, %v780
    %v782 = vpop.f32.mrb[0].mxu0
    %783 = vdwg.mxu0
    %v784 = vadd.f32 %v609, %v778
    %v785 = vadd.f32 %v610, %v781
    %786 = vrot.lane.b32.xlu0 %v252, 104
    %v787 = vpop.permute.xlu0 %786
    %788 = vrot.lane.b32.xlu0 %v252, 72
    %v789 = vpop.permute.xlu0 %788
    %v791 = vsel %vm256, %v787, 0
    %v794 = vsel %vm256, %v789, 0
    %796 = vmatprep.subr.bf16.mxu0 0
    %797 = vmatpush1.bf16.xpose.msra.mxu0 %v794
    %798 = vmatprep.subr.bf16.mxu0 0
    %799 = vmatpush1.bf16.xpose.msra.mxu0 0
    %800 = vmatprep.subr.bf16.mxu0 0
    %801 = vmatpush1.bf16.xpose.msra.mxu0 0
    %802 = vmatprep.subr.bf16.mxu0 0
    %803 = vmatpush1.bf16.xpose.msra.mxu0 0
    %804 = vmatprep.subr.bf16.mxu0 0
    %805 = vmatpush1.bf16.xpose.msra.mxu0 0
    %806 = vmatprep.subr.bf16.mxu0 0
    %807 = vmatpush1.bf16.xpose.msra.mxu0 0
    %808 = vmatprep.subr.bf16.mxu0 0
    %809 = vmatpush1.bf16.xpose.msra.mxu0 0
    %810 = vmatprep.subr.bf16.mxu0 0
    %811 = vmatpush1.bf16.xpose.msra.mxu0 0
    %812 = vmatprep.subr.bf16.mxu0 0
    %813 = vmatpush1.bf16.xpose.msra.mxu0 0
    %814 = vmatprep.subr.bf16.mxu0 0
    %815 = vmatpush1.bf16.xpose.msra.mxu0 0
    %816 = vmatprep.subr.bf16.mxu0 0
    %817 = vmatpush1.bf16.xpose.msra.mxu0 0
    %818 = vmatprep.subr.bf16.mxu0 0
    %819 = vmatpush1.bf16.xpose.msra.mxu0 0
    %820 = vmatprep.subr.bf16.mxu0 0
    %821 = vmatpush1.bf16.xpose.msra.mxu0 0
    %822 = vmatprep.subr.bf16.mxu0 0
    %823 = vmatpush1.bf16.xpose.msra.mxu0 0
    %824 = vmatprep.subr.bf16.mxu0 0
    %825 = vmatpush1.bf16.xpose.msra.mxu0 0
    %826 = vmatprep.subr.bf16.mxu0 0
    %827 = vmatpush1.bf16.xpose.msra.mxu0 0
    %828 = vmatprep.mubr.bf16.mxu0 0
    %829 = vmatmul.mubr.bf16.gmra.mrb[0].mxu0 %v791
    %v830 = vpop.f32.mrb[0].mxu0
    %v831 = vadd.f32 0.0, %v830
    %v832 = vpop.f32.mrb[0].mxu0
    %v833 = vpop.f32.mrb[0].mxu0
    %v834 = vadd.f32 0.0, %v833
    %v835 = vpop.f32.mrb[0].mxu0
    %836 = vdwg.mxu0
    %v837 = vmul.f32 %v831, 0.35355338
    %v838 = vmul.f32 %v834, 0.35355338
    %v839 = vadd.f32 %v837, %v110
    %v840 = vadd.f32 %v838, %v111
    %v841 = vsel %vm308, %v839, -inf
    %842 = vmax.xlane.f32.xlu0 %v841
    %v843 = vpop.xlane.xlu0 %842
    %v844 = vsel %vm308, %v840, -inf
    %845 = vmax.xlane.f32.xlu0 %v844
    %v846 = vpop.xlane.xlu0 %845
    %v847 = vsub.f32 %v839, %v843
    %v848 = vsub.f32 %v840, %v846
    %v849 = vmul.f32 %v847, 1.442695
    %v850 = vpow.pop %v849
    %v851 = vmul.f32 %v848, 1.442695
    %v852 = vpow.pop %v851
    %v853 = vsel %vm308, %v850, 0.0
    %854 = vadd.xlane.f32.xlu0 %v853
    %v855 = vpop.xlane.xlu0 %854
    %v856 = vsel %vm308, %v852, 0.0
    %857 = vadd.xlane.f32.xlu0 %v856
    %v858 = vpop.xlane.xlu0 %857
    %v859 = vrcp.pop %v855
    %v860 = vrcp.pop %v858
    %v861 = vmul.f32 %v850, %v859
    %v862 = vmul.f32 %v852, %v860
    %v863 = vpack.c.bf16 %v862, %v861
    %864 = vrot.lane.b32.xlu0 %v252, 40
    %v865 = vpop.permute.xlu0 %864
    %v868 = vsel %vm308, %v863, 0
    %870 = vmatprep.subr.bf16.mxu0 0
    %871 = vmatpush1.bf16.msra.mxu0 %v865
    %872 = vmatprep.subr.bf16.mxu0 0
    %873 = vmatpush1.bf16.msra.mxu0 0
    %874 = vmatprep.subr.bf16.mxu0 0
    %875 = vmatpush1.bf16.msra.mxu0 0
    %876 = vmatprep.subr.bf16.mxu0 0
    %877 = vmatpush1.bf16.msra.mxu0 0
    %878 = vmatprep.subr.bf16.mxu0 0
    %879 = vmatpush1.bf16.msra.mxu0 0
    %880 = vmatprep.subr.bf16.mxu0 0
    %881 = vmatpush1.bf16.msra.mxu0 0
    %882 = vmatprep.subr.bf16.mxu0 0
    %883 = vmatpush1.bf16.msra.mxu0 0
    %884 = vmatprep.subr.bf16.mxu0 0
    %885 = vmatpush1.bf16.msra.mxu0 0
    %886 = vmatprep.subr.bf16.mxu0 0
    %887 = vmatpush1.bf16.msra.mxu0 0
    %888 = vmatprep.subr.bf16.mxu0 0
    %889 = vmatpush1.bf16.msra.mxu0 0
    %890 = vmatprep.subr.bf16.mxu0 0
    %891 = vmatpush1.bf16.msra.mxu0 0
    %892 = vmatprep.subr.bf16.mxu0 0
    %893 = vmatpush1.bf16.msra.mxu0 0
    %894 = vmatprep.subr.bf16.mxu0 0
    %895 = vmatpush1.bf16.msra.mxu0 0
    %896 = vmatprep.subr.bf16.mxu0 0
    %897 = vmatpush1.bf16.msra.mxu0 0
    %898 = vmatprep.subr.bf16.mxu0 0
    %899 = vmatpush1.bf16.msra.mxu0 0
    %900 = vmatprep.subr.bf16.mxu0 0
    %901 = vmatpush1.bf16.msra.mxu0 0
    %902 = vmatprep.mubr.bf16.mxu0 0
    %903 = vmatmul.mubr.bf16.gmra.mrb[0].mxu0 %v868
    %v904 = vpop.f32.mrb[0].mxu0
    %v905 = vadd.f32 0.0, %v904
    %v906 = vpop.f32.mrb[0].mxu0
    %v907 = vpop.f32.mrb[0].mxu0
    %v908 = vadd.f32 0.0, %v907
    %v909 = vpop.f32.mrb[0].mxu0
    %910 = vdwg.mxu0
    %v911 = vpack.c.bf16 %v908, %v905
    %v913 = vsel %vm256, %v911, 0
    %v916 = vsel %vm383, %v187, 0
    %918 = vmatprep.subr.bf16.mxu0 0
    %919 = vmatpush1.bf16.msra.mxu0 %v916
    %920 = vmatprep.subr.bf16.mxu0 0
    %921 = vmatpush1.bf16.msra.mxu0 0
    %922 = vmatprep.subr.bf16.mxu0 0
    %923 = vmatpush1.bf16.msra.mxu0 0
    %924 = vmatprep.subr.bf16.mxu0 0
    %925 = vmatpush1.bf16.msra.mxu0 0
    %926 = vmatprep.subr.bf16.mxu0 0
    %927 = vmatpush1.bf16.msra.mxu0 0
    %928 = vmatprep.subr.bf16.mxu0 0
    %929 = vmatpush1.bf16.msra.mxu0 0
    %930 = vmatprep.subr.bf16.mxu0 0
    %931 = vmatpush1.bf16.msra.mxu0 0
    %932 = vmatprep.subr.bf16.mxu0 0
    %933 = vmatpush1.bf16.msra.mxu0 0
    %934 = vmatprep.subr.bf16.mxu0 0
    %935 = vmatpush1.bf16.msra.mxu0 0
    %936 = vmatprep.subr.bf16.mxu0 0
    %937 = vmatpush1.bf16.msra.mxu0 0
    %938 = vmatprep.subr.bf16.mxu0 0
    %939 = vmatpush1.bf16.msra.mxu0 0
    %940 = vmatprep.subr.bf16.mxu0 0
    %941 = vmatpush1.bf16.msra.mxu0 0
    %942 = vmatprep.subr.bf16.mxu0 0
    %943 = vmatpush1.bf16.msra.mxu0 0
    %944 = vmatprep.subr.bf16.mxu0 0
    %945 = vmatpush1.bf16.msra.mxu0 0
    %946 = vmatprep.subr.bf16.mxu0 0
    %947 = vmatpush1.bf16.msra.mxu0 0
    %948 = vmatprep.subr.bf16.mxu0 0
    %949 = vmatpush1.bf16.msra.mxu0 0
    %950 = vmatprep.mubr.bf16.mxu0 0
    %951 = vmatmul.mubr.bf16.gmra.mrb[0].mxu0 %v913
    %v952 = vpop.f32.mrb[0].mxu0
    %v953 = vadd.f32 0.0, %v952
    %v954 = vpop.f32.mrb[0].mxu0
    %v955 = vpop.f32.mrb[0].mxu0
    %v956 = vadd.f32 0.0, %v955
    %v957 = vpop.f32.mrb[0].mxu0
    %958 = vdwg.mxu0
    %v959 = vadd.f32 %v784, %v953
    %v960 = vadd.f32 %v785, %v956
    %v961 = vadd.f32 %v116, %v959
    %v962 = vadd.f32 %v117, %v960
    %s963 = scalar_lea.vmem %s13, 2
    %v964 = vld [vmem:[%s963] sm:$0x1]
    %s965 = scalar_lea.vmem %s13, 3
    %v966 = vld [vmem:[%s965] sm:$0x1]
    %v967 = vsel %vm121, %v961, 0.0
    %968 = vadd.xlane.f32.xlu0 %v967
    %v969 = vpop.xlane.xlu0 %968
    %v970 = vsel %vm121, %v962, 0.0
    %971 = vadd.xlane.f32.xlu0 %v970
    %v972 = vpop.xlane.xlu0 %971
    %v973 = vmul.f32 %v969, %v128
    %v974 = vmul.f32 %v972, %v128
    %v975 = vsub.f32 %v961, %v973
    %v976 = vsub.f32 %v962, %v974
    %v977 = vmul.f32 %v975, %v975
    %v978 = vmul.f32 %v976, %v976
    %v979 = vsel %vm121, %v977, 0.0
    %980 = vadd.xlane.f32.xlu0 %v979
    %v981 = vpop.xlane.xlu0 %980
    %v982 = vsel %vm121, %v978, 0.0
    %983 = vadd.xlane.f32.xlu0 %v982
    %v984 = vpop.xlane.xlu0 %983
    %v985 = vmul.f32 %v981, 0.032258064
    %v986 = vmul.f32 %v984, 0.032258064
    %v987 = vrsqrt.pop %v985
    %v988 = vmul.f32 %v985, %v987
    %vm989 = vcmp.eq.f32.partialorder %v985, inf
    %v990 = vsel %vm989, %v985, %v988
    %vm991 = vcmp.eq.f32.partialorder %v985, 0.0
    %v992 = vand.u32 %v985, 2147483648
    %v993 = vsel %vm991, %v992, %v990
    %v994 = vrsqrt.pop %v986
    %v995 = vmul.f32 %v986, %v994
    %vm996 = vcmp.eq.f32.partialorder %v986, inf
    %v997 = vsel %vm996, %v986, %v995
    %vm998 = vcmp.eq.f32.partialorder %v986, 0.0
    %v999 = vand.u32 %v986, 2147483648
    %v1000 = vsel %vm998, %v999, %v997
    %v1001 = vadd.f32 %v993, 1e-06
    %v1002 = vadd.f32 %v1000, 1e-06
    %v1003 = vrcp.pop %v1001
    %v1004 = vrcp.pop %v1002
    %v1006 = vlaneseq
    %v1007 = vshrl.u32 %v1006, 7
    %v1008 = vsub.s32 0, %v1007
    %v1009 = vrot.slane %v964, %v1008
    %v1011 = vmul.f32 %v1009, %v975
    %v1012 = vmul.f32 %v1009, %v976
    %v1013 = vmul.f32 %v1011, %v1003
    %v1014 = vmul.f32 %v1012, %v1004
    %v1016 = vlaneseq
    %v1017 = vshrl.u32 %v1016, 7
    %v1018 = vsub.s32 0, %v1017
    %v1019 = vrot.slane %v966, %v1018
    %v1021 = vadd.f32 %v1013, %v1019
    %v1022 = vadd.f32 %v1014, %v1019
    %v1023 = vld [vmem:[%s9] sm:$0xf]
    %v1024 = vld [vmem:[%s9 + $0x4] sm:$0xf]
    %v1025 = vld [vmem:[%s9 + $0x8] sm:$0xf]
    %v1026 = vld [vmem:[%s9 + $0xc] sm:$0xf]
    %v1027 = vld [vmem:[%s10] sm:$0x1]
    %v1028 = vld [vmem:[%s11] sm:$0xf]
    %v1029 = vld [vmem:[%s11 + $0x4] sm:$0xf]
    %v1030 = vld [vmem:[%s11 + $0x8] sm:$0xf]
    %v1031 = vld [vmem:[%s11 + $0xc] sm:$0xf]
    %v1032 = vld [vmem:[%s11 + $0x10] sm:$0xf]
    %v1033 = vld [vmem:[%s11 + $0x14] sm:$0xf]
    %v1034 = vld [vmem:[%s11 + $0x18] sm:$0xf]
    %v1035 = vld [vmem:[%s11 + $0x1c] sm:$0xf]
    %v1036 = vld [vmem:[%s12] sm:$0x1]
    %v1037 = vpack.c.bf16 %v1022, %v1021
    %v1039 = vlaneseq
    %v1040 = vshrl.u32 %v1039, 7
    %v1041 = vsub.s32 0, %v1040
    %v1042 = vrot.slane %v1027, %v1041
    %v1048 = vunpack.c.l.b16 %v1023
    %v1049 = vunpack.c.l.b16 %v1024
    %v1050 = vunpack.c.l.b16 %v1025
    %v1051 = vunpack.c.l.b16 %v1026
    %v1052 = vpack.c.b16 %v1049, %v1048
    %v1053 = vpack.c.b16 %v1051, %v1050
    %v1057 = vsel %vm121, %v1037, 0
    %1059 = vmatprep.subr.bf16.mxu0 0
    %1060 = vmatpush1.bf16.msra.mxu0 %v1052
    %1061 = vmatprep.subr.bf16.mxu0 0
    %1062 = vmatpush1.bf16.msra.mxu0 %v1053
    %1063 = vmatprep.subr.bf16.mxu0 0
    %1064 = vmatpush1.bf16.msra.mxu0 0
    %1065 = vmatprep.subr.bf16.mxu0 0
    %1066 = vmatpush1.bf16.msra.mxu0 0
    %1067 = vmatprep.subr.bf16.mxu0 0
    %1068 = vmatpush1.bf16.msra.mxu0 0
    %1069 = vmatprep.subr.bf16.mxu0 0
    %1070 = vmatpush1.bf16.msra.mxu0 0
    %1071 = vmatprep.subr.bf16.mxu0 0
    %1072 = vmatpush1.bf16.msra.mxu0 0
    %1073 = vmatprep.subr.bf16.mxu0 0
    %1074 = vmatpush1.bf16.msra.mxu0 0
    %1075 = vmatprep.subr.bf16.mxu0 0
    %1076 = vmatpush1.bf16.msra.mxu0 0
    %1077 = vmatprep.subr.bf16.mxu0 0
    %1078 = vmatpush1.bf16.msra.mxu0 0
    %1079 = vmatprep.subr.bf16.mxu0 0
    %1080 = vmatpush1.bf16.msra.mxu0 0
    %1081 = vmatprep.subr.bf16.mxu0 0
    %1082 = vmatpush1.bf16.msra.mxu0 0
    %1083 = vmatprep.subr.bf16.mxu0 0
    %1084 = vmatpush1.bf16.msra.mxu0 0
    %1085 = vmatprep.subr.bf16.mxu0 0
    %1086 = vmatpush1.bf16.msra.mxu0 0
    %1087 = vmatprep.subr.bf16.mxu0 0
    %1088 = vmatpush1.bf16.msra.mxu0 0
    %1089 = vmatprep.subr.bf16.mxu0 0
    %1090 = vmatpush1.bf16.msra.mxu0 0
    %1091 = vmatprep.mubr.bf16.mxu0 0
    %1092 = vmatmul.mubr.bf16.gmra.mrb[0].mxu0 %v1057
    %v1093 = vpop.f32.mrb[0].mxu0
    %v1094 = vadd.f32 %v1042, %v1093
    %v1095 = vpop.f32.mrb[0].mxu0
    %v1096 = vpop.f32.mrb[0].mxu0
    %v1097 = vadd.f32 %v1042, %v1096
    %v1098 = vpop.f32.mrb[0].mxu0
    %1099 = vdwg.mxu0
    %v1100 = vmax.f32 %v1094, 0.0
    %v1101 = vmax.f32 %v1097, 0.0
    %v1102 = vpack.c.bf16 %v1101, %v1100
    %v1104 = vlaneseq
    %v1105 = vshrl.u32 %v1104, 7
    %v1106 = vsub.s32 0, %v1105
    %v1107 = vrot.slane %v1036, %v1106
    %v1117 = vunpack.c.l.b16 %v1028
    %v1118 = vunpack.c.l.b16 %v1029
    %v1119 = vunpack.c.l.b16 %v1030
    %v1120 = vunpack.c.l.b16 %v1031
    %v1121 = vunpack.c.l.b16 %v1032
    %v1122 = vunpack.c.l.b16 %v1033
    %v1123 = vunpack.c.l.b16 %v1034
    %v1124 = vunpack.c.l.b16 %v1035
    %v1125 = vpack.c.b16 %v1118, %v1117
    %v1126 = vpack.c.b16 %v1120, %v1119
    %v1127 = vpack.c.b16 %v1122, %v1121
    %v1128 = vpack.c.b16 %v1124, %v1123
    %vm1133 = vcmask 523264
    %v1135 = vsel %vm1133, %v1102, 0
    %1137 = vmatprep.subr.bf16.mxu0 0
    %1138 = vmatpush1.bf16.msra.mxu0 %v1125
    %1139 = vmatprep.subr.bf16.mxu0 0
    %1140 = vmatpush1.bf16.msra.mxu0 %v1126
    %1141 = vmatprep.subr.bf16.mxu0 0
    %1142 = vmatpush1.bf16.msra.mxu0 %v1127
    %1143 = vmatprep.subr.bf16.mxu0 0
    %1144 = vmatpush1.bf16.msra.mxu0 %v1128
    %1145 = vmatprep.subr.bf16.mxu0 0
    %1146 = vmatpush1.bf16.msra.mxu0 0
    %1147 = vmatprep.subr.bf16.mxu0 0
    %1148 = vmatpush1.bf16.msra.mxu0 0
    %1149 = vmatprep.subr.bf16.mxu0 0
    %1150 = vmatpush1.bf16.msra.mxu0 0
    %1151 = vmatprep.subr.bf16.mxu0 0
    %1152 = vmatpush1.bf16.msra.mxu0 0
    %1153 = vmatprep.subr.bf16.mxu0 0
    %1154 = vmatpush1.bf16.msra.mxu0 0
    %1155 = vmatprep.subr.bf16.mxu0 0
    %1156 = vmatpush1.bf16.msra.mxu0 0
    %1157 = vmatprep.subr.bf16.mxu0 0
    %1158 = vmatpush1.bf16.msra.mxu0 0
    %1159 = vmatprep.subr.bf16.mxu0 0
    %1160 = vmatpush1.bf16.msra.mxu0 0
    %1161 = vmatprep.subr.bf16.mxu0 0
    %1162 = vmatpush1.bf16.msra.mxu0 0
    %1163 = vmatprep.subr.bf16.mxu0 0
    %1164 = vmatpush1.bf16.msra.mxu0 0
    %1165 = vmatprep.subr.bf16.mxu0 0
    %1166 = vmatpush1.bf16.msra.mxu0 0
    %1167 = vmatprep.subr.bf16.mxu0 0
    %1168 = vmatpush1.bf16.msra.mxu0 0
    %1169 = vmatprep.mubr.bf16.mxu0 0
    %1170 = vmatmul.mubr.bf16.gmra.mrb[0].mxu0 %v1135
    %v1171 = vpop.f32.mrb[0].mxu0
    %v1172 = vadd.f32 %v1107, %v1171
    %v1173 = vpop.f32.mrb[0].mxu0
    %v1174 = vpop.f32.mrb[0].mxu0
    %v1175 = vadd.f32 %v1107, %v1174
    %v1176 = vpop.f32.mrb[0].mxu0
    %1177 = vdwg.mxu0
    %v1178 = vadd.f32 %v961, %v1172
    %v1179 = vadd.f32 %v962, %v1175
    %s1180 = scalar_lea.vmem %s13, 4
    %v1181 = vld [vmem:[%s1180] sm:$0x1]
    %s1182 = scalar_lea.vmem %s13, 5
    %v1183 = vld [vmem:[%s1182] sm:$0x1]
    %v1184 = vsel %vm121, %v1178, 0.0
    %1185 = vadd.xlane.f32.xlu0 %v1184
    %v1186 = vpop.xlane.xlu0 %1185
    %v1187 = vsel %vm121, %v1179, 0.0
    %1188 = vadd.xlane.f32.xlu0 %v1187
    %v1189 = vpop.xlane.xlu0 %1188
    %v1190 = vmul.f32 %v1186, %v128
    %v1191 = vmul.f32 %v1189, %v128
    %v1192 = vsub.f32 %v1178, %v1190
    %v1193 = vsub.f32 %v1179, %v1191
    %v1194 = vmul.f32 %v1192, %v1192
    %v1195 = vmul.f32 %v1193, %v1193
    %v1196 = vsel %vm121, %v1194, 0.0
    %1197 = vadd.xlane.f32.xlu0 %v1196
    %v1198 = vpop.xlane.xlu0 %1197
    %v1199 = vsel %vm121, %v1195, 0.0
    %1200 = vadd.xlane.f32.xlu0 %v1199
    %v1201 = vpop.xlane.xlu0 %1200
    %v1202 = vmul.f32 %v1198, 0.032258064
    %v1203 = vmul.f32 %v1201, 0.032258064
    %v1204 = vrsqrt.pop %v1202
    %v1205 = vmul.f32 %v1202, %v1204
    %vm1206 = vcmp.eq.f32.partialorder %v1202, inf
    %v1207 = vsel %vm1206, %v1202, %v1205
    %vm1208 = vcmp.eq.f32.partialorder %v1202, 0.0
    %v1209 = vand.u32 %v1202, 2147483648
    %v1210 = vsel %vm1208, %v1209, %v1207
    %v1211 = vrsqrt.pop %v1203
    %v1212 = vmul.f32 %v1203, %v1211
    %vm1213 = vcmp.eq.f32.partialorder %v1203, inf
    %v1214 = vsel %vm1213, %v1203, %v1212
    %vm1215 = vcmp.eq.f32.partialorder %v1203, 0.0
    %v1216 = vand.u32 %v1203, 2147483648
    %v1217 = vsel %vm1215, %v1216, %v1214
    %v1218 = vadd.f32 %v1210, 1e-06
    %v1219 = vadd.f32 %v1217, 1e-06
    %v1220 = vrcp.pop %v1218
    %v1221 = vrcp.pop %v1219
    %v1223 = vlaneseq
    %v1224 = vshrl.u32 %v1223, 7
    %v1225 = vsub.s32 0, %v1224
    %v1226 = vrot.slane %v1181, %v1225
    %v1228 = vmul.f32 %v1226, %v1192
    %v1229 = vmul.f32 %v1226, %v1193
    %v1230 = vmul.f32 %v1228, %v1220
    %v1231 = vmul.f32 %v1229, %v1221
    %v1233 = vlaneseq
    %v1234 = vshrl.u32 %v1233, 7
    %v1235 = vsub.s32 0, %v1234
    %v1236 = vrot.slane %v1183, %v1235
    %v1238 = vadd.f32 %v1230, %v1236
    %v1239 = vadd.f32 %v1231, %v1236
    %s1240 = scalar_lea.vmem %s5, 16
    %v1241 = vld [vmem:[%s1240] sm:$0xf]
    %v1242 = vld [vmem:[%s1240 + $0x4] sm:$0xf]
    %v1243 = vld [vmem:[%s1240 + $0x8] sm:$0xf]
    %v1244 = vld [vmem:[%s1240 + $0xc] sm:$0xf]
    %s1245 = scalar_lea.vmem %s6, 1
    %v1246 = vld [vmem:[%s1245] sm:$0x1]
    %s1247 = scalar_lea.vmem %s7, 16
    %v1248 = vld [vmem:[%s1247] sm:$0xf]
    %v1249 = vld [vmem:[%s1247 + $0x4] sm:$0xf]
    %v1250 = vld [vmem:[%s1247 + $0x8] sm:$0xf]
    %v1251 = vld [vmem:[%s1247 + $0xc] sm:$0xf]
    %s1252 = scalar_lea.vmem %s8, 1
    %v1253 = vld [vmem:[%s1252] sm:$0x1]
    %v1254 = vpack.c.bf16 %v1239, %v1238
    %v1256 = vlaneseq
    %v1257 = vshrl.u32 %v1256, 7
    %v1258 = vsub.s32 0, %v1257
    %v1259 = vrot.slane %v1246, %v1258
    %v1265 = vunpack.c.l.b16 %v1241
    %v1266 = vunpack.c.l.b16 %v1242
    %v1267 = vunpack.c.l.b16 %v1243
    %v1268 = vunpack.c.l.b16 %v1244
    %v1269 = vpack.c.b16 %v1266, %v1265
    %v1270 = vpack.c.b16 %v1268, %v1267
    %v1274 = vsel %vm121, %v1254, 0
    %1276 = vmatprep.subr.bf16.mxu0 0
    %1277 = vmatpush1.bf16.msra.mxu0 %v1269
    %1278 = vmatprep.subr.bf16.mxu0 0
    %1279 = vmatpush1.bf16.msra.mxu0 %v1270
    %1280 = vmatprep.subr.bf16.mxu0 0
    %1281 = vmatpush1.bf16.msra.mxu0 0
    %1282 = vmatprep.subr.bf16.mxu0 0
    %1283 = vmatpush1.bf16.msra.mxu0 0
    %1284 = vmatprep.subr.bf16.mxu0 0
    %1285 = vmatpush1.bf16.msra.mxu0 0
    %1286 = vmatprep.subr.bf16.mxu0 0
    %1287 = vmatpush1.bf16.msra.mxu0 0
    %1288 = vmatprep.subr.bf16.mxu0 0
    %1289 = vmatpush1.bf16.msra.mxu0 0
    %1290 = vmatprep.subr.bf16.mxu0 0
    %1291 = vmatpush1.bf16.msra.mxu0 0
    %1292 = vmatprep.subr.bf16.mxu0 0
    %1293 = vmatpush1.bf16.msra.mxu0 0
    %1294 = vmatprep.subr.bf16.mxu0 0
    %1295 = vmatpush1.bf16.msra.mxu0 0
    %1296 = vmatprep.subr.bf16.mxu0 0
    %1297 = vmatpush1.bf16.msra.mxu0 0
    %1298 = vmatprep.subr.bf16.mxu0 0
    %1299 = vmatpush1.bf16.msra.mxu0 0
    %1300 = vmatprep.subr.bf16.mxu0 0
    %1301 = vmatpush1.bf16.msra.mxu0 0
    %1302 = vmatprep.subr.bf16.mxu0 0
    %1303 = vmatpush1.bf16.msra.mxu0 0
    %1304 = vmatprep.subr.bf16.mxu0 0
    %1305 = vmatpush1.bf16.msra.mxu0 0
    %1306 = vmatprep.subr.bf16.mxu0 0
    %1307 = vmatpush1.bf16.msra.mxu0 0
    %1308 = vmatprep.mubr.bf16.mxu0 0
    %1309 = vmatmul.mubr.bf16.gmra.mrb[0].mxu0 %v1274
    %v1310 = vpop.f32.mrb[0].mxu0
    %v1311 = vadd.f32 %v1259, %v1310
    %v1312 = vpop.f32.mrb[0].mxu0
    %v1313 = vpop.f32.mrb[0].mxu0
    %v1314 = vadd.f32 %v1259, %v1313
    %v1315 = vpop.f32.mrb[0].mxu0
    %1316 = vdwg.mxu0
    %v1317 = vpack.c.bf16 %v1314, %v1311
    %1319 = vrot.lane.b32.xlu0 %v1317, 96
    %v1320 = vpop.permute.xlu0 %1319
    %v1322 = vsel %vm256, %v1317, 0
    %v1325 = vsel %vm256, %v1320, 0
    %1327 = vmatprep.subr.bf16.mxu0 0
    %1328 = vmatpush1.bf16.xpose.msra.mxu0 %v1325
    %1329 = vmatprep.subr.bf16.mxu0 0
    %1330 = vmatpush1.bf16.xpose.msra.mxu0 0
    %1331 = vmatprep.subr.bf16.mxu0 0
    %1332 = vmatpush1.bf16.xpose.msra.mxu0 0
    %1333 = vmatprep.subr.bf16.mxu0 0
    %1334 = vmatpush1.bf16.xpose.msra.mxu0 0
    %1335 = vmatprep.subr.bf16.mxu0 0
    %1336 = vmatpush1.bf16.xpose.msra.mxu0 0
    %1337 = vmatprep.subr.bf16.mxu0 0
    %1338 = vmatpush1.bf16.xpose.msra.mxu0 0
    %1339 = vmatprep.subr.bf16.mxu0 0
    %1340 = vmatpush1.bf16.xpose.msra.mxu0 0
    %1341 = vmatprep.subr.bf16.mxu0 0
    %1342 = vmatpush1.bf16.xpose.msra.mxu0 0
    %1343 = vmatprep.subr.bf16.mxu0 0
    %1344 = vmatpush1.bf16.xpose.msra.mxu0 0
    %1345 = vmatprep.subr.bf16.mxu0 0
    %1346 = vmatpush1.bf16.xpose.msra.mxu0 0
    %1347 = vmatprep.subr.bf16.mxu0 0
    %1348 = vmatpush1.bf16.xpose.msra.mxu0 0
    %1349 = vmatprep.subr.bf16.mxu0 0
    %1350 = vmatpush1.bf16.xpose.msra.mxu0 0
    %1351 = vmatprep.subr.bf16.mxu0 0
    %1352 = vmatpush1.bf16.xpose.msra.mxu0 0
    %1353 = vmatprep.subr.bf16.mxu0 0
    %1354 = vmatpush1.bf16.xpose.msra.mxu0 0
    %1355 = vmatprep.subr.bf16.mxu0 0
    %1356 = vmatpush1.bf16.xpose.msra.mxu0 0
    %1357 = vmatprep.subr.bf16.mxu0 0
    %1358 = vmatpush1.bf16.xpose.msra.mxu0 0
    %1359 = vmatprep.mubr.bf16.mxu0 0
    %1360 = vmatmul.mubr.bf16.gmra.mrb[0].mxu0 %v1322
    %v1361 = vpop.f32.mrb[0].mxu0
    %v1362 = vadd.f32 0.0, %v1361
    %v1363 = vpop.f32.mrb[0].mxu0
    %v1364 = vpop.f32.mrb[0].mxu0
    %v1365 = vadd.f32 0.0, %v1364
    %v1366 = vpop.f32.mrb[0].mxu0
    %1367 = vdwg.mxu0
    %v1368 = vmul.f32 %v1362, 0.35355338
    %v1369 = vmul.f32 %v1365, 0.35355338
    %v1370 = vadd.f32 %v1368, %v110
    %v1371 = vadd.f32 %v1369, %v111
    %v1372 = vsel %vm308, %v1370, -inf
    %1373 = vmax.xlane.f32.xlu0 %v1372
    %v1374 = vpop.xlane.xlu0 %1373
    %v1375 = vsel %vm308, %v1371, -inf
    %1376 = vmax.xlane.f32.xlu0 %v1375
    %v1377 = vpop.xlane.xlu0 %1376
    %v1378 = vsub.f32 %v1370, %v1374
    %v1379 = vsub.f32 %v1371, %v1377
    %v1380 = vmul.f32 %v1378, 1.442695
    %v1381 = vpow.pop %v1380
    %v1382 = vmul.f32 %v1379, 1.442695
    %v1383 = vpow.pop %v1382
    %v1384 = vsel %vm308, %v1381, 0.0
    %1385 = vadd.xlane.f32.xlu0 %v1384
    %v1386 = vpop.xlane.xlu0 %1385
    %v1387 = vsel %vm308, %v1383, 0.0
    %1388 = vadd.xlane.f32.xlu0 %v1387
    %v1389 = vpop.xlane.xlu0 %1388
    %v1390 = vrcp.pop %v1386
    %v1391 = vrcp.pop %v1389
    %v1392 = vmul.f32 %v1381, %v1390
    %v1393 = vmul.f32 %v1383, %v1391
    %v1394 = vpack.c.bf16 %v1393, %v1392
    %1395 = vrot.lane.b32.xlu0 %v1317, 64
    %v1396 = vpop.permute.xlu0 %1395
    %v1399 = vsel %vm308, %v1394, 0
    %1401 = vmatprep.subr.bf16.mxu0 0
    %1402 = vmatpush1.bf16.msra.mxu0 %v1396
    %1403 = vmatprep.subr.bf16.mxu0 0
    %1404 = vmatpush1.bf16.msra.mxu0 0
    %1405 = vmatprep.subr.bf16.mxu0 0
    %1406 = vmatpush1.bf16.msra.mxu0 0
    %1407 = vmatprep.subr.bf16.mxu0 0
    %1408 = vmatpush1.bf16.msra.mxu0 0
    %1409 = vmatprep.subr.bf16.mxu0 0
    %1410 = vmatpush1.bf16.msra.mxu0 0
    %1411 = vmatprep.subr.bf16.mxu0 0
    %1412 = vmatpush1.bf16.msra.mxu0 0
    %1413 = vmatprep.subr.bf16.mxu0 0
    %1414 = vmatpush1.bf16.msra.mxu0 0
    %1415 = vmatprep.subr.bf16.mxu0 0
    %1416 = vmatpush1.bf16.msra.mxu0 0
    %1417 = vmatprep.subr.bf16.mxu0 0
    %1418 = vmatpush1.bf16.msra.mxu0 0
    %1419 = vmatprep.subr.bf16.mxu0 0
    %1420 = vmatpush1.bf16.msra.mxu0 0
    %1421 = vmatprep.subr.bf16.mxu0 0
    %1422 = vmatpush1.bf16.msra.mxu0 0
    %1423 = vmatprep.subr.bf16.mxu0 0
    %1424 = vmatpush1.bf16.msra.mxu0 0
    %1425 = vmatprep.subr.bf16.mxu0 0
    %1426 = vmatpush1.bf16.msra.mxu0 0
    %1427 = vmatprep.subr.bf16.mxu0 0
    %1428 = vmatpush1.bf16.msra.mxu0 0
    %1429 = vmatprep.subr.bf16.mxu0 0
    %1430 = vmatpush1.bf16.msra.mxu0 0
    %1431 = vmatprep.subr.bf16.mxu0 0
    %1432 = vmatpush1.bf16.msra.mxu0 0
    %1433 = vmatprep.mubr.bf16.mxu0 0
    %1434 = vmatmul.mubr.bf16.gmra.mrb[0].mxu0 %v1399
    %v1435 = vpop.f32.mrb[0].mxu0
    %v1436 = vadd.f32 0.0, %v1435
    %v1437 = vpop.f32.mrb[0].mxu0
    %v1438 = vpop.f32.mrb[0].mxu0
    %v1439 = vadd.f32 0.0, %v1438
    %v1440 = vpop.f32.mrb[0].mxu0
    %1441 = vdwg.mxu0
    %v1442 = vpack.c.bf16 %v1439, %v1436
    %v1444 = vsel %vm256, %v1442, 0
    %v1447 = vsel %vm383, %v1248, 0
    %1449 = vmatprep.subr.bf16.mxu0 0
    %1450 = vmatpush1.bf16.msra.mxu0 %v1447
    %1451 = vmatprep.subr.bf16.mxu0 0
    %1452 = vmatpush1.bf16.msra.mxu0 0
    %1453 = vmatprep.subr.bf16.mxu0 0
    %1454 = vmatpush1.bf16.msra.mxu0 0
    %1455 = vmatprep.subr.bf16.mxu0 0
    %1456 = vmatpush1.bf16.msra.mxu0 0
    %1457 = vmatprep.subr.bf16.mxu0 0
    %1458 = vmatpush1.bf16.msra.mxu0 0
    %1459 = vmatprep.subr.bf16.mxu0 0
    %1460 = vmatpush1.bf16.msra.mxu0 0
    %1461 = vmatprep.subr.bf16.mxu0 0
    %1462 = vmatpush1.bf16.msra.mxu0 0
    %1463 = vmatprep.subr.bf16.mxu0 0
    %1464 = vmatpush1.bf16.msra.mxu0 0
    %1465 = vmatprep.subr.bf16.mxu0 0
    %1466 = vmatpush1.bf16.msra.mxu0 0
    %1467 = vmatprep.subr.bf16.mxu0 0
    %1468 = vmatpush1.bf16.msra.mxu0 0
    %1469 = vmatprep.subr.bf16.mxu0 0
    %1470 = vmatpush1.bf16.msra.mxu0 0
    %1471 = vmatprep.subr.bf16.mxu0 0
    %1472 = vmatpush1.bf16.msra.mxu0 0
    %1473 = vmatprep.subr.bf16.mxu0 0
    %1474 = vmatpush1.bf16.msra.mxu0 0
    %1475 = vmatprep.subr.bf16.mxu0 0
    %1476 = vmatpush1.bf16.msra.mxu0 0
    %1477 = vmatprep.subr.bf16.mxu0 0
    %1478 = vmatpush1.bf16.msra.mxu0 0
    %1479 = vmatprep.subr.bf16.mxu0 0
    %1480 = vmatpush1.bf16.msra.mxu0 0
    %1481 = vmatprep.mubr.bf16.mxu0 0
    %1482 = vmatmul.mubr.bf16.gmra.mrb[0].mxu0 %v1444
    %v1483 = vpop.f32.mrb[0].mxu0
    %v1484 = vadd.f32 0.0, %v1483
    %v1485 = vpop.f32.mrb[0].mxu0
    %v1486 = vpop.f32.mrb[0].mxu0
    %v1487 = vadd.f32 0.0, %v1486
    %v1488 = vpop.f32.mrb[0].mxu0
    %1489 = vdwg.mxu0
    %v1491 = vlaneseq
    %v1492 = vshrl.u32 %v1491, 7
    %v1493 = vsub.s32 0, %v1492
    %v1494 = vrot.slane %v1253, %v1493
    %v1496 = vadd.f32 %v1494, %v1484
    %v1497 = vadd.f32 %v1494, %v1487
    %1498 = vrot.lane.b32.xlu0 %v1317, 120
    %v1499 = vpop.permute.xlu0 %1498
    %1500 = vrot.lane.b32.xlu0 %v1317, 88
    %v1501 = vpop.permute.xlu0 %1500
    %v1503 = vsel %vm256, %v1499, 0
    %v1506 = vsel %vm256, %v1501, 0
    %1508 = vmatprep.subr.bf16.mxu0 0
    %1509 = vmatpush1.bf16.xpose.msra.mxu0 %v1506
    %1510 = vmatprep.subr.bf16.mxu0 0
    %1511 = vmatpush1.bf16.xpose.msra.mxu0 0
    %1512 = vmatprep.subr.bf16.mxu0 0
    %1513 = vmatpush1.bf16.xpose.msra.mxu0 0
    %1514 = vmatprep.subr.bf16.mxu0 0
    %1515 = vmatpush1.bf16.xpose.msra.mxu0 0
    %1516 = vmatprep.subr.bf16.mxu0 0
    %1517 = vmatpush1.bf16.xpose.msra.mxu0 0
    %1518 = vmatprep.subr.bf16.mxu0 0
    %1519 = vmatpush1.bf16.xpose.msra.mxu0 0
    %1520 = vmatprep.subr.bf16.mxu0 0
    %1521 = vmatpush1.bf16.xpose.msra.mxu0 0
    %1522 = vmatprep.subr.bf16.mxu0 0
    %1523 = vmatpush1.bf16.xpose.msra.mxu0 0
    %1524 = vmatprep.subr.bf16.mxu0 0
    %1525 = vmatpush1.bf16.xpose.msra.mxu0 0
    %1526 = vmatprep.subr.bf16.mxu0 0
    %1527 = vmatpush1.bf16.xpose.msra.mxu0 0
    %1528 = vmatprep.subr.bf16.mxu0 0
    %1529 = vmatpush1.bf16.xpose.msra.mxu0 0
    %1530 = vmatprep.subr.bf16.mxu0 0
    %1531 = vmatpush1.bf16.xpose.msra.mxu0 0
    %1532 = vmatprep.subr.bf16.mxu0 0
    %1533 = vmatpush1.bf16.xpose.msra.mxu0 0
    %1534 = vmatprep.subr.bf16.mxu0 0
    %1535 = vmatpush1.bf16.xpose.msra.mxu0 0
    %1536 = vmatprep.subr.bf16.mxu0 0
    %1537 = vmatpush1.bf16.xpose.msra.mxu0 0
    %1538 = vmatprep.subr.bf16.mxu0 0
    %1539 = vmatpush1.bf16.xpose.msra.mxu0 0
    %1540 = vmatprep.mubr.bf16.mxu0 0
    %1541 = vmatmul.mubr.bf16.gmra.mrb[0].mxu0 %v1503
    %v1542 = vpop.f32.mrb[0].mxu0
    %v1543 = vadd.f32 0.0, %v1542
    %v1544 = vpop.f32.mrb[0].mxu0
    %v1545 = vpop.f32.mrb[0].mxu0
    %v1546 = vadd.f32 0.0, %v1545
    %v1547 = vpop.f32.mrb[0].mxu0
    %1548 = vdwg.mxu0
    %v1549 = vmul.f32 %v1543, 0.35355338
    %v1550 = vmul.f32 %v1546, 0.35355338
    %v1551 = vadd.f32 %v1549, %v110
    %v1552 = vadd.f32 %v1550, %v111
    %v1553 = vsel %vm308, %v1551, -inf
    %1554 = vmax.xlane.f32.xlu0 %v1553
    %v1555 = vpop.xlane.xlu0 %1554
    %v1556 = vsel %vm308, %v1552, -inf
    %1557 = vmax.xlane.f32.xlu0 %v1556
    %v1558 = vpop.xlane.xlu0 %1557
    %v1559 = vsub.f32 %v1551, %v1555
    %v1560 = vsub.f32 %v1552, %v1558
    %v1561 = vmul.f32 %v1559, 1.442695
    %v1562 = vpow.pop %v1561
    %v1563 = vmul.f32 %v1560, 1.442695
    %v1564 = vpow.pop %v1563
    %v1565 = vsel %vm308, %v1562, 0.0
    %1566 = vadd.xlane.f32.xlu0 %v1565
    %v1567 = vpop.xlane.xlu0 %1566
    %v1568 = vsel %vm308, %v1564, 0.0
    %1569 = vadd.xlane.f32.xlu0 %v1568
    %v1570 = vpop.xlane.xlu0 %1569
    %v1571 = vrcp.pop %v1567
    %v1572 = vrcp.pop %v1570
    %v1573 = vmul.f32 %v1562, %v1571
    %v1574 = vmul.f32 %v1564, %v1572
    %v1575 = vpack.c.bf16 %v1574, %v1573
    %1576 = vrot.lane.b32.xlu0 %v1317, 56
    %v1577 = vpop.permute.xlu0 %1576
    %v1580 = vsel %vm308, %v1575, 0
    %1582 = vmatprep.subr.bf16.mxu0 0
    %1583 = vmatpush1.bf16.msra.mxu0 %v1577
    %1584 = vmatprep.subr.bf16.mxu0 0
    %1585 = vmatpush1.bf16.msra.mxu0 0
    %1586 = vmatprep.subr.bf16.mxu0 0
    %1587 = vmatpush1.bf16.msra.mxu0 0
    %1588 = vmatprep.subr.bf16.mxu0 0
    %1589 = vmatpush1.bf16.msra.mxu0 0
    %1590 = vmatprep.subr.bf16.mxu0 0
    %1591 = vmatpush1.bf16.msra.mxu0 0
    %1592 = vmatprep.subr.bf16.mxu0 0
    %1593 = vmatpush1.bf16.msra.mxu0 0
    %1594 = vmatprep.subr.bf16.mxu0 0
    %1595 = vmatpush1.bf16.msra.mxu0 0
    %1596 = vmatprep.subr.bf16.mxu0 0
    %1597 = vmatpush1.bf16.msra.mxu0 0
    %1598 = vmatprep.subr.bf16.mxu0 0
    %1599 = vmatpush1.bf16.msra.mxu0 0
    %1600 = vmatprep.subr.bf16.mxu0 0
    %1601 = vmatpush1.bf16.msra.mxu0 0
    %1602 = vmatprep.subr.bf16.mxu0 0
    %1603 = vmatpush1.bf16.msra.mxu0 0
    %1604 = vmatprep.subr.bf16.mxu0 0
    %1605 = vmatpush1.bf16.msra.mxu0 0
    %1606 = vmatprep.subr.bf16.mxu0 0
    %1607 = vmatpush1.bf16.msra.mxu0 0
    %1608 = vmatprep.subr.bf16.mxu0 0
    %1609 = vmatpush1.bf16.msra.mxu0 0
    %1610 = vmatprep.subr.bf16.mxu0 0
    %1611 = vmatpush1.bf16.msra.mxu0 0
    %1612 = vmatprep.subr.bf16.mxu0 0
    %1613 = vmatpush1.bf16.msra.mxu0 0
    %1614 = vmatprep.mubr.bf16.mxu0 0
    %1615 = vmatmul.mubr.bf16.gmra.mrb[0].mxu0 %v1580
    %v1616 = vpop.f32.mrb[0].mxu0
    %v1617 = vadd.f32 0.0, %v1616
    %v1618 = vpop.f32.mrb[0].mxu0
    %v1619 = vpop.f32.mrb[0].mxu0
    %v1620 = vadd.f32 0.0, %v1619
    %v1621 = vpop.f32.mrb[0].mxu0
    %1622 = vdwg.mxu0
    %v1623 = vpack.c.bf16 %v1620, %v1617
    %v1625 = vsel %vm256, %v1623, 0
    %v1628 = vsel %vm383, %v1249, 0
    %1630 = vmatprep.subr.bf16.mxu0 0
    %1631 = vmatpush1.bf16.msra.mxu0 %v1628
    %1632 = vmatprep.subr.bf16.mxu0 0
    %1633 = vmatpush1.bf16.msra.mxu0 0
    %1634 = vmatprep.subr.bf16.mxu0 0
    %1635 = vmatpush1.bf16.msra.mxu0 0
    %1636 = vmatprep.subr.bf16.mxu0 0
    %1637 = vmatpush1.bf16.msra.mxu0 0
    %1638 = vmatprep.subr.bf16.mxu0 0
    %1639 = vmatpush1.bf16.msra.mxu0 0
    %1640 = vmatprep.subr.bf16.mxu0 0
    %1641 = vmatpush1.bf16.msra.mxu0 0
    %1642 = vmatprep.subr.bf16.mxu0 0
    %1643 = vmatpush1.bf16.msra.mxu0 0
    %1644 = vmatprep.subr.bf16.mxu0 0
    %1645 = vmatpush1.bf16.msra.mxu0 0
    %1646 = vmatprep.subr.bf16.mxu0 0
    %1647 = vmatpush1.bf16.msra.mxu0 0
    %1648 = vmatprep.subr.bf16.mxu0 0
    %1649 = vmatpush1.bf16.msra.mxu0 0
    %1650 = vmatprep.subr.bf16.mxu0 0
    %1651 = vmatpush1.bf16.msra.mxu0 0
    %1652 = vmatprep.subr.bf16.mxu0 0
    %1653 = vmatpush1.bf16.msra.mxu0 0
    %1654 = vmatprep.subr.bf16.mxu0 0
    %1655 = vmatpush1.bf16.msra.mxu0 0
    %1656 = vmatprep.subr.bf16.mxu0 0
    %1657 = vmatpush1.bf16.msra.mxu0 0
    %1658 = vmatprep.subr.bf16.mxu0 0
    %1659 = vmatpush1.bf16.msra.mxu0 0
    %1660 = vmatprep.subr.bf16.mxu0 0
    %1661 = vmatpush1.bf16.msra.mxu0 0
    %1662 = vmatprep.mubr.bf16.mxu0 0
    %1663 = vmatmul.mubr.bf16.gmra.mrb[0].mxu0 %v1625
    %v1664 = vpop.f32.mrb[0].mxu0
    %v1665 = vadd.f32 0.0, %v1664
    %v1666 = vpop.f32.mrb[0].mxu0
    %v1667 = vpop.f32.mrb[0].mxu0
    %v1668 = vadd.f32 0.0, %v1667
    %v1669 = vpop.f32.mrb[0].mxu0
    %1670 = vdwg.mxu0
    %v1671 = vadd.f32 %v1496, %v1665
    %v1672 = vadd.f32 %v1497, %v1668
    %1673 = vrot.lane.b32.xlu0 %v1317, 112
    %v1674 = vpop.permute.xlu0 %1673
    %1675 = vrot.lane.b32.xlu0 %v1317, 80
    %v1676 = vpop.permute.xlu0 %1675
    %v1678 = vsel %vm256, %v1674, 0
    %v1681 = vsel %vm256, %v1676, 0
    %1683 = vmatprep.subr.bf16.mxu0 0
    %1684 = vmatpush1.bf16.xpose.msra.mxu0 %v1681
    %1685 = vmatprep.subr.bf16.mxu0 0
    %1686 = vmatpush1.bf16.xpose.msra.mxu0 0
    %1687 = vmatprep.subr.bf16.mxu0 0
    %1688 = vmatpush1.bf16.xpose.msra.mxu0 0
    %1689 = vmatprep.subr.bf16.mxu0 0
    %1690 = vmatpush1.bf16.xpose.msra.mxu0 0
    %1691 = vmatprep.subr.bf16.mxu0 0
    %1692 = vmatpush1.bf16.xpose.msra.mxu0 0
    %1693 = vmatprep.subr.bf16.mxu0 0
    %1694 = vmatpush1.bf16.xpose.msra.mxu0 0
    %1695 = vmatprep.subr.bf16.mxu0 0
    %1696 = vmatpush1.bf16.xpose.msra.mxu0 0
    %1697 = vmatprep.subr.bf16.mxu0 0
    %1698 = vmatpush1.bf16.xpose.msra.mxu0 0
    %1699 = vmatprep.subr.bf16.mxu0 0
    %1700 = vmatpush1.bf16.xpose.msra.mxu0 0
    %1701 = vmatprep.subr.bf16.mxu0 0
    %1702 = vmatpush1.bf16.xpose.msra.mxu0 0
    %1703 = vmatprep.subr.bf16.mxu0 0
    %1704 = vmatpush1.bf16.xpose.msra.mxu0 0
    %1705 = vmatprep.subr.bf16.mxu0 0
    %1706 = vmatpush1.bf16.xpose.msra.mxu0 0
    %1707 = vmatprep.subr.bf16.mxu0 0
    %1708 = vmatpush1.bf16.xpose.msra.mxu0 0
    %1709 = vmatprep.subr.bf16.mxu0 0
    %1710 = vmatpush1.bf16.xpose.msra.mxu0 0
    %1711 = vmatprep.subr.bf16.mxu0 0
    %1712 = vmatpush1.bf16.xpose.msra.mxu0 0
    %1713 = vmatprep.subr.bf16.mxu0 0
    %1714 = vmatpush1.bf16.xpose.msra.mxu0 0
    %1715 = vmatprep.mubr.bf16.mxu0 0
    %1716 = vmatmul.mubr.bf16.gmra.mrb[0].mxu0 %v1678
    %v1717 = vpop.f32.mrb[0].mxu0
    %v1718 = vadd.f32 0.0, %v1717
    %v1719 = vpop.f32.mrb[0].mxu0
    %v1720 = vpop.f32.mrb[0].mxu0
    %v1721 = vadd.f32 0.0, %v1720
    %v1722 = vpop.f32.mrb[0].mxu0
    %1723 = vdwg.mxu0
    %v1724 = vmul.f32 %v1718, 0.35355338
    %v1725 = vmul.f32 %v1721, 0.35355338
    %v1726 = vadd.f32 %v1724, %v110
    %v1727 = vadd.f32 %v1725, %v111
    %v1728 = vsel %vm308, %v1726, -inf
    %1729 = vmax.xlane.f32.xlu0 %v1728
    %v1730 = vpop.xlane.xlu0 %1729
    %v1731 = vsel %vm308, %v1727, -inf
    %1732 = vmax.xlane.f32.xlu0 %v1731
    %v1733 = vpop.xlane.xlu0 %1732
    %v1734 = vsub.f32 %v1726, %v1730
    %v1735 = vsub.f32 %v1727, %v1733
    %v1736 = vmul.f32 %v1734, 1.442695
    %v1737 = vpow.pop %v1736
    %v1738 = vmul.f32 %v1735, 1.442695
    %v1739 = vpow.pop %v1738
    %v1740 = vsel %vm308, %v1737, 0.0
    %1741 = vadd.xlane.f32.xlu0 %v1740
    %v1742 = vpop.xlane.xlu0 %1741
    %v1743 = vsel %vm308, %v1739, 0.0
    %1744 = vadd.xlane.f32.xlu0 %v1743
    %v1745 = vpop.xlane.xlu0 %1744
    %v1746 = vrcp.pop %v1742
    %v1747 = vrcp.pop %v1745
    %v1748 = vmul.f32 %v1737, %v1746
    %v1749 = vmul.f32 %v1739, %v1747
    %v1750 = vpack.c.bf16 %v1749, %v1748
    %1751 = vrot.lane.b32.xlu0 %v1317, 48
    %v1752 = vpop.permute.xlu0 %1751
    %v1755 = vsel %vm308, %v1750, 0
    %1757 = vmatprep.subr.bf16.mxu0 0
    %1758 = vmatpush1.bf16.msra.mxu0 %v1752
    %1759 = vmatprep.subr.bf16.mxu0 0
    %1760 = vmatpush1.bf16.msra.mxu0 0
    %1761 = vmatprep.subr.bf16.mxu0 0
    %1762 = vmatpush1.bf16.msra.mxu0 0
    %1763 = vmatprep.subr.bf16.mxu0 0
    %1764 = vmatpush1.bf16.msra.mxu0 0
    %1765 = vmatprep.subr.bf16.mxu0 0
    %1766 = vmatpush1.bf16.msra.mxu0 0
    %1767 = vmatprep.subr.bf16.mxu0 0
    %1768 = vmatpush1.bf16.msra.mxu0 0
    %1769 = vmatprep.subr.bf16.mxu0 0
    %1770 = vmatpush1.bf16.msra.mxu0 0
    %1771 = vmatprep.subr.bf16.mxu0 0
    %1772 = vmatpush1.bf16.msra.mxu0 0
    %1773 = vmatprep.subr.bf16.mxu0 0
    %1774 = vmatpush1.bf16.msra.mxu0 0
    %1775 = vmatprep.subr.bf16.mxu0 0
    %1776 = vmatpush1.bf16.msra.mxu0 0
    %1777 = vmatprep.subr.bf16.mxu0 0
    %1778 = vmatpush1.bf16.msra.mxu0 0
    %1779 = vmatprep.subr.bf16.mxu0 0
    %1780 = vmatpush1.bf16.msra.mxu0 0
    %1781 = vmatprep.subr.bf16.mxu0 0
    %1782 = vmatpush1.bf16.msra.mxu0 0
    %1783 = vmatprep.subr.bf16.mxu0 0
    %1784 = vmatpush1.bf16.msra.mxu0 0
    %1785 = vmatprep.subr.bf16.mxu0 0
    %1786 = vmatpush1.bf16.msra.mxu0 0
    %1787 = vmatprep.subr.bf16.mxu0 0
    %1788 = vmatpush1.bf16.msra.mxu0 0
    %1789 = vmatprep.mubr.bf16.mxu0 0
    %1790 = vmatmul.mubr.bf16.gmra.mrb[0].mxu0 %v1755
    %v1791 = vpop.f32.mrb[0].mxu0
    %v1792 = vadd.f32 0.0, %v1791
    %v1793 = vpop.f32.mrb[0].mxu0
    %v1794 = vpop.f32.mrb[0].mxu0
    %v1795 = vadd.f32 0.0, %v1794
    %v1796 = vpop.f32.mrb[0].mxu0
    %1797 = vdwg.mxu0
    %v1798 = vpack.c.bf16 %v1795, %v1792
    %v1800 = vsel %vm256, %v1798, 0
    %v1803 = vsel %vm383, %v1250, 0
    %1805 = vmatprep.subr.bf16.mxu0 0
    %1806 = vmatpush1.bf16.msra.mxu0 %v1803
    %1807 = vmatprep.subr.bf16.mxu0 0
    %1808 = vmatpush1.bf16.msra.mxu0 0
    %1809 = vmatprep.subr.bf16.mxu0 0
    %1810 = vmatpush1.bf16.msra.mxu0 0
    %1811 = vmatprep.subr.bf16.mxu0 0
    %1812 = vmatpush1.bf16.msra.mxu0 0
    %1813 = vmatprep.subr.bf16.mxu0 0
    %1814 = vmatpush1.bf16.msra.mxu0 0
    %1815 = vmatprep.subr.bf16.mxu0 0
    %1816 = vmatpush1.bf16.msra.mxu0 0
    %1817 = vmatprep.subr.bf16.mxu0 0
    %1818 = vmatpush1.bf16.msra.mxu0 0
    %1819 = vmatprep.subr.bf16.mxu0 0
    %1820 = vmatpush1.bf16.msra.mxu0 0
    %1821 = vmatprep.subr.bf16.mxu0 0
    %1822 = vmatpush1.bf16.msra.mxu0 0
    %1823 = vmatprep.subr.bf16.mxu0 0
    %1824 = vmatpush1.bf16.msra.mxu0 0
    %1825 = vmatprep.subr.bf16.mxu0 0
    %1826 = vmatpush1.bf16.msra.mxu0 0
    %1827 = vmatprep.subr.bf16.mxu0 0
    %1828 = vmatpush1.bf16.msra.mxu0 0
    %1829 = vmatprep.subr.bf16.mxu0 0
    %1830 = vmatpush1.bf16.msra.mxu0 0
    %1831 = vmatprep.subr.bf16.mxu0 0
    %1832 = vmatpush1.bf16.msra.mxu0 0
    %1833 = vmatprep.subr.bf16.mxu0 0
    %1834 = vmatpush1.bf16.msra.mxu0 0
    %1835 = vmatprep.subr.bf16.mxu0 0
    %1836 = vmatpush1.bf16.msra.mxu0 0
    %1837 = vmatprep.mubr.bf16.mxu0 0
    %1838 = vmatmul.mubr.bf16.gmra.mrb[0].mxu0 %v1800
    %v1839 = vpop.f32.mrb[0].mxu0
    %v1840 = vadd.f32 0.0, %v1839
    %v1841 = vpop.f32.mrb[0].mxu0
    %v1842 = vpop.f32.mrb[0].mxu0
    %v1843 = vadd.f32 0.0, %v1842
    %v1844 = vpop.f32.mrb[0].mxu0
    %1845 = vdwg.mxu0
    %v1846 = vadd.f32 %v1671, %v1840
    %v1847 = vadd.f32 %v1672, %v1843
    %1848 = vrot.lane.b32.xlu0 %v1317, 104
    %v1849 = vpop.permute.xlu0 %1848
    %1850 = vrot.lane.b32.xlu0 %v1317, 72
    %v1851 = vpop.permute.xlu0 %1850
    %v1853 = vsel %vm256, %v1849, 0
    %v1856 = vsel %vm256, %v1851, 0
    %1858 = vmatprep.subr.bf16.mxu0 0
    %1859 = vmatpush1.bf16.xpose.msra.mxu0 %v1856
    %1860 = vmatprep.subr.bf16.mxu0 0
    %1861 = vmatpush1.bf16.xpose.msra.mxu0 0
    %1862 = vmatprep.subr.bf16.mxu0 0
    %1863 = vmatpush1.bf16.xpose.msra.mxu0 0
    %1864 = vmatprep.subr.bf16.mxu0 0
    %1865 = vmatpush1.bf16.xpose.msra.mxu0 0
    %1866 = vmatprep.subr.bf16.mxu0 0
    %1867 = vmatpush1.bf16.xpose.msra.mxu0 0
    %1868 = vmatprep.subr.bf16.mxu0 0
    %1869 = vmatpush1.bf16.xpose.msra.mxu0 0
    %1870 = vmatprep.subr.bf16.mxu0 0
    %1871 = vmatpush1.bf16.xpose.msra.mxu0 0
    %1872 = vmatprep.subr.bf16.mxu0 0
    %1873 = vmatpush1.bf16.xpose.msra.mxu0 0
    %1874 = vmatprep.subr.bf16.mxu0 0
    %1875 = vmatpush1.bf16.xpose.msra.mxu0 0
    %1876 = vmatprep.subr.bf16.mxu0 0
    %1877 = vmatpush1.bf16.xpose.msra.mxu0 0
    %1878 = vmatprep.subr.bf16.mxu0 0
    %1879 = vmatpush1.bf16.xpose.msra.mxu0 0
    %1880 = vmatprep.subr.bf16.mxu0 0
    %1881 = vmatpush1.bf16.xpose.msra.mxu0 0
    %1882 = vmatprep.subr.bf16.mxu0 0
    %1883 = vmatpush1.bf16.xpose.msra.mxu0 0
    %1884 = vmatprep.subr.bf16.mxu0 0
    %1885 = vmatpush1.bf16.xpose.msra.mxu0 0
    %1886 = vmatprep.subr.bf16.mxu0 0
    %1887 = vmatpush1.bf16.xpose.msra.mxu0 0
    %1888 = vmatprep.subr.bf16.mxu0 0
    %1889 = vmatpush1.bf16.xpose.msra.mxu0 0
    %1890 = vmatprep.mubr.bf16.mxu0 0
    %1891 = vmatmul.mubr.bf16.gmra.mrb[0].mxu0 %v1853
    %v1892 = vpop.f32.mrb[0].mxu0
    %v1893 = vadd.f32 0.0, %v1892
    %v1894 = vpop.f32.mrb[0].mxu0
    %v1895 = vpop.f32.mrb[0].mxu0
    %v1896 = vadd.f32 0.0, %v1895
    %v1897 = vpop.f32.mrb[0].mxu0
    %1898 = vdwg.mxu0
    %v1899 = vmul.f32 %v1893, 0.35355338
    %v1900 = vmul.f32 %v1896, 0.35355338
    %v1901 = vadd.f32 %v1899, %v110
    %v1902 = vadd.f32 %v1900, %v111
    %v1903 = vsel %vm308, %v1901, -inf
    %1904 = vmax.xlane.f32.xlu0 %v1903
    %v1905 = vpop.xlane.xlu0 %1904
    %v1906 = vsel %vm308, %v1902, -inf
    %1907 = vmax.xlane.f32.xlu0 %v1906
    %v1908 = vpop.xlane.xlu0 %1907
    %v1909 = vsub.f32 %v1901, %v1905
    %v1910 = vsub.f32 %v1902, %v1908
    %v1911 = vmul.f32 %v1909, 1.442695
    %v1912 = vpow.pop %v1911
    %v1913 = vmul.f32 %v1910, 1.442695
    %v1914 = vpow.pop %v1913
    %v1915 = vsel %vm308, %v1912, 0.0
    %1916 = vadd.xlane.f32.xlu0 %v1915
    %v1917 = vpop.xlane.xlu0 %1916
    %v1918 = vsel %vm308, %v1914, 0.0
    %1919 = vadd.xlane.f32.xlu0 %v1918
    %v1920 = vpop.xlane.xlu0 %1919
    %v1921 = vrcp.pop %v1917
    %v1922 = vrcp.pop %v1920
    %v1923 = vmul.f32 %v1912, %v1921
    %v1924 = vmul.f32 %v1914, %v1922
    %v1925 = vpack.c.bf16 %v1924, %v1923
    %1926 = vrot.lane.b32.xlu0 %v1317, 40
    %v1927 = vpop.permute.xlu0 %1926
    %v1930 = vsel %vm308, %v1925, 0
    %1932 = vmatprep.subr.bf16.mxu0 0
    %1933 = vmatpush1.bf16.msra.mxu0 %v1927
    %1934 = vmatprep.subr.bf16.mxu0 0
    %1935 = vmatpush1.bf16.msra.mxu0 0
    %1936 = vmatprep.subr.bf16.mxu0 0
    %1937 = vmatpush1.bf16.msra.mxu0 0
    %1938 = vmatprep.subr.bf16.mxu0 0
    %1939 = vmatpush1.bf16.msra.mxu0 0
    %1940 = vmatprep.subr.bf16.mxu0 0
    %1941 = vmatpush1.bf16.msra.mxu0 0
    %1942 = vmatprep.subr.bf16.mxu0 0
    %1943 = vmatpush1.bf16.msra.mxu0 0
    %1944 = vmatprep.subr.bf16.mxu0 0
    %1945 = vmatpush1.bf16.msra.mxu0 0
    %1946 = vmatprep.subr.bf16.mxu0 0
    %1947 = vmatpush1.bf16.msra.mxu0 0
    %1948 = vmatprep.subr.bf16.mxu0 0
    %1949 = vmatpush1.bf16.msra.mxu0 0
    %1950 = vmatprep.subr.bf16.mxu0 0
    %1951 = vmatpush1.bf16.msra.mxu0 0
    %1952 = vmatprep.subr.bf16.mxu0 0
    %1953 = vmatpush1.bf16.msra.mxu0 0
    %1954 = vmatprep.subr.bf16.mxu0 0
    %1955 = vmatpush1.bf16.msra.mxu0 0
    %1956 = vmatprep.subr.bf16.mxu0 0
    %1957 = vmatpush1.bf16.msra.mxu0 0
    %1958 = vmatprep.subr.bf16.mxu0 0
    %1959 = vmatpush1.bf16.msra.mxu0 0
    %1960 = vmatprep.subr.bf16.mxu0 0
    %1961 = vmatpush1.bf16.msra.mxu0 0
    %1962 = vmatprep.subr.bf16.mxu0 0
    %1963 = vmatpush1.bf16.msra.mxu0 0
    %1964 = vmatprep.mubr.bf16.mxu0 0
    %1965 = vmatmul.mubr.bf16.gmra.mrb[0].mxu0 %v1930
    %v1966 = vpop.f32.mrb[0].mxu0
    %v1967 = vadd.f32 0.0, %v1966
    %v1968 = vpop.f32.mrb[0].mxu0
    %v1969 = vpop.f32.mrb[0].mxu0
    %v1970 = vadd.f32 0.0, %v1969
    %v1971 = vpop.f32.mrb[0].mxu0
    %1972 = vdwg.mxu0
    %v1973 = vpack.c.bf16 %v1970, %v1967
    %v1975 = vsel %vm256, %v1973, 0
    %v1978 = vsel %vm383, %v1251, 0
    %1980 = vmatprep.subr.bf16.mxu0 0
    %1981 = vmatpush1.bf16.msra.mxu0 %v1978
    %1982 = vmatprep.subr.bf16.mxu0 0
    %1983 = vmatpush1.bf16.msra.mxu0 0
    %1984 = vmatprep.subr.bf16.mxu0 0
    %1985 = vmatpush1.bf16.msra.mxu0 0
    %1986 = vmatprep.subr.bf16.mxu0 0
    %1987 = vmatpush1.bf16.msra.mxu0 0
    %1988 = vmatprep.subr.bf16.mxu0 0
    %1989 = vmatpush1.bf16.msra.mxu0 0
    %1990 = vmatprep.subr.bf16.mxu0 0
    %1991 = vmatpush1.bf16.msra.mxu0 0
    %1992 = vmatprep.subr.bf16.mxu0 0
    %1993 = vmatpush1.bf16.msra.mxu0 0
    %1994 = vmatprep.subr.bf16.mxu0 0
    %1995 = vmatpush1.bf16.msra.mxu0 0
    %1996 = vmatprep.subr.bf16.mxu0 0
    %1997 = vmatpush1.bf16.msra.mxu0 0
    %1998 = vmatprep.subr.bf16.mxu0 0
    %1999 = vmatpush1.bf16.msra.mxu0 0
    %2000 = vmatprep.subr.bf16.mxu0 0
    %2001 = vmatpush1.bf16.msra.mxu0 0
    %2002 = vmatprep.subr.bf16.mxu0 0
    %2003 = vmatpush1.bf16.msra.mxu0 0
    %2004 = vmatprep.subr.bf16.mxu0 0
    %2005 = vmatpush1.bf16.msra.mxu0 0
    %2006 = vmatprep.subr.bf16.mxu0 0
    %2007 = vmatpush1.bf16.msra.mxu0 0
    %2008 = vmatprep.subr.bf16.mxu0 0
    %2009 = vmatpush1.bf16.msra.mxu0 0
    %2010 = vmatprep.subr.bf16.mxu0 0
    %2011 = vmatpush1.bf16.msra.mxu0 0
    %2012 = vmatprep.mubr.bf16.mxu0 0
    %2013 = vmatmul.mubr.bf16.gmra.mrb[0].mxu0 %v1975
    %v2014 = vpop.f32.mrb[0].mxu0
    %v2015 = vadd.f32 0.0, %v2014
    %v2016 = vpop.f32.mrb[0].mxu0
    %v2017 = vpop.f32.mrb[0].mxu0
    %v2018 = vadd.f32 0.0, %v2017
    %v2019 = vpop.f32.mrb[0].mxu0
    %2020 = vdwg.mxu0
    %v2021 = vadd.f32 %v1846, %v2015
    %v2022 = vadd.f32 %v1847, %v2018
    %v2023 = vadd.f32 %v1178, %v2021
    %v2024 = vadd.f32 %v1179, %v2022
    %s2025 = scalar_lea.vmem %s13, 6
    %v2026 = vld [vmem:[%s2025] sm:$0x1]
    %s2027 = scalar_lea.vmem %s13, 7
    %v2028 = vld [vmem:[%s2027] sm:$0x1]
    %v2029 = vsel %vm121, %v2023, 0.0
    %2030 = vadd.xlane.f32.xlu0 %v2029
    %v2031 = vpop.xlane.xlu0 %2030
    %v2032 = vsel %vm121, %v2024, 0.0
    %2033 = vadd.xlane.f32.xlu0 %v2032
    %v2034 = vpop.xlane.xlu0 %2033
    %v2035 = vmul.f32 %v2031, %v128
    %v2036 = vmul.f32 %v2034, %v128
    %v2037 = vsub.f32 %v2023, %v2035
    %v2038 = vsub.f32 %v2024, %v2036
    %v2039 = vmul.f32 %v2037, %v2037
    %v2040 = vmul.f32 %v2038, %v2038
    %v2041 = vsel %vm121, %v2039, 0.0
    %2042 = vadd.xlane.f32.xlu0 %v2041
    %v2043 = vpop.xlane.xlu0 %2042
    %v2044 = vsel %vm121, %v2040, 0.0
    %2045 = vadd.xlane.f32.xlu0 %v2044
    %v2046 = vpop.xlane.xlu0 %2045
    %v2047 = vmul.f32 %v2043, 0.032258064
    %v2048 = vmul.f32 %v2046, 0.032258064
    %v2049 = vrsqrt.pop %v2047
    %v2050 = vmul.f32 %v2047, %v2049
    %vm2051 = vcmp.eq.f32.partialorder %v2047, inf
    %v2052 = vsel %vm2051, %v2047, %v2050
    %vm2053 = vcmp.eq.f32.partialorder %v2047, 0.0
    %v2054 = vand.u32 %v2047, 2147483648
    %v2055 = vsel %vm2053, %v2054, %v2052
    %v2056 = vrsqrt.pop %v2048
    %v2057 = vmul.f32 %v2048, %v2056
    %vm2058 = vcmp.eq.f32.partialorder %v2048, inf
    %v2059 = vsel %vm2058, %v2048, %v2057
    %vm2060 = vcmp.eq.f32.partialorder %v2048, 0.0
    %v2061 = vand.u32 %v2048, 2147483648
    %v2062 = vsel %vm2060, %v2061, %v2059
    %v2063 = vadd.f32 %v2055, 1e-06
    %v2064 = vadd.f32 %v2062, 1e-06
    %v2065 = vrcp.pop %v2063
    %v2066 = vrcp.pop %v2064
    %v2068 = vlaneseq
    %v2069 = vshrl.u32 %v2068, 7
    %v2070 = vsub.s32 0, %v2069
    %v2071 = vrot.slane %v2026, %v2070
    %v2073 = vmul.f32 %v2071, %v2037
    %v2074 = vmul.f32 %v2071, %v2038
    %v2075 = vmul.f32 %v2073, %v2065
    %v2076 = vmul.f32 %v2074, %v2066
    %v2078 = vlaneseq
    %v2079 = vshrl.u32 %v2078, 7
    %v2080 = vsub.s32 0, %v2079
    %v2081 = vrot.slane %v2028, %v2080
    %v2083 = vadd.f32 %v2075, %v2081
    %v2084 = vadd.f32 %v2076, %v2081
    %s2085 = scalar_lea.vmem %s9, 16
    %v2086 = vld [vmem:[%s2085] sm:$0xf]
    %v2087 = vld [vmem:[%s2085 + $0x4] sm:$0xf]
    %v2088 = vld [vmem:[%s2085 + $0x8] sm:$0xf]
    %v2089 = vld [vmem:[%s2085 + $0xc] sm:$0xf]
    %s2090 = scalar_lea.vmem %s10, 1
    %v2091 = vld [vmem:[%s2090] sm:$0x1]
    %s2092 = scalar_lea.vmem %s11, 32
    %v2093 = vld [vmem:[%s2092] sm:$0xf]
    %v2094 = vld [vmem:[%s2092 + $0x4] sm:$0xf]
    %v2095 = vld [vmem:[%s2092 + $0x8] sm:$0xf]
    %v2096 = vld [vmem:[%s2092 + $0xc] sm:$0xf]
    %v2097 = vld [vmem:[%s2092 + $0x10] sm:$0xf]
    %v2098 = vld [vmem:[%s2092 + $0x14] sm:$0xf]
    %v2099 = vld [vmem:[%s2092 + $0x18] sm:$0xf]
    %v2100 = vld [vmem:[%s2092 + $0x1c] sm:$0xf]
    %s2101 = scalar_lea.vmem %s12, 1
    %v2102 = vld [vmem:[%s2101] sm:$0x1]
    %v2103 = vpack.c.bf16 %v2084, %v2083
    %v2105 = vlaneseq
    %v2106 = vshrl.u32 %v2105, 7
    %v2107 = vsub.s32 0, %v2106
    %v2108 = vrot.slane %v2091, %v2107
    %v2114 = vunpack.c.l.b16 %v2086
    %v2115 = vunpack.c.l.b16 %v2087
    %v2116 = vunpack.c.l.b16 %v2088
    %v2117 = vunpack.c.l.b16 %v2089
    %v2118 = vpack.c.b16 %v2115, %v2114
    %v2119 = vpack.c.b16 %v2117, %v2116
    %v2123 = vsel %vm121, %v2103, 0
    %2125 = vmatprep.subr.bf16.mxu0 0
    %2126 = vmatpush1.bf16.msra.mxu0 %v2118
    %2127 = vmatprep.subr.bf16.mxu0 0
    %2128 = vmatpush1.bf16.msra.mxu0 %v2119
    %2129 = vmatprep.subr.bf16.mxu0 0
    %2130 = vmatpush1.bf16.msra.mxu0 0
    %2131 = vmatprep.subr.bf16.mxu0 0
    %2132 = vmatpush1.bf16.msra.mxu0 0
    %2133 = vmatprep.subr.bf16.mxu0 0
    %2134 = vmatpush1.bf16.msra.mxu0 0
    %2135 = vmatprep.subr.bf16.mxu0 0
    %2136 = vmatpush1.bf16.msra.mxu0 0
    %2137 = vmatprep.subr.bf16.mxu0 0
    %2138 = vmatpush1.bf16.msra.mxu0 0
    %2139 = vmatprep.subr.bf16.mxu0 0
    %2140 = vmatpush1.bf16.msra.mxu0 0
    %2141 = vmatprep.subr.bf16.mxu0 0
    %2142 = vmatpush1.bf16.msra.mxu0 0
    %2143 = vmatprep.subr.bf16.mxu0 0
    %2144 = vmatpush1.bf16.msra.mxu0 0
    %2145 = vmatprep.subr.bf16.mxu0 0
    %2146 = vmatpush1.bf16.msra.mxu0 0
    %2147 = vmatprep.subr.bf16.mxu0 0
    %2148 = vmatpush1.bf16.msra.mxu0 0
    %2149 = vmatprep.subr.bf16.mxu0 0
    %2150 = vmatpush1.bf16.msra.mxu0 0
    %2151 = vmatprep.subr.bf16.mxu0 0
    %2152 = vmatpush1.bf16.msra.mxu0 0
    %2153 = vmatprep.subr.bf16.mxu0 0
    %2154 = vmatpush1.bf16.msra.mxu0 0
    %2155 = vmatprep.subr.bf16.mxu0 0
    %2156 = vmatpush1.bf16.msra.mxu0 0
    %2157 = vmatprep.mubr.bf16.mxu0 0
    %2158 = vmatmul.mubr.bf16.gmra.mrb[0].mxu0 %v2123
    %v2159 = vpop.f32.mrb[0].mxu0
    %v2160 = vadd.f32 %v2108, %v2159
    %v2161 = vpop.f32.mrb[0].mxu0
    %v2162 = vpop.f32.mrb[0].mxu0
    %v2163 = vadd.f32 %v2108, %v2162
    %v2164 = vpop.f32.mrb[0].mxu0
    %2165 = vdwg.mxu0
    %v2166 = vmax.f32 %v2160, 0.0
    %v2167 = vmax.f32 %v2163, 0.0
    %v2168 = vpack.c.bf16 %v2167, %v2166
    %v2170 = vlaneseq
    %v2171 = vshrl.u32 %v2170, 7
    %v2172 = vsub.s32 0, %v2171
    %v2173 = vrot.slane %v2102, %v2172
    %v2183 = vunpack.c.l.b16 %v2093
    %v2184 = vunpack.c.l.b16 %v2094
    %v2185 = vunpack.c.l.b16 %v2095
    %v2186 = vunpack.c.l.b16 %v2096
    %v2187 = vunpack.c.l.b16 %v2097
    %v2188 = vunpack.c.l.b16 %v2098
    %v2189 = vunpack.c.l.b16 %v2099
    %v2190 = vunpack.c.l.b16 %v2100
    %v2191 = vpack.c.b16 %v2184, %v2183
    %v2192 = vpack.c.b16 %v2186, %v2185
    %v2193 = vpack.c.b16 %v2188, %v2187
    %v2194 = vpack.c.b16 %v2190, %v2189
    %v2200 = vsel %vm1133, %v2168, 0
    %2202 = vmatprep.subr.bf16.mxu0 0
    %2203 = vmatpush1.bf16.msra.mxu0 %v2191
    %2204 = vmatprep.subr.bf16.mxu0 0
    %2205 = vmatpush1.bf16.msra.mxu0 %v2192
    %2206 = vmatprep.subr.bf16.mxu0 0
    %2207 = vmatpush1.bf16.msra.mxu0 %v2193
    %2208 = vmatprep.subr.bf16.mxu0 0
    %2209 = vmatpush1.bf16.msra.mxu0 %v2194
    %2210 = vmatprep.subr.bf16.mxu0 0
    %2211 = vmatpush1.bf16.msra.mxu0 0
    %2212 = vmatprep.subr.bf16.mxu0 0
    %2213 = vmatpush1.bf16.msra.mxu0 0
    %2214 = vmatprep.subr.bf16.mxu0 0
    %2215 = vmatpush1.bf16.msra.mxu0 0
    %2216 = vmatprep.subr.bf16.mxu0 0
    %2217 = vmatpush1.bf16.msra.mxu0 0
    %2218 = vmatprep.subr.bf16.mxu0 0
    %2219 = vmatpush1.bf16.msra.mxu0 0
    %2220 = vmatprep.subr.bf16.mxu0 0
    %2221 = vmatpush1.bf16.msra.mxu0 0
    %2222 = vmatprep.subr.bf16.mxu0 0
    %2223 = vmatpush1.bf16.msra.mxu0 0
    %2224 = vmatprep.subr.bf16.mxu0 0
    %2225 = vmatpush1.bf16.msra.mxu0 0
    %2226 = vmatprep.subr.bf16.mxu0 0
    %2227 = vmatpush1.bf16.msra.mxu0 0
    %2228 = vmatprep.subr.bf16.mxu0 0
    %2229 = vmatpush1.bf16.msra.mxu0 0
    %2230 = vmatprep.subr.bf16.mxu0 0
    %2231 = vmatpush1.bf16.msra.mxu0 0
    %2232 = vmatprep.subr.bf16.mxu0 0
    %2233 = vmatpush1.bf16.msra.mxu0 0
    %2234 = vmatprep.mubr.bf16.mxu0 0
    %2235 = vmatmul.mubr.bf16.gmra.mrb[0].mxu0 %v2200
    %v2236 = vpop.f32.mrb[0].mxu0
    %v2237 = vadd.f32 %v2173, %v2236
    %v2238 = vpop.f32.mrb[0].mxu0
    %v2239 = vpop.f32.mrb[0].mxu0
    %v2240 = vadd.f32 %v2173, %v2239
    %v2241 = vpop.f32.mrb[0].mxu0
    %2242 = vdwg.mxu0
    %v2243 = vadd.f32 %v2023, %v2237
    %v2244 = vadd.f32 %v2024, %v2240
    %v2245 = vld [vmem:[%s14] sm:$0x1]
    %s2246 = scalar_lea.vmem %s14, 1
    %v2247 = vld [vmem:[%s2246] sm:$0x1]
    %v2248 = vsel %vm121, %v2243, 0.0
    %2249 = vadd.xlane.f32.xlu0 %v2248
    %v2250 = vpop.xlane.xlu0 %2249
    %v2251 = vsel %vm121, %v2244, 0.0
    %2252 = vadd.xlane.f32.xlu0 %v2251
    %v2253 = vpop.xlane.xlu0 %2252
    %v2254 = vmul.f32 %v2250, %v128
    %v2255 = vmul.f32 %v2253, %v128
    %v2256 = vsub.f32 %v2243, %v2254
    %v2257 = vsub.f32 %v2244, %v2255
    %v2258 = vmul.f32 %v2256, %v2256
    %v2259 = vmul.f32 %v2257, %v2257
    %v2260 = vsel %vm121, %v2258, 0.0
    %2261 = vadd.xlane.f32.xlu0 %v2260
    %v2262 = vpop.xlane.xlu0 %2261
    %v2263 = vsel %vm121, %v2259, 0.0
    %2264 = vadd.xlane.f32.xlu0 %v2263
    %v2265 = vpop.xlane.xlu0 %2264
    %v2266 = vmul.f32 %v2262, 0.032258064
    %v2267 = vmul.f32 %v2265, 0.032258064
    %v2268 = vrsqrt.pop %v2266
    %v2269 = vmul.f32 %v2266, %v2268
    %vm2270 = vcmp.eq.f32.partialorder %v2266, inf
    %v2271 = vsel %vm2270, %v2266, %v2269
    %vm2272 = vcmp.eq.f32.partialorder %v2266, 0.0
    %v2273 = vand.u32 %v2266, 2147483648
    %v2274 = vsel %vm2272, %v2273, %v2271
    %v2275 = vrsqrt.pop %v2267
    %v2276 = vmul.f32 %v2267, %v2275
    %vm2277 = vcmp.eq.f32.partialorder %v2267, inf
    %v2278 = vsel %vm2277, %v2267, %v2276
    %vm2279 = vcmp.eq.f32.partialorder %v2267, 0.0
    %v2280 = vand.u32 %v2267, 2147483648
    %v2281 = vsel %vm2279, %v2280, %v2278
    %v2282 = vadd.f32 %v2274, 1e-06
    %v2283 = vadd.f32 %v2281, 1e-06
    %v2284 = vrcp.pop %v2282
    %v2285 = vrcp.pop %v2283
    %v2287 = vlaneseq
    %v2288 = vshrl.u32 %v2287, 7
    %v2289 = vsub.s32 0, %v2288
    %v2290 = vrot.slane %v2245, %v2289
    %v2292 = vmul.f32 %v2290, %v2256
    %v2293 = vmul.f32 %v2290, %v2257
    %v2294 = vmul.f32 %v2292, %v2284
    %v2295 = vmul.f32 %v2293, %v2285
    %v2297 = vlaneseq
    %v2298 = vshrl.u32 %v2297, 7
    %v2299 = vsub.s32 0, %v2298
    %v2300 = vrot.slane %v2247, %v2299
    %v2302 = vadd.f32 %v2294, %v2300
    %v2303 = vadd.f32 %v2295, %v2300
    %v2304 = vld [vmem:[%s1] sm:$0xff]
    %v2305 = vld [vmem:[%s1 + $0x8] sm:$0xff]
    %v2306 = vld [vmem:[%s23] sm:$0x1]
    %s2307 = scalar_lea.vmem %s23, 1
    %v2308 = vld [vmem:[%s2307] sm:$0x1]
    %v2309 = vsel %vm121, %v2304, 0.0
    %2310 = vadd.xlane.f32.xlu0 %v2309
    %v2311 = vpop.xlane.xlu0 %2310
    %v2312 = vsel %vm121, %v2305, 0.0
    %2313 = vadd.xlane.f32.xlu0 %v2312
    %v2314 = vpop.xlane.xlu0 %2313
    %v2315 = vmul.f32 %v2311, %v128
    %v2316 = vmul.f32 %v2314, %v128
    %v2317 = vsub.f32 %v2304, %v2315
    %v2318 = vsub.f32 %v2305, %v2316
    %v2319 = vmul.f32 %v2317, %v2317
    %v2320 = vmul.f32 %v2318, %v2318
    %v2321 = vsel %vm121, %v2319, 0.0
    %2322 = vadd.xlane.f32.xlu0 %v2321
    %v2323 = vpop.xlane.xlu0 %2322
    %v2324 = vsel %vm121, %v2320, 0.0
    %2325 = vadd.xlane.f32.xlu0 %v2324
    %v2326 = vpop.xlane.xlu0 %2325
    %v2327 = vmul.f32 %v2323, 0.032258064
    %v2328 = vmul.f32 %v2326, 0.032258064
    %v2329 = vrsqrt.pop %v2327
    %v2330 = vmul.f32 %v2327, %v2329
    %vm2331 = vcmp.eq.f32.partialorder %v2327, inf
    %v2332 = vsel %vm2331, %v2327, %v2330
    %vm2333 = vcmp.eq.f32.partialorder %v2327, 0.0
    %v2334 = vand.u32 %v2327, 2147483648
    %v2335 = vsel %vm2333, %v2334, %v2332
    %v2336 = vrsqrt.pop %v2328
    %v2337 = vmul.f32 %v2328, %v2336
    %vm2338 = vcmp.eq.f32.partialorder %v2328, inf
    %v2339 = vsel %vm2338, %v2328, %v2337
    %vm2340 = vcmp.eq.f32.partialorder %v2328, 0.0
    %v2341 = vand.u32 %v2328, 2147483648
    %v2342 = vsel %vm2340, %v2341, %v2339
    %v2343 = vadd.f32 %v2335, 1e-06
    %v2344 = vadd.f32 %v2342, 1e-06
    %v2345 = vrcp.pop %v2343
    %v2346 = vrcp.pop %v2344
    %v2348 = vlaneseq
    %v2349 = vshrl.u32 %v2348, 7
    %v2350 = vsub.s32 0, %v2349
    %v2351 = vrot.slane %v2306, %v2350
    %v2353 = vmul.f32 %v2351, %v2317
    %v2354 = vmul.f32 %v2351, %v2318
    %v2355 = vmul.f32 %v2353, %v2345
    %v2356 = vmul.f32 %v2354, %v2346
    %v2358 = vlaneseq
    %v2359 = vshrl.u32 %v2358, 7
    %v2360 = vsub.s32 0, %v2359
    %v2361 = vrot.slane %v2308, %v2360
    %v2363 = vadd.f32 %v2355, %v2361
    %v2364 = vadd.f32 %v2356, %v2361
    %v2365 = vld [vmem:[%s15] sm:$0xf]
    %v2366 = vld [vmem:[%s15 + $0x4] sm:$0xf]
    %v2367 = vld [vmem:[%s15 + $0x8] sm:$0xf]
    %v2368 = vld [vmem:[%s15 + $0xc] sm:$0xf]
    %v2369 = vld [vmem:[%s16] sm:$0x1]
    %v2370 = vld [vmem:[%s17] sm:$0xf]
    %v2371 = vld [vmem:[%s17 + $0x4] sm:$0xf]
    %v2372 = vld [vmem:[%s17 + $0x8] sm:$0xf]
    %v2373 = vld [vmem:[%s17 + $0xc] sm:$0xf]
    %v2374 = vld [vmem:[%s18] sm:$0x1]
    %v2375 = vpack.c.bf16 %v2364, %v2363
    %v2377 = vlaneseq
    %v2378 = vshrl.u32 %v2377, 7
    %v2379 = vsub.s32 0, %v2378
    %v2380 = vrot.slane %v2369, %v2379
    %v2386 = vunpack.c.l.b16 %v2365
    %v2387 = vunpack.c.l.b16 %v2366
    %v2388 = vunpack.c.l.b16 %v2367
    %v2389 = vunpack.c.l.b16 %v2368
    %v2390 = vpack.c.b16 %v2387, %v2386
    %v2391 = vpack.c.b16 %v2389, %v2388
    %v2395 = vsel %vm121, %v2375, 0
    %2397 = vmatprep.subr.bf16.mxu0 0
    %2398 = vmatpush1.bf16.msra.mxu0 %v2390
    %2399 = vmatprep.subr.bf16.mxu0 0
    %2400 = vmatpush1.bf16.msra.mxu0 %v2391
    %2401 = vmatprep.subr.bf16.mxu0 0
    %2402 = vmatpush1.bf16.msra.mxu0 0
    %2403 = vmatprep.subr.bf16.mxu0 0
    %2404 = vmatpush1.bf16.msra.mxu0 0
    %2405 = vmatprep.subr.bf16.mxu0 0
    %2406 = vmatpush1.bf16.msra.mxu0 0
    %2407 = vmatprep.subr.bf16.mxu0 0
    %2408 = vmatpush1.bf16.msra.mxu0 0
    %2409 = vmatprep.subr.bf16.mxu0 0
    %2410 = vmatpush1.bf16.msra.mxu0 0
    %2411 = vmatprep.subr.bf16.mxu0 0
    %2412 = vmatpush1.bf16.msra.mxu0 0
    %2413 = vmatprep.subr.bf16.mxu0 0
    %2414 = vmatpush1.bf16.msra.mxu0 0
    %2415 = vmatprep.subr.bf16.mxu0 0
    %2416 = vmatpush1.bf16.msra.mxu0 0
    %2417 = vmatprep.subr.bf16.mxu0 0
    %2418 = vmatpush1.bf16.msra.mxu0 0
    %2419 = vmatprep.subr.bf16.mxu0 0
    %2420 = vmatpush1.bf16.msra.mxu0 0
    %2421 = vmatprep.subr.bf16.mxu0 0
    %2422 = vmatpush1.bf16.msra.mxu0 0
    %2423 = vmatprep.subr.bf16.mxu0 0
    %2424 = vmatpush1.bf16.msra.mxu0 0
    %2425 = vmatprep.subr.bf16.mxu0 0
    %2426 = vmatpush1.bf16.msra.mxu0 0
    %2427 = vmatprep.subr.bf16.mxu0 0
    %2428 = vmatpush1.bf16.msra.mxu0 0
    %2429 = vmatprep.mubr.bf16.mxu0 0
    %2430 = vmatmul.mubr.bf16.gmra.mrb[0].mxu0 %v2395
    %v2431 = vpop.f32.mrb[0].mxu0
    %v2432 = vadd.f32 %v2380, %v2431
    %v2433 = vpop.f32.mrb[0].mxu0
    %v2434 = vpop.f32.mrb[0].mxu0
    %v2435 = vadd.f32 %v2380, %v2434
    %v2436 = vpop.f32.mrb[0].mxu0
    %2437 = vdwg.mxu0
    %v2438 = vpack.c.bf16 %v2435, %v2432
    %2440 = vrot.lane.b32.xlu0 %v2438, 96
    %v2441 = vpop.permute.xlu0 %2440
    %v2443 = vsel %vm256, %v2438, 0
    %v2446 = vsel %vm256, %v2441, 0
    %2448 = vmatprep.subr.bf16.mxu0 0
    %2449 = vmatpush1.bf16.xpose.msra.mxu0 %v2446
    %2450 = vmatprep.subr.bf16.mxu0 0
    %2451 = vmatpush1.bf16.xpose.msra.mxu0 0
    %2452 = vmatprep.subr.bf16.mxu0 0
    %2453 = vmatpush1.bf16.xpose.msra.mxu0 0
    %2454 = vmatprep.subr.bf16.mxu0 0
    %2455 = vmatpush1.bf16.xpose.msra.mxu0 0
    %2456 = vmatprep.subr.bf16.mxu0 0
    %2457 = vmatpush1.bf16.xpose.msra.mxu0 0
    %2458 = vmatprep.subr.bf16.mxu0 0
    %2459 = vmatpush1.bf16.xpose.msra.mxu0 0
    %2460 = vmatprep.subr.bf16.mxu0 0
    %2461 = vmatpush1.bf16.xpose.msra.mxu0 0
    %2462 = vmatprep.subr.bf16.mxu0 0
    %2463 = vmatpush1.bf16.xpose.msra.mxu0 0
    %2464 = vmatprep.subr.bf16.mxu0 0
    %2465 = vmatpush1.bf16.xpose.msra.mxu0 0
    %2466 = vmatprep.subr.bf16.mxu0 0
    %2467 = vmatpush1.bf16.xpose.msra.mxu0 0
    %2468 = vmatprep.subr.bf16.mxu0 0
    %2469 = vmatpush1.bf16.xpose.msra.mxu0 0
    %2470 = vmatprep.subr.bf16.mxu0 0
    %2471 = vmatpush1.bf16.xpose.msra.mxu0 0
    %2472 = vmatprep.subr.bf16.mxu0 0
    %2473 = vmatpush1.bf16.xpose.msra.mxu0 0
    %2474 = vmatprep.subr.bf16.mxu0 0
    %2475 = vmatpush1.bf16.xpose.msra.mxu0 0
    %2476 = vmatprep.subr.bf16.mxu0 0
    %2477 = vmatpush1.bf16.xpose.msra.mxu0 0
    %2478 = vmatprep.subr.bf16.mxu0 0
    %2479 = vmatpush1.bf16.xpose.msra.mxu0 0
    %2480 = vmatprep.mubr.bf16.mxu0 0
    %2481 = vmatmul.mubr.bf16.gmra.mrb[0].mxu0 %v2443
    %v2482 = vpop.f32.mrb[0].mxu0
    %v2483 = vadd.f32 0.0, %v2482
    %v2484 = vpop.f32.mrb[0].mxu0
    %v2485 = vpop.f32.mrb[0].mxu0
    %v2486 = vadd.f32 0.0, %v2485
    %v2487 = vpop.f32.mrb[0].mxu0
    %2488 = vdwg.mxu0
    %v2489 = vmul.f32 %v2483, 0.35355338
    %v2490 = vmul.f32 %v2486, 0.35355338
    %v2491 = vadd.f32 %v2489, %v112
    %v2492 = vadd.f32 %v2490, %v113
    %v2493 = vsel %vm308, %v2491, -inf
    %2494 = vmax.xlane.f32.xlu0 %v2493
    %v2495 = vpop.xlane.xlu0 %2494
    %v2496 = vsel %vm308, %v2492, -inf
    %2497 = vmax.xlane.f32.xlu0 %v2496
    %v2498 = vpop.xlane.xlu0 %2497
    %v2499 = vsub.f32 %v2491, %v2495
    %v2500 = vsub.f32 %v2492, %v2498
    %v2501 = vmul.f32 %v2499, 1.442695
    %v2502 = vpow.pop %v2501
    %v2503 = vmul.f32 %v2500, 1.442695
    %v2504 = vpow.pop %v2503
    %v2505 = vsel %vm308, %v2502, 0.0
    %2506 = vadd.xlane.f32.xlu0 %v2505
    %v2507 = vpop.xlane.xlu0 %2506
    %v2508 = vsel %vm308, %v2504, 0.0
    %2509 = vadd.xlane.f32.xlu0 %v2508
    %v2510 = vpop.xlane.xlu0 %2509
    %v2511 = vrcp.pop %v2507
    %v2512 = vrcp.pop %v2510
    %v2513 = vmul.f32 %v2502, %v2511
    %v2514 = vmul.f32 %v2504, %v2512
    %v2515 = vpack.c.bf16 %v2514, %v2513
    %2516 = vrot.lane.b32.xlu0 %v2438, 64
    %v2517 = vpop.permute.xlu0 %2516
    %v2520 = vsel %vm308, %v2515, 0
    %2522 = vmatprep.subr.bf16.mxu0 0
    %2523 = vmatpush1.bf16.msra.mxu0 %v2517
    %2524 = vmatprep.subr.bf16.mxu0 0
    %2525 = vmatpush1.bf16.msra.mxu0 0
    %2526 = vmatprep.subr.bf16.mxu0 0
    %2527 = vmatpush1.bf16.msra.mxu0 0
    %2528 = vmatprep.subr.bf16.mxu0 0
    %2529 = vmatpush1.bf16.msra.mxu0 0
    %2530 = vmatprep.subr.bf16.mxu0 0
    %2531 = vmatpush1.bf16.msra.mxu0 0
    %2532 = vmatprep.subr.bf16.mxu0 0
    %2533 = vmatpush1.bf16.msra.mxu0 0
    %2534 = vmatprep.subr.bf16.mxu0 0
    %2535 = vmatpush1.bf16.msra.mxu0 0
    %2536 = vmatprep.subr.bf16.mxu0 0
    %2537 = vmatpush1.bf16.msra.mxu0 0
    %2538 = vmatprep.subr.bf16.mxu0 0
    %2539 = vmatpush1.bf16.msra.mxu0 0
    %2540 = vmatprep.subr.bf16.mxu0 0
    %2541 = vmatpush1.bf16.msra.mxu0 0
    %2542 = vmatprep.subr.bf16.mxu0 0
    %2543 = vmatpush1.bf16.msra.mxu0 0
    %2544 = vmatprep.subr.bf16.mxu0 0
    %2545 = vmatpush1.bf16.msra.mxu0 0
    %2546 = vmatprep.subr.bf16.mxu0 0
    %2547 = vmatpush1.bf16.msra.mxu0 0
    %2548 = vmatprep.subr.bf16.mxu0 0
    %2549 = vmatpush1.bf16.msra.mxu0 0
    %2550 = vmatprep.subr.bf16.mxu0 0
    %2551 = vmatpush1.bf16.msra.mxu0 0
    %2552 = vmatprep.subr.bf16.mxu0 0
    %2553 = vmatpush1.bf16.msra.mxu0 0
    %2554 = vmatprep.mubr.bf16.mxu0 0
    %2555 = vmatmul.mubr.bf16.gmra.mrb[0].mxu0 %v2520
    %v2556 = vpop.f32.mrb[0].mxu0
    %v2557 = vadd.f32 0.0, %v2556
    %v2558 = vpop.f32.mrb[0].mxu0
    %v2559 = vpop.f32.mrb[0].mxu0
    %v2560 = vadd.f32 0.0, %v2559
    %v2561 = vpop.f32.mrb[0].mxu0
    %2562 = vdwg.mxu0
    %v2563 = vpack.c.bf16 %v2560, %v2557
    %v2565 = vsel %vm256, %v2563, 0
    %v2568 = vsel %vm383, %v2370, 0
    %2570 = vmatprep.subr.bf16.mxu0 0
    %2571 = vmatpush1.bf16.msra.mxu0 %v2568
    %2572 = vmatprep.subr.bf16.mxu0 0
    %2573 = vmatpush1.bf16.msra.mxu0 0
    %2574 = vmatprep.subr.bf16.mxu0 0
    %2575 = vmatpush1.bf16.msra.mxu0 0
    %2576 = vmatprep.subr.bf16.mxu0 0
    %2577 = vmatpush1.bf16.msra.mxu0 0
    %2578 = vmatprep.subr.bf16.mxu0 0
    %2579 = vmatpush1.bf16.msra.mxu0 0
    %2580 = vmatprep.subr.bf16.mxu0 0
    %2581 = vmatpush1.bf16.msra.mxu0 0
    %2582 = vmatprep.subr.bf16.mxu0 0
    %2583 = vmatpush1.bf16.msra.mxu0 0
    %2584 = vmatprep.subr.bf16.mxu0 0
    %2585 = vmatpush1.bf16.msra.mxu0 0
    %2586 = vmatprep.subr.bf16.mxu0 0
    %2587 = vmatpush1.bf16.msra.mxu0 0
    %2588 = vmatprep.subr.bf16.mxu0 0
    %2589 = vmatpush1.bf16.msra.mxu0 0
    %2590 = vmatprep.subr.bf16.mxu0 0
    %2591 = vmatpush1.bf16.msra.mxu0 0
    %2592 = vmatprep.subr.bf16.mxu0 0
    %2593 = vmatpush1.bf16.msra.mxu0 0
    %2594 = vmatprep.subr.bf16.mxu0 0
    %2595 = vmatpush1.bf16.msra.mxu0 0
    %2596 = vmatprep.subr.bf16.mxu0 0
    %2597 = vmatpush1.bf16.msra.mxu0 0
    %2598 = vmatprep.subr.bf16.mxu0 0
    %2599 = vmatpush1.bf16.msra.mxu0 0
    %2600 = vmatprep.subr.bf16.mxu0 0
    %2601 = vmatpush1.bf16.msra.mxu0 0
    %2602 = vmatprep.mubr.bf16.mxu0 0
    %2603 = vmatmul.mubr.bf16.gmra.mrb[0].mxu0 %v2565
    %v2604 = vpop.f32.mrb[0].mxu0
    %v2605 = vadd.f32 0.0, %v2604
    %v2606 = vpop.f32.mrb[0].mxu0
    %v2607 = vpop.f32.mrb[0].mxu0
    %v2608 = vadd.f32 0.0, %v2607
    %v2609 = vpop.f32.mrb[0].mxu0
    %2610 = vdwg.mxu0
    %v2612 = vlaneseq
    %v2613 = vshrl.u32 %v2612, 7
    %v2614 = vsub.s32 0, %v2613
    %v2615 = vrot.slane %v2374, %v2614
    %v2617 = vadd.f32 %v2615, %v2605
    %v2618 = vadd.f32 %v2615, %v2608
    %2619 = vrot.lane.b32.xlu0 %v2438, 120
    %v2620 = vpop.permute.xlu0 %2619
    %2621 = vrot.lane.b32.xlu0 %v2438, 88
    %v2622 = vpop.permute.xlu0 %2621
    %v2624 = vsel %vm256, %v2620, 0
    %v2627 = vsel %vm256, %v2622, 0
    %2629 = vmatprep.subr.bf16.mxu0 0
    %2630 = vmatpush1.bf16.xpose.msra.mxu0 %v2627
    %2631 = vmatprep.subr.bf16.mxu0 0
    %2632 = vmatpush1.bf16.xpose.msra.mxu0 0
    %2633 = vmatprep.subr.bf16.mxu0 0
    %2634 = vmatpush1.bf16.xpose.msra.mxu0 0
    %2635 = vmatprep.subr.bf16.mxu0 0
    %2636 = vmatpush1.bf16.xpose.msra.mxu0 0
    %2637 = vmatprep.subr.bf16.mxu0 0
    %2638 = vmatpush1.bf16.xpose.msra.mxu0 0
    %2639 = vmatprep.subr.bf16.mxu0 0
    %2640 = vmatpush1.bf16.xpose.msra.mxu0 0
    %2641 = vmatprep.subr.bf16.mxu0 0
    %2642 = vmatpush1.bf16.xpose.msra.mxu0 0
    %2643 = vmatprep.subr.bf16.mxu0 0
    %2644 = vmatpush1.bf16.xpose.msra.mxu0 0
    %2645 = vmatprep.subr.bf16.mxu0 0
    %2646 = vmatpush1.bf16.xpose.msra.mxu0 0
    %2647 = vmatprep.subr.bf16.mxu0 0
    %2648 = vmatpush1.bf16.xpose.msra.mxu0 0
    %2649 = vmatprep.subr.bf16.mxu0 0
    %2650 = vmatpush1.bf16.xpose.msra.mxu0 0
    %2651 = vmatprep.subr.bf16.mxu0 0
    %2652 = vmatpush1.bf16.xpose.msra.mxu0 0
    %2653 = vmatprep.subr.bf16.mxu0 0
    %2654 = vmatpush1.bf16.xpose.msra.mxu0 0
    %2655 = vmatprep.subr.bf16.mxu0 0
    %2656 = vmatpush1.bf16.xpose.msra.mxu0 0
    %2657 = vmatprep.subr.bf16.mxu0 0
    %2658 = vmatpush1.bf16.xpose.msra.mxu0 0
    %2659 = vmatprep.subr.bf16.mxu0 0
    %2660 = vmatpush1.bf16.xpose.msra.mxu0 0
    %2661 = vmatprep.mubr.bf16.mxu0 0
    %2662 = vmatmul.mubr.bf16.gmra.mrb[0].mxu0 %v2624
    %v2663 = vpop.f32.mrb[0].mxu0
    %v2664 = vadd.f32 0.0, %v2663
    %v2665 = vpop.f32.mrb[0].mxu0
    %v2666 = vpop.f32.mrb[0].mxu0
    %v2667 = vadd.f32 0.0, %v2666
    %v2668 = vpop.f32.mrb[0].mxu0
    %2669 = vdwg.mxu0
    %v2670 = vmul.f32 %v2664, 0.35355338
    %v2671 = vmul.f32 %v2667, 0.35355338
    %v2672 = vadd.f32 %v2670, %v112
    %v2673 = vadd.f32 %v2671, %v113
    %v2674 = vsel %vm308, %v2672, -inf
    %2675 = vmax.xlane.f32.xlu0 %v2674
    %v2676 = vpop.xlane.xlu0 %2675
    %v2677 = vsel %vm308, %v2673, -inf
    %2678 = vmax.xlane.f32.xlu0 %v2677
    %v2679 = vpop.xlane.xlu0 %2678
    %v2680 = vsub.f32 %v2672, %v2676
    %v2681 = vsub.f32 %v2673, %v2679
    %v2682 = vmul.f32 %v2680, 1.442695
    %v2683 = vpow.pop %v2682
    %v2684 = vmul.f32 %v2681, 1.442695
    %v2685 = vpow.pop %v2684
    %v2686 = vsel %vm308, %v2683, 0.0
    %2687 = vadd.xlane.f32.xlu0 %v2686
    %v2688 = vpop.xlane.xlu0 %2687
    %v2689 = vsel %vm308, %v2685, 0.0
    %2690 = vadd.xlane.f32.xlu0 %v2689
    %v2691 = vpop.xlane.xlu0 %2690
    %v2692 = vrcp.pop %v2688
    %v2693 = vrcp.pop %v2691
    %v2694 = vmul.f32 %v2683, %v2692
    %v2695 = vmul.f32 %v2685, %v2693
    %v2696 = vpack.c.bf16 %v2695, %v2694
    %2697 = vrot.lane.b32.xlu0 %v2438, 56
    %v2698 = vpop.permute.xlu0 %2697
    %v2701 = vsel %vm308, %v2696, 0
    %2703 = vmatprep.subr.bf16.mxu0 0
    %2704 = vmatpush1.bf16.msra.mxu0 %v2698
    %2705 = vmatprep.subr.bf16.mxu0 0
    %2706 = vmatpush1.bf16.msra.mxu0 0
    %2707 = vmatprep.subr.bf16.mxu0 0
    %2708 = vmatpush1.bf16.msra.mxu0 0
    %2709 = vmatprep.subr.bf16.mxu0 0
    %2710 = vmatpush1.bf16.msra.mxu0 0
    %2711 = vmatprep.subr.bf16.mxu0 0
    %2712 = vmatpush1.bf16.msra.mxu0 0
    %2713 = vmatprep.subr.bf16.mxu0 0
    %2714 = vmatpush1.bf16.msra.mxu0 0
    %2715 = vmatprep.subr.bf16.mxu0 0
    %2716 = vmatpush1.bf16.msra.mxu0 0
    %2717 = vmatprep.subr.bf16.mxu0 0
    %2718 = vmatpush1.bf16.msra.mxu0 0
    %2719 = vmatprep.subr.bf16.mxu0 0
    %2720 = vmatpush1.bf16.msra.mxu0 0
    %2721 = vmatprep.subr.bf16.mxu0 0
    %2722 = vmatpush1.bf16.msra.mxu0 0
    %2723 = vmatprep.subr.bf16.mxu0 0
    %2724 = vmatpush1.bf16.msra.mxu0 0
    %2725 = vmatprep.subr.bf16.mxu0 0
    %2726 = vmatpush1.bf16.msra.mxu0 0
    %2727 = vmatprep.subr.bf16.mxu0 0
    %2728 = vmatpush1.bf16.msra.mxu0 0
    %2729 = vmatprep.subr.bf16.mxu0 0
    %2730 = vmatpush1.bf16.msra.mxu0 0
    %2731 = vmatprep.subr.bf16.mxu0 0
    %2732 = vmatpush1.bf16.msra.mxu0 0
    %2733 = vmatprep.subr.bf16.mxu0 0
    %2734 = vmatpush1.bf16.msra.mxu0 0
    %2735 = vmatprep.mubr.bf16.mxu0 0
    %2736 = vmatmul.mubr.bf16.gmra.mrb[0].mxu0 %v2701
    %v2737 = vpop.f32.mrb[0].mxu0
    %v2738 = vadd.f32 0.0, %v2737
    %v2739 = vpop.f32.mrb[0].mxu0
    %v2740 = vpop.f32.mrb[0].mxu0
    %v2741 = vadd.f32 0.0, %v2740
    %v2742 = vpop.f32.mrb[0].mxu0
    %2743 = vdwg.mxu0
    %v2744 = vpack.c.bf16 %v2741, %v2738
    %v2746 = vsel %vm256, %v2744, 0
    %v2749 = vsel %vm383, %v2371, 0
    %2751 = vmatprep.subr.bf16.mxu0 0
    %2752 = vmatpush1.bf16.msra.mxu0 %v2749
    %2753 = vmatprep.subr.bf16.mxu0 0
    %2754 = vmatpush1.bf16.msra.mxu0 0
    %2755 = vmatprep.subr.bf16.mxu0 0
    %2756 = vmatpush1.bf16.msra.mxu0 0
    %2757 = vmatprep.subr.bf16.mxu0 0
    %2758 = vmatpush1.bf16.msra.mxu0 0
    %2759 = vmatprep.subr.bf16.mxu0 0
    %2760 = vmatpush1.bf16.msra.mxu0 0
    %2761 = vmatprep.subr.bf16.mxu0 0
    %2762 = vmatpush1.bf16.msra.mxu0 0
    %2763 = vmatprep.subr.bf16.mxu0 0
    %2764 = vmatpush1.bf16.msra.mxu0 0
    %2765 = vmatprep.subr.bf16.mxu0 0
    %2766 = vmatpush1.bf16.msra.mxu0 0
    %2767 = vmatprep.subr.bf16.mxu0 0
    %2768 = vmatpush1.bf16.msra.mxu0 0
    %2769 = vmatprep.subr.bf16.mxu0 0
    %2770 = vmatpush1.bf16.msra.mxu0 0
    %2771 = vmatprep.subr.bf16.mxu0 0
    %2772 = vmatpush1.bf16.msra.mxu0 0
    %2773 = vmatprep.subr.bf16.mxu0 0
    %2774 = vmatpush1.bf16.msra.mxu0 0
    %2775 = vmatprep.subr.bf16.mxu0 0
    %2776 = vmatpush1.bf16.msra.mxu0 0
    %2777 = vmatprep.subr.bf16.mxu0 0
    %2778 = vmatpush1.bf16.msra.mxu0 0
    %2779 = vmatprep.subr.bf16.mxu0 0
    %2780 = vmatpush1.bf16.msra.mxu0 0
    %2781 = vmatprep.subr.bf16.mxu0 0
    %2782 = vmatpush1.bf16.msra.mxu0 0
    %2783 = vmatprep.mubr.bf16.mxu0 0
    %2784 = vmatmul.mubr.bf16.gmra.mrb[0].mxu0 %v2746
    %v2785 = vpop.f32.mrb[0].mxu0
    %v2786 = vadd.f32 0.0, %v2785
    %v2787 = vpop.f32.mrb[0].mxu0
    %v2788 = vpop.f32.mrb[0].mxu0
    %v2789 = vadd.f32 0.0, %v2788
    %v2790 = vpop.f32.mrb[0].mxu0
    %2791 = vdwg.mxu0
    %v2792 = vadd.f32 %v2617, %v2786
    %v2793 = vadd.f32 %v2618, %v2789
    %2794 = vrot.lane.b32.xlu0 %v2438, 112
    %v2795 = vpop.permute.xlu0 %2794
    %2796 = vrot.lane.b32.xlu0 %v2438, 80
    %v2797 = vpop.permute.xlu0 %2796
    %v2799 = vsel %vm256, %v2795, 0
    %v2802 = vsel %vm256, %v2797, 0
    %2804 = vmatprep.subr.bf16.mxu0 0
    %2805 = vmatpush1.bf16.xpose.msra.mxu0 %v2802
    %2806 = vmatprep.subr.bf16.mxu0 0
    %2807 = vmatpush1.bf16.xpose.msra.mxu0 0
    %2808 = vmatprep.subr.bf16.mxu0 0
    %2809 = vmatpush1.bf16.xpose.msra.mxu0 0
    %2810 = vmatprep.subr.bf16.mxu0 0
    %2811 = vmatpush1.bf16.xpose.msra.mxu0 0
    %2812 = vmatprep.subr.bf16.mxu0 0
    %2813 = vmatpush1.bf16.xpose.msra.mxu0 0
    %2814 = vmatprep.subr.bf16.mxu0 0
    %2815 = vmatpush1.bf16.xpose.msra.mxu0 0
    %2816 = vmatprep.subr.bf16.mxu0 0
    %2817 = vmatpush1.bf16.xpose.msra.mxu0 0
    %2818 = vmatprep.subr.bf16.mxu0 0
    %2819 = vmatpush1.bf16.xpose.msra.mxu0 0
    %2820 = vmatprep.subr.bf16.mxu0 0
    %2821 = vmatpush1.bf16.xpose.msra.mxu0 0
    %2822 = vmatprep.subr.bf16.mxu0 0
    %2823 = vmatpush1.bf16.xpose.msra.mxu0 0
    %2824 = vmatprep.subr.bf16.mxu0 0
    %2825 = vmatpush1.bf16.xpose.msra.mxu0 0
    %2826 = vmatprep.subr.bf16.mxu0 0
    %2827 = vmatpush1.bf16.xpose.msra.mxu0 0
    %2828 = vmatprep.subr.bf16.mxu0 0
    %2829 = vmatpush1.bf16.xpose.msra.mxu0 0
    %2830 = vmatprep.subr.bf16.mxu0 0
    %2831 = vmatpush1.bf16.xpose.msra.mxu0 0
    %2832 = vmatprep.subr.bf16.mxu0 0
    %2833 = vmatpush1.bf16.xpose.msra.mxu0 0
    %2834 = vmatprep.subr.bf16.mxu0 0
    %2835 = vmatpush1.bf16.xpose.msra.mxu0 0
    %2836 = vmatprep.mubr.bf16.mxu0 0
    %2837 = vmatmul.mubr.bf16.gmra.mrb[0].mxu0 %v2799
    %v2838 = vpop.f32.mrb[0].mxu0
    %v2839 = vadd.f32 0.0, %v2838
    %v2840 = vpop.f32.mrb[0].mxu0
    %v2841 = vpop.f32.mrb[0].mxu0
    %v2842 = vadd.f32 0.0, %v2841
    %v2843 = vpop.f32.mrb[0].mxu0
    %2844 = vdwg.mxu0
    %v2845 = vmul.f32 %v2839, 0.35355338
    %v2846 = vmul.f32 %v2842, 0.35355338
    %v2847 = vadd.f32 %v2845, %v112
    %v2848 = vadd.f32 %v2846, %v113
    %v2849 = vsel %vm308, %v2847, -inf
    %2850 = vmax.xlane.f32.xlu0 %v2849
    %v2851 = vpop.xlane.xlu0 %2850
    %v2852 = vsel %vm308, %v2848, -inf
    %2853 = vmax.xlane.f32.xlu0 %v2852
    %v2854 = vpop.xlane.xlu0 %2853
    %v2855 = vsub.f32 %v2847, %v2851
    %v2856 = vsub.f32 %v2848, %v2854
    %v2857 = vmul.f32 %v2855, 1.442695
    %v2858 = vpow.pop %v2857
    %v2859 = vmul.f32 %v2856, 1.442695
    %v2860 = vpow.pop %v2859
    %v2861 = vsel %vm308, %v2858, 0.0
    %2862 = vadd.xlane.f32.xlu0 %v2861
    %v2863 = vpop.xlane.xlu0 %2862
    %v2864 = vsel %vm308, %v2860, 0.0
    %2865 = vadd.xlane.f32.xlu0 %v2864
    %v2866 = vpop.xlane.xlu0 %2865
    %v2867 = vrcp.pop %v2863
    %v2868 = vrcp.pop %v2866
    %v2869 = vmul.f32 %v2858, %v2867
    %v2870 = vmul.f32 %v2860, %v2868
    %v2871 = vpack.c.bf16 %v2870, %v2869
    %2872 = vrot.lane.b32.xlu0 %v2438, 48
    %v2873 = vpop.permute.xlu0 %2872
    %v2876 = vsel %vm308, %v2871, 0
    %2878 = vmatprep.subr.bf16.mxu0 0
    %2879 = vmatpush1.bf16.msra.mxu0 %v2873
    %2880 = vmatprep.subr.bf16.mxu0 0
    %2881 = vmatpush1.bf16.msra.mxu0 0
    %2882 = vmatprep.subr.bf16.mxu0 0
    %2883 = vmatpush1.bf16.msra.mxu0 0
    %2884 = vmatprep.subr.bf16.mxu0 0
    %2885 = vmatpush1.bf16.msra.mxu0 0
    %2886 = vmatprep.subr.bf16.mxu0 0
    %2887 = vmatpush1.bf16.msra.mxu0 0
    %2888 = vmatprep.subr.bf16.mxu0 0
    %2889 = vmatpush1.bf16.msra.mxu0 0
    %2890 = vmatprep.subr.bf16.mxu0 0
    %2891 = vmatpush1.bf16.msra.mxu0 0
    %2892 = vmatprep.subr.bf16.mxu0 0
    %2893 = vmatpush1.bf16.msra.mxu0 0
    %2894 = vmatprep.subr.bf16.mxu0 0
    %2895 = vmatpush1.bf16.msra.mxu0 0
    %2896 = vmatprep.subr.bf16.mxu0 0
    %2897 = vmatpush1.bf16.msra.mxu0 0
    %2898 = vmatprep.subr.bf16.mxu0 0
    %2899 = vmatpush1.bf16.msra.mxu0 0
    %2900 = vmatprep.subr.bf16.mxu0 0
    %2901 = vmatpush1.bf16.msra.mxu0 0
    %2902 = vmatprep.subr.bf16.mxu0 0
    %2903 = vmatpush1.bf16.msra.mxu0 0
    %2904 = vmatprep.subr.bf16.mxu0 0
    %2905 = vmatpush1.bf16.msra.mxu0 0
    %2906 = vmatprep.subr.bf16.mxu0 0
    %2907 = vmatpush1.bf16.msra.mxu0 0
    %2908 = vmatprep.subr.bf16.mxu0 0
    %2909 = vmatpush1.bf16.msra.mxu0 0
    %2910 = vmatprep.mubr.bf16.mxu0 0
    %2911 = vmatmul.mubr.bf16.gmra.mrb[0].mxu0 %v2876
    %v2912 = vpop.f32.mrb[0].mxu0
    %v2913 = vadd.f32 0.0, %v2912
    %v2914 = vpop.f32.mrb[0].mxu0
    %v2915 = vpop.f32.mrb[0].mxu0
    %v2916 = vadd.f32 0.0, %v2915
    %v2917 = vpop.f32.mrb[0].mxu0
    %2918 = vdwg.mxu0
    %v2919 = vpack.c.bf16 %v2916, %v2913
    %v2921 = vsel %vm256, %v2919, 0
    %v2924 = vsel %vm383, %v2372, 0
    %2926 = vmatprep.subr.bf16.mxu0 0
    %2927 = vmatpush1.bf16.msra.mxu0 %v2924
    %2928 = vmatprep.subr.bf16.mxu0 0
    %2929 = vmatpush1.bf16.msra.mxu0 0
    %2930 = vmatprep.subr.bf16.mxu0 0
    %2931 = vmatpush1.bf16.msra.mxu0 0
    %2932 = vmatprep.subr.bf16.mxu0 0
    %2933 = vmatpush1.bf16.msra.mxu0 0
    %2934 = vmatprep.subr.bf16.mxu0 0
    %2935 = vmatpush1.bf16.msra.mxu0 0
    %2936 = vmatprep.subr.bf16.mxu0 0
    %2937 = vmatpush1.bf16.msra.mxu0 0
    %2938 = vmatprep.subr.bf16.mxu0 0
    %2939 = vmatpush1.bf16.msra.mxu0 0
    %2940 = vmatprep.subr.bf16.mxu0 0
    %2941 = vmatpush1.bf16.msra.mxu0 0
    %2942 = vmatprep.subr.bf16.mxu0 0
    %2943 = vmatpush1.bf16.msra.mxu0 0
    %2944 = vmatprep.subr.bf16.mxu0 0
    %2945 = vmatpush1.bf16.msra.mxu0 0
    %2946 = vmatprep.subr.bf16.mxu0 0
    %2947 = vmatpush1.bf16.msra.mxu0 0
    %2948 = vmatprep.subr.bf16.mxu0 0
    %2949 = vmatpush1.bf16.msra.mxu0 0
    %2950 = vmatprep.subr.bf16.mxu0 0
    %2951 = vmatpush1.bf16.msra.mxu0 0
    %2952 = vmatprep.subr.bf16.mxu0 0
    %2953 = vmatpush1.bf16.msra.mxu0 0
    %2954 = vmatprep.subr.bf16.mxu0 0
    %2955 = vmatpush1.bf16.msra.mxu0 0
    %2956 = vmatprep.subr.bf16.mxu0 0
    %2957 = vmatpush1.bf16.msra.mxu0 0
    %2958 = vmatprep.mubr.bf16.mxu0 0
    %2959 = vmatmul.mubr.bf16.gmra.mrb[0].mxu0 %v2921
    %v2960 = vpop.f32.mrb[0].mxu0
    %v2961 = vadd.f32 0.0, %v2960
    %v2962 = vpop.f32.mrb[0].mxu0
    %v2963 = vpop.f32.mrb[0].mxu0
    %v2964 = vadd.f32 0.0, %v2963
    %v2965 = vpop.f32.mrb[0].mxu0
    %2966 = vdwg.mxu0
    %v2967 = vadd.f32 %v2792, %v2961
    %v2968 = vadd.f32 %v2793, %v2964
    %2969 = vrot.lane.b32.xlu0 %v2438, 104
    %v2970 = vpop.permute.xlu0 %2969
    %2971 = vrot.lane.b32.xlu0 %v2438, 72
    %v2972 = vpop.permute.xlu0 %2971
    %v2974 = vsel %vm256, %v2970, 0
    %v2977 = vsel %vm256, %v2972, 0
    %2979 = vmatprep.subr.bf16.mxu0 0
    %2980 = vmatpush1.bf16.xpose.msra.mxu0 %v2977
    %2981 = vmatprep.subr.bf16.mxu0 0
    %2982 = vmatpush1.bf16.xpose.msra.mxu0 0
    %2983 = vmatprep.subr.bf16.mxu0 0
    %2984 = vmatpush1.bf16.xpose.msra.mxu0 0
    %2985 = vmatprep.subr.bf16.mxu0 0
    %2986 = vmatpush1.bf16.xpose.msra.mxu0 0
    %2987 = vmatprep.subr.bf16.mxu0 0
    %2988 = vmatpush1.bf16.xpose.msra.mxu0 0
    %2989 = vmatprep.subr.bf16.mxu0 0
    %2990 = vmatpush1.bf16.xpose.msra.mxu0 0
    %2991 = vmatprep.subr.bf16.mxu0 0
    %2992 = vmatpush1.bf16.xpose.msra.mxu0 0
    %2993 = vmatprep.subr.bf16.mxu0 0
    %2994 = vmatpush1.bf16.xpose.msra.mxu0 0
    %2995 = vmatprep.subr.bf16.mxu0 0
    %2996 = vmatpush1.bf16.xpose.msra.mxu0 0
    %2997 = vmatprep.subr.bf16.mxu0 0
    %2998 = vmatpush1.bf16.xpose.msra.mxu0 0
    %2999 = vmatprep.subr.bf16.mxu0 0
    %3000 = vmatpush1.bf16.xpose.msra.mxu0 0
    %3001 = vmatprep.subr.bf16.mxu0 0
    %3002 = vmatpush1.bf16.xpose.msra.mxu0 0
    %3003 = vmatprep.subr.bf16.mxu0 0
    %3004 = vmatpush1.bf16.xpose.msra.mxu0 0
    %3005 = vmatprep.subr.bf16.mxu0 0
    %3006 = vmatpush1.bf16.xpose.msra.mxu0 0
    %3007 = vmatprep.subr.bf16.mxu0 0
    %3008 = vmatpush1.bf16.xpose.msra.mxu0 0
    %3009 = vmatprep.subr.bf16.mxu0 0
    %3010 = vmatpush1.bf16.xpose.msra.mxu0 0
    %3011 = vmatprep.mubr.bf16.mxu0 0
    %3012 = vmatmul.mubr.bf16.gmra.mrb[0].mxu0 %v2974
    %v3013 = vpop.f32.mrb[0].mxu0
    %v3014 = vadd.f32 0.0, %v3013
    %v3015 = vpop.f32.mrb[0].mxu0
    %v3016 = vpop.f32.mrb[0].mxu0
    %v3017 = vadd.f32 0.0, %v3016
    %v3018 = vpop.f32.mrb[0].mxu0
    %3019 = vdwg.mxu0
    %v3020 = vmul.f32 %v3014, 0.35355338
    %v3021 = vmul.f32 %v3017, 0.35355338
    %v3022 = vadd.f32 %v3020, %v112
    %v3023 = vadd.f32 %v3021, %v113
    %v3024 = vsel %vm308, %v3022, -inf
    %3025 = vmax.xlane.f32.xlu0 %v3024
    %v3026 = vpop.xlane.xlu0 %3025
    %v3027 = vsel %vm308, %v3023, -inf
    %3028 = vmax.xlane.f32.xlu0 %v3027
    %v3029 = vpop.xlane.xlu0 %3028
    %v3030 = vsub.f32 %v3022, %v3026
    %v3031 = vsub.f32 %v3023, %v3029
    %v3032 = vmul.f32 %v3030, 1.442695
    %v3033 = vpow.pop %v3032
    %v3034 = vmul.f32 %v3031, 1.442695
    %v3035 = vpow.pop %v3034
    %v3036 = vsel %vm308, %v3033, 0.0
    %3037 = vadd.xlane.f32.xlu0 %v3036
    %v3038 = vpop.xlane.xlu0 %3037
    %v3039 = vsel %vm308, %v3035, 0.0
    %3040 = vadd.xlane.f32.xlu0 %v3039
    %v3041 = vpop.xlane.xlu0 %3040
    %v3042 = vrcp.pop %v3038
    %v3043 = vrcp.pop %v3041
    %v3044 = vmul.f32 %v3033, %v3042
    %v3045 = vmul.f32 %v3035, %v3043
    %v3046 = vpack.c.bf16 %v3045, %v3044
    %3047 = vrot.lane.b32.xlu0 %v2438, 40
    %v3048 = vpop.permute.xlu0 %3047
    %v3051 = vsel %vm308, %v3046, 0
    %3053 = vmatprep.subr.bf16.mxu0 0
    %3054 = vmatpush1.bf16.msra.mxu0 %v3048
    %3055 = vmatprep.subr.bf16.mxu0 0
    %3056 = vmatpush1.bf16.msra.mxu0 0
    %3057 = vmatprep.subr.bf16.mxu0 0
    %3058 = vmatpush1.bf16.msra.mxu0 0
    %3059 = vmatprep.subr.bf16.mxu0 0
    %3060 = vmatpush1.bf16.msra.mxu0 0
    %3061 = vmatprep.subr.bf16.mxu0 0
    %3062 = vmatpush1.bf16.msra.mxu0 0
    %3063 = vmatprep.subr.bf16.mxu0 0
    %3064 = vmatpush1.bf16.msra.mxu0 0
    %3065 = vmatprep.subr.bf16.mxu0 0
    %3066 = vmatpush1.bf16.msra.mxu0 0
    %3067 = vmatprep.subr.bf16.mxu0 0
    %3068 = vmatpush1.bf16.msra.mxu0 0
    %3069 = vmatprep.subr.bf16.mxu0 0
    %3070 = vmatpush1.bf16.msra.mxu0 0
    %3071 = vmatprep.subr.bf16.mxu0 0
    %3072 = vmatpush1.bf16.msra.mxu0 0
    %3073 = vmatprep.subr.bf16.mxu0 0
    %3074 = vmatpush1.bf16.msra.mxu0 0
    %3075 = vmatprep.subr.bf16.mxu0 0
    %3076 = vmatpush1.bf16.msra.mxu0 0
    %3077 = vmatprep.subr.bf16.mxu0 0
    %3078 = vmatpush1.bf16.msra.mxu0 0
    %3079 = vmatprep.subr.bf16.mxu0 0
    %3080 = vmatpush1.bf16.msra.mxu0 0
    %3081 = vmatprep.subr.bf16.mxu0 0
    %3082 = vmatpush1.bf16.msra.mxu0 0
    %3083 = vmatprep.subr.bf16.mxu0 0
    %3084 = vmatpush1.bf16.msra.mxu0 0
    %3085 = vmatprep.mubr.bf16.mxu0 0
    %3086 = vmatmul.mubr.bf16.gmra.mrb[0].mxu0 %v3051
    %v3087 = vpop.f32.mrb[0].mxu0
    %v3088 = vadd.f32 0.0, %v3087
    %v3089 = vpop.f32.mrb[0].mxu0
    %v3090 = vpop.f32.mrb[0].mxu0
    %v3091 = vadd.f32 0.0, %v3090
    %v3092 = vpop.f32.mrb[0].mxu0
    %3093 = vdwg.mxu0
    %v3094 = vpack.c.bf16 %v3091, %v3088
    %v3096 = vsel %vm256, %v3094, 0
    %v3099 = vsel %vm383, %v2373, 0
    %3101 = vmatprep.subr.bf16.mxu0 0
    %3102 = vmatpush1.bf16.msra.mxu0 %v3099
    %3103 = vmatprep.subr.bf16.mxu0 0
    %3104 = vmatpush1.bf16.msra.mxu0 0
    %3105 = vmatprep.subr.bf16.mxu0 0
    %3106 = vmatpush1.bf16.msra.mxu0 0
    %3107 = vmatprep.subr.bf16.mxu0 0
    %3108 = vmatpush1.bf16.msra.mxu0 0
    %3109 = vmatprep.subr.bf16.mxu0 0
    %3110 = vmatpush1.bf16.msra.mxu0 0
    %3111 = vmatprep.subr.bf16.mxu0 0
    %3112 = vmatpush1.bf16.msra.mxu0 0
    %3113 = vmatprep.subr.bf16.mxu0 0
    %3114 = vmatpush1.bf16.msra.mxu0 0
    %3115 = vmatprep.subr.bf16.mxu0 0
    %3116 = vmatpush1.bf16.msra.mxu0 0
    %3117 = vmatprep.subr.bf16.mxu0 0
    %3118 = vmatpush1.bf16.msra.mxu0 0
    %3119 = vmatprep.subr.bf16.mxu0 0
    %3120 = vmatpush1.bf16.msra.mxu0 0
    %3121 = vmatprep.subr.bf16.mxu0 0
    %3122 = vmatpush1.bf16.msra.mxu0 0
    %3123 = vmatprep.subr.bf16.mxu0 0
    %3124 = vmatpush1.bf16.msra.mxu0 0
    %3125 = vmatprep.subr.bf16.mxu0 0
    %3126 = vmatpush1.bf16.msra.mxu0 0
    %3127 = vmatprep.subr.bf16.mxu0 0
    %3128 = vmatpush1.bf16.msra.mxu0 0
    %3129 = vmatprep.subr.bf16.mxu0 0
    %3130 = vmatpush1.bf16.msra.mxu0 0
    %3131 = vmatprep.subr.bf16.mxu0 0
    %3132 = vmatpush1.bf16.msra.mxu0 0
    %3133 = vmatprep.mubr.bf16.mxu0 0
    %3134 = vmatmul.mubr.bf16.gmra.mrb[0].mxu0 %v3096
    %v3135 = vpop.f32.mrb[0].mxu0
    %v3136 = vadd.f32 0.0, %v3135
    %v3137 = vpop.f32.mrb[0].mxu0
    %v3138 = vpop.f32.mrb[0].mxu0
    %v3139 = vadd.f32 0.0, %v3138
    %v3140 = vpop.f32.mrb[0].mxu0
    %3141 = vdwg.mxu0
    %v3142 = vadd.f32 %v2967, %v3136
    %v3143 = vadd.f32 %v2968, %v3139
    %v3144 = vadd.f32 %v2304, %v3142
    %v3145 = vadd.f32 %v2305, %v3143
    %s3146 = scalar_lea.vmem %s23, 2
    %v3147 = vld [vmem:[%s3146] sm:$0x1]
    %s3148 = scalar_lea.vmem %s23, 3
    %v3149 = vld [vmem:[%s3148] sm:$0x1]
    %v3150 = vsel %vm121, %v3144, 0.0
    %3151 = vadd.xlane.f32.xlu0 %v3150
    %v3152 = vpop.xlane.xlu0 %3151
    %v3153 = vsel %vm121, %v3145, 0.0
    %3154 = vadd.xlane.f32.xlu0 %v3153
    %v3155 = vpop.xlane.xlu0 %3154
    %v3156 = vmul.f32 %v3152, %v128
    %v3157 = vmul.f32 %v3155, %v128
    %v3158 = vsub.f32 %v3144, %v3156
    %v3159 = vsub.f32 %v3145, %v3157
    %v3160 = vmul.f32 %v3158, %v3158
    %v3161 = vmul.f32 %v3159, %v3159
    %v3162 = vsel %vm121, %v3160, 0.0
    %3163 = vadd.xlane.f32.xlu0 %v3162
    %v3164 = vpop.xlane.xlu0 %3163
    %v3165 = vsel %vm121, %v3161, 0.0
    %3166 = vadd.xlane.f32.xlu0 %v3165
    %v3167 = vpop.xlane.xlu0 %3166
    %v3168 = vmul.f32 %v3164, 0.032258064
    %v3169 = vmul.f32 %v3167, 0.032258064
    %v3170 = vrsqrt.pop %v3168
    %v3171 = vmul.f32 %v3168, %v3170
    %vm3172 = vcmp.eq.f32.partialorder %v3168, inf
    %v3173 = vsel %vm3172, %v3168, %v3171
    %vm3174 = vcmp.eq.f32.partialorder %v3168, 0.0
    %v3175 = vand.u32 %v3168, 2147483648
    %v3176 = vsel %vm3174, %v3175, %v3173
    %v3177 = vrsqrt.pop %v3169
    %v3178 = vmul.f32 %v3169, %v3177
    %vm3179 = vcmp.eq.f32.partialorder %v3169, inf
    %v3180 = vsel %vm3179, %v3169, %v3178
    %vm3181 = vcmp.eq.f32.partialorder %v3169, 0.0
    %v3182 = vand.u32 %v3169, 2147483648
    %v3183 = vsel %vm3181, %v3182, %v3180
    %v3184 = vadd.f32 %v3176, 1e-06
    %v3185 = vadd.f32 %v3183, 1e-06
    %v3186 = vrcp.pop %v3184
    %v3187 = vrcp.pop %v3185
    %v3189 = vlaneseq
    %v3190 = vshrl.u32 %v3189, 7
    %v3191 = vsub.s32 0, %v3190
    %v3192 = vrot.slane %v3147, %v3191
    %v3194 = vmul.f32 %v3192, %v3158
    %v3195 = vmul.f32 %v3192, %v3159
    %v3196 = vmul.f32 %v3194, %v3186
    %v3197 = vmul.f32 %v3195, %v3187
    %v3199 = vlaneseq
    %v3200 = vshrl.u32 %v3199, 7
    %v3201 = vsub.s32 0, %v3200
    %v3202 = vrot.slane %v3149, %v3201
    %v3204 = vadd.f32 %v3196, %v3202
    %v3205 = vadd.f32 %v3197, %v3202
    %s3206 = scalar_lea.vmem %s15, 16
    %v3207 = vld [vmem:[%s3206] sm:$0xf]
    %v3208 = vld [vmem:[%s3206 + $0x4] sm:$0xf]
    %v3209 = vld [vmem:[%s3206 + $0x8] sm:$0xf]
    %v3210 = vld [vmem:[%s3206 + $0xc] sm:$0xf]
    %s3211 = scalar_lea.vmem %s16, 1
    %v3212 = vld [vmem:[%s3211] sm:$0x1]
    %s3213 = scalar_lea.vmem %s17, 16
    %v3214 = vld [vmem:[%s3213] sm:$0xf]
    %v3215 = vld [vmem:[%s3213 + $0x4] sm:$0xf]
    %v3216 = vld [vmem:[%s3213 + $0x8] sm:$0xf]
    %v3217 = vld [vmem:[%s3213 + $0xc] sm:$0xf]
    %s3218 = scalar_lea.vmem %s18, 1
    %v3219 = vld [vmem:[%s3218] sm:$0x1]
    %v3220 = vpack.c.bf16 %v3205, %v3204
    %v3222 = vlaneseq
    %v3223 = vshrl.u32 %v3222, 7
    %v3224 = vsub.s32 0, %v3223
    %v3225 = vrot.slane %v3212, %v3224
    %v3231 = vunpack.c.l.b16 %v3207
    %v3232 = vunpack.c.l.b16 %v3208
    %v3233 = vunpack.c.l.b16 %v3209
    %v3234 = vunpack.c.l.b16 %v3210
    %v3235 = vpack.c.b16 %v3232, %v3231
    %v3236 = vpack.c.b16 %v3234, %v3233
    %v3240 = vsel %vm121, %v3220, 0
    %3242 = vmatprep.subr.bf16.mxu0 0
    %3243 = vmatpush1.bf16.msra.mxu0 %v3235
    %3244 = vmatprep.subr.bf16.mxu0 0
    %3245 = vmatpush1.bf16.msra.mxu0 %v3236
    %3246 = vmatprep.subr.bf16.mxu0 0
    %3247 = vmatpush1.bf16.msra.mxu0 0
    %3248 = vmatprep.subr.bf16.mxu0 0
    %3249 = vmatpush1.bf16.msra.mxu0 0
    %3250 = vmatprep.subr.bf16.mxu0 0
    %3251 = vmatpush1.bf16.msra.mxu0 0
    %3252 = vmatprep.subr.bf16.mxu0 0
    %3253 = vmatpush1.bf16.msra.mxu0 0
    %3254 = vmatprep.subr.bf16.mxu0 0
    %3255 = vmatpush1.bf16.msra.mxu0 0
    %3256 = vmatprep.subr.bf16.mxu0 0
    %3257 = vmatpush1.bf16.msra.mxu0 0
    %3258 = vmatprep.subr.bf16.mxu0 0
    %3259 = vmatpush1.bf16.msra.mxu0 0
    %3260 = vmatprep.subr.bf16.mxu0 0
    %3261 = vmatpush1.bf16.msra.mxu0 0
    %3262 = vmatprep.subr.bf16.mxu0 0
    %3263 = vmatpush1.bf16.msra.mxu0 0
    %3264 = vmatprep.subr.bf16.mxu0 0
    %3265 = vmatpush1.bf16.msra.mxu0 0
    %3266 = vmatprep.subr.bf16.mxu0 0
    %3267 = vmatpush1.bf16.msra.mxu0 0
    %3268 = vmatprep.subr.bf16.mxu0 0
    %3269 = vmatpush1.bf16.msra.mxu0 0
    %3270 = vmatprep.subr.bf16.mxu0 0
    %3271 = vmatpush1.bf16.msra.mxu0 0
    %3272 = vmatprep.subr.bf16.mxu0 0
    %3273 = vmatpush1.bf16.msra.mxu0 0
    %3274 = vmatprep.mubr.bf16.mxu0 0
    %3275 = vmatmul.mubr.bf16.gmra.mrb[0].mxu0 %v3240
    %v3276 = vpop.f32.mrb[0].mxu0
    %v3277 = vadd.f32 %v3225, %v3276
    %v3278 = vpop.f32.mrb[0].mxu0
    %v3279 = vpop.f32.mrb[0].mxu0
    %v3280 = vadd.f32 %v3225, %v3279
    %v3281 = vpop.f32.mrb[0].mxu0
    %3282 = vdwg.mxu0
    %v3283 = vpack.c.bf16 %v2303, %v2302
    %3284 = vrot.lane.b32.xlu0 %v3235, 96
    %v3285 = vpop.permute.xlu0 %3284
    %3286 = vrot.lane.b32.xlu0 %v3236, 96
    %v3287 = vpop.permute.xlu0 %3286
    %3290 = vrot.lane.b32.xlu0 %v3225, 96
    %v3291 = vpop.permute.xlu0 %3290
    %v3294 = vsel %vm121, %v3283, 0
    %3296 = vmatprep.subr.bf16.mxu0 0
    %3297 = vmatpush1.bf16.msra.mxu0 %v3285
    %3298 = vmatprep.subr.bf16.mxu0 0
    %3299 = vmatpush1.bf16.msra.mxu0 %v3287
    %3300 = vmatprep.subr.bf16.mxu0 0
    %3301 = vmatpush1.bf16.msra.mxu0 0
    %3302 = vmatprep.subr.bf16.mxu0 0
    %3303 = vmatpush1.bf16.msra.mxu0 0
    %3304 = vmatprep.subr.bf16.mxu0 0
    %3305 = vmatpush1.bf16.msra.mxu0 0
    %3306 = vmatprep.subr.bf16.mxu0 0
    %3307 = vmatpush1.bf16.msra.mxu0 0
    %3308 = vmatprep.subr.bf16.mxu0 0
    %3309 = vmatpush1.bf16.msra.mxu0 0
    %3310 = vmatprep.subr.bf16.mxu0 0
    %3311 = vmatpush1.bf16.msra.mxu0 0
    %3312 = vmatprep.subr.bf16.mxu0 0
    %3313 = vmatpush1.bf16.msra.mxu0 0
    %3314 = vmatprep.subr.bf16.mxu0 0
    %3315 = vmatpush1.bf16.msra.mxu0 0
    %3316 = vmatprep.subr.bf16.mxu0 0
    %3317 = vmatpush1.bf16.msra.mxu0 0
    %3318 = vmatprep.subr.bf16.mxu0 0
    %3319 = vmatpush1.bf16.msra.mxu0 0
    %3320 = vmatprep.subr.bf16.mxu0 0
    %3321 = vmatpush1.bf16.msra.mxu0 0
    %3322 = vmatprep.subr.bf16.mxu0 0
    %3323 = vmatpush1.bf16.msra.mxu0 0
    %3324 = vmatprep.subr.bf16.mxu0 0
    %3325 = vmatpush1.bf16.msra.mxu0 0
    %3326 = vmatprep.subr.bf16.mxu0 0
    %3327 = vmatpush1.bf16.msra.mxu0 0
    %3328 = vmatprep.mubr.bf16.mxu0 0
    %3329 = vmatmul.mubr.bf16.gmra.mrb[0].mxu0 %v3294
    %v3330 = vpop.f32.mrb[0].mxu0
    %v3331 = vadd.f32 %v3291, %v3330
    %v3332 = vpop.f32.mrb[0].mxu0
    %v3333 = vpop.f32.mrb[0].mxu0
    %v3334 = vadd.f32 %v3291, %v3333
    %v3335 = vpop.f32.mrb[0].mxu0
    %3336 = vdwg.mxu0
    %v3337 = vpack.c.bf16 %v3280, %v3277
    %v3338 = vpack.c.bf16 %v3334, %v3331
    %v3340 = vsel %vm256, %v3337, 0
    %v3343 = vsel %vm256, %v3338, 0
    %3345 = vmatprep.subr.bf16.mxu0 0
    %3346 = vmatpush1.bf16.xpose.msra.mxu0 %v3343
    %3347 = vmatprep.subr.bf16.mxu0 0
    %3348 = vmatpush1.bf16.xpose.msra.mxu0 0
    %3349 = vmatprep.subr.bf16.mxu0 0
    %3350 = vmatpush1.bf16.xpose.msra.mxu0 0
    %3351 = vmatprep.subr.bf16.mxu0 0
    %3352 = vmatpush1.bf16.xpose.msra.mxu0 0
    %3353 = vmatprep.subr.bf16.mxu0 0
    %3354 = vmatpush1.bf16.xpose.msra.mxu0 0
    %3355 = vmatprep.subr.bf16.mxu0 0
    %3356 = vmatpush1.bf16.xpose.msra.mxu0 0
    %3357 = vmatprep.subr.bf16.mxu0 0
    %3358 = vmatpush1.bf16.xpose.msra.mxu0 0
    %3359 = vmatprep.subr.bf16.mxu0 0
    %3360 = vmatpush1.bf16.xpose.msra.mxu0 0
    %3361 = vmatprep.subr.bf16.mxu0 0
    %3362 = vmatpush1.bf16.xpose.msra.mxu0 0
    %3363 = vmatprep.subr.bf16.mxu0 0
    %3364 = vmatpush1.bf16.xpose.msra.mxu0 0
    %3365 = vmatprep.subr.bf16.mxu0 0
    %3366 = vmatpush1.bf16.xpose.msra.mxu0 0
    %3367 = vmatprep.subr.bf16.mxu0 0
    %3368 = vmatpush1.bf16.xpose.msra.mxu0 0
    %3369 = vmatprep.subr.bf16.mxu0 0
    %3370 = vmatpush1.bf16.xpose.msra.mxu0 0
    %3371 = vmatprep.subr.bf16.mxu0 0
    %3372 = vmatpush1.bf16.xpose.msra.mxu0 0
    %3373 = vmatprep.subr.bf16.mxu0 0
    %3374 = vmatpush1.bf16.xpose.msra.mxu0 0
    %3375 = vmatprep.subr.bf16.mxu0 0
    %3376 = vmatpush1.bf16.xpose.msra.mxu0 0
    %3377 = vmatprep.mubr.bf16.mxu0 0
    %3378 = vmatmul.mubr.bf16.gmra.mrb[0].mxu0 %v3340
    %v3379 = vpop.f32.mrb[0].mxu0
    %v3380 = vadd.f32 0.0, %v3379
    %v3381 = vpop.f32.mrb[0].mxu0
    %v3382 = vpop.f32.mrb[0].mxu0
    %v3383 = vadd.f32 0.0, %v3382
    %v3384 = vpop.f32.mrb[0].mxu0
    %3385 = vdwg.mxu0
    %v3386 = vmul.f32 %v3380, 0.35355338
    %v3387 = vmul.f32 %v3383, 0.35355338
    %v3388 = vadd.f32 %v3386, %v114
    %v3389 = vadd.f32 %v3387, %v115
    %v3390 = vsel %vm308, %v3388, -inf
    %3391 = vmax.xlane.f32.xlu0 %v3390
    %v3392 = vpop.xlane.xlu0 %3391
    %v3393 = vsel %vm308, %v3389, -inf
    %3394 = vmax.xlane.f32.xlu0 %v3393
    %v3395 = vpop.xlane.xlu0 %3394
    %v3396 = vsub.f32 %v3388, %v3392
    %v3397 = vsub.f32 %v3389, %v3395
    %v3398 = vmul.f32 %v3396, 1.442695
    %v3399 = vpow.pop %v3398
    %v3400 = vmul.f32 %v3397, 1.442695
    %v3401 = vpow.pop %v3400
    %v3402 = vsel %vm308, %v3399, 0.0
    %3403 = vadd.xlane.f32.xlu0 %v3402
    %v3404 = vpop.xlane.xlu0 %3403
    %v3405 = vsel %vm308, %v3401, 0.0
    %3406 = vadd.xlane.f32.xlu0 %v3405
    %v3407 = vpop.xlane.xlu0 %3406
    %v3408 = vrcp.pop %v3404
    %v3409 = vrcp.pop %v3407
    %v3410 = vmul.f32 %v3399, %v3408
    %v3411 = vmul.f32 %v3401, %v3409
    %v3412 = vpack.c.bf16 %v3411, %v3410
    %3414 = vrot.lane.b32.xlu0 %v3338, 96
    %v3415 = vpop.permute.xlu0 %3414
    %v3418 = vsel %vm308, %v3412, 0
    %3420 = vmatprep.subr.bf16.mxu0 0
    %3421 = vmatpush1.bf16.msra.mxu0 %v3415
    %3422 = vmatprep.subr.bf16.mxu0 0
    %3423 = vmatpush1.bf16.msra.mxu0 0
    %3424 = vmatprep.subr.bf16.mxu0 0
    %3425 = vmatpush1.bf16.msra.mxu0 0
    %3426 = vmatprep.subr.bf16.mxu0 0
    %3427 = vmatpush1.bf16.msra.mxu0 0
    %3428 = vmatprep.subr.bf16.mxu0 0
    %3429 = vmatpush1.bf16.msra.mxu0 0
    %3430 = vmatprep.subr.bf16.mxu0 0
    %3431 = vmatpush1.bf16.msra.mxu0 0
    %3432 = vmatprep.subr.bf16.mxu0 0
    %3433 = vmatpush1.bf16.msra.mxu0 0
    %3434 = vmatprep.subr.bf16.mxu0 0
    %3435 = vmatpush1.bf16.msra.mxu0 0
    %3436 = vmatprep.subr.bf16.mxu0 0
    %3437 = vmatpush1.bf16.msra.mxu0 0
    %3438 = vmatprep.subr.bf16.mxu0 0
    %3439 = vmatpush1.bf16.msra.mxu0 0
    %3440 = vmatprep.subr.bf16.mxu0 0
    %3441 = vmatpush1.bf16.msra.mxu0 0
    %3442 = vmatprep.subr.bf16.mxu0 0
    %3443 = vmatpush1.bf16.msra.mxu0 0
    %3444 = vmatprep.subr.bf16.mxu0 0
    %3445 = vmatpush1.bf16.msra.mxu0 0
    %3446 = vmatprep.subr.bf16.mxu0 0
    %3447 = vmatpush1.bf16.msra.mxu0 0
    %3448 = vmatprep.subr.bf16.mxu0 0
    %3449 = vmatpush1.bf16.msra.mxu0 0
    %3450 = vmatprep.subr.bf16.mxu0 0
    %3451 = vmatpush1.bf16.msra.mxu0 0
    %3452 = vmatprep.mubr.bf16.mxu0 0
    %3453 = vmatmul.mubr.bf16.gmra.mrb[0].mxu0 %v3418
    %v3454 = vpop.f32.mrb[0].mxu0
    %v3455 = vadd.f32 0.0, %v3454
    %v3456 = vpop.f32.mrb[0].mxu0
    %v3457 = vpop.f32.mrb[0].mxu0
    %v3458 = vadd.f32 0.0, %v3457
    %v3459 = vpop.f32.mrb[0].mxu0
    %3460 = vdwg.mxu0
    %v3461 = vpack.c.bf16 %v3458, %v3455
    %v3463 = vsel %vm256, %v3461, 0
    %v3466 = vsel %vm383, %v3214, 0
    %3468 = vmatprep.subr.bf16.mxu0 0
    %3469 = vmatpush1.bf16.msra.mxu0 %v3466
    %3470 = vmatprep.subr.bf16.mxu0 0
    %3471 = vmatpush1.bf16.msra.mxu0 0
    %3472 = vmatprep.subr.bf16.mxu0 0
    %3473 = vmatpush1.bf16.msra.mxu0 0
    %3474 = vmatprep.subr.bf16.mxu0 0
    %3475 = vmatpush1.bf16.msra.mxu0 0
    %3476 = vmatprep.subr.bf16.mxu0 0
    %3477 = vmatpush1.bf16.msra.mxu0 0
    %3478 = vmatprep.subr.bf16.mxu0 0
    %3479 = vmatpush1.bf16.msra.mxu0 0
    %3480 = vmatprep.subr.bf16.mxu0 0
    %3481 = vmatpush1.bf16.msra.mxu0 0
    %3482 = vmatprep.subr.bf16.mxu0 0
    %3483 = vmatpush1.bf16.msra.mxu0 0
    %3484 = vmatprep.subr.bf16.mxu0 0
    %3485 = vmatpush1.bf16.msra.mxu0 0
    %3486 = vmatprep.subr.bf16.mxu0 0
    %3487 = vmatpush1.bf16.msra.mxu0 0
    %3488 = vmatprep.subr.bf16.mxu0 0
    %3489 = vmatpush1.bf16.msra.mxu0 0
    %3490 = vmatprep.subr.bf16.mxu0 0
    %3491 = vmatpush1.bf16.msra.mxu0 0
    %3492 = vmatprep.subr.bf16.mxu0 0
    %3493 = vmatpush1.bf16.msra.mxu0 0
    %3494 = vmatprep.subr.bf16.mxu0 0
    %3495 = vmatpush1.bf16.msra.mxu0 0
    %3496 = vmatprep.subr.bf16.mxu0 0
    %3497 = vmatpush1.bf16.msra.mxu0 0
    %3498 = vmatprep.subr.bf16.mxu0 0
    %3499 = vmatpush1.bf16.msra.mxu0 0
    %3500 = vmatprep.mubr.bf16.mxu0 0
    %3501 = vmatmul.mubr.bf16.gmra.mrb[0].mxu0 %v3463
    %v3502 = vpop.f32.mrb[0].mxu0
    %v3503 = vadd.f32 0.0, %v3502
    %v3504 = vpop.f32.mrb[0].mxu0
    %v3505 = vpop.f32.mrb[0].mxu0
    %v3506 = vadd.f32 0.0, %v3505
    %v3507 = vpop.f32.mrb[0].mxu0
    %3508 = vdwg.mxu0
    %v3510 = vlaneseq
    %v3511 = vshrl.u32 %v3510, 7
    %v3512 = vsub.s32 0, %v3511
    %v3513 = vrot.slane %v3219, %v3512
    %v3515 = vadd.f32 %v3513, %v3503
    %v3516 = vadd.f32 %v3513, %v3506
    %3518 = vrot.lane.b32.xlu0 %v3337, 120
    %v3519 = vpop.permute.xlu0 %3518
    %3520 = vrot.lane.b32.xlu0 %v3338, 120
    %v3521 = vpop.permute.xlu0 %3520
    %v3523 = vsel %vm256, %v3519, 0
    %v3526 = vsel %vm256, %v3521, 0
    %3528 = vmatprep.subr.bf16.mxu0 0
    %3529 = vmatpush1.bf16.xpose.msra.mxu0 %v3526
    %3530 = vmatprep.subr.bf16.mxu0 0
    %3531 = vmatpush1.bf16.xpose.msra.mxu0 0
    %3532 = vmatprep.subr.bf16.mxu0 0
    %3533 = vmatpush1.bf16.xpose.msra.mxu0 0
    %3534 = vmatprep.subr.bf16.mxu0 0
    %3535 = vmatpush1.bf16.xpose.msra.mxu0 0
    %3536 = vmatprep.subr.bf16.mxu0 0
    %3537 = vmatpush1.bf16.xpose.msra.mxu0 0
    %3538 = vmatprep.subr.bf16.mxu0 0
    %3539 = vmatpush1.bf16.xpose.msra.mxu0 0
    %3540 = vmatprep.subr.bf16.mxu0 0
    %3541 = vmatpush1.bf16.xpose.msra.mxu0 0
    %3542 = vmatprep.subr.bf16.mxu0 0
    %3543 = vmatpush1.bf16.xpose.msra.mxu0 0
    %3544 = vmatprep.subr.bf16.mxu0 0
    %3545 = vmatpush1.bf16.xpose.msra.mxu0 0
    %3546 = vmatprep.subr.bf16.mxu0 0
    %3547 = vmatpush1.bf16.xpose.msra.mxu0 0
    %3548 = vmatprep.subr.bf16.mxu0 0
    %3549 = vmatpush1.bf16.xpose.msra.mxu0 0
    %3550 = vmatprep.subr.bf16.mxu0 0
    %3551 = vmatpush1.bf16.xpose.msra.mxu0 0
    %3552 = vmatprep.subr.bf16.mxu0 0
    %3553 = vmatpush1.bf16.xpose.msra.mxu0 0
    %3554 = vmatprep.subr.bf16.mxu0 0
    %3555 = vmatpush1.bf16.xpose.msra.mxu0 0
    %3556 = vmatprep.subr.bf16.mxu0 0
    %3557 = vmatpush1.bf16.xpose.msra.mxu0 0
    %3558 = vmatprep.subr.bf16.mxu0 0
    %3559 = vmatpush1.bf16.xpose.msra.mxu0 0
    %3560 = vmatprep.mubr.bf16.mxu0 0
    %3561 = vmatmul.mubr.bf16.gmra.mrb[0].mxu0 %v3523
    %v3562 = vpop.f32.mrb[0].mxu0
    %v3563 = vadd.f32 0.0, %v3562
    %v3564 = vpop.f32.mrb[0].mxu0
    %v3565 = vpop.f32.mrb[0].mxu0
    %v3566 = vadd.f32 0.0, %v3565
    %v3567 = vpop.f32.mrb[0].mxu0
    %3568 = vdwg.mxu0
    %v3569 = vmul.f32 %v3563, 0.35355338
    %v3570 = vmul.f32 %v3566, 0.35355338
    %v3571 = vadd.f32 %v3569, %v114
    %v3572 = vadd.f32 %v3570, %v115
    %v3573 = vsel %vm308, %v3571, -inf
    %3574 = vmax.xlane.f32.xlu0 %v3573
    %v3575 = vpop.xlane.xlu0 %3574
    %v3576 = vsel %vm308, %v3572, -inf
    %3577 = vmax.xlane.f32.xlu0 %v3576
    %v3578 = vpop.xlane.xlu0 %3577
    %v3579 = vsub.f32 %v3571, %v3575
    %v3580 = vsub.f32 %v3572, %v3578
    %v3581 = vmul.f32 %v3579, 1.442695
    %v3582 = vpow.pop %v3581
    %v3583 = vmul.f32 %v3580, 1.442695
    %v3584 = vpow.pop %v3583
    %v3585 = vsel %vm308, %v3582, 0.0
    %3586 = vadd.xlane.f32.xlu0 %v3585
    %v3587 = vpop.xlane.xlu0 %3586
    %v3588 = vsel %vm308, %v3584, 0.0
    %3589 = vadd.xlane.f32.xlu0 %v3588
    %v3590 = vpop.xlane.xlu0 %3589
    %v3591 = vrcp.pop %v3587
    %v3592 = vrcp.pop %v3590
    %v3593 = vmul.f32 %v3582, %v3591
    %v3594 = vmul.f32 %v3584, %v3592
    %v3595 = vpack.c.bf16 %v3594, %v3593
    %3596 = vrot.lane.b32.xlu0 %v3338, 88
    %v3597 = vpop.permute.xlu0 %3596
    %v3600 = vsel %vm308, %v3595, 0
    %3602 = vmatprep.subr.bf16.mxu0 0
    %3603 = vmatpush1.bf16.msra.mxu0 %v3597
    %3604 = vmatprep.subr.bf16.mxu0 0
    %3605 = vmatpush1.bf16.msra.mxu0 0
    %3606 = vmatprep.subr.bf16.mxu0 0
    %3607 = vmatpush1.bf16.msra.mxu0 0
    %3608 = vmatprep.subr.bf16.mxu0 0
    %3609 = vmatpush1.bf16.msra.mxu0 0
    %3610 = vmatprep.subr.bf16.mxu0 0
    %3611 = vmatpush1.bf16.msra.mxu0 0
    %3612 = vmatprep.subr.bf16.mxu0 0
    %3613 = vmatpush1.bf16.msra.mxu0 0
    %3614 = vmatprep.subr.bf16.mxu0 0
    %3615 = vmatpush1.bf16.msra.mxu0 0
    %3616 = vmatprep.subr.bf16.mxu0 0
    %3617 = vmatpush1.bf16.msra.mxu0 0
    %3618 = vmatprep.subr.bf16.mxu0 0
    %3619 = vmatpush1.bf16.msra.mxu0 0
    %3620 = vmatprep.subr.bf16.mxu0 0
    %3621 = vmatpush1.bf16.msra.mxu0 0
    %3622 = vmatprep.subr.bf16.mxu0 0
    %3623 = vmatpush1.bf16.msra.mxu0 0
    %3624 = vmatprep.subr.bf16.mxu0 0
    %3625 = vmatpush1.bf16.msra.mxu0 0
    %3626 = vmatprep.subr.bf16.mxu0 0
    %3627 = vmatpush1.bf16.msra.mxu0 0
    %3628 = vmatprep.subr.bf16.mxu0 0
    %3629 = vmatpush1.bf16.msra.mxu0 0
    %3630 = vmatprep.subr.bf16.mxu0 0
    %3631 = vmatpush1.bf16.msra.mxu0 0
    %3632 = vmatprep.subr.bf16.mxu0 0
    %3633 = vmatpush1.bf16.msra.mxu0 0
    %3634 = vmatprep.mubr.bf16.mxu0 0
    %3635 = vmatmul.mubr.bf16.gmra.mrb[0].mxu0 %v3600
    %v3636 = vpop.f32.mrb[0].mxu0
    %v3637 = vadd.f32 0.0, %v3636
    %v3638 = vpop.f32.mrb[0].mxu0
    %v3639 = vpop.f32.mrb[0].mxu0
    %v3640 = vadd.f32 0.0, %v3639
    %v3641 = vpop.f32.mrb[0].mxu0
    %3642 = vdwg.mxu0
    %v3643 = vpack.c.bf16 %v3640, %v3637
    %v3645 = vsel %vm256, %v3643, 0
    %v3648 = vsel %vm383, %v3215, 0
    %3650 = vmatprep.subr.bf16.mxu0 0
    %3651 = vmatpush1.bf16.msra.mxu0 %v3648
    %3652 = vmatprep.subr.bf16.mxu0 0
    %3653 = vmatpush1.bf16.msra.mxu0 0
    %3654 = vmatprep.subr.bf16.mxu0 0
    %3655 = vmatpush1.bf16.msra.mxu0 0
    %3656 = vmatprep.subr.bf16.mxu0 0
    %3657 = vmatpush1.bf16.msra.mxu0 0
    %3658 = vmatprep.subr.bf16.mxu0 0
    %3659 = vmatpush1.bf16.msra.mxu0 0
    %3660 = vmatprep.subr.bf16.mxu0 0
    %3661 = vmatpush1.bf16.msra.mxu0 0
    %3662 = vmatprep.subr.bf16.mxu0 0
    %3663 = vmatpush1.bf16.msra.mxu0 0
    %3664 = vmatprep.subr.bf16.mxu0 0
    %3665 = vmatpush1.bf16.msra.mxu0 0
    %3666 = vmatprep.subr.bf16.mxu0 0
    %3667 = vmatpush1.bf16.msra.mxu0 0
    %3668 = vmatprep.subr.bf16.mxu0 0
    %3669 = vmatpush1.bf16.msra.mxu0 0
    %3670 = vmatprep.subr.bf16.mxu0 0
    %3671 = vmatpush1.bf16.msra.mxu0 0
    %3672 = vmatprep.subr.bf16.mxu0 0
    %3673 = vmatpush1.bf16.msra.mxu0 0
    %3674 = vmatprep.subr.bf16.mxu0 0
    %3675 = vmatpush1.bf16.msra.mxu0 0
    %3676 = vmatprep.subr.bf16.mxu0 0
    %3677 = vmatpush1.bf16.msra.mxu0 0
    %3678 = vmatprep.subr.bf16.mxu0 0
    %3679 = vmatpush1.bf16.msra.mxu0 0
    %3680 = vmatprep.subr.bf16.mxu0 0
    %3681 = vmatpush1.bf16.msra.mxu0 0
    %3682 = vmatprep.mubr.bf16.mxu0 0
    %3683 = vmatmul.mubr.bf16.gmra.mrb[0].mxu0 %v3645
    %v3684 = vpop.f32.mrb[0].mxu0
    %v3685 = vadd.f32 0.0, %v3684
    %v3686 = vpop.f32.mrb[0].mxu0
    %v3687 = vpop.f32.mrb[0].mxu0
    %v3688 = vadd.f32 0.0, %v3687
    %v3689 = vpop.f32.mrb[0].mxu0
    %3690 = vdwg.mxu0
    %v3691 = vadd.f32 %v3515, %v3685
    %v3692 = vadd.f32 %v3516, %v3688
    %3693 = vrot.lane.b32.xlu0 %v3337, 112
    %v3694 = vpop.permute.xlu0 %3693
    %3695 = vrot.lane.b32.xlu0 %v3338, 112
    %v3696 = vpop.permute.xlu0 %3695
    %v3698 = vsel %vm256, %v3694, 0
    %v3701 = vsel %vm256, %v3696, 0
    %3703 = vmatprep.subr.bf16.mxu0 0
    %3704 = vmatpush1.bf16.xpose.msra.mxu0 %v3701
    %3705 = vmatprep.subr.bf16.mxu0 0
    %3706 = vmatpush1.bf16.xpose.msra.mxu0 0
    %3707 = vmatprep.subr.bf16.mxu0 0
    %3708 = vmatpush1.bf16.xpose.msra.mxu0 0
    %3709 = vmatprep.subr.bf16.mxu0 0
    %3710 = vmatpush1.bf16.xpose.msra.mxu0 0
    %3711 = vmatprep.subr.bf16.mxu0 0
    %3712 = vmatpush1.bf16.xpose.msra.mxu0 0
    %3713 = vmatprep.subr.bf16.mxu0 0
    %3714 = vmatpush1.bf16.xpose.msra.mxu0 0
    %3715 = vmatprep.subr.bf16.mxu0 0
    %3716 = vmatpush1.bf16.xpose.msra.mxu0 0
    %3717 = vmatprep.subr.bf16.mxu0 0
    %3718 = vmatpush1.bf16.xpose.msra.mxu0 0
    %3719 = vmatprep.subr.bf16.mxu0 0
    %3720 = vmatpush1.bf16.xpose.msra.mxu0 0
    %3721 = vmatprep.subr.bf16.mxu0 0
    %3722 = vmatpush1.bf16.xpose.msra.mxu0 0
    %3723 = vmatprep.subr.bf16.mxu0 0
    %3724 = vmatpush1.bf16.xpose.msra.mxu0 0
    %3725 = vmatprep.subr.bf16.mxu0 0
    %3726 = vmatpush1.bf16.xpose.msra.mxu0 0
    %3727 = vmatprep.subr.bf16.mxu0 0
    %3728 = vmatpush1.bf16.xpose.msra.mxu0 0
    %3729 = vmatprep.subr.bf16.mxu0 0
    %3730 = vmatpush1.bf16.xpose.msra.mxu0 0
    %3731 = vmatprep.subr.bf16.mxu0 0
    %3732 = vmatpush1.bf16.xpose.msra.mxu0 0
    %3733 = vmatprep.subr.bf16.mxu0 0
    %3734 = vmatpush1.bf16.xpose.msra.mxu0 0
    %3735 = vmatprep.mubr.bf16.mxu0 0
    %3736 = vmatmul.mubr.bf16.gmra.mrb[0].mxu0 %v3698
    %v3737 = vpop.f32.mrb[0].mxu0
    %v3738 = vadd.f32 0.0, %v3737
    %v3739 = vpop.f32.mrb[0].mxu0
    %v3740 = vpop.f32.mrb[0].mxu0
    %v3741 = vadd.f32 0.0, %v3740
    %v3742 = vpop.f32.mrb[0].mxu0
    %3743 = vdwg.mxu0
    %v3744 = vmul.f32 %v3738, 0.35355338
    %v3745 = vmul.f32 %v3741, 0.35355338
    %v3746 = vadd.f32 %v3744, %v114
    %v3747 = vadd.f32 %v3745, %v115
    %v3748 = vsel %vm308, %v3746, -inf
    %3749 = vmax.xlane.f32.xlu0 %v3748
    %v3750 = vpop.xlane.xlu0 %3749
    %v3751 = vsel %vm308, %v3747, -inf
    %3752 = vmax.xlane.f32.xlu0 %v3751
    %v3753 = vpop.xlane.xlu0 %3752
    %v3754 = vsub.f32 %v3746, %v3750
    %v3755 = vsub.f32 %v3747, %v3753
    %v3756 = vmul.f32 %v3754, 1.442695
    %v3757 = vpow.pop %v3756
    %v3758 = vmul.f32 %v3755, 1.442695
    %v3759 = vpow.pop %v3758
    %v3760 = vsel %vm308, %v3757, 0.0
    %3761 = vadd.xlane.f32.xlu0 %v3760
    %v3762 = vpop.xlane.xlu0 %3761
    %v3763 = vsel %vm308, %v3759, 0.0
    %3764 = vadd.xlane.f32.xlu0 %v3763
    %v3765 = vpop.xlane.xlu0 %3764
    %v3766 = vrcp.pop %v3762
    %v3767 = vrcp.pop %v3765
    %v3768 = vmul.f32 %v3757, %v3766
    %v3769 = vmul.f32 %v3759, %v3767
    %v3770 = vpack.c.bf16 %v3769, %v3768
    %3771 = vrot.lane.b32.xlu0 %v3338, 80
    %v3772 = vpop.permute.xlu0 %3771
    %v3775 = vsel %vm308, %v3770, 0
    %3777 = vmatprep.subr.bf16.mxu0 0
    %3778 = vmatpush1.bf16.msra.mxu0 %v3772
    %3779 = vmatprep.subr.bf16.mxu0 0
    %3780 = vmatpush1.bf16.msra.mxu0 0
    %3781 = vmatprep.subr.bf16.mxu0 0
    %3782 = vmatpush1.bf16.msra.mxu0 0
    %3783 = vmatprep.subr.bf16.mxu0 0
    %3784 = vmatpush1.bf16.msra.mxu0 0
    %3785 = vmatprep.subr.bf16.mxu0 0
    %3786 = vmatpush1.bf16.msra.mxu0 0
    %3787 = vmatprep.subr.bf16.mxu0 0
    %3788 = vmatpush1.bf16.msra.mxu0 0
    %3789 = vmatprep.subr.bf16.mxu0 0
    %3790 = vmatpush1.bf16.msra.mxu0 0
    %3791 = vmatprep.subr.bf16.mxu0 0
    %3792 = vmatpush1.bf16.msra.mxu0 0
    %3793 = vmatprep.subr.bf16.mxu0 0
    %3794 = vmatpush1.bf16.msra.mxu0 0
    %3795 = vmatprep.subr.bf16.mxu0 0
    %3796 = vmatpush1.bf16.msra.mxu0 0
    %3797 = vmatprep.subr.bf16.mxu0 0
    %3798 = vmatpush1.bf16.msra.mxu0 0
    %3799 = vmatprep.subr.bf16.mxu0 0
    %3800 = vmatpush1.bf16.msra.mxu0 0
    %3801 = vmatprep.subr.bf16.mxu0 0
    %3802 = vmatpush1.bf16.msra.mxu0 0
    %3803 = vmatprep.subr.bf16.mxu0 0
    %3804 = vmatpush1.bf16.msra.mxu0 0
    %3805 = vmatprep.subr.bf16.mxu0 0
    %3806 = vmatpush1.bf16.msra.mxu0 0
    %3807 = vmatprep.subr.bf16.mxu0 0
    %3808 = vmatpush1.bf16.msra.mxu0 0
    %3809 = vmatprep.mubr.bf16.mxu0 0
    %3810 = vmatmul.mubr.bf16.gmra.mrb[0].mxu0 %v3775
    %v3811 = vpop.f32.mrb[0].mxu0
    %v3812 = vadd.f32 0.0, %v3811
    %v3813 = vpop.f32.mrb[0].mxu0
    %v3814 = vpop.f32.mrb[0].mxu0
    %v3815 = vadd.f32 0.0, %v3814
    %v3816 = vpop.f32.mrb[0].mxu0
    %3817 = vdwg.mxu0
    %v3818 = vpack.c.bf16 %v3815, %v3812
    %v3820 = vsel %vm256, %v3818, 0
    %v3823 = vsel %vm383, %v3216, 0
    %3825 = vmatprep.subr.bf16.mxu0 0
    %3826 = vmatpush1.bf16.msra.mxu0 %v3823
    %3827 = vmatprep.subr.bf16.mxu0 0
    %3828 = vmatpush1.bf16.msra.mxu0 0
    %3829 = vmatprep.subr.bf16.mxu0 0
    %3830 = vmatpush1.bf16.msra.mxu0 0
    %3831 = vmatprep.subr.bf16.mxu0 0
    %3832 = vmatpush1.bf16.msra.mxu0 0
    %3833 = vmatprep.subr.bf16.mxu0 0
    %3834 = vmatpush1.bf16.msra.mxu0 0
    %3835 = vmatprep.subr.bf16.mxu0 0
    %3836 = vmatpush1.bf16.msra.mxu0 0
    %3837 = vmatprep.subr.bf16.mxu0 0
    %3838 = vmatpush1.bf16.msra.mxu0 0
    %3839 = vmatprep.subr.bf16.mxu0 0
    %3840 = vmatpush1.bf16.msra.mxu0 0
    %3841 = vmatprep.subr.bf16.mxu0 0
    %3842 = vmatpush1.bf16.msra.mxu0 0
    %3843 = vmatprep.subr.bf16.mxu0 0
    %3844 = vmatpush1.bf16.msra.mxu0 0
    %3845 = vmatprep.subr.bf16.mxu0 0
    %3846 = vmatpush1.bf16.msra.mxu0 0
    %3847 = vmatprep.subr.bf16.mxu0 0
    %3848 = vmatpush1.bf16.msra.mxu0 0
    %3849 = vmatprep.subr.bf16.mxu0 0
    %3850 = vmatpush1.bf16.msra.mxu0 0
    %3851 = vmatprep.subr.bf16.mxu0 0
    %3852 = vmatpush1.bf16.msra.mxu0 0
    %3853 = vmatprep.subr.bf16.mxu0 0
    %3854 = vmatpush1.bf16.msra.mxu0 0
    %3855 = vmatprep.subr.bf16.mxu0 0
    %3856 = vmatpush1.bf16.msra.mxu0 0
    %3857 = vmatprep.mubr.bf16.mxu0 0
    %3858 = vmatmul.mubr.bf16.gmra.mrb[0].mxu0 %v3820
    %v3859 = vpop.f32.mrb[0].mxu0
    %v3860 = vadd.f32 0.0, %v3859
    %v3861 = vpop.f32.mrb[0].mxu0
    %v3862 = vpop.f32.mrb[0].mxu0
    %v3863 = vadd.f32 0.0, %v3862
    %v3864 = vpop.f32.mrb[0].mxu0
    %3865 = vdwg.mxu0
    %v3866 = vadd.f32 %v3691, %v3860
    %v3867 = vadd.f32 %v3692, %v3863
    %3868 = vrot.lane.b32.xlu0 %v3337, 104
    %v3869 = vpop.permute.xlu0 %3868
    %3870 = vrot.lane.b32.xlu0 %v3338, 104
    %v3871 = vpop.permute.xlu0 %3870
    %v3873 = vsel %vm256, %v3869, 0
    %v3876 = vsel %vm256, %v3871, 0
    %3878 = vmatprep.subr.bf16.mxu0 0
    %3879 = vmatpush1.bf16.xpose.msra.mxu0 %v3876
    %3880 = vmatprep.subr.bf16.mxu0 0
    %3881 = vmatpush1.bf16.xpose.msra.mxu0 0
    %3882 = vmatprep.subr.bf16.mxu0 0
    %3883 = vmatpush1.bf16.xpose.msra.mxu0 0
    %3884 = vmatprep.subr.bf16.mxu0 0
    %3885 = vmatpush1.bf16.xpose.msra.mxu0 0
    %3886 = vmatprep.subr.bf16.mxu0 0
    %3887 = vmatpush1.bf16.xpose.msra.mxu0 0
    %3888 = vmatprep.subr.bf16.mxu0 0
    %3889 = vmatpush1.bf16.xpose.msra.mxu0 0
    %3890 = vmatprep.subr.bf16.mxu0 0
    %3891 = vmatpush1.bf16.xpose.msra.mxu0 0
    %3892 = vmatprep.subr.bf16.mxu0 0
    %3893 = vmatpush1.bf16.xpose.msra.mxu0 0
    %3894 = vmatprep.subr.bf16.mxu0 0
    %3895 = vmatpush1.bf16.xpose.msra.mxu0 0
    %3896 = vmatprep.subr.bf16.mxu0 0
    %3897 = vmatpush1.bf16.xpose.msra.mxu0 0
    %3898 = vmatprep.subr.bf16.mxu0 0
    %3899 = vmatpush1.bf16.xpose.msra.mxu0 0
    %3900 = vmatprep.subr.bf16.mxu0 0
    %3901 = vmatpush1.bf16.xpose.msra.mxu0 0
    %3902 = vmatprep.subr.bf16.mxu0 0
    %3903 = vmatpush1.bf16.xpose.msra.mxu0 0
    %3904 = vmatprep.subr.bf16.mxu0 0
    %3905 = vmatpush1.bf16.xpose.msra.mxu0 0
    %3906 = vmatprep.subr.bf16.mxu0 0
    %3907 = vmatpush1.bf16.xpose.msra.mxu0 0
    %3908 = vmatprep.subr.bf16.mxu0 0
    %3909 = vmatpush1.bf16.xpose.msra.mxu0 0
    %3910 = vmatprep.mubr.bf16.mxu0 0
    %3911 = vmatmul.mubr.bf16.gmra.mrb[0].mxu0 %v3873
    %v3912 = vpop.f32.mrb[0].mxu0
    %v3913 = vadd.f32 0.0, %v3912
    %v3914 = vpop.f32.mrb[0].mxu0
    %v3915 = vpop.f32.mrb[0].mxu0
    %v3916 = vadd.f32 0.0, %v3915
    %v3917 = vpop.f32.mrb[0].mxu0
    %3918 = vdwg.mxu0
    %v3919 = vmul.f32 %v3913, 0.35355338
    %v3920 = vmul.f32 %v3916, 0.35355338
    %v3921 = vadd.f32 %v3919, %v114
    %v3922 = vadd.f32 %v3920, %v115
    %v3923 = vsel %vm308, %v3921, -inf
    %3924 = vmax.xlane.f32.xlu0 %v3923
    %v3925 = vpop.xlane.xlu0 %3924
    %v3926 = vsel %vm308, %v3922, -inf
    %3927 = vmax.xlane.f32.xlu0 %v3926
    %v3928 = vpop.xlane.xlu0 %3927
    %v3929 = vsub.f32 %v3921, %v3925
    %v3930 = vsub.f32 %v3922, %v3928
    %v3931 = vmul.f32 %v3929, 1.442695
    %v3932 = vpow.pop %v3931
    %v3933 = vmul.f32 %v3930, 1.442695
    %v3934 = vpow.pop %v3933
    %v3935 = vsel %vm308, %v3932, 0.0
    %3936 = vadd.xlane.f32.xlu0 %v3935
    %v3937 = vpop.xlane.xlu0 %3936
    %v3938 = vsel %vm308, %v3934, 0.0
    %3939 = vadd.xlane.f32.xlu0 %v3938
    %v3940 = vpop.xlane.xlu0 %3939
    %v3941 = vrcp.pop %v3937
    %v3942 = vrcp.pop %v3940
    %v3943 = vmul.f32 %v3932, %v3941
    %v3944 = vmul.f32 %v3934, %v3942
    %v3945 = vpack.c.bf16 %v3944, %v3943
    %3946 = vrot.lane.b32.xlu0 %v3338, 72
    %v3947 = vpop.permute.xlu0 %3946
    %v3950 = vsel %vm308, %v3945, 0
    %3952 = vmatprep.subr.bf16.mxu0 0
    %3953 = vmatpush1.bf16.msra.mxu0 %v3947
    %3954 = vmatprep.subr.bf16.mxu0 0
    %3955 = vmatpush1.bf16.msra.mxu0 0
    %3956 = vmatprep.subr.bf16.mxu0 0
    %3957 = vmatpush1.bf16.msra.mxu0 0
    %3958 = vmatprep.subr.bf16.mxu0 0
    %3959 = vmatpush1.bf16.msra.mxu0 0
    %3960 = vmatprep.subr.bf16.mxu0 0
    %3961 = vmatpush1.bf16.msra.mxu0 0
    %3962 = vmatprep.subr.bf16.mxu0 0
    %3963 = vmatpush1.bf16.msra.mxu0 0
    %3964 = vmatprep.subr.bf16.mxu0 0
    %3965 = vmatpush1.bf16.msra.mxu0 0
    %3966 = vmatprep.subr.bf16.mxu0 0
    %3967 = vmatpush1.bf16.msra.mxu0 0
    %3968 = vmatprep.subr.bf16.mxu0 0
    %3969 = vmatpush1.bf16.msra.mxu0 0
    %3970 = vmatprep.subr.bf16.mxu0 0
    %3971 = vmatpush1.bf16.msra.mxu0 0
    %3972 = vmatprep.subr.bf16.mxu0 0
    %3973 = vmatpush1.bf16.msra.mxu0 0
    %3974 = vmatprep.subr.bf16.mxu0 0
    %3975 = vmatpush1.bf16.msra.mxu0 0
    %3976 = vmatprep.subr.bf16.mxu0 0
    %3977 = vmatpush1.bf16.msra.mxu0 0
    %3978 = vmatprep.subr.bf16.mxu0 0
    %3979 = vmatpush1.bf16.msra.mxu0 0
    %3980 = vmatprep.subr.bf16.mxu0 0
    %3981 = vmatpush1.bf16.msra.mxu0 0
    %3982 = vmatprep.subr.bf16.mxu0 0
    %3983 = vmatpush1.bf16.msra.mxu0 0
    %3984 = vmatprep.mubr.bf16.mxu0 0
    %3985 = vmatmul.mubr.bf16.gmra.mrb[0].mxu0 %v3950
    %v3986 = vpop.f32.mrb[0].mxu0
    %v3987 = vadd.f32 0.0, %v3986
    %v3988 = vpop.f32.mrb[0].mxu0
    %v3989 = vpop.f32.mrb[0].mxu0
    %v3990 = vadd.f32 0.0, %v3989
    %v3991 = vpop.f32.mrb[0].mxu0
    %3992 = vdwg.mxu0
    %v3993 = vpack.c.bf16 %v3990, %v3987
    %v3995 = vsel %vm256, %v3993, 0
    %v3998 = vsel %vm383, %v3217, 0
    %4000 = vmatprep.subr.bf16.mxu0 0
    %4001 = vmatpush1.bf16.msra.mxu0 %v3998
    %4002 = vmatprep.subr.bf16.mxu0 0
    %4003 = vmatpush1.bf16.msra.mxu0 0
    %4004 = vmatprep.subr.bf16.mxu0 0
    %4005 = vmatpush1.bf16.msra.mxu0 0
    %4006 = vmatprep.subr.bf16.mxu0 0
    %4007 = vmatpush1.bf16.msra.mxu0 0
    %4008 = vmatprep.subr.bf16.mxu0 0
    %4009 = vmatpush1.bf16.msra.mxu0 0
    %4010 = vmatprep.subr.bf16.mxu0 0
    %4011 = vmatpush1.bf16.msra.mxu0 0
    %4012 = vmatprep.subr.bf16.mxu0 0
    %4013 = vmatpush1.bf16.msra.mxu0 0
    %4014 = vmatprep.subr.bf16.mxu0 0
    %4015 = vmatpush1.bf16.msra.mxu0 0
    %4016 = vmatprep.subr.bf16.mxu0 0
    %4017 = vmatpush1.bf16.msra.mxu0 0
    %4018 = vmatprep.subr.bf16.mxu0 0
    %4019 = vmatpush1.bf16.msra.mxu0 0
    %4020 = vmatprep.subr.bf16.mxu0 0
    %4021 = vmatpush1.bf16.msra.mxu0 0
    %4022 = vmatprep.subr.bf16.mxu0 0
    %4023 = vmatpush1.bf16.msra.mxu0 0
    %4024 = vmatprep.subr.bf16.mxu0 0
    %4025 = vmatpush1.bf16.msra.mxu0 0
    %4026 = vmatprep.subr.bf16.mxu0 0
    %4027 = vmatpush1.bf16.msra.mxu0 0
    %4028 = vmatprep.subr.bf16.mxu0 0
    %4029 = vmatpush1.bf16.msra.mxu0 0
    %4030 = vmatprep.subr.bf16.mxu0 0
    %4031 = vmatpush1.bf16.msra.mxu0 0
    %4032 = vmatprep.mubr.bf16.mxu0 0
    %4033 = vmatmul.mubr.bf16.gmra.mrb[0].mxu0 %v3995
    %v4034 = vpop.f32.mrb[0].mxu0
    %v4035 = vadd.f32 0.0, %v4034
    %v4036 = vpop.f32.mrb[0].mxu0
    %v4037 = vpop.f32.mrb[0].mxu0
    %v4038 = vadd.f32 0.0, %v4037
    %v4039 = vpop.f32.mrb[0].mxu0
    %4040 = vdwg.mxu0
    %v4041 = vadd.f32 %v3866, %v4035
    %v4042 = vadd.f32 %v3867, %v4038
    %v4043 = vadd.f32 %v3144, %v4041
    %v4044 = vadd.f32 %v3145, %v4042
    %s4045 = scalar_lea.vmem %s23, 4
    %v4046 = vld [vmem:[%s4045] sm:$0x1]
    %s4047 = scalar_lea.vmem %s23, 5
    %v4048 = vld [vmem:[%s4047] sm:$0x1]
    %v4049 = vsel %vm121, %v4043, 0.0
    %4050 = vadd.xlane.f32.xlu0 %v4049
    %v4051 = vpop.xlane.xlu0 %4050
    %v4052 = vsel %vm121, %v4044, 0.0
    %4053 = vadd.xlane.f32.xlu0 %v4052
    %v4054 = vpop.xlane.xlu0 %4053
    %v4055 = vmul.f32 %v4051, %v128
    %v4056 = vmul.f32 %v4054, %v128
    %v4057 = vsub.f32 %v4043, %v4055
    %v4058 = vsub.f32 %v4044, %v4056
    %v4059 = vmul.f32 %v4057, %v4057
    %v4060 = vmul.f32 %v4058, %v4058
    %v4061 = vsel %vm121, %v4059, 0.0
    %4062 = vadd.xlane.f32.xlu0 %v4061
    %v4063 = vpop.xlane.xlu0 %4062
    %v4064 = vsel %vm121, %v4060, 0.0
    %4065 = vadd.xlane.f32.xlu0 %v4064
    %v4066 = vpop.xlane.xlu0 %4065
    %v4067 = vmul.f32 %v4063, 0.032258064
    %v4068 = vmul.f32 %v4066, 0.032258064
    %v4069 = vrsqrt.pop %v4067
    %v4070 = vmul.f32 %v4067, %v4069
    %vm4071 = vcmp.eq.f32.partialorder %v4067, inf
    %v4072 = vsel %vm4071, %v4067, %v4070
    %vm4073 = vcmp.eq.f32.partialorder %v4067, 0.0
    %v4074 = vand.u32 %v4067, 2147483648
    %v4075 = vsel %vm4073, %v4074, %v4072
    %v4076 = vrsqrt.pop %v4068
    %v4077 = vmul.f32 %v4068, %v4076
    %vm4078 = vcmp.eq.f32.partialorder %v4068, inf
    %v4079 = vsel %vm4078, %v4068, %v4077
    %vm4080 = vcmp.eq.f32.partialorder %v4068, 0.0
    %v4081 = vand.u32 %v4068, 2147483648
    %v4082 = vsel %vm4080, %v4081, %v4079
    %v4083 = vadd.f32 %v4075, 1e-06
    %v4084 = vadd.f32 %v4082, 1e-06
    %v4085 = vrcp.pop %v4083
    %v4086 = vrcp.pop %v4084
    %v4088 = vlaneseq
    %v4089 = vshrl.u32 %v4088, 7
    %v4090 = vsub.s32 0, %v4089
    %v4091 = vrot.slane %v4046, %v4090
    %v4093 = vmul.f32 %v4091, %v4057
    %v4094 = vmul.f32 %v4091, %v4058
    %v4095 = vmul.f32 %v4093, %v4085
    %v4096 = vmul.f32 %v4094, %v4086
    %v4098 = vlaneseq
    %v4099 = vshrl.u32 %v4098, 7
    %v4100 = vsub.s32 0, %v4099
    %v4101 = vrot.slane %v4048, %v4100
    %v4103 = vadd.f32 %v4095, %v4101
    %v4104 = vadd.f32 %v4096, %v4101
    %v4105 = vld [vmem:[%s19] sm:$0xf]
    %v4106 = vld [vmem:[%s19 + $0x4] sm:$0xf]
    %v4107 = vld [vmem:[%s19 + $0x8] sm:$0xf]
    %v4108 = vld [vmem:[%s19 + $0xc] sm:$0xf]
    %v4109 = vld [vmem:[%s20] sm:$0x1]
    %v4110 = vld [vmem:[%s21] sm:$0xf]
    %v4111 = vld [vmem:[%s21 + $0x4] sm:$0xf]
    %v4112 = vld [vmem:[%s21 + $0x8] sm:$0xf]
    %v4113 = vld [vmem:[%s21 + $0xc] sm:$0xf]
    %v4114 = vld [vmem:[%s21 + $0x10] sm:$0xf]
    %v4115 = vld [vmem:[%s21 + $0x14] sm:$0xf]
    %v4116 = vld [vmem:[%s21 + $0x18] sm:$0xf]
    %v4117 = vld [vmem:[%s21 + $0x1c] sm:$0xf]
    %v4118 = vld [vmem:[#allocation2] sm:$0x1]
    %v4119 = vpack.c.bf16 %v4104, %v4103
    %v4121 = vlaneseq
    %v4122 = vshrl.u32 %v4121, 7
    %v4123 = vsub.s32 0, %v4122
    %v4124 = vrot.slane %v4109, %v4123
    %v4130 = vunpack.c.l.b16 %v4105
    %v4131 = vunpack.c.l.b16 %v4106
    %v4132 = vunpack.c.l.b16 %v4107
    %v4133 = vunpack.c.l.b16 %v4108
    %v4134 = vpack.c.b16 %v4131, %v4130
    %v4135 = vpack.c.b16 %v4133, %v4132
    %v4139 = vsel %vm121, %v4119, 0
    %4141 = vmatprep.subr.bf16.mxu0 0
    %4142 = vmatpush1.bf16.msra.mxu0 %v4134
    %4143 = vmatprep.subr.bf16.mxu0 0
    %4144 = vmatpush1.bf16.msra.mxu0 %v4135
    %4145 = vmatprep.subr.bf16.mxu0 0
    %4146 = vmatpush1.bf16.msra.mxu0 0
    %4147 = vmatprep.subr.bf16.mxu0 0
    %4148 = vmatpush1.bf16.msra.mxu0 0
    %4149 = vmatprep.subr.bf16.mxu0 0
    %4150 = vmatpush1.bf16.msra.mxu0 0
    %4151 = vmatprep.subr.bf16.mxu0 0
    %4152 = vmatpush1.bf16.msra.mxu0 0
    %4153 = vmatprep.subr.bf16.mxu0 0
    %4154 = vmatpush1.bf16.msra.mxu0 0
    %4155 = vmatprep.subr.bf16.mxu0 0
    %4156 = vmatpush1.bf16.msra.mxu0 0
    %4157 = vmatprep.subr.bf16.mxu0 0
    %4158 = vmatpush1.bf16.msra.mxu0 0
    %4159 = vmatprep.subr.bf16.mxu0 0
    %4160 = vmatpush1.bf16.msra.mxu0 0
    %4161 = vmatprep.subr.bf16.mxu0 0
    %4162 = vmatpush1.bf16.msra.mxu0 0
    %4163 = vmatprep.subr.bf16.mxu0 0
    %4164 = vmatpush1.bf16.msra.mxu0 0
    %4165 = vmatprep.subr.bf16.mxu0 0
    %4166 = vmatpush1.bf16.msra.mxu0 0
    %4167 = vmatprep.subr.bf16.mxu0 0
    %4168 = vmatpush1.bf16.msra.mxu0 0
    %4169 = vmatprep.subr.bf16.mxu0 0
    %4170 = vmatpush1.bf16.msra.mxu0 0
    %4171 = vmatprep.subr.bf16.mxu0 0
    %4172 = vmatpush1.bf16.msra.mxu0 0
    %4173 = vmatprep.mubr.bf16.mxu0 0
    %4174 = vmatmul.mubr.bf16.gmra.mrb[0].mxu0 %v4139
    %v4175 = vpop.f32.mrb[0].mxu0
    %v4176 = vadd.f32 %v4124, %v4175
    %v4177 = vpop.f32.mrb[0].mxu0
    %v4178 = vpop.f32.mrb[0].mxu0
    %v4179 = vadd.f32 %v4124, %v4178
    %v4180 = vpop.f32.mrb[0].mxu0
    %4181 = vdwg.mxu0
    %v4182 = vmax.f32 %v4176, 0.0
    %v4183 = vmax.f32 %v4179, 0.0
    %v4184 = vpack.c.bf16 %v4183, %v4182
    %v4186 = vlaneseq
    %v4187 = vshrl.u32 %v4186, 7
    %v4188 = vsub.s32 0, %v4187
    %v4189 = vrot.slane %v4118, %v4188
    %v4199 = vunpack.c.l.b16 %v4110
    %v4200 = vunpack.c.l.b16 %v4111
    %v4201 = vunpack.c.l.b16 %v4112
    %v4202 = vunpack.c.l.b16 %v4113
    %v4203 = vunpack.c.l.b16 %v4114
    %v4204 = vunpack.c.l.b16 %v4115
    %v4205 = vunpack.c.l.b16 %v4116
    %v4206 = vunpack.c.l.b16 %v4117
    %v4207 = vpack.c.b16 %v4200, %v4199
    %v4208 = vpack.c.b16 %v4202, %v4201
    %v4209 = vpack.c.b16 %v4204, %v4203
    %v4210 = vpack.c.b16 %v4206, %v4205
    %v4216 = vsel %vm1133, %v4184, 0
    %4218 = vmatprep.subr.bf16.mxu0 0
    %4219 = vmatpush1.bf16.msra.mxu0 %v4207
    %4220 = vmatprep.subr.bf16.mxu0 0
    %4221 = vmatpush1.bf16.msra.mxu0 %v4208
    %4222 = vmatprep.subr.bf16.mxu0 0
    %4223 = vmatpush1.bf16.msra.mxu0 %v4209
    %4224 = vmatprep.subr.bf16.mxu0 0
    %4225 = vmatpush1.bf16.msra.mxu0 %v4210
    %4226 = vmatprep.subr.bf16.mxu0 0
    %4227 = vmatpush1.bf16.msra.mxu0 0
    %4228 = vmatprep.subr.bf16.mxu0 0
    %4229 = vmatpush1.bf16.msra.mxu0 0
    %4230 = vmatprep.subr.bf16.mxu0 0
    %4231 = vmatpush1.bf16.msra.mxu0 0
    %4232 = vmatprep.subr.bf16.mxu0 0
    %4233 = vmatpush1.bf16.msra.mxu0 0
    %4234 = vmatprep.subr.bf16.mxu0 0
    %4235 = vmatpush1.bf16.msra.mxu0 0
    %4236 = vmatprep.subr.bf16.mxu0 0
    %4237 = vmatpush1.bf16.msra.mxu0 0
    %4238 = vmatprep.subr.bf16.mxu0 0
    %4239 = vmatpush1.bf16.msra.mxu0 0
    %4240 = vmatprep.subr.bf16.mxu0 0
    %4241 = vmatpush1.bf16.msra.mxu0 0
    %4242 = vmatprep.subr.bf16.mxu0 0
    %4243 = vmatpush1.bf16.msra.mxu0 0
    %4244 = vmatprep.subr.bf16.mxu0 0
    %4245 = vmatpush1.bf16.msra.mxu0 0
    %4246 = vmatprep.subr.bf16.mxu0 0
    %4247 = vmatpush1.bf16.msra.mxu0 0
    %4248 = vmatprep.subr.bf16.mxu0 0
    %4249 = vmatpush1.bf16.msra.mxu0 0
    %4250 = vmatprep.mubr.bf16.mxu0 0
    %4251 = vmatmul.mubr.bf16.gmra.mrb[0].mxu0 %v4216
    %v4252 = vpop.f32.mrb[0].mxu0
    %v4253 = vadd.f32 %v4189, %v4252
    %v4254 = vpop.f32.mrb[0].mxu0
    %v4255 = vpop.f32.mrb[0].mxu0
    %v4256 = vadd.f32 %v4189, %v4255
    %v4257 = vpop.f32.mrb[0].mxu0
    %4258 = vdwg.mxu0
    %v4259 = vadd.f32 %v4043, %v4253
    %v4260 = vadd.f32 %v4044, %v4256
    %s4261 = scalar_lea.vmem %s23, 6
    %v4262 = vld [vmem:[%s4261] sm:$0x1]
    %s4263 = scalar_lea.vmem %s23, 7
    %v4264 = vld [vmem:[%s4263] sm:$0x1]
    %v4265 = vsel %vm121, %v4259, 0.0
    %4266 = vadd.xlane.f32.xlu0 %v4265
    %v4267 = vpop.xlane.xlu0 %4266
    %v4268 = vsel %vm121, %v4260, 0.0
    %4269 = vadd.xlane.f32.xlu0 %v4268
    %v4270 = vpop.xlane.xlu0 %4269
    %v4271 = vmul.f32 %v4267, %v128
    %v4272 = vmul.f32 %v4270, %v128
    %v4273 = vsub.f32 %v4259, %v4271
    %v4274 = vsub.f32 %v4260, %v4272
    %v4275 = vmul.f32 %v4273, %v4273
    %v4276 = vmul.f32 %v4274, %v4274
    %v4277 = vsel %vm121, %v4275, 0.0
    %4278 = vadd.xlane.f32.xlu0 %v4277
    %v4279 = vpop.xlane.xlu0 %4278
    %v4280 = vsel %vm121, %v4276, 0.0
    %4281 = vadd.xlane.f32.xlu0 %v4280
    %v4282 = vpop.xlane.xlu0 %4281
    %v4283 = vmul.f32 %v4279, 0.032258064
    %v4284 = vmul.f32 %v4282, 0.032258064
    %v4285 = vrsqrt.pop %v4283
    %v4286 = vmul.f32 %v4283, %v4285
    %vm4287 = vcmp.eq.f32.partialorder %v4283, inf
    %v4288 = vsel %vm4287, %v4283, %v4286
    %vm4289 = vcmp.eq.f32.partialorder %v4283, 0.0
    %v4290 = vand.u32 %v4283, 2147483648
    %v4291 = vsel %vm4289, %v4290, %v4288
    %v4292 = vrsqrt.pop %v4284
    %v4293 = vmul.f32 %v4284, %v4292
    %vm4294 = vcmp.eq.f32.partialorder %v4284, inf
    %v4295 = vsel %vm4294, %v4284, %v4293
    %vm4296 = vcmp.eq.f32.partialorder %v4284, 0.0
    %v4297 = vand.u32 %v4284, 2147483648
    %v4298 = vsel %vm4296, %v4297, %v4295
    %v4299 = vadd.f32 %v4291, 1e-06
    %v4300 = vadd.f32 %v4298, 1e-06
    %v4301 = vrcp.pop %v4299
    %v4302 = vrcp.pop %v4300
    %v4304 = vlaneseq
    %v4305 = vshrl.u32 %v4304, 7
    %v4306 = vsub.s32 0, %v4305
    %v4307 = vrot.slane %v4262, %v4306
    %v4309 = vmul.f32 %v4307, %v4273
    %v4310 = vmul.f32 %v4307, %v4274
    %v4311 = vmul.f32 %v4309, %v4301
    %v4312 = vmul.f32 %v4310, %v4302
    %v4314 = vlaneseq
    %v4315 = vshrl.u32 %v4314, 7
    %v4316 = vsub.s32 0, %v4315
    %v4317 = vrot.slane %v4264, %v4316
    %v4319 = vadd.f32 %v4311, %v4317
    %v4320 = vadd.f32 %v4312, %v4317
    %s4321 = scalar_lea.vmem %s15, 32
    %v4322 = vld [vmem:[%s4321] sm:$0xf]
    %v4323 = vld [vmem:[%s4321 + $0x4] sm:$0xf]
    %v4324 = vld [vmem:[%s4321 + $0x8] sm:$0xf]
    %v4325 = vld [vmem:[%s4321 + $0xc] sm:$0xf]
    %s4326 = scalar_lea.vmem %s16, 2
    %v4327 = vld [vmem:[%s4326] sm:$0x1]
    %s4328 = scalar_lea.vmem %s17, 32
    %v4329 = vld [vmem:[%s4328] sm:$0xf]
    %v4330 = vld [vmem:[%s4328 + $0x4] sm:$0xf]
    %v4331 = vld [vmem:[%s4328 + $0x8] sm:$0xf]
    %v4332 = vld [vmem:[%s4328 + $0xc] sm:$0xf]
    %s4333 = scalar_lea.vmem %s18, 2
    %v4334 = vld [vmem:[%s4333] sm:$0x1]
    %v4335 = vpack.c.bf16 %v4320, %v4319
    %v4337 = vlaneseq
    %v4338 = vshrl.u32 %v4337, 7
    %v4339 = vsub.s32 0, %v4338
    %v4340 = vrot.slane %v4327, %v4339
    %v4346 = vunpack.c.l.b16 %v4322
    %v4347 = vunpack.c.l.b16 %v4323
    %v4348 = vunpack.c.l.b16 %v4324
    %v4349 = vunpack.c.l.b16 %v4325
    %v4350 = vpack.c.b16 %v4347, %v4346
    %v4351 = vpack.c.b16 %v4349, %v4348
    %v4355 = vsel %vm121, %v4335, 0
    %4357 = vmatprep.subr.bf16.mxu0 0
    %4358 = vmatpush1.bf16.msra.mxu0 %v4350
    %4359 = vmatprep.subr.bf16.mxu0 0
    %4360 = vmatpush1.bf16.msra.mxu0 %v4351
    %4361 = vmatprep.subr.bf16.mxu0 0
    %4362 = vmatpush1.bf16.msra.mxu0 0
    %4363 = vmatprep.subr.bf16.mxu0 0
    %4364 = vmatpush1.bf16.msra.mxu0 0
    %4365 = vmatprep.subr.bf16.mxu0 0
    %4366 = vmatpush1.bf16.msra.mxu0 0
    %4367 = vmatprep.subr.bf16.mxu0 0
    %4368 = vmatpush1.bf16.msra.mxu0 0
    %4369 = vmatprep.subr.bf16.mxu0 0
    %4370 = vmatpush1.bf16.msra.mxu0 0
    %4371 = vmatprep.subr.bf16.mxu0 0
    %4372 = vmatpush1.bf16.msra.mxu0 0
    %4373 = vmatprep.subr.bf16.mxu0 0
    %4374 = vmatpush1.bf16.msra.mxu0 0
    %4375 = vmatprep.subr.bf16.mxu0 0
    %4376 = vmatpush1.bf16.msra.mxu0 0
    %4377 = vmatprep.subr.bf16.mxu0 0
    %4378 = vmatpush1.bf16.msra.mxu0 0
    %4379 = vmatprep.subr.bf16.mxu0 0
    %4380 = vmatpush1.bf16.msra.mxu0 0
    %4381 = vmatprep.subr.bf16.mxu0 0
    %4382 = vmatpush1.bf16.msra.mxu0 0
    %4383 = vmatprep.subr.bf16.mxu0 0
    %4384 = vmatpush1.bf16.msra.mxu0 0
    %4385 = vmatprep.subr.bf16.mxu0 0
    %4386 = vmatpush1.bf16.msra.mxu0 0
    %4387 = vmatprep.subr.bf16.mxu0 0
    %4388 = vmatpush1.bf16.msra.mxu0 0
    %4389 = vmatprep.mubr.bf16.mxu0 0
    %4390 = vmatmul.mubr.bf16.gmra.mrb[0].mxu0 %v4355
    %v4391 = vpop.f32.mrb[0].mxu0
    %v4392 = vadd.f32 %v4340, %v4391
    %v4393 = vpop.f32.mrb[0].mxu0
    %v4394 = vpop.f32.mrb[0].mxu0
    %v4395 = vadd.f32 %v4340, %v4394
    %v4396 = vpop.f32.mrb[0].mxu0
    %4397 = vdwg.mxu0
    %v4398 = vpack.c.bf16 %v4395, %v4392
    %4400 = vrot.lane.b32.xlu0 %v4398, 96
    %v4401 = vpop.permute.xlu0 %4400
    %v4403 = vsel %vm256, %v4398, 0
    %v4406 = vsel %vm256, %v4401, 0
    %4408 = vmatprep.subr.bf16.mxu0 0
    %4409 = vmatpush1.bf16.xpose.msra.mxu0 %v4406
    %4410 = vmatprep.subr.bf16.mxu0 0
    %4411 = vmatpush1.bf16.xpose.msra.mxu0 0
    %4412 = vmatprep.subr.bf16.mxu0 0
    %4413 = vmatpush1.bf16.xpose.msra.mxu0 0
    %4414 = vmatprep.subr.bf16.mxu0 0
    %4415 = vmatpush1.bf16.xpose.msra.mxu0 0
    %4416 = vmatprep.subr.bf16.mxu0 0
    %4417 = vmatpush1.bf16.xpose.msra.mxu0 0
    %4418 = vmatprep.subr.bf16.mxu0 0
    %4419 = vmatpush1.bf16.xpose.msra.mxu0 0
    %4420 = vmatprep.subr.bf16.mxu0 0
    %4421 = vmatpush1.bf16.xpose.msra.mxu0 0
    %4422 = vmatprep.subr.bf16.mxu0 0
    %4423 = vmatpush1.bf16.xpose.msra.mxu0 0
    %4424 = vmatprep.subr.bf16.mxu0 0
    %4425 = vmatpush1.bf16.xpose.msra.mxu0 0
    %4426 = vmatprep.subr.bf16.mxu0 0
    %4427 = vmatpush1.bf16.xpose.msra.mxu0 0
    %4428 = vmatprep.subr.bf16.mxu0 0
    %4429 = vmatpush1.bf16.xpose.msra.mxu0 0
    %4430 = vmatprep.subr.bf16.mxu0 0
    %4431 = vmatpush1.bf16.xpose.msra.mxu0 0
    %4432 = vmatprep.subr.bf16.mxu0 0
    %4433 = vmatpush1.bf16.xpose.msra.mxu0 0
    %4434 = vmatprep.subr.bf16.mxu0 0
    %4435 = vmatpush1.bf16.xpose.msra.mxu0 0
    %4436 = vmatprep.subr.bf16.mxu0 0
    %4437 = vmatpush1.bf16.xpose.msra.mxu0 0
    %4438 = vmatprep.subr.bf16.mxu0 0
    %4439 = vmatpush1.bf16.xpose.msra.mxu0 0
    %4440 = vmatprep.mubr.bf16.mxu0 0
    %4441 = vmatmul.mubr.bf16.gmra.mrb[0].mxu0 %v4403
    %v4442 = vpop.f32.mrb[0].mxu0
    %v4443 = vadd.f32 0.0, %v4442
    %v4444 = vpop.f32.mrb[0].mxu0
    %v4445 = vpop.f32.mrb[0].mxu0
    %v4446 = vadd.f32 0.0, %v4445
    %v4447 = vpop.f32.mrb[0].mxu0
    %4448 = vdwg.mxu0
    %v4449 = vmul.f32 %v4443, 0.35355338
    %v4450 = vmul.f32 %v4446, 0.35355338
    %v4451 = vadd.f32 %v4449, %v112
    %v4452 = vadd.f32 %v4450, %v113
    %v4453 = vsel %vm308, %v4451, -inf
    %4454 = vmax.xlane.f32.xlu0 %v4453
    %v4455 = vpop.xlane.xlu0 %4454
    %v4456 = vsel %vm308, %v4452, -inf
    %4457 = vmax.xlane.f32.xlu0 %v4456
    %v4458 = vpop.xlane.xlu0 %4457
    %v4459 = vsub.f32 %v4451, %v4455
    %v4460 = vsub.f32 %v4452, %v4458
    %v4461 = vmul.f32 %v4459, 1.442695
    %v4462 = vpow.pop %v4461
    %v4463 = vmul.f32 %v4460, 1.442695
    %v4464 = vpow.pop %v4463
    %v4465 = vsel %vm308, %v4462, 0.0
    %4466 = vadd.xlane.f32.xlu0 %v4465
    %v4467 = vpop.xlane.xlu0 %4466
    %v4468 = vsel %vm308, %v4464, 0.0
    %4469 = vadd.xlane.f32.xlu0 %v4468
    %v4470 = vpop.xlane.xlu0 %4469
    %v4471 = vrcp.pop %v4467
    %v4472 = vrcp.pop %v4470
    %v4473 = vmul.f32 %v4462, %v4471
    %v4474 = vmul.f32 %v4464, %v4472
    %v4475 = vpack.c.bf16 %v4474, %v4473
    %4476 = vrot.lane.b32.xlu0 %v4398, 64
    %v4477 = vpop.permute.xlu0 %4476
    %v4480 = vsel %vm308, %v4475, 0
    %4482 = vmatprep.subr.bf16.mxu0 0
    %4483 = vmatpush1.bf16.msra.mxu0 %v4477
    %4484 = vmatprep.subr.bf16.mxu0 0
    %4485 = vmatpush1.bf16.msra.mxu0 0
    %4486 = vmatprep.subr.bf16.mxu0 0
    %4487 = vmatpush1.bf16.msra.mxu0 0
    %4488 = vmatprep.subr.bf16.mxu0 0
    %4489 = vmatpush1.bf16.msra.mxu0 0
    %4490 = vmatprep.subr.bf16.mxu0 0
    %4491 = vmatpush1.bf16.msra.mxu0 0
    %4492 = vmatprep.subr.bf16.mxu0 0
    %4493 = vmatpush1.bf16.msra.mxu0 0
    %4494 = vmatprep.subr.bf16.mxu0 0
    %4495 = vmatpush1.bf16.msra.mxu0 0
    %4496 = vmatprep.subr.bf16.mxu0 0
    %4497 = vmatpush1.bf16.msra.mxu0 0
    %4498 = vmatprep.subr.bf16.mxu0 0
    %4499 = vmatpush1.bf16.msra.mxu0 0
    %4500 = vmatprep.subr.bf16.mxu0 0
    %4501 = vmatpush1.bf16.msra.mxu0 0
    %4502 = vmatprep.subr.bf16.mxu0 0
    %4503 = vmatpush1.bf16.msra.mxu0 0
    %4504 = vmatprep.subr.bf16.mxu0 0
    %4505 = vmatpush1.bf16.msra.mxu0 0
    %4506 = vmatprep.subr.bf16.mxu0 0
    %4507 = vmatpush1.bf16.msra.mxu0 0
    %4508 = vmatprep.subr.bf16.mxu0 0
    %4509 = vmatpush1.bf16.msra.mxu0 0
    %4510 = vmatprep.subr.bf16.mxu0 0
    %4511 = vmatpush1.bf16.msra.mxu0 0
    %4512 = vmatprep.subr.bf16.mxu0 0
    %4513 = vmatpush1.bf16.msra.mxu0 0
    %4514 = vmatprep.mubr.bf16.mxu0 0
    %4515 = vmatmul.mubr.bf16.gmra.mrb[0].mxu0 %v4480
    %v4516 = vpop.f32.mrb[0].mxu0
    %v4517 = vadd.f32 0.0, %v4516
    %v4518 = vpop.f32.mrb[0].mxu0
    %v4519 = vpop.f32.mrb[0].mxu0
    %v4520 = vadd.f32 0.0, %v4519
    %v4521 = vpop.f32.mrb[0].mxu0
    %4522 = vdwg.mxu0
    %v4523 = vpack.c.bf16 %v4520, %v4517
    %v4525 = vsel %vm256, %v4523, 0
    %v4528 = vsel %vm383, %v4329, 0
    %4530 = vmatprep.subr.bf16.mxu0 0
    %4531 = vmatpush1.bf16.msra.mxu0 %v4528
    %4532 = vmatprep.subr.bf16.mxu0 0
    %4533 = vmatpush1.bf16.msra.mxu0 0
    %4534 = vmatprep.subr.bf16.mxu0 0
    %4535 = vmatpush1.bf16.msra.mxu0 0
    %4536 = vmatprep.subr.bf16.mxu0 0
    %4537 = vmatpush1.bf16.msra.mxu0 0
    %4538 = vmatprep.subr.bf16.mxu0 0
    %4539 = vmatpush1.bf16.msra.mxu0 0
    %4540 = vmatprep.subr.bf16.mxu0 0
    %4541 = vmatpush1.bf16.msra.mxu0 0
    %4542 = vmatprep.subr.bf16.mxu0 0
    %4543 = vmatpush1.bf16.msra.mxu0 0
    %4544 = vmatprep.subr.bf16.mxu0 0
    %4545 = vmatpush1.bf16.msra.mxu0 0
    %4546 = vmatprep.subr.bf16.mxu0 0
    %4547 = vmatpush1.bf16.msra.mxu0 0
    %4548 = vmatprep.subr.bf16.mxu0 0
    %4549 = vmatpush1.bf16.msra.mxu0 0
    %4550 = vmatprep.subr.bf16.mxu0 0
    %4551 = vmatpush1.bf16.msra.mxu0 0
    %4552 = vmatprep.subr.bf16.mxu0 0
    %4553 = vmatpush1.bf16.msra.mxu0 0
    %4554 = vmatprep.subr.bf16.mxu0 0
    %4555 = vmatpush1.bf16.msra.mxu0 0
    %4556 = vmatprep.subr.bf16.mxu0 0
    %4557 = vmatpush1.bf16.msra.mxu0 0
    %4558 = vmatprep.subr.bf16.mxu0 0
    %4559 = vmatpush1.bf16.msra.mxu0 0
    %4560 = vmatprep.subr.bf16.mxu0 0
    %4561 = vmatpush1.bf16.msra.mxu0 0
    %4562 = vmatprep.mubr.bf16.mxu0 0
    %4563 = vmatmul.mubr.bf16.gmra.mrb[0].mxu0 %v4525
    %v4564 = vpop.f32.mrb[0].mxu0
    %v4565 = vadd.f32 0.0, %v4564
    %v4566 = vpop.f32.mrb[0].mxu0
    %v4567 = vpop.f32.mrb[0].mxu0
    %v4568 = vadd.f32 0.0, %v4567
    %v4569 = vpop.f32.mrb[0].mxu0
    %4570 = vdwg.mxu0
    %v4572 = vlaneseq
    %v4573 = vshrl.u32 %v4572, 7
    %v4574 = vsub.s32 0, %v4573
    %v4575 = vrot.slane %v4334, %v4574
    %v4577 = vadd.f32 %v4575, %v4565
    %v4578 = vadd.f32 %v4575, %v4568
    %4579 = vrot.lane.b32.xlu0 %v4398, 120
    %v4580 = vpop.permute.xlu0 %4579
    %4581 = vrot.lane.b32.xlu0 %v4398, 88
    %v4582 = vpop.permute.xlu0 %4581
    %v4584 = vsel %vm256, %v4580, 0
    %v4587 = vsel %vm256, %v4582, 0
    %4589 = vmatprep.subr.bf16.mxu0 0
    %4590 = vmatpush1.bf16.xpose.msra.mxu0 %v4587
    %4591 = vmatprep.subr.bf16.mxu0 0
    %4592 = vmatpush1.bf16.xpose.msra.mxu0 0
    %4593 = vmatprep.subr.bf16.mxu0 0
    %4594 = vmatpush1.bf16.xpose.msra.mxu0 0
    %4595 = vmatprep.subr.bf16.mxu0 0
    %4596 = vmatpush1.bf16.xpose.msra.mxu0 0
    %4597 = vmatprep.subr.bf16.mxu0 0
    %4598 = vmatpush1.bf16.xpose.msra.mxu0 0
    %4599 = vmatprep.subr.bf16.mxu0 0
    %4600 = vmatpush1.bf16.xpose.msra.mxu0 0
    %4601 = vmatprep.subr.bf16.mxu0 0
    %4602 = vmatpush1.bf16.xpose.msra.mxu0 0
    %4603 = vmatprep.subr.bf16.mxu0 0
    %4604 = vmatpush1.bf16.xpose.msra.mxu0 0
    %4605 = vmatprep.subr.bf16.mxu0 0
    %4606 = vmatpush1.bf16.xpose.msra.mxu0 0
    %4607 = vmatprep.subr.bf16.mxu0 0
    %4608 = vmatpush1.bf16.xpose.msra.mxu0 0
    %4609 = vmatprep.subr.bf16.mxu0 0
    %4610 = vmatpush1.bf16.xpose.msra.mxu0 0
    %4611 = vmatprep.subr.bf16.mxu0 0
    %4612 = vmatpush1.bf16.xpose.msra.mxu0 0
    %4613 = vmatprep.subr.bf16.mxu0 0
    %4614 = vmatpush1.bf16.xpose.msra.mxu0 0
    %4615 = vmatprep.subr.bf16.mxu0 0
    %4616 = vmatpush1.bf16.xpose.msra.mxu0 0
    %4617 = vmatprep.subr.bf16.mxu0 0
    %4618 = vmatpush1.bf16.xpose.msra.mxu0 0
    %4619 = vmatprep.subr.bf16.mxu0 0
    %4620 = vmatpush1.bf16.xpose.msra.mxu0 0
    %4621 = vmatprep.mubr.bf16.mxu0 0
    %4622 = vmatmul.mubr.bf16.gmra.mrb[0].mxu0 %v4584
    %v4623 = vpop.f32.mrb[0].mxu0
    %v4624 = vadd.f32 0.0, %v4623
    %v4625 = vpop.f32.mrb[0].mxu0
    %v4626 = vpop.f32.mrb[0].mxu0
    %v4627 = vadd.f32 0.0, %v4626
    %v4628 = vpop.f32.mrb[0].mxu0
    %4629 = vdwg.mxu0
    %v4630 = vmul.f32 %v4624, 0.35355338
    %v4631 = vmul.f32 %v4627, 0.35355338
    %v4632 = vadd.f32 %v4630, %v112
    %v4633 = vadd.f32 %v4631, %v113
    %v4634 = vsel %vm308, %v4632, -inf
    %4635 = vmax.xlane.f32.xlu0 %v4634
    %v4636 = vpop.xlane.xlu0 %4635
    %v4637 = vsel %vm308, %v4633, -inf
    %4638 = vmax.xlane.f32.xlu0 %v4637
    %v4639 = vpop.xlane.xlu0 %4638
    %v4640 = vsub.f32 %v4632, %v4636
    %v4641 = vsub.f32 %v4633, %v4639
    %v4642 = vmul.f32 %v4640, 1.442695
    %v4643 = vpow.pop %v4642
    %v4644 = vmul.f32 %v4641, 1.442695
    %v4645 = vpow.pop %v4644
    %v4646 = vsel %vm308, %v4643, 0.0
    %4647 = vadd.xlane.f32.xlu0 %v4646
    %v4648 = vpop.xlane.xlu0 %4647
    %v4649 = vsel %vm308, %v4645, 0.0
    %4650 = vadd.xlane.f32.xlu0 %v4649
    %v4651 = vpop.xlane.xlu0 %4650
    %v4652 = vrcp.pop %v4648
    %v4653 = vrcp.pop %v4651
    %v4654 = vmul.f32 %v4643, %v4652
    %v4655 = vmul.f32 %v4645, %v4653
    %v4656 = vpack.c.bf16 %v4655, %v4654
    %4657 = vrot.lane.b32.xlu0 %v4398, 56
    %v4658 = vpop.permute.xlu0 %4657
    %v4661 = vsel %vm308, %v4656, 0
    %4663 = vmatprep.subr.bf16.mxu0 0
    %4664 = vmatpush1.bf16.msra.mxu0 %v4658
    %4665 = vmatprep.subr.bf16.mxu0 0
    %4666 = vmatpush1.bf16.msra.mxu0 0
    %4667 = vmatprep.subr.bf16.mxu0 0
    %4668 = vmatpush1.bf16.msra.mxu0 0
    %4669 = vmatprep.subr.bf16.mxu0 0
    %4670 = vmatpush1.bf16.msra.mxu0 0
    %4671 = vmatprep.subr.bf16.mxu0 0
    %4672 = vmatpush1.bf16.msra.mxu0 0
    %4673 = vmatprep.subr.bf16.mxu0 0
    %4674 = vmatpush1.bf16.msra.mxu0 0
    %4675 = vmatprep.subr.bf16.mxu0 0
    %4676 = vmatpush1.bf16.msra.mxu0 0
    %4677 = vmatprep.subr.bf16.mxu0 0
    %4678 = vmatpush1.bf16.msra.mxu0 0
    %4679 = vmatprep.subr.bf16.mxu0 0
    %4680 = vmatpush1.bf16.msra.mxu0 0
    %4681 = vmatprep.subr.bf16.mxu0 0
    %4682 = vmatpush1.bf16.msra.mxu0 0
    %4683 = vmatprep.subr.bf16.mxu0 0
    %4684 = vmatpush1.bf16.msra.mxu0 0
    %4685 = vmatprep.subr.bf16.mxu0 0
    %4686 = vmatpush1.bf16.msra.mxu0 0
    %4687 = vmatprep.subr.bf16.mxu0 0
    %4688 = vmatpush1.bf16.msra.mxu0 0
    %4689 = vmatprep.subr.bf16.mxu0 0
    %4690 = vmatpush1.bf16.msra.mxu0 0
    %4691 = vmatprep.subr.bf16.mxu0 0
    %4692 = vmatpush1.bf16.msra.mxu0 0
    %4693 = vmatprep.subr.bf16.mxu0 0
    %4694 = vmatpush1.bf16.msra.mxu0 0
    %4695 = vmatprep.mubr.bf16.mxu0 0
    %4696 = vmatmul.mubr.bf16.gmra.mrb[0].mxu0 %v4661
    %v4697 = vpop.f32.mrb[0].mxu0
    %v4698 = vadd.f32 0.0, %v4697
    %v4699 = vpop.f32.mrb[0].mxu0
    %v4700 = vpop.f32.mrb[0].mxu0
    %v4701 = vadd.f32 0.0, %v4700
    %v4702 = vpop.f32.mrb[0].mxu0
    %4703 = vdwg.mxu0
    %v4704 = vpack.c.bf16 %v4701, %v4698
    %v4706 = vsel %vm256, %v4704, 0
    %v4709 = vsel %vm383, %v4330, 0
    %4711 = vmatprep.subr.bf16.mxu0 0
    %4712 = vmatpush1.bf16.msra.mxu0 %v4709
    %4713 = vmatprep.subr.bf16.mxu0 0
    %4714 = vmatpush1.bf16.msra.mxu0 0
    %4715 = vmatprep.subr.bf16.mxu0 0
    %4716 = vmatpush1.bf16.msra.mxu0 0
    %4717 = vmatprep.subr.bf16.mxu0 0
    %4718 = vmatpush1.bf16.msra.mxu0 0
    %4719 = vmatprep.subr.bf16.mxu0 0
    %4720 = vmatpush1.bf16.msra.mxu0 0
    %4721 = vmatprep.subr.bf16.mxu0 0
    %4722 = vmatpush1.bf16.msra.mxu0 0
    %4723 = vmatprep.subr.bf16.mxu0 0
    %4724 = vmatpush1.bf16.msra.mxu0 0
    %4725 = vmatprep.subr.bf16.mxu0 0
    %4726 = vmatpush1.bf16.msra.mxu0 0
    %4727 = vmatprep.subr.bf16.mxu0 0
    %4728 = vmatpush1.bf16.msra.mxu0 0
    %4729 = vmatprep.subr.bf16.mxu0 0
    %4730 = vmatpush1.bf16.msra.mxu0 0
    %4731 = vmatprep.subr.bf16.mxu0 0
    %4732 = vmatpush1.bf16.msra.mxu0 0
    %4733 = vmatprep.subr.bf16.mxu0 0
    %4734 = vmatpush1.bf16.msra.mxu0 0
    %4735 = vmatprep.subr.bf16.mxu0 0
    %4736 = vmatpush1.bf16.msra.mxu0 0
    %4737 = vmatprep.subr.bf16.mxu0 0
    %4738 = vmatpush1.bf16.msra.mxu0 0
    %4739 = vmatprep.subr.bf16.mxu0 0
    %4740 = vmatpush1.bf16.msra.mxu0 0
    %4741 = vmatprep.subr.bf16.mxu0 0
    %4742 = vmatpush1.bf16.msra.mxu0 0
    %4743 = vmatprep.mubr.bf16.mxu0 0
    %4744 = vmatmul.mubr.bf16.gmra.mrb[0].mxu0 %v4706
    %v4745 = vpop.f32.mrb[0].mxu0
    %v4746 = vadd.f32 0.0, %v4745
    %v4747 = vpop.f32.mrb[0].mxu0
    %v4748 = vpop.f32.mrb[0].mxu0
    %v4749 = vadd.f32 0.0, %v4748
    %v4750 = vpop.f32.mrb[0].mxu0
    %4751 = vdwg.mxu0
    %v4752 = vadd.f32 %v4577, %v4746
    %v4753 = vadd.f32 %v4578, %v4749
    %4754 = vrot.lane.b32.xlu0 %v4398, 112
    %v4755 = vpop.permute.xlu0 %4754
    %4756 = vrot.lane.b32.xlu0 %v4398, 80
    %v4757 = vpop.permute.xlu0 %4756
    %v4759 = vsel %vm256, %v4755, 0
    %v4762 = vsel %vm256, %v4757, 0
    %4764 = vmatprep.subr.bf16.mxu0 0
    %4765 = vmatpush1.bf16.xpose.msra.mxu0 %v4762
    %4766 = vmatprep.subr.bf16.mxu0 0
    %4767 = vmatpush1.bf16.xpose.msra.mxu0 0
    %4768 = vmatprep.subr.bf16.mxu0 0
    %4769 = vmatpush1.bf16.xpose.msra.mxu0 0
    %4770 = vmatprep.subr.bf16.mxu0 0
    %4771 = vmatpush1.bf16.xpose.msra.mxu0 0
    %4772 = vmatprep.subr.bf16.mxu0 0
    %4773 = vmatpush1.bf16.xpose.msra.mxu0 0
    %4774 = vmatprep.subr.bf16.mxu0 0
    %4775 = vmatpush1.bf16.xpose.msra.mxu0 0
    %4776 = vmatprep.subr.bf16.mxu0 0
    %4777 = vmatpush1.bf16.xpose.msra.mxu0 0
    %4778 = vmatprep.subr.bf16.mxu0 0
    %4779 = vmatpush1.bf16.xpose.msra.mxu0 0
    %4780 = vmatprep.subr.bf16.mxu0 0
    %4781 = vmatpush1.bf16.xpose.msra.mxu0 0
    %4782 = vmatprep.subr.bf16.mxu0 0
    %4783 = vmatpush1.bf16.xpose.msra.mxu0 0
    %4784 = vmatprep.subr.bf16.mxu0 0
    %4785 = vmatpush1.bf16.xpose.msra.mxu0 0
    %4786 = vmatprep.subr.bf16.mxu0 0
    %4787 = vmatpush1.bf16.xpose.msra.mxu0 0
    %4788 = vmatprep.subr.bf16.mxu0 0
    %4789 = vmatpush1.bf16.xpose.msra.mxu0 0
    %4790 = vmatprep.subr.bf16.mxu0 0
    %4791 = vmatpush1.bf16.xpose.msra.mxu0 0
    %4792 = vmatprep.subr.bf16.mxu0 0
    %4793 = vmatpush1.bf16.xpose.msra.mxu0 0
    %4794 = vmatprep.subr.bf16.mxu0 0
    %4795 = vmatpush1.bf16.xpose.msra.mxu0 0
    %4796 = vmatprep.mubr.bf16.mxu0 0
    %4797 = vmatmul.mubr.bf16.gmra.mrb[0].mxu0 %v4759
    %v4798 = vpop.f32.mrb[0].mxu0
    %v4799 = vadd.f32 0.0, %v4798
    %v4800 = vpop.f32.mrb[0].mxu0
    %v4801 = vpop.f32.mrb[0].mxu0
    %v4802 = vadd.f32 0.0, %v4801
    %v4803 = vpop.f32.mrb[0].mxu0
    %4804 = vdwg.mxu0
    %v4805 = vmul.f32 %v4799, 0.35355338
    %v4806 = vmul.f32 %v4802, 0.35355338
    %v4807 = vadd.f32 %v4805, %v112
    %v4808 = vadd.f32 %v4806, %v113
    %v4809 = vsel %vm308, %v4807, -inf
    %4810 = vmax.xlane.f32.xlu0 %v4809
    %v4811 = vpop.xlane.xlu0 %4810
    %v4812 = vsel %vm308, %v4808, -inf
    %4813 = vmax.xlane.f32.xlu0 %v4812
    %v4814 = vpop.xlane.xlu0 %4813
    %v4815 = vsub.f32 %v4807, %v4811
    %v4816 = vsub.f32 %v4808, %v4814
    %v4817 = vmul.f32 %v4815, 1.442695
    %v4818 = vpow.pop %v4817
    %v4819 = vmul.f32 %v4816, 1.442695
    %v4820 = vpow.pop %v4819
    %v4821 = vsel %vm308, %v4818, 0.0
    %4822 = vadd.xlane.f32.xlu0 %v4821
    %v4823 = vpop.xlane.xlu0 %4822
    %v4824 = vsel %vm308, %v4820, 0.0
    %4825 = vadd.xlane.f32.xlu0 %v4824
    %v4826 = vpop.xlane.xlu0 %4825
    %v4827 = vrcp.pop %v4823
    %v4828 = vrcp.pop %v4826
    %v4829 = vmul.f32 %v4818, %v4827
    %v4830 = vmul.f32 %v4820, %v4828
    %v4831 = vpack.c.bf16 %v4830, %v4829
    %4832 = vrot.lane.b32.xlu0 %v4398, 48
    %v4833 = vpop.permute.xlu0 %4832
    %v4836 = vsel %vm308, %v4831, 0
    %4838 = vmatprep.subr.bf16.mxu0 0
    %4839 = vmatpush1.bf16.msra.mxu0 %v4833
    %4840 = vmatprep.subr.bf16.mxu0 0
    %4841 = vmatpush1.bf16.msra.mxu0 0
    %4842 = vmatprep.subr.bf16.mxu0 0
    %4843 = vmatpush1.bf16.msra.mxu0 0
    %4844 = vmatprep.subr.bf16.mxu0 0
    %4845 = vmatpush1.bf16.msra.mxu0 0
    %4846 = vmatprep.subr.bf16.mxu0 0
    %4847 = vmatpush1.bf16.msra.mxu0 0
    %4848 = vmatprep.subr.bf16.mxu0 0
    %4849 = vmatpush1.bf16.msra.mxu0 0
    %4850 = vmatprep.subr.bf16.mxu0 0
    %4851 = vmatpush1.bf16.msra.mxu0 0
    %4852 = vmatprep.subr.bf16.mxu0 0
    %4853 = vmatpush1.bf16.msra.mxu0 0
    %4854 = vmatprep.subr.bf16.mxu0 0
    %4855 = vmatpush1.bf16.msra.mxu0 0
    %4856 = vmatprep.subr.bf16.mxu0 0
    %4857 = vmatpush1.bf16.msra.mxu0 0
    %4858 = vmatprep.subr.bf16.mxu0 0
    %4859 = vmatpush1.bf16.msra.mxu0 0
    %4860 = vmatprep.subr.bf16.mxu0 0
    %4861 = vmatpush1.bf16.msra.mxu0 0
    %4862 = vmatprep.subr.bf16.mxu0 0
    %4863 = vmatpush1.bf16.msra.mxu0 0
    %4864 = vmatprep.subr.bf16.mxu0 0
    %4865 = vmatpush1.bf16.msra.mxu0 0
    %4866 = vmatprep.subr.bf16.mxu0 0
    %4867 = vmatpush1.bf16.msra.mxu0 0
    %4868 = vmatprep.subr.bf16.mxu0 0
    %4869 = vmatpush1.bf16.msra.mxu0 0
    %4870 = vmatprep.mubr.bf16.mxu0 0
    %4871 = vmatmul.mubr.bf16.gmra.mrb[0].mxu0 %v4836
    %v4872 = vpop.f32.mrb[0].mxu0
    %v4873 = vadd.f32 0.0, %v4872
    %v4874 = vpop.f32.mrb[0].mxu0
    %v4875 = vpop.f32.mrb[0].mxu0
    %v4876 = vadd.f32 0.0, %v4875
    %v4877 = vpop.f32.mrb[0].mxu0
    %4878 = vdwg.mxu0
    %v4879 = vpack.c.bf16 %v4876, %v4873
    %v4881 = vsel %vm256, %v4879, 0
    %v4884 = vsel %vm383, %v4331, 0
    %4886 = vmatprep.subr.bf16.mxu0 0
    %4887 = vmatpush1.bf16.msra.mxu0 %v4884
    %4888 = vmatprep.subr.bf16.mxu0 0
    %4889 = vmatpush1.bf16.msra.mxu0 0
    %4890 = vmatprep.subr.bf16.mxu0 0
    %4891 = vmatpush1.bf16.msra.mxu0 0
    %4892 = vmatprep.subr.bf16.mxu0 0
    %4893 = vmatpush1.bf16.msra.mxu0 0
    %4894 = vmatprep.subr.bf16.mxu0 0
    %4895 = vmatpush1.bf16.msra.mxu0 0
    %4896 = vmatprep.subr.bf16.mxu0 0
    %4897 = vmatpush1.bf16.msra.mxu0 0
    %4898 = vmatprep.subr.bf16.mxu0 0
    %4899 = vmatpush1.bf16.msra.mxu0 0
    %4900 = vmatprep.subr.bf16.mxu0 0
    %4901 = vmatpush1.bf16.msra.mxu0 0
    %4902 = vmatprep.subr.bf16.mxu0 0
    %4903 = vmatpush1.bf16.msra.mxu0 0
    %4904 = vmatprep.subr.bf16.mxu0 0
    %4905 = vmatpush1.bf16.msra.mxu0 0
    %4906 = vmatprep.subr.bf16.mxu0 0
    %4907 = vmatpush1.bf16.msra.mxu0 0
    %4908 = vmatprep.subr.bf16.mxu0 0
    %4909 = vmatpush1.bf16.msra.mxu0 0
    %4910 = vmatprep.subr.bf16.mxu0 0
    %4911 = vmatpush1.bf16.msra.mxu0 0
    %4912 = vmatprep.subr.bf16.mxu0 0
    %4913 = vmatpush1.bf16.msra.mxu0 0
    %4914 = vmatprep.subr.bf16.mxu0 0
    %4915 = vmatpush1.bf16.msra.mxu0 0
    %4916 = vmatprep.subr.bf16.mxu0 0
    %4917 = vmatpush1.bf16.msra.mxu0 0
    %4918 = vmatprep.mubr.bf16.mxu0 0
    %4919 = vmatmul.mubr.bf16.gmra.mrb[0].mxu0 %v4881
    %v4920 = vpop.f32.mrb[0].mxu0
    %v4921 = vadd.f32 0.0, %v4920
    %v4922 = vpop.f32.mrb[0].mxu0
    %v4923 = vpop.f32.mrb[0].mxu0
    %v4924 = vadd.f32 0.0, %v4923
    %v4925 = vpop.f32.mrb[0].mxu0
    %4926 = vdwg.mxu0
    %v4927 = vadd.f32 %v4752, %v4921
    %v4928 = vadd.f32 %v4753, %v4924
    %4929 = vrot.lane.b32.xlu0 %v4398, 104
    %v4930 = vpop.permute.xlu0 %4929
    %4931 = vrot.lane.b32.xlu0 %v4398, 72
    %v4932 = vpop.permute.xlu0 %4931
    %v4934 = vsel %vm256, %v4930, 0
    %v4937 = vsel %vm256, %v4932, 0
    %4939 = vmatprep.subr.bf16.mxu0 0
    %4940 = vmatpush1.bf16.xpose.msra.mxu0 %v4937
    %4941 = vmatprep.subr.bf16.mxu0 0
    %4942 = vmatpush1.bf16.xpose.msra.mxu0 0
    %4943 = vmatprep.subr.bf16.mxu0 0
    %4944 = vmatpush1.bf16.xpose.msra.mxu0 0
    %4945 = vmatprep.subr.bf16.mxu0 0
    %4946 = vmatpush1.bf16.xpose.msra.mxu0 0
    %4947 = vmatprep.subr.bf16.mxu0 0
    %4948 = vmatpush1.bf16.xpose.msra.mxu0 0
    %4949 = vmatprep.subr.bf16.mxu0 0
    %4950 = vmatpush1.bf16.xpose.msra.mxu0 0
    %4951 = vmatprep.subr.bf16.mxu0 0
    %4952 = vmatpush1.bf16.xpose.msra.mxu0 0
    %4953 = vmatprep.subr.bf16.mxu0 0
    %4954 = vmatpush1.bf16.xpose.msra.mxu0 0
    %4955 = vmatprep.subr.bf16.mxu0 0
    %4956 = vmatpush1.bf16.xpose.msra.mxu0 0
    %4957 = vmatprep.subr.bf16.mxu0 0
    %4958 = vmatpush1.bf16.xpose.msra.mxu0 0
    %4959 = vmatprep.subr.bf16.mxu0 0
    %4960 = vmatpush1.bf16.xpose.msra.mxu0 0
    %4961 = vmatprep.subr.bf16.mxu0 0
    %4962 = vmatpush1.bf16.xpose.msra.mxu0 0
    %4963 = vmatprep.subr.bf16.mxu0 0
    %4964 = vmatpush1.bf16.xpose.msra.mxu0 0
    %4965 = vmatprep.subr.bf16.mxu0 0
    %4966 = vmatpush1.bf16.xpose.msra.mxu0 0
    %4967 = vmatprep.subr.bf16.mxu0 0
    %4968 = vmatpush1.bf16.xpose.msra.mxu0 0
    %4969 = vmatprep.subr.bf16.mxu0 0
    %4970 = vmatpush1.bf16.xpose.msra.mxu0 0
    %4971 = vmatprep.mubr.bf16.mxu0 0
    %4972 = vmatmul.mubr.bf16.gmra.mrb[0].mxu0 %v4934
    %v4973 = vpop.f32.mrb[0].mxu0
    %v4974 = vadd.f32 0.0, %v4973
    %v4975 = vpop.f32.mrb[0].mxu0
    %v4976 = vpop.f32.mrb[0].mxu0
    %v4977 = vadd.f32 0.0, %v4976
    %v4978 = vpop.f32.mrb[0].mxu0
    %4979 = vdwg.mxu0
    %v4980 = vmul.f32 %v4974, 0.35355338
    %v4981 = vmul.f32 %v4977, 0.35355338
    %v4982 = vadd.f32 %v4980, %v112
    %v4983 = vadd.f32 %v4981, %v113
    %v4984 = vsel %vm308, %v4982, -inf
    %4985 = vmax.xlane.f32.xlu0 %v4984
    %v4986 = vpop.xlane.xlu0 %4985
    %v4987 = vsel %vm308, %v4983, -inf
    %4988 = vmax.xlane.f32.xlu0 %v4987
    %v4989 = vpop.xlane.xlu0 %4988
    %v4990 = vsub.f32 %v4982, %v4986
    %v4991 = vsub.f32 %v4983, %v4989
    %v4992 = vmul.f32 %v4990, 1.442695
    %v4993 = vpow.pop %v4992
    %v4994 = vmul.f32 %v4991, 1.442695
    %v4995 = vpow.pop %v4994
    %v4996 = vsel %vm308, %v4993, 0.0
    %4997 = vadd.xlane.f32.xlu0 %v4996
    %v4998 = vpop.xlane.xlu0 %4997
    %v4999 = vsel %vm308, %v4995, 0.0
    %5000 = vadd.xlane.f32.xlu0 %v4999
    %v5001 = vpop.xlane.xlu0 %5000
    %v5002 = vrcp.pop %v4998
    %v5003 = vrcp.pop %v5001
    %v5004 = vmul.f32 %v4993, %v5002
    %v5005 = vmul.f32 %v4995, %v5003
    %v5006 = vpack.c.bf16 %v5005, %v5004
    %5007 = vrot.lane.b32.xlu0 %v4398, 40
    %v5008 = vpop.permute.xlu0 %5007
    %v5011 = vsel %vm308, %v5006, 0
    %5013 = vmatprep.subr.bf16.mxu0 0
    %5014 = vmatpush1.bf16.msra.mxu0 %v5008
    %5015 = vmatprep.subr.bf16.mxu0 0
    %5016 = vmatpush1.bf16.msra.mxu0 0
    %5017 = vmatprep.subr.bf16.mxu0 0
    %5018 = vmatpush1.bf16.msra.mxu0 0
    %5019 = vmatprep.subr.bf16.mxu0 0
    %5020 = vmatpush1.bf16.msra.mxu0 0
    %5021 = vmatprep.subr.bf16.mxu0 0
    %5022 = vmatpush1.bf16.msra.mxu0 0
    %5023 = vmatprep.subr.bf16.mxu0 0
    %5024 = vmatpush1.bf16.msra.mxu0 0
    %5025 = vmatprep.subr.bf16.mxu0 0
    %5026 = vmatpush1.bf16.msra.mxu0 0
    %5027 = vmatprep.subr.bf16.mxu0 0
    %5028 = vmatpush1.bf16.msra.mxu0 0
    %5029 = vmatprep.subr.bf16.mxu0 0
    %5030 = vmatpush1.bf16.msra.mxu0 0
    %5031 = vmatprep.subr.bf16.mxu0 0
    %5032 = vmatpush1.bf16.msra.mxu0 0
    %5033 = vmatprep.subr.bf16.mxu0 0
    %5034 = vmatpush1.bf16.msra.mxu0 0
    %5035 = vmatprep.subr.bf16.mxu0 0
    %5036 = vmatpush1.bf16.msra.mxu0 0
    %5037 = vmatprep.subr.bf16.mxu0 0
    %5038 = vmatpush1.bf16.msra.mxu0 0
    %5039 = vmatprep.subr.bf16.mxu0 0
    %5040 = vmatpush1.bf16.msra.mxu0 0
    %5041 = vmatprep.subr.bf16.mxu0 0
    %5042 = vmatpush1.bf16.msra.mxu0 0
    %5043 = vmatprep.subr.bf16.mxu0 0
    %5044 = vmatpush1.bf16.msra.mxu0 0
    %5045 = vmatprep.mubr.bf16.mxu0 0
    %5046 = vmatmul.mubr.bf16.gmra.mrb[0].mxu0 %v5011
    %v5047 = vpop.f32.mrb[0].mxu0
    %v5048 = vadd.f32 0.0, %v5047
    %v5049 = vpop.f32.mrb[0].mxu0
    %v5050 = vpop.f32.mrb[0].mxu0
    %v5051 = vadd.f32 0.0, %v5050
    %v5052 = vpop.f32.mrb[0].mxu0
    %5053 = vdwg.mxu0
    %v5054 = vpack.c.bf16 %v5051, %v5048
    %v5056 = vsel %vm256, %v5054, 0
    %v5059 = vsel %vm383, %v4332, 0
    %5061 = vmatprep.subr.bf16.mxu0 0
    %5062 = vmatpush1.bf16.msra.mxu0 %v5059
    %5063 = vmatprep.subr.bf16.mxu0 0
    %5064 = vmatpush1.bf16.msra.mxu0 0
    %5065 = vmatprep.subr.bf16.mxu0 0
    %5066 = vmatpush1.bf16.msra.mxu0 0
    %5067 = vmatprep.subr.bf16.mxu0 0
    %5068 = vmatpush1.bf16.msra.mxu0 0
    %5069 = vmatprep.subr.bf16.mxu0 0
    %5070 = vmatpush1.bf16.msra.mxu0 0
    %5071 = vmatprep.subr.bf16.mxu0 0
    %5072 = vmatpush1.bf16.msra.mxu0 0
    %5073 = vmatprep.subr.bf16.mxu0 0
    %5074 = vmatpush1.bf16.msra.mxu0 0
    %5075 = vmatprep.subr.bf16.mxu0 0
    %5076 = vmatpush1.bf16.msra.mxu0 0
    %5077 = vmatprep.subr.bf16.mxu0 0
    %5078 = vmatpush1.bf16.msra.mxu0 0
    %5079 = vmatprep.subr.bf16.mxu0 0
    %5080 = vmatpush1.bf16.msra.mxu0 0
    %5081 = vmatprep.subr.bf16.mxu0 0
    %5082 = vmatpush1.bf16.msra.mxu0 0
    %5083 = vmatprep.subr.bf16.mxu0 0
    %5084 = vmatpush1.bf16.msra.mxu0 0
    %5085 = vmatprep.subr.bf16.mxu0 0
    %5086 = vmatpush1.bf16.msra.mxu0 0
    %5087 = vmatprep.subr.bf16.mxu0 0
    %5088 = vmatpush1.bf16.msra.mxu0 0
    %5089 = vmatprep.subr.bf16.mxu0 0
    %5090 = vmatpush1.bf16.msra.mxu0 0
    %5091 = vmatprep.subr.bf16.mxu0 0
    %5092 = vmatpush1.bf16.msra.mxu0 0
    %5093 = vmatprep.mubr.bf16.mxu0 0
    %5094 = vmatmul.mubr.bf16.gmra.mrb[0].mxu0 %v5056
    %v5095 = vpop.f32.mrb[0].mxu0
    %v5096 = vadd.f32 0.0, %v5095
    %v5097 = vpop.f32.mrb[0].mxu0
    %v5098 = vpop.f32.mrb[0].mxu0
    %v5099 = vadd.f32 0.0, %v5098
    %v5100 = vpop.f32.mrb[0].mxu0
    %5101 = vdwg.mxu0
    %v5102 = vadd.f32 %v4927, %v5096
    %v5103 = vadd.f32 %v4928, %v5099
    %v5104 = vadd.f32 %v4259, %v5102
    %v5105 = vadd.f32 %v4260, %v5103
    %s5106 = scalar_lea.vmem %s23, 8
    %v5107 = vld [vmem:[%s5106] sm:$0x1]
    %s5108 = scalar_lea.vmem %s23, 9
    %v5109 = vld [vmem:[%s5108] sm:$0x1]
    %v5110 = vsel %vm121, %v5104, 0.0
    %5111 = vadd.xlane.f32.xlu0 %v5110
    %v5112 = vpop.xlane.xlu0 %5111
    %v5113 = vsel %vm121, %v5105, 0.0
    %5114 = vadd.xlane.f32.xlu0 %v5113
    %v5115 = vpop.xlane.xlu0 %5114
    %v5116 = vmul.f32 %v5112, %v128
    %v5117 = vmul.f32 %v5115, %v128
    %v5118 = vsub.f32 %v5104, %v5116
    %v5119 = vsub.f32 %v5105, %v5117
    %v5120 = vmul.f32 %v5118, %v5118
    %v5121 = vmul.f32 %v5119, %v5119
    %v5122 = vsel %vm121, %v5120, 0.0
    %5123 = vadd.xlane.f32.xlu0 %v5122
    %v5124 = vpop.xlane.xlu0 %5123
    %v5125 = vsel %vm121, %v5121, 0.0
    %5126 = vadd.xlane.f32.xlu0 %v5125
    %v5127 = vpop.xlane.xlu0 %5126
    %v5128 = vmul.f32 %v5124, 0.032258064
    %v5129 = vmul.f32 %v5127, 0.032258064
    %v5130 = vrsqrt.pop %v5128
    %v5131 = vmul.f32 %v5128, %v5130
    %vm5132 = vcmp.eq.f32.partialorder %v5128, inf
    %v5133 = vsel %vm5132, %v5128, %v5131
    %vm5134 = vcmp.eq.f32.partialorder %v5128, 0.0
    %v5135 = vand.u32 %v5128, 2147483648
    %v5136 = vsel %vm5134, %v5135, %v5133
    %v5137 = vrsqrt.pop %v5129
    %v5138 = vmul.f32 %v5129, %v5137
    %vm5139 = vcmp.eq.f32.partialorder %v5129, inf
    %v5140 = vsel %vm5139, %v5129, %v5138
    %vm5141 = vcmp.eq.f32.partialorder %v5129, 0.0
    %v5142 = vand.u32 %v5129, 2147483648
    %v5143 = vsel %vm5141, %v5142, %v5140
    %v5144 = vadd.f32 %v5136, 1e-06
    %v5145 = vadd.f32 %v5143, 1e-06
    %v5146 = vrcp.pop %v5144
    %v5147 = vrcp.pop %v5145
    %v5149 = vlaneseq
    %v5150 = vshrl.u32 %v5149, 7
    %v5151 = vsub.s32 0, %v5150
    %v5152 = vrot.slane %v5107, %v5151
    %v5154 = vmul.f32 %v5152, %v5118
    %v5155 = vmul.f32 %v5152, %v5119
    %v5156 = vmul.f32 %v5154, %v5146
    %v5157 = vmul.f32 %v5155, %v5147
    %v5159 = vlaneseq
    %v5160 = vshrl.u32 %v5159, 7
    %v5161 = vsub.s32 0, %v5160
    %v5162 = vrot.slane %v5109, %v5161
    %v5164 = vadd.f32 %v5156, %v5162
    %v5165 = vadd.f32 %v5157, %v5162
    %s5166 = scalar_lea.vmem %s15, 48
    %v5167 = vld [vmem:[%s5166] sm:$0xf]
    %v5168 = vld [vmem:[%s5166 + $0x4] sm:$0xf]
    %v5169 = vld [vmem:[%s5166 + $0x8] sm:$0xf]
    %v5170 = vld [vmem:[%s5166 + $0xc] sm:$0xf]
    %s5171 = scalar_lea.vmem %s16, 3
    %v5172 = vld [vmem:[%s5171] sm:$0x1]
    %s5173 = scalar_lea.vmem %s17, 48
    %v5174 = vld [vmem:[%s5173] sm:$0xf]
    %v5175 = vld [vmem:[%s5173 + $0x4] sm:$0xf]
    %v5176 = vld [vmem:[%s5173 + $0x8] sm:$0xf]
    %v5177 = vld [vmem:[%s5173 + $0xc] sm:$0xf]
    %s5178 = scalar_lea.vmem %s18, 3
    %v5179 = vld [vmem:[%s5178] sm:$0x1]
    %v5180 = vpack.c.bf16 %v5165, %v5164
    %v5182 = vlaneseq
    %v5183 = vshrl.u32 %v5182, 7
    %v5184 = vsub.s32 0, %v5183
    %v5185 = vrot.slane %v5172, %v5184
    %v5191 = vunpack.c.l.b16 %v5167
    %v5192 = vunpack.c.l.b16 %v5168
    %v5193 = vunpack.c.l.b16 %v5169
    %v5194 = vunpack.c.l.b16 %v5170
    %v5195 = vpack.c.b16 %v5192, %v5191
    %v5196 = vpack.c.b16 %v5194, %v5193
    %v5200 = vsel %vm121, %v5180, 0
    %5202 = vmatprep.subr.bf16.mxu0 0
    %5203 = vmatpush1.bf16.msra.mxu0 %v5195
    %5204 = vmatprep.subr.bf16.mxu0 0
    %5205 = vmatpush1.bf16.msra.mxu0 %v5196
    %5206 = vmatprep.subr.bf16.mxu0 0
    %5207 = vmatpush1.bf16.msra.mxu0 0
    %5208 = vmatprep.subr.bf16.mxu0 0
    %5209 = vmatpush1.bf16.msra.mxu0 0
    %5210 = vmatprep.subr.bf16.mxu0 0
    %5211 = vmatpush1.bf16.msra.mxu0 0
    %5212 = vmatprep.subr.bf16.mxu0 0
    %5213 = vmatpush1.bf16.msra.mxu0 0
    %5214 = vmatprep.subr.bf16.mxu0 0
    %5215 = vmatpush1.bf16.msra.mxu0 0
    %5216 = vmatprep.subr.bf16.mxu0 0
    %5217 = vmatpush1.bf16.msra.mxu0 0
    %5218 = vmatprep.subr.bf16.mxu0 0
    %5219 = vmatpush1.bf16.msra.mxu0 0
    %5220 = vmatprep.subr.bf16.mxu0 0
    %5221 = vmatpush1.bf16.msra.mxu0 0
    %5222 = vmatprep.subr.bf16.mxu0 0
    %5223 = vmatpush1.bf16.msra.mxu0 0
    %5224 = vmatprep.subr.bf16.mxu0 0
    %5225 = vmatpush1.bf16.msra.mxu0 0
    %5226 = vmatprep.subr.bf16.mxu0 0
    %5227 = vmatpush1.bf16.msra.mxu0 0
    %5228 = vmatprep.subr.bf16.mxu0 0
    %5229 = vmatpush1.bf16.msra.mxu0 0
    %5230 = vmatprep.subr.bf16.mxu0 0
    %5231 = vmatpush1.bf16.msra.mxu0 0
    %5232 = vmatprep.subr.bf16.mxu0 0
    %5233 = vmatpush1.bf16.msra.mxu0 0
    %5234 = vmatprep.mubr.bf16.mxu0 0
    %5235 = vmatmul.mubr.bf16.gmra.mrb[0].mxu0 %v5200
    %v5236 = vpop.f32.mrb[0].mxu0
    %v5237 = vadd.f32 %v5185, %v5236
    %v5238 = vpop.f32.mrb[0].mxu0
    %v5239 = vpop.f32.mrb[0].mxu0
    %v5240 = vadd.f32 %v5185, %v5239
    %v5241 = vpop.f32.mrb[0].mxu0
    %5242 = vdwg.mxu0
    %5243 = vrot.lane.b32.xlu0 %v5195, 96
    %v5244 = vpop.permute.xlu0 %5243
    %5245 = vrot.lane.b32.xlu0 %v5196, 96
    %v5246 = vpop.permute.xlu0 %5245
    %5249 = vrot.lane.b32.xlu0 %v5185, 96
    %v5250 = vpop.permute.xlu0 %5249
    %5252 = vmatprep.subr.bf16.mxu0 0
    %5253 = vmatpush1.bf16.msra.mxu0 %v5244
    %5254 = vmatprep.subr.bf16.mxu0 0
    %5255 = vmatpush1.bf16.msra.mxu0 %v5246
    %5256 = vmatprep.subr.bf16.mxu0 0
    %5257 = vmatpush1.bf16.msra.mxu0 0
    %5258 = vmatprep.subr.bf16.mxu0 0
    %5259 = vmatpush1.bf16.msra.mxu0 0
    %5260 = vmatprep.subr.bf16.mxu0 0
    %5261 = vmatpush1.bf16.msra.mxu0 0
    %5262 = vmatprep.subr.bf16.mxu0 0
    %5263 = vmatpush1.bf16.msra.mxu0 0
    %5264 = vmatprep.subr.bf16.mxu0 0
    %5265 = vmatpush1.bf16.msra.mxu0 0
    %5266 = vmatprep.subr.bf16.mxu0 0
    %5267 = vmatpush1.bf16.msra.mxu0 0
    %5268 = vmatprep.subr.bf16.mxu0 0
    %5269 = vmatpush1.bf16.msra.mxu0 0
    %5270 = vmatprep.subr.bf16.mxu0 0
    %5271 = vmatpush1.bf16.msra.mxu0 0
    %5272 = vmatprep.subr.bf16.mxu0 0
    %5273 = vmatpush1.bf16.msra.mxu0 0
    %5274 = vmatprep.subr.bf16.mxu0 0
    %5275 = vmatpush1.bf16.msra.mxu0 0
    %5276 = vmatprep.subr.bf16.mxu0 0
    %5277 = vmatpush1.bf16.msra.mxu0 0
    %5278 = vmatprep.subr.bf16.mxu0 0
    %5279 = vmatpush1.bf16.msra.mxu0 0
    %5280 = vmatprep.subr.bf16.mxu0 0
    %5281 = vmatpush1.bf16.msra.mxu0 0
    %5282 = vmatprep.subr.bf16.mxu0 0
    %5283 = vmatpush1.bf16.msra.mxu0 0
    %5284 = vmatprep.mubr.bf16.mxu0 0
    %5285 = vmatmul.mubr.bf16.gmra.mrb[0].mxu0 %v3294
    %v5286 = vpop.f32.mrb[0].mxu0
    %v5287 = vadd.f32 %v5250, %v5286
    %v5288 = vpop.f32.mrb[0].mxu0
    %v5289 = vpop.f32.mrb[0].mxu0
    %v5290 = vadd.f32 %v5250, %v5289
    %v5291 = vpop.f32.mrb[0].mxu0
    %5292 = vdwg.mxu0
    %v5293 = vpack.c.bf16 %v5240, %v5237
    %v5294 = vpack.c.bf16 %v5290, %v5287
    %v5296 = vsel %vm256, %v5293, 0
    %v5299 = vsel %vm256, %v5294, 0
    %5301 = vmatprep.subr.bf16.mxu0 0
    %5302 = vmatpush1.bf16.xpose.msra.mxu0 %v5299
    %5303 = vmatprep.subr.bf16.mxu0 0
    %5304 = vmatpush1.bf16.xpose.msra.mxu0 0
    %5305 = vmatprep.subr.bf16.mxu0 0
    %5306 = vmatpush1.bf16.xpose.msra.mxu0 0
    %5307 = vmatprep.subr.bf16.mxu0 0
    %5308 = vmatpush1.bf16.xpose.msra.mxu0 0
    %5309 = vmatprep.subr.bf16.mxu0 0
    %5310 = vmatpush1.bf16.xpose.msra.mxu0 0
    %5311 = vmatprep.subr.bf16.mxu0 0
    %5312 = vmatpush1.bf16.xpose.msra.mxu0 0
    %5313 = vmatprep.subr.bf16.mxu0 0
    %5314 = vmatpush1.bf16.xpose.msra.mxu0 0
    %5315 = vmatprep.subr.bf16.mxu0 0
    %5316 = vmatpush1.bf16.xpose.msra.mxu0 0
    %5317 = vmatprep.subr.bf16.mxu0 0
    %5318 = vmatpush1.bf16.xpose.msra.mxu0 0
    %5319 = vmatprep.subr.bf16.mxu0 0
    %5320 = vmatpush1.bf16.xpose.msra.mxu0 0
    %5321 = vmatprep.subr.bf16.mxu0 0
    %5322 = vmatpush1.bf16.xpose.msra.mxu0 0
    %5323 = vmatprep.subr.bf16.mxu0 0
    %5324 = vmatpush1.bf16.xpose.msra.mxu0 0
    %5325 = vmatprep.subr.bf16.mxu0 0
    %5326 = vmatpush1.bf16.xpose.msra.mxu0 0
    %5327 = vmatprep.subr.bf16.mxu0 0
    %5328 = vmatpush1.bf16.xpose.msra.mxu0 0
    %5329 = vmatprep.subr.bf16.mxu0 0
    %5330 = vmatpush1.bf16.xpose.msra.mxu0 0
    %5331 = vmatprep.subr.bf16.mxu0 0
    %5332 = vmatpush1.bf16.xpose.msra.mxu0 0
    %5333 = vmatprep.mubr.bf16.mxu0 0
    %5334 = vmatmul.mubr.bf16.gmra.mrb[0].mxu0 %v5296
    %v5335 = vpop.f32.mrb[0].mxu0
    %v5336 = vadd.f32 0.0, %v5335
    %v5337 = vpop.f32.mrb[0].mxu0
    %v5338 = vpop.f32.mrb[0].mxu0
    %v5339 = vadd.f32 0.0, %v5338
    %v5340 = vpop.f32.mrb[0].mxu0
    %5341 = vdwg.mxu0
    %v5342 = vmul.f32 %v5336, 0.35355338
    %v5343 = vmul.f32 %v5339, 0.35355338
    %v5344 = vadd.f32 %v5342, %v114
    %v5345 = vadd.f32 %v5343, %v115
    %v5346 = vsel %vm308, %v5344, -inf
    %5347 = vmax.xlane.f32.xlu0 %v5346
    %v5348 = vpop.xlane.xlu0 %5347
    %v5349 = vsel %vm308, %v5345, -inf
    %5350 = vmax.xlane.f32.xlu0 %v5349
    %v5351 = vpop.xlane.xlu0 %5350
    %v5352 = vsub.f32 %v5344, %v5348
    %v5353 = vsub.f32 %v5345, %v5351
    %v5354 = vmul.f32 %v5352, 1.442695
    %v5355 = vpow.pop %v5354
    %v5356 = vmul.f32 %v5353, 1.442695
    %v5357 = vpow.pop %v5356
    %v5358 = vsel %vm308, %v5355, 0.0
    %5359 = vadd.xlane.f32.xlu0 %v5358
    %v5360 = vpop.xlane.xlu0 %5359
    %v5361 = vsel %vm308, %v5357, 0.0
    %5362 = vadd.xlane.f32.xlu0 %v5361
    %v5363 = vpop.xlane.xlu0 %5362
    %v5364 = vrcp.pop %v5360
    %v5365 = vrcp.pop %v5363
    %v5366 = vmul.f32 %v5355, %v5364
    %v5367 = vmul.f32 %v5357, %v5365
    %v5368 = vpack.c.bf16 %v5367, %v5366
    %5370 = vrot.lane.b32.xlu0 %v5294, 96
    %v5371 = vpop.permute.xlu0 %5370
    %v5374 = vsel %vm308, %v5368, 0
    %5376 = vmatprep.subr.bf16.mxu0 0
    %5377 = vmatpush1.bf16.msra.mxu0 %v5371
    %5378 = vmatprep.subr.bf16.mxu0 0
    %5379 = vmatpush1.bf16.msra.mxu0 0
    %5380 = vmatprep.subr.bf16.mxu0 0
    %5381 = vmatpush1.bf16.msra.mxu0 0
    %5382 = vmatprep.subr.bf16.mxu0 0
    %5383 = vmatpush1.bf16.msra.mxu0 0
    %5384 = vmatprep.subr.bf16.mxu0 0
    %5385 = vmatpush1.bf16.msra.mxu0 0
    %5386 = vmatprep.subr.bf16.mxu0 0
    %5387 = vmatpush1.bf16.msra.mxu0 0
    %5388 = vmatprep.subr.bf16.mxu0 0
    %5389 = vmatpush1.bf16.msra.mxu0 0
    %5390 = vmatprep.subr.bf16.mxu0 0
    %5391 = vmatpush1.bf16.msra.mxu0 0
    %5392 = vmatprep.subr.bf16.mxu0 0
    %5393 = vmatpush1.bf16.msra.mxu0 0
    %5394 = vmatprep.subr.bf16.mxu0 0
    %5395 = vmatpush1.bf16.msra.mxu0 0
    %5396 = vmatprep.subr.bf16.mxu0 0
    %5397 = vmatpush1.bf16.msra.mxu0 0
    %5398 = vmatprep.subr.bf16.mxu0 0
    %5399 = vmatpush1.bf16.msra.mxu0 0
    %5400 = vmatprep.subr.bf16.mxu0 0
    %5401 = vmatpush1.bf16.msra.mxu0 0
    %5402 = vmatprep.subr.bf16.mxu0 0
    %5403 = vmatpush1.bf16.msra.mxu0 0
    %5404 = vmatprep.subr.bf16.mxu0 0
    %5405 = vmatpush1.bf16.msra.mxu0 0
    %5406 = vmatprep.subr.bf16.mxu0 0
    %5407 = vmatpush1.bf16.msra.mxu0 0
    %5408 = vmatprep.mubr.bf16.mxu0 0
    %5409 = vmatmul.mubr.bf16.gmra.mrb[0].mxu0 %v5374
    %v5410 = vpop.f32.mrb[0].mxu0
    %v5411 = vadd.f32 0.0, %v5410
    %v5412 = vpop.f32.mrb[0].mxu0
    %v5413 = vpop.f32.mrb[0].mxu0
    %v5414 = vadd.f32 0.0, %v5413
    %v5415 = vpop.f32.mrb[0].mxu0
    %5416 = vdwg.mxu0
    %v5417 = vpack.c.bf16 %v5414, %v5411
    %v5419 = vsel %vm256, %v5417, 0
    %v5422 = vsel %vm383, %v5174, 0
    %5424 = vmatprep.subr.bf16.mxu0 0
    %5425 = vmatpush1.bf16.msra.mxu0 %v5422
    %5426 = vmatprep.subr.bf16.mxu0 0
    %5427 = vmatpush1.bf16.msra.mxu0 0
    %5428 = vmatprep.subr.bf16.mxu0 0
    %5429 = vmatpush1.bf16.msra.mxu0 0
    %5430 = vmatprep.subr.bf16.mxu0 0
    %5431 = vmatpush1.bf16.msra.mxu0 0
    %5432 = vmatprep.subr.bf16.mxu0 0
    %5433 = vmatpush1.bf16.msra.mxu0 0
    %5434 = vmatprep.subr.bf16.mxu0 0
    %5435 = vmatpush1.bf16.msra.mxu0 0
    %5436 = vmatprep.subr.bf16.mxu0 0
    %5437 = vmatpush1.bf16.msra.mxu0 0
    %5438 = vmatprep.subr.bf16.mxu0 0
    %5439 = vmatpush1.bf16.msra.mxu0 0
    %5440 = vmatprep.subr.bf16.mxu0 0
    %5441 = vmatpush1.bf16.msra.mxu0 0
    %5442 = vmatprep.subr.bf16.mxu0 0
    %5443 = vmatpush1.bf16.msra.mxu0 0
    %5444 = vmatprep.subr.bf16.mxu0 0
    %5445 = vmatpush1.bf16.msra.mxu0 0
    %5446 = vmatprep.subr.bf16.mxu0 0
    %5447 = vmatpush1.bf16.msra.mxu0 0
    %5448 = vmatprep.subr.bf16.mxu0 0
    %5449 = vmatpush1.bf16.msra.mxu0 0
    %5450 = vmatprep.subr.bf16.mxu0 0
    %5451 = vmatpush1.bf16.msra.mxu0 0
    %5452 = vmatprep.subr.bf16.mxu0 0
    %5453 = vmatpush1.bf16.msra.mxu0 0
    %5454 = vmatprep.subr.bf16.mxu0 0
    %5455 = vmatpush1.bf16.msra.mxu0 0
    %5456 = vmatprep.mubr.bf16.mxu0 0
    %5457 = vmatmul.mubr.bf16.gmra.mrb[0].mxu0 %v5419
    %v5458 = vpop.f32.mrb[0].mxu0
    %v5459 = vadd.f32 0.0, %v5458
    %v5460 = vpop.f32.mrb[0].mxu0
    %v5461 = vpop.f32.mrb[0].mxu0
    %v5462 = vadd.f32 0.0, %v5461
    %v5463 = vpop.f32.mrb[0].mxu0
    %5464 = vdwg.mxu0
    %v5466 = vlaneseq
    %v5467 = vshrl.u32 %v5466, 7
    %v5468 = vsub.s32 0, %v5467
    %v5469 = vrot.slane %v5179, %v5468
    %v5471 = vadd.f32 %v5469, %v5459
    %v5472 = vadd.f32 %v5469, %v5462
    %5474 = vrot.lane.b32.xlu0 %v5293, 120
    %v5475 = vpop.permute.xlu0 %5474
    %5476 = vrot.lane.b32.xlu0 %v5294, 120
    %v5477 = vpop.permute.xlu0 %5476
    %v5479 = vsel %vm256, %v5475, 0
    %v5482 = vsel %vm256, %v5477, 0
    %5484 = vmatprep.subr.bf16.mxu0 0
    %5485 = vmatpush1.bf16.xpose.msra.mxu0 %v5482
    %5486 = vmatprep.subr.bf16.mxu0 0
    %5487 = vmatpush1.bf16.xpose.msra.mxu0 0
    %5488 = vmatprep.subr.bf16.mxu0 0
    %5489 = vmatpush1.bf16.xpose.msra.mxu0 0
    %5490 = vmatprep.subr.bf16.mxu0 0
    %5491 = vmatpush1.bf16.xpose.msra.mxu0 0
    %5492 = vmatprep.subr.bf16.mxu0 0
    %5493 = vmatpush1.bf16.xpose.msra.mxu0 0
    %5494 = vmatprep.subr.bf16.mxu0 0
    %5495 = vmatpush1.bf16.xpose.msra.mxu0 0
    %5496 = vmatprep.subr.bf16.mxu0 0
    %5497 = vmatpush1.bf16.xpose.msra.mxu0 0
    %5498 = vmatprep.subr.bf16.mxu0 0
    %5499 = vmatpush1.bf16.xpose.msra.mxu0 0
    %5500 = vmatprep.subr.bf16.mxu0 0
    %5501 = vmatpush1.bf16.xpose.msra.mxu0 0
    %5502 = vmatprep.subr.bf16.mxu0 0
    %5503 = vmatpush1.bf16.xpose.msra.mxu0 0
    %5504 = vmatprep.subr.bf16.mxu0 0
    %5505 = vmatpush1.bf16.xpose.msra.mxu0 0
    %5506 = vmatprep.subr.bf16.mxu0 0
    %5507 = vmatpush1.bf16.xpose.msra.mxu0 0
    %5508 = vmatprep.subr.bf16.mxu0 0
    %5509 = vmatpush1.bf16.xpose.msra.mxu0 0
    %5510 = vmatprep.subr.bf16.mxu0 0
    %5511 = vmatpush1.bf16.xpose.msra.mxu0 0
    %5512 = vmatprep.subr.bf16.mxu0 0
    %5513 = vmatpush1.bf16.xpose.msra.mxu0 0
    %5514 = vmatprep.subr.bf16.mxu0 0
    %5515 = vmatpush1.bf16.xpose.msra.mxu0 0
    %5516 = vmatprep.mubr.bf16.mxu0 0
    %5517 = vmatmul.mubr.bf16.gmra.mrb[0].mxu0 %v5479
    %v5518 = vpop.f32.mrb[0].mxu0
    %v5519 = vadd.f32 0.0, %v5518
    %v5520 = vpop.f32.mrb[0].mxu0
    %v5521 = vpop.f32.mrb[0].mxu0
    %v5522 = vadd.f32 0.0, %v5521
    %v5523 = vpop.f32.mrb[0].mxu0
    %5524 = vdwg.mxu0
    %v5525 = vmul.f32 %v5519, 0.35355338
    %v5526 = vmul.f32 %v5522, 0.35355338
    %v5527 = vadd.f32 %v5525, %v114
    %v5528 = vadd.f32 %v5526, %v115
    %v5529 = vsel %vm308, %v5527, -inf
    %5530 = vmax.xlane.f32.xlu0 %v5529
    %v5531 = vpop.xlane.xlu0 %5530
    %v5532 = vsel %vm308, %v5528, -inf
    %5533 = vmax.xlane.f32.xlu0 %v5532
    %v5534 = vpop.xlane.xlu0 %5533
    %v5535 = vsub.f32 %v5527, %v5531
    %v5536 = vsub.f32 %v5528, %v5534
    %v5537 = vmul.f32 %v5535, 1.442695
    %v5538 = vpow.pop %v5537
    %v5539 = vmul.f32 %v5536, 1.442695
    %v5540 = vpow.pop %v5539
    %v5541 = vsel %vm308, %v5538, 0.0
    %5542 = vadd.xlane.f32.xlu0 %v5541
    %v5543 = vpop.xlane.xlu0 %5542
    %v5544 = vsel %vm308, %v5540, 0.0
    %5545 = vadd.xlane.f32.xlu0 %v5544
    %v5546 = vpop.xlane.xlu0 %5545
    %v5547 = vrcp.pop %v5543
    %v5548 = vrcp.pop %v5546
    %v5549 = vmul.f32 %v5538, %v5547
    %v5550 = vmul.f32 %v5540, %v5548
    %v5551 = vpack.c.bf16 %v5550, %v5549
    %5552 = vrot.lane.b32.xlu0 %v5294, 88
    %v5553 = vpop.permute.xlu0 %5552
    %v5556 = vsel %vm308, %v5551, 0
    %5558 = vmatprep.subr.bf16.mxu0 0
    %5559 = vmatpush1.bf16.msra.mxu0 %v5553
    %5560 = vmatprep.subr.bf16.mxu0 0
    %5561 = vmatpush1.bf16.msra.mxu0 0
    %5562 = vmatprep.subr.bf16.mxu0 0
    %5563 = vmatpush1.bf16.msra.mxu0 0
    %5564 = vmatprep.subr.bf16.mxu0 0
    %5565 = vmatpush1.bf16.msra.mxu0 0
    %5566 = vmatprep.subr.bf16.mxu0 0
    %5567 = vmatpush1.bf16.msra.mxu0 0
    %5568 = vmatprep.subr.bf16.mxu0 0
    %5569 = vmatpush1.bf16.msra.mxu0 0
    %5570 = vmatprep.subr.bf16.mxu0 0
    %5571 = vmatpush1.bf16.msra.mxu0 0
    %5572 = vmatprep.subr.bf16.mxu0 0
    %5573 = vmatpush1.bf16.msra.mxu0 0
    %5574 = vmatprep.subr.bf16.mxu0 0
    %5575 = vmatpush1.bf16.msra.mxu0 0
    %5576 = vmatprep.subr.bf16.mxu0 0
    %5577 = vmatpush1.bf16.msra.mxu0 0
    %5578 = vmatprep.subr.bf16.mxu0 0
    %5579 = vmatpush1.bf16.msra.mxu0 0
    %5580 = vmatprep.subr.bf16.mxu0 0
    %5581 = vmatpush1.bf16.msra.mxu0 0
    %5582 = vmatprep.subr.bf16.mxu0 0
    %5583 = vmatpush1.bf16.msra.mxu0 0
    %5584 = vmatprep.subr.bf16.mxu0 0
    %5585 = vmatpush1.bf16.msra.mxu0 0
    %5586 = vmatprep.subr.bf16.mxu0 0
    %5587 = vmatpush1.bf16.msra.mxu0 0
    %5588 = vmatprep.subr.bf16.mxu0 0
    %5589 = vmatpush1.bf16.msra.mxu0 0
    %5590 = vmatprep.mubr.bf16.mxu0 0
    %5591 = vmatmul.mubr.bf16.gmra.mrb[0].mxu0 %v5556
    %v5592 = vpop.f32.mrb[0].mxu0
    %v5593 = vadd.f32 0.0, %v5592
    %v5594 = vpop.f32.mrb[0].mxu0
    %v5595 = vpop.f32.mrb[0].mxu0
    %v5596 = vadd.f32 0.0, %v5595
    %v5597 = vpop.f32.mrb[0].mxu0
    %5598 = vdwg.mxu0
    %v5599 = vpack.c.bf16 %v5596, %v5593
    %v5601 = vsel %vm256, %v5599, 0
    %v5604 = vsel %vm383, %v5175, 0
    %5606 = vmatprep.subr.bf16.mxu0 0
    %5607 = vmatpush1.bf16.msra.mxu0 %v5604
    %5608 = vmatprep.subr.bf16.mxu0 0
    %5609 = vmatpush1.bf16.msra.mxu0 0
    %5610 = vmatprep.subr.bf16.mxu0 0
    %5611 = vmatpush1.bf16.msra.mxu0 0
    %5612 = vmatprep.subr.bf16.mxu0 0
    %5613 = vmatpush1.bf16.msra.mxu0 0
    %5614 = vmatprep.subr.bf16.mxu0 0
    %5615 = vmatpush1.bf16.msra.mxu0 0
    %5616 = vmatprep.subr.bf16.mxu0 0
    %5617 = vmatpush1.bf16.msra.mxu0 0
    %5618 = vmatprep.subr.bf16.mxu0 0
    %5619 = vmatpush1.bf16.msra.mxu0 0
    %5620 = vmatprep.subr.bf16.mxu0 0
    %5621 = vmatpush1.bf16.msra.mxu0 0
    %5622 = vmatprep.subr.bf16.mxu0 0
    %5623 = vmatpush1.bf16.msra.mxu0 0
    %5624 = vmatprep.subr.bf16.mxu0 0
    %5625 = vmatpush1.bf16.msra.mxu0 0
    %5626 = vmatprep.subr.bf16.mxu0 0
    %5627 = vmatpush1.bf16.msra.mxu0 0
    %5628 = vmatprep.subr.bf16.mxu0 0
    %5629 = vmatpush1.bf16.msra.mxu0 0
    %5630 = vmatprep.subr.bf16.mxu0 0
    %5631 = vmatpush1.bf16.msra.mxu0 0
    %5632 = vmatprep.subr.bf16.mxu0 0
    %5633 = vmatpush1.bf16.msra.mxu0 0
    %5634 = vmatprep.subr.bf16.mxu0 0
    %5635 = vmatpush1.bf16.msra.mxu0 0
    %5636 = vmatprep.subr.bf16.mxu0 0
    %5637 = vmatpush1.bf16.msra.mxu0 0
    %5638 = vmatprep.mubr.bf16.mxu0 0
    %5639 = vmatmul.mubr.bf16.gmra.mrb[0].mxu0 %v5601
    %v5640 = vpop.f32.mrb[0].mxu0
    %v5641 = vadd.f32 0.0, %v5640
    %v5642 = vpop.f32.mrb[0].mxu0
    %v5643 = vpop.f32.mrb[0].mxu0
    %v5644 = vadd.f32 0.0, %v5643
    %v5645 = vpop.f32.mrb[0].mxu0
    %5646 = vdwg.mxu0
    %v5647 = vadd.f32 %v5471, %v5641
    %v5648 = vadd.f32 %v5472, %v5644
    %5649 = vrot.lane.b32.xlu0 %v5293, 112
    %v5650 = vpop.permute.xlu0 %5649
    %5651 = vrot.lane.b32.xlu0 %v5294, 112
    %v5652 = vpop.permute.xlu0 %5651
    %v5654 = vsel %vm256, %v5650, 0
    %v5657 = vsel %vm256, %v5652, 0
    %5659 = vmatprep.subr.bf16.mxu0 0
    %5660 = vmatpush1.bf16.xpose.msra.mxu0 %v5657
    %5661 = vmatprep.subr.bf16.mxu0 0
    %5662 = vmatpush1.bf16.xpose.msra.mxu0 0
    %5663 = vmatprep.subr.bf16.mxu0 0
    %5664 = vmatpush1.bf16.xpose.msra.mxu0 0
    %5665 = vmatprep.subr.bf16.mxu0 0
    %5666 = vmatpush1.bf16.xpose.msra.mxu0 0
    %5667 = vmatprep.subr.bf16.mxu0 0
    %5668 = vmatpush1.bf16.xpose.msra.mxu0 0
    %5669 = vmatprep.subr.bf16.mxu0 0
    %5670 = vmatpush1.bf16.xpose.msra.mxu0 0
    %5671 = vmatprep.subr.bf16.mxu0 0
    %5672 = vmatpush1.bf16.xpose.msra.mxu0 0
    %5673 = vmatprep.subr.bf16.mxu0 0
    %5674 = vmatpush1.bf16.xpose.msra.mxu0 0
    %5675 = vmatprep.subr.bf16.mxu0 0
    %5676 = vmatpush1.bf16.xpose.msra.mxu0 0
    %5677 = vmatprep.subr.bf16.mxu0 0
    %5678 = vmatpush1.bf16.xpose.msra.mxu0 0
    %5679 = vmatprep.subr.bf16.mxu0 0
    %5680 = vmatpush1.bf16.xpose.msra.mxu0 0
    %5681 = vmatprep.subr.bf16.mxu0 0
    %5682 = vmatpush1.bf16.xpose.msra.mxu0 0
    %5683 = vmatprep.subr.bf16.mxu0 0
    %5684 = vmatpush1.bf16.xpose.msra.mxu0 0
    %5685 = vmatprep.subr.bf16.mxu0 0
    %5686 = vmatpush1.bf16.xpose.msra.mxu0 0
    %5687 = vmatprep.subr.bf16.mxu0 0
    %5688 = vmatpush1.bf16.xpose.msra.mxu0 0
    %5689 = vmatprep.subr.bf16.mxu0 0
    %5690 = vmatpush1.bf16.xpose.msra.mxu0 0
    %5691 = vmatprep.mubr.bf16.mxu0 0
    %5692 = vmatmul.mubr.bf16.gmra.mrb[0].mxu0 %v5654
    %v5693 = vpop.f32.mrb[0].mxu0
    %v5694 = vadd.f32 0.0, %v5693
    %v5695 = vpop.f32.mrb[0].mxu0
    %v5696 = vpop.f32.mrb[0].mxu0
    %v5697 = vadd.f32 0.0, %v5696
    %v5698 = vpop.f32.mrb[0].mxu0
    %5699 = vdwg.mxu0
    %v5700 = vmul.f32 %v5694, 0.35355338
    %v5701 = vmul.f32 %v5697, 0.35355338
    %v5702 = vadd.f32 %v5700, %v114
    %v5703 = vadd.f32 %v5701, %v115
    %v5704 = vsel %vm308, %v5702, -inf
    %5705 = vmax.xlane.f32.xlu0 %v5704
    %v5706 = vpop.xlane.xlu0 %5705
    %v5707 = vsel %vm308, %v5703, -inf
    %5708 = vmax.xlane.f32.xlu0 %v5707
    %v5709 = vpop.xlane.xlu0 %5708
    %v5710 = vsub.f32 %v5702, %v5706
    %v5711 = vsub.f32 %v5703, %v5709
    %v5712 = vmul.f32 %v5710, 1.442695
    %v5713 = vpow.pop %v5712
    %v5714 = vmul.f32 %v5711, 1.442695
    %v5715 = vpow.pop %v5714
    %v5716 = vsel %vm308, %v5713, 0.0
    %5717 = vadd.xlane.f32.xlu0 %v5716
    %v5718 = vpop.xlane.xlu0 %5717
    %v5719 = vsel %vm308, %v5715, 0.0
    %5720 = vadd.xlane.f32.xlu0 %v5719
    %v5721 = vpop.xlane.xlu0 %5720
    %v5722 = vrcp.pop %v5718
    %v5723 = vrcp.pop %v5721
    %v5724 = vmul.f32 %v5713, %v5722
    %v5725 = vmul.f32 %v5715, %v5723
    %v5726 = vpack.c.bf16 %v5725, %v5724
    %5727 = vrot.lane.b32.xlu0 %v5294, 80
    %v5728 = vpop.permute.xlu0 %5727
    %v5731 = vsel %vm308, %v5726, 0
    %5733 = vmatprep.subr.bf16.mxu0 0
    %5734 = vmatpush1.bf16.msra.mxu0 %v5728
    %5735 = vmatprep.subr.bf16.mxu0 0
    %5736 = vmatpush1.bf16.msra.mxu0 0
    %5737 = vmatprep.subr.bf16.mxu0 0
    %5738 = vmatpush1.bf16.msra.mxu0 0
    %5739 = vmatprep.subr.bf16.mxu0 0
    %5740 = vmatpush1.bf16.msra.mxu0 0
    %5741 = vmatprep.subr.bf16.mxu0 0
    %5742 = vmatpush1.bf16.msra.mxu0 0
    %5743 = vmatprep.subr.bf16.mxu0 0
    %5744 = vmatpush1.bf16.msra.mxu0 0
    %5745 = vmatprep.subr.bf16.mxu0 0
    %5746 = vmatpush1.bf16.msra.mxu0 0
    %5747 = vmatprep.subr.bf16.mxu0 0
    %5748 = vmatpush1.bf16.msra.mxu0 0
    %5749 = vmatprep.subr.bf16.mxu0 0
    %5750 = vmatpush1.bf16.msra.mxu0 0
    %5751 = vmatprep.subr.bf16.mxu0 0
    %5752 = vmatpush1.bf16.msra.mxu0 0
    %5753 = vmatprep.subr.bf16.mxu0 0
    %5754 = vmatpush1.bf16.msra.mxu0 0
    %5755 = vmatprep.subr.bf16.mxu0 0
    %5756 = vmatpush1.bf16.msra.mxu0 0
    %5757 = vmatprep.subr.bf16.mxu0 0
    %5758 = vmatpush1.bf16.msra.mxu0 0
    %5759 = vmatprep.subr.bf16.mxu0 0
    %5760 = vmatpush1.bf16.msra.mxu0 0
    %5761 = vmatprep.subr.bf16.mxu0 0
    %5762 = vmatpush1.bf16.msra.mxu0 0
    %5763 = vmatprep.subr.bf16.mxu0 0
    %5764 = vmatpush1.bf16.msra.mxu0 0
    %5765 = vmatprep.mubr.bf16.mxu0 0
    %5766 = vmatmul.mubr.bf16.gmra.mrb[0].mxu0 %v5731
    %v5767 = vpop.f32.mrb[0].mxu0
    %v5768 = vadd.f32 0.0, %v5767
    %v5769 = vpop.f32.mrb[0].mxu0
    %v5770 = vpop.f32.mrb[0].mxu0
    %v5771 = vadd.f32 0.0, %v5770
    %v5772 = vpop.f32.mrb[0].mxu0
    %5773 = vdwg.mxu0
    %v5774 = vpack.c.bf16 %v5771, %v5768
    %v5776 = vsel %vm256, %v5774, 0
    %v5779 = vsel %vm383, %v5176, 0
    %5781 = vmatprep.subr.bf16.mxu0 0
    %5782 = vmatpush1.bf16.msra.mxu0 %v5779
    %5783 = vmatprep.subr.bf16.mxu0 0
    %5784 = vmatpush1.bf16.msra.mxu0 0
    %5785 = vmatprep.subr.bf16.mxu0 0
    %5786 = vmatpush1.bf16.msra.mxu0 0
    %5787 = vmatprep.subr.bf16.mxu0 0
    %5788 = vmatpush1.bf16.msra.mxu0 0
    %5789 = vmatprep.subr.bf16.mxu0 0
    %5790 = vmatpush1.bf16.msra.mxu0 0
    %5791 = vmatprep.subr.bf16.mxu0 0
    %5792 = vmatpush1.bf16.msra.mxu0 0
    %5793 = vmatprep.subr.bf16.mxu0 0
    %5794 = vmatpush1.bf16.msra.mxu0 0
    %5795 = vmatprep.subr.bf16.mxu0 0
    %5796 = vmatpush1.bf16.msra.mxu0 0
    %5797 = vmatprep.subr.bf16.mxu0 0
    %5798 = vmatpush1.bf16.msra.mxu0 0
    %5799 = vmatprep.subr.bf16.mxu0 0
    %5800 = vmatpush1.bf16.msra.mxu0 0
    %5801 = vmatprep.subr.bf16.mxu0 0
    %5802 = vmatpush1.bf16.msra.mxu0 0
    %5803 = vmatprep.subr.bf16.mxu0 0
    %5804 = vmatpush1.bf16.msra.mxu0 0
    %5805 = vmatprep.subr.bf16.mxu0 0
    %5806 = vmatpush1.bf16.msra.mxu0 0
    %5807 = vmatprep.subr.bf16.mxu0 0
    %5808 = vmatpush1.bf16.msra.mxu0 0
    %5809 = vmatprep.subr.bf16.mxu0 0
    %5810 = vmatpush1.bf16.msra.mxu0 0
    %5811 = vmatprep.subr.bf16.mxu0 0
    %5812 = vmatpush1.bf16.msra.mxu0 0
    %5813 = vmatprep.mubr.bf16.mxu0 0
    %5814 = vmatmul.mubr.bf16.gmra.mrb[0].mxu0 %v5776
    %v5815 = vpop.f32.mrb[0].mxu0
    %v5816 = vadd.f32 0.0, %v5815
    %v5817 = vpop.f32.mrb[0].mxu0
    %v5818 = vpop.f32.mrb[0].mxu0
    %v5819 = vadd.f32 0.0, %v5818
    %v5820 = vpop.f32.mrb[0].mxu0
    %5821 = vdwg.mxu0
    %v5822 = vadd.f32 %v5647, %v5816
    %v5823 = vadd.f32 %v5648, %v5819
    %5824 = vrot.lane.b32.xlu0 %v5293, 104
    %v5825 = vpop.permute.xlu0 %5824
    %5826 = vrot.lane.b32.xlu0 %v5294, 104
    %v5827 = vpop.permute.xlu0 %5826
    %v5829 = vsel %vm256, %v5825, 0
    %v5832 = vsel %vm256, %v5827, 0
    %5834 = vmatprep.subr.bf16.mxu0 0
    %5835 = vmatpush1.bf16.xpose.msra.mxu0 %v5832
    %5836 = vmatprep.subr.bf16.mxu0 0
    %5837 = vmatpush1.bf16.xpose.msra.mxu0 0
    %5838 = vmatprep.subr.bf16.mxu0 0
    %5839 = vmatpush1.bf16.xpose.msra.mxu0 0
    %5840 = vmatprep.subr.bf16.mxu0 0
    %5841 = vmatpush1.bf16.xpose.msra.mxu0 0
    %5842 = vmatprep.subr.bf16.mxu0 0
    %5843 = vmatpush1.bf16.xpose.msra.mxu0 0
    %5844 = vmatprep.subr.bf16.mxu0 0
    %5845 = vmatpush1.bf16.xpose.msra.mxu0 0
    %5846 = vmatprep.subr.bf16.mxu0 0
    %5847 = vmatpush1.bf16.xpose.msra.mxu0 0
    %5848 = vmatprep.subr.bf16.mxu0 0
    %5849 = vmatpush1.bf16.xpose.msra.mxu0 0
    %5850 = vmatprep.subr.bf16.mxu0 0
    %5851 = vmatpush1.bf16.xpose.msra.mxu0 0
    %5852 = vmatprep.subr.bf16.mxu0 0
    %5853 = vmatpush1.bf16.xpose.msra.mxu0 0
    %5854 = vmatprep.subr.bf16.mxu0 0
    %5855 = vmatpush1.bf16.xpose.msra.mxu0 0
    %5856 = vmatprep.subr.bf16.mxu0 0
    %5857 = vmatpush1.bf16.xpose.msra.mxu0 0
    %5858 = vmatprep.subr.bf16.mxu0 0
    %5859 = vmatpush1.bf16.xpose.msra.mxu0 0
    %5860 = vmatprep.subr.bf16.mxu0 0
    %5861 = vmatpush1.bf16.xpose.msra.mxu0 0
    %5862 = vmatprep.subr.bf16.mxu0 0
    %5863 = vmatpush1.bf16.xpose.msra.mxu0 0
    %5864 = vmatprep.subr.bf16.mxu0 0
    %5865 = vmatpush1.bf16.xpose.msra.mxu0 0
    %5866 = vmatprep.mubr.bf16.mxu0 0
    %5867 = vmatmul.mubr.bf16.gmra.mrb[0].mxu0 %v5829
    %v5868 = vpop.f32.mrb[0].mxu0
    %v5869 = vadd.f32 0.0, %v5868
    %v5870 = vpop.f32.mrb[0].mxu0
    %v5871 = vpop.f32.mrb[0].mxu0
    %v5872 = vadd.f32 0.0, %v5871
    %v5873 = vpop.f32.mrb[0].mxu0
    %5874 = vdwg.mxu0
    %v5875 = vmul.f32 %v5869, 0.35355338
    %v5876 = vmul.f32 %v5872, 0.35355338
    %v5877 = vadd.f32 %v5875, %v114
    %v5878 = vadd.f32 %v5876, %v115
    %v5879 = vsel %vm308, %v5877, -inf
    %5880 = vmax.xlane.f32.xlu0 %v5879
    %v5881 = vpop.xlane.xlu0 %5880
    %v5882 = vsel %vm308, %v5878, -inf
    %5883 = vmax.xlane.f32.xlu0 %v5882
    %v5884 = vpop.xlane.xlu0 %5883
    %v5885 = vsub.f32 %v5877, %v5881
    %v5886 = vsub.f32 %v5878, %v5884
    %v5887 = vmul.f32 %v5885, 1.442695
    %v5888 = vpow.pop %v5887
    %v5889 = vmul.f32 %v5886, 1.442695
    %v5890 = vpow.pop %v5889
    %v5891 = vsel %vm308, %v5888, 0.0
    %5892 = vadd.xlane.f32.xlu0 %v5891
    %v5893 = vpop.xlane.xlu0 %5892
    %v5894 = vsel %vm308, %v5890, 0.0
    %5895 = vadd.xlane.f32.xlu0 %v5894
    %v5896 = vpop.xlane.xlu0 %5895
    %v5897 = vrcp.pop %v5893
    %v5898 = vrcp.pop %v5896
    %v5899 = vmul.f32 %v5888, %v5897
    %v5900 = vmul.f32 %v5890, %v5898
    %v5901 = vpack.c.bf16 %v5900, %v5899
    %5902 = vrot.lane.b32.xlu0 %v5294, 72
    %v5903 = vpop.permute.xlu0 %5902
    %v5906 = vsel %vm308, %v5901, 0
    %5908 = vmatprep.subr.bf16.mxu0 0
    %5909 = vmatpush1.bf16.msra.mxu0 %v5903
    %5910 = vmatprep.subr.bf16.mxu0 0
    %5911 = vmatpush1.bf16.msra.mxu0 0
    %5912 = vmatprep.subr.bf16.mxu0 0
    %5913 = vmatpush1.bf16.msra.mxu0 0
    %5914 = vmatprep.subr.bf16.mxu0 0
    %5915 = vmatpush1.bf16.msra.mxu0 0
    %5916 = vmatprep.subr.bf16.mxu0 0
    %5917 = vmatpush1.bf16.msra.mxu0 0
    %5918 = vmatprep.subr.bf16.mxu0 0
    %5919 = vmatpush1.bf16.msra.mxu0 0
    %5920 = vmatprep.subr.bf16.mxu0 0
    %5921 = vmatpush1.bf16.msra.mxu0 0
    %5922 = vmatprep.subr.bf16.mxu0 0
    %5923 = vmatpush1.bf16.msra.mxu0 0
    %5924 = vmatprep.subr.bf16.mxu0 0
    %5925 = vmatpush1.bf16.msra.mxu0 0
    %5926 = vmatprep.subr.bf16.mxu0 0
    %5927 = vmatpush1.bf16.msra.mxu0 0
    %5928 = vmatprep.subr.bf16.mxu0 0
    %5929 = vmatpush1.bf16.msra.mxu0 0
    %5930 = vmatprep.subr.bf16.mxu0 0
    %5931 = vmatpush1.bf16.msra.mxu0 0
    %5932 = vmatprep.subr.bf16.mxu0 0
    %5933 = vmatpush1.bf16.msra.mxu0 0
    %5934 = vmatprep.subr.bf16.mxu0 0
    %5935 = vmatpush1.bf16.msra.mxu0 0
    %5936 = vmatprep.subr.bf16.mxu0 0
    %5937 = vmatpush1.bf16.msra.mxu0 0
    %5938 = vmatprep.subr.bf16.mxu0 0
    %5939 = vmatpush1.bf16.msra.mxu0 0
    %5940 = vmatprep.mubr.bf16.mxu0 0
    %5941 = vmatmul.mubr.bf16.gmra.mrb[0].mxu0 %v5906
    %v5942 = vpop.f32.mrb[0].mxu0
    %v5943 = vadd.f32 0.0, %v5942
    %v5944 = vpop.f32.mrb[0].mxu0
    %v5945 = vpop.f32.mrb[0].mxu0
    %v5946 = vadd.f32 0.0, %v5945
    %v5947 = vpop.f32.mrb[0].mxu0
    %5948 = vdwg.mxu0
    %v5949 = vpack.c.bf16 %v5946, %v5943
    %v5951 = vsel %vm256, %v5949, 0
    %v5954 = vsel %vm383, %v5177, 0
    %5956 = vmatprep.subr.bf16.mxu0 0
    %5957 = vmatpush1.bf16.msra.mxu0 %v5954
    %5958 = vmatprep.subr.bf16.mxu0 0
    %5959 = vmatpush1.bf16.msra.mxu0 0
    %5960 = vmatprep.subr.bf16.mxu0 0
    %5961 = vmatpush1.bf16.msra.mxu0 0
    %5962 = vmatprep.subr.bf16.mxu0 0
    %5963 = vmatpush1.bf16.msra.mxu0 0
    %5964 = vmatprep.subr.bf16.mxu0 0
    %5965 = vmatpush1.bf16.msra.mxu0 0
    %5966 = vmatprep.subr.bf16.mxu0 0
    %5967 = vmatpush1.bf16.msra.mxu0 0
    %5968 = vmatprep.subr.bf16.mxu0 0
    %5969 = vmatpush1.bf16.msra.mxu0 0
    %5970 = vmatprep.subr.bf16.mxu0 0
    %5971 = vmatpush1.bf16.msra.mxu0 0
    %5972 = vmatprep.subr.bf16.mxu0 0
    %5973 = vmatpush1.bf16.msra.mxu0 0
    %5974 = vmatprep.subr.bf16.mxu0 0
    %5975 = vmatpush1.bf16.msra.mxu0 0
    %5976 = vmatprep.subr.bf16.mxu0 0
    %5977 = vmatpush1.bf16.msra.mxu0 0
    %5978 = vmatprep.subr.bf16.mxu0 0
    %5979 = vmatpush1.bf16.msra.mxu0 0
    %5980 = vmatprep.subr.bf16.mxu0 0
    %5981 = vmatpush1.bf16.msra.mxu0 0
    %5982 = vmatprep.subr.bf16.mxu0 0
    %5983 = vmatpush1.bf16.msra.mxu0 0
    %5984 = vmatprep.subr.bf16.mxu0 0
    %5985 = vmatpush1.bf16.msra.mxu0 0
    %5986 = vmatprep.subr.bf16.mxu0 0
    %5987 = vmatpush1.bf16.msra.mxu0 0
    %5988 = vmatprep.mubr.bf16.mxu0 0
    %5989 = vmatmul.mubr.bf16.gmra.mrb[0].mxu0 %v5951
    %v5990 = vpop.f32.mrb[0].mxu0
    %v5991 = vadd.f32 0.0, %v5990
    %v5992 = vpop.f32.mrb[0].mxu0
    %v5993 = vpop.f32.mrb[0].mxu0
    %v5994 = vadd.f32 0.0, %v5993
    %v5995 = vpop.f32.mrb[0].mxu0
    %5996 = vdwg.mxu0
    %v5997 = vadd.f32 %v5822, %v5991
    %v5998 = vadd.f32 %v5823, %v5994
    %v5999 = vadd.f32 %v5104, %v5997
    %v6000 = vadd.f32 %v5105, %v5998
    %s6001 = scalar_lea.vmem %s23, 10
    %v6002 = vld [vmem:[%s6001] sm:$0x1]
    %s6003 = scalar_lea.vmem %s23, 11
    %v6004 = vld [vmem:[%s6003] sm:$0x1]
    %v6005 = vsel %vm121, %v5999, 0.0
    %6006 = vadd.xlane.f32.xlu0 %v6005
    %v6007 = vpop.xlane.xlu0 %6006
    %v6008 = vsel %vm121, %v6000, 0.0
    %6009 = vadd.xlane.f32.xlu0 %v6008
    %v6010 = vpop.xlane.xlu0 %6009
    %v6011 = vmul.f32 %v6007, %v128
    %v6012 = vmul.f32 %v6010, %v128
    %v6013 = vsub.f32 %v5999, %v6011
    %v6014 = vsub.f32 %v6000, %v6012
    %v6015 = vmul.f32 %v6013, %v6013
    %v6016 = vmul.f32 %v6014, %v6014
    %v6017 = vsel %vm121, %v6015, 0.0
    %6018 = vadd.xlane.f32.xlu0 %v6017
    %v6019 = vpop.xlane.xlu0 %6018
    %v6020 = vsel %vm121, %v6016, 0.0
    %6021 = vadd.xlane.f32.xlu0 %v6020
    %v6022 = vpop.xlane.xlu0 %6021
    %v6023 = vmul.f32 %v6019, 0.032258064
    %v6024 = vmul.f32 %v6022, 0.032258064
    %v6025 = vrsqrt.pop %v6023
    %v6026 = vmul.f32 %v6023, %v6025
    %vm6027 = vcmp.eq.f32.partialorder %v6023, inf
    %v6028 = vsel %vm6027, %v6023, %v6026
    %vm6029 = vcmp.eq.f32.partialorder %v6023, 0.0
    %v6030 = vand.u32 %v6023, 2147483648
    %v6031 = vsel %vm6029, %v6030, %v6028
    %v6032 = vrsqrt.pop %v6024
    %v6033 = vmul.f32 %v6024, %v6032
    %vm6034 = vcmp.eq.f32.partialorder %v6024, inf
    %v6035 = vsel %vm6034, %v6024, %v6033
    %vm6036 = vcmp.eq.f32.partialorder %v6024, 0.0
    %v6037 = vand.u32 %v6024, 2147483648
    %v6038 = vsel %vm6036, %v6037, %v6035
    %v6039 = vadd.f32 %v6031, 1e-06
    %v6040 = vadd.f32 %v6038, 1e-06
    %v6041 = vrcp.pop %v6039
    %v6042 = vrcp.pop %v6040
    %v6044 = vlaneseq
    %v6045 = vshrl.u32 %v6044, 7
    %v6046 = vsub.s32 0, %v6045
    %v6047 = vrot.slane %v6002, %v6046
    %v6049 = vmul.f32 %v6047, %v6013
    %v6050 = vmul.f32 %v6047, %v6014
    %v6051 = vmul.f32 %v6049, %v6041
    %v6052 = vmul.f32 %v6050, %v6042
    %v6054 = vlaneseq
    %v6055 = vshrl.u32 %v6054, 7
    %v6056 = vsub.s32 0, %v6055
    %v6057 = vrot.slane %v6004, %v6056
    %v6059 = vadd.f32 %v6051, %v6057
    %v6060 = vadd.f32 %v6052, %v6057
    %s6061 = scalar_lea.vmem %s19, 16
    %v6062 = vld [vmem:[%s6061] sm:$0xf]
    %v6063 = vld [vmem:[%s6061 + $0x4] sm:$0xf]
    %v6064 = vld [vmem:[%s6061 + $0x8] sm:$0xf]
    %v6065 = vld [vmem:[%s6061 + $0xc] sm:$0xf]
    %s6066 = scalar_lea.vmem %s20, 1
    %v6067 = vld [vmem:[%s6066] sm:$0x1]
    %s6068 = scalar_lea.vmem %s21, 32
    %v6069 = vld [vmem:[%s6068] sm:$0xf]
    %v6070 = vld [vmem:[%s6068 + $0x4] sm:$0xf]
    %v6071 = vld [vmem:[%s6068 + $0x8] sm:$0xf]
    %v6072 = vld [vmem:[%s6068 + $0xc] sm:$0xf]
    %v6073 = vld [vmem:[%s6068 + $0x10] sm:$0xf]
    %v6074 = vld [vmem:[%s6068 + $0x14] sm:$0xf]
    %v6075 = vld [vmem:[%s6068 + $0x18] sm:$0xf]
    %v6076 = vld [vmem:[%s6068 + $0x1c] sm:$0xf]
    %s6077 = scalar_lea.vmem [#allocation2], 1
    %v6078 = vld [vmem:[%s6077] sm:$0x1]
    %v6079 = vpack.c.bf16 %v6060, %v6059
    %v6081 = vlaneseq
    %v6082 = vshrl.u32 %v6081, 7
    %v6083 = vsub.s32 0, %v6082
    %v6084 = vrot.slane %v6067, %v6083
    %v6090 = vunpack.c.l.b16 %v6062
    %v6091 = vunpack.c.l.b16 %v6063
    %v6092 = vunpack.c.l.b16 %v6064
    %v6093 = vunpack.c.l.b16 %v6065
    %v6094 = vpack.c.b16 %v6091, %v6090
    %v6095 = vpack.c.b16 %v6093, %v6092
    %v6099 = vsel %vm121, %v6079, 0
    %6101 = vmatprep.subr.bf16.mxu0 0
    %6102 = vmatpush1.bf16.msra.mxu0 %v6094
    %6103 = vmatprep.subr.bf16.mxu0 0
    %6104 = vmatpush1.bf16.msra.mxu0 %v6095
    %6105 = vmatprep.subr.bf16.mxu0 0
    %6106 = vmatpush1.bf16.msra.mxu0 0
    %6107 = vmatprep.subr.bf16.mxu0 0
    %6108 = vmatpush1.bf16.msra.mxu0 0
    %6109 = vmatprep.subr.bf16.mxu0 0
    %6110 = vmatpush1.bf16.msra.mxu0 0
    %6111 = vmatprep.subr.bf16.mxu0 0
    %6112 = vmatpush1.bf16.msra.mxu0 0
    %6113 = vmatprep.subr.bf16.mxu0 0
    %6114 = vmatpush1.bf16.msra.mxu0 0
    %6115 = vmatprep.subr.bf16.mxu0 0
    %6116 = vmatpush1.bf16.msra.mxu0 0
    %6117 = vmatprep.subr.bf16.mxu0 0
    %6118 = vmatpush1.bf16.msra.mxu0 0
    %6119 = vmatprep.subr.bf16.mxu0 0
    %6120 = vmatpush1.bf16.msra.mxu0 0
    %6121 = vmatprep.subr.bf16.mxu0 0
    %6122 = vmatpush1.bf16.msra.mxu0 0
    %6123 = vmatprep.subr.bf16.mxu0 0
    %6124 = vmatpush1.bf16.msra.mxu0 0
    %6125 = vmatprep.subr.bf16.mxu0 0
    %6126 = vmatpush1.bf16.msra.mxu0 0
    %6127 = vmatprep.subr.bf16.mxu0 0
    %6128 = vmatpush1.bf16.msra.mxu0 0
    %6129 = vmatprep.subr.bf16.mxu0 0
    %6130 = vmatpush1.bf16.msra.mxu0 0
    %6131 = vmatprep.subr.bf16.mxu0 0
    %6132 = vmatpush1.bf16.msra.mxu0 0
    %6133 = vmatprep.mubr.bf16.mxu0 0
    %6134 = vmatmul.mubr.bf16.gmra.mrb[0].mxu0 %v6099
    %v6135 = vpop.f32.mrb[0].mxu0
    %v6136 = vadd.f32 %v6084, %v6135
    %v6137 = vpop.f32.mrb[0].mxu0
    %v6138 = vpop.f32.mrb[0].mxu0
    %v6139 = vadd.f32 %v6084, %v6138
    %v6140 = vpop.f32.mrb[0].mxu0
    %6141 = vdwg.mxu0
    %v6142 = vmax.f32 %v6136, 0.0
    %v6143 = vmax.f32 %v6139, 0.0
    %v6144 = vpack.c.bf16 %v6143, %v6142
    %v6146 = vlaneseq
    %v6147 = vshrl.u32 %v6146, 7
    %v6148 = vsub.s32 0, %v6147
    %v6149 = vrot.slane %v6078, %v6148
    %v6159 = vunpack.c.l.b16 %v6069
    %v6160 = vunpack.c.l.b16 %v6070
    %v6161 = vunpack.c.l.b16 %v6071
    %v6162 = vunpack.c.l.b16 %v6072
    %v6163 = vunpack.c.l.b16 %v6073
    %v6164 = vunpack.c.l.b16 %v6074
    %v6165 = vunpack.c.l.b16 %v6075
    %v6166 = vunpack.c.l.b16 %v6076
    %v6167 = vpack.c.b16 %v6160, %v6159
    %v6168 = vpack.c.b16 %v6162, %v6161
    %v6169 = vpack.c.b16 %v6164, %v6163
    %v6170 = vpack.c.b16 %v6166, %v6165
    %v6176 = vsel %vm1133, %v6144, 0
    %6178 = vmatprep.subr.bf16.mxu0 0
    %6179 = vmatpush1.bf16.msra.mxu0 %v6167
    %6180 = vmatprep.subr.bf16.mxu0 0
    %6181 = vmatpush1.bf16.msra.mxu0 %v6168
    %6182 = vmatprep.subr.bf16.mxu0 0
    %6183 = vmatpush1.bf16.msra.mxu0 %v6169
    %6184 = vmatprep.subr.bf16.mxu0 0
    %6185 = vmatpush1.bf16.msra.mxu0 %v6170
    %6186 = vmatprep.subr.bf16.mxu0 0
    %6187 = vmatpush1.bf16.msra.mxu0 0
    %6188 = vmatprep.subr.bf16.mxu0 0
    %6189 = vmatpush1.bf16.msra.mxu0 0
    %6190 = vmatprep.subr.bf16.mxu0 0
    %6191 = vmatpush1.bf16.msra.mxu0 0
    %6192 = vmatprep.subr.bf16.mxu0 0
    %6193 = vmatpush1.bf16.msra.mxu0 0
    %6194 = vmatprep.subr.bf16.mxu0 0
    %6195 = vmatpush1.bf16.msra.mxu0 0
    %6196 = vmatprep.subr.bf16.mxu0 0
    %6197 = vmatpush1.bf16.msra.mxu0 0
    %6198 = vmatprep.subr.bf16.mxu0 0
    %6199 = vmatpush1.bf16.msra.mxu0 0
    %6200 = vmatprep.subr.bf16.mxu0 0
    %6201 = vmatpush1.bf16.msra.mxu0 0
    %6202 = vmatprep.subr.bf16.mxu0 0
    %6203 = vmatpush1.bf16.msra.mxu0 0
    %6204 = vmatprep.subr.bf16.mxu0 0
    %6205 = vmatpush1.bf16.msra.mxu0 0
    %6206 = vmatprep.subr.bf16.mxu0 0
    %6207 = vmatpush1.bf16.msra.mxu0 0
    %6208 = vmatprep.subr.bf16.mxu0 0
    %6209 = vmatpush1.bf16.msra.mxu0 0
    %6210 = vmatprep.mubr.bf16.mxu0 0
    %6211 = vmatmul.mubr.bf16.gmra.mrb[0].mxu0 %v6176
    %v6212 = vpop.f32.mrb[0].mxu0
    %v6213 = vadd.f32 %v6149, %v6212
    %v6214 = vpop.f32.mrb[0].mxu0
    %v6215 = vpop.f32.mrb[0].mxu0
    %v6216 = vadd.f32 %v6149, %v6215
    %v6217 = vpop.f32.mrb[0].mxu0
    %6218 = vdwg.mxu0
    %v6219 = vadd.f32 %v5999, %v6213
    %v6220 = vadd.f32 %v6000, %v6216
    %v6221 = vld [vmem:[#allocation5] sm:$0x1]
    %s6222 = scalar_lea.vmem [#allocation5], 1
    %v6223 = vld [vmem:[%s6222] sm:$0x1]
    %v6224 = vsel %vm121, %v6219, 0.0
    %6225 = vadd.xlane.f32.xlu0 %v6224
    %v6226 = vpop.xlane.xlu0 %6225
    %v6227 = vsel %vm121, %v6220, 0.0
    %6228 = vadd.xlane.f32.xlu0 %v6227
    %v6229 = vpop.xlane.xlu0 %6228
    %v6230 = vmul.f32 %v6226, %v128
    %v6231 = vmul.f32 %v6229, %v128
    %v6232 = vsub.f32 %v6219, %v6230
    %v6233 = vsub.f32 %v6220, %v6231
    %v6234 = vmul.f32 %v6232, %v6232
    %v6235 = vmul.f32 %v6233, %v6233
    %v6236 = vsel %vm121, %v6234, 0.0
    %6237 = vadd.xlane.f32.xlu0 %v6236
    %v6238 = vpop.xlane.xlu0 %6237
    %v6239 = vsel %vm121, %v6235, 0.0
    %6240 = vadd.xlane.f32.xlu0 %v6239
    %v6241 = vpop.xlane.xlu0 %6240
    %v6242 = vmul.f32 %v6238, 0.032258064
    %v6243 = vmul.f32 %v6241, 0.032258064
    %v6244 = vrsqrt.pop %v6242
    %v6245 = vmul.f32 %v6242, %v6244
    %vm6246 = vcmp.eq.f32.partialorder %v6242, inf
    %v6247 = vsel %vm6246, %v6242, %v6245
    %vm6248 = vcmp.eq.f32.partialorder %v6242, 0.0
    %v6249 = vand.u32 %v6242, 2147483648
    %v6250 = vsel %vm6248, %v6249, %v6247
    %v6251 = vrsqrt.pop %v6243
    %v6252 = vmul.f32 %v6243, %v6251
    %vm6253 = vcmp.eq.f32.partialorder %v6243, inf
    %v6254 = vsel %vm6253, %v6243, %v6252
    %vm6255 = vcmp.eq.f32.partialorder %v6243, 0.0
    %v6256 = vand.u32 %v6243, 2147483648
    %v6257 = vsel %vm6255, %v6256, %v6254
    %v6258 = vadd.f32 %v6250, 1e-06
    %v6259 = vadd.f32 %v6257, 1e-06
    %v6260 = vrcp.pop %v6258
    %v6261 = vrcp.pop %v6259
    %v6263 = vlaneseq
    %v6264 = vshrl.u32 %v6263, 7
    %v6265 = vsub.s32 0, %v6264
    %v6266 = vrot.slane %v6221, %v6265
    %v6268 = vmul.f32 %v6266, %v6232
    %v6269 = vmul.f32 %v6266, %v6233
    %v6270 = vmul.f32 %v6268, %v6260
    %v6271 = vmul.f32 %v6269, %v6261
    %v6273 = vlaneseq
    %v6274 = vshrl.u32 %v6273, 7
    %v6275 = vsub.s32 0, %v6274
    %v6276 = vrot.slane %v6223, %v6275
    %v6278 = vadd.f32 %v6270, %v6276
    %v6279 = vadd.f32 %v6271, %v6276
    %6280 = vst.msk [vmem:[#allocation7] sm:$0xff] %vm121, %v6278
    %6281 = vst.msk [vmem:[#allocation7 + $0x8] sm:$0xff] %vm121, %v6279
    // Predicated region
    $region110: #{encoder_decoder_forward.1} parent=1 // pred_check
      _
    $region111: #{encoder_decoder_forward.1} parent=1 // pred_check_branch
      %6283 = sbr.rel (0) target = $region113
    $region112: #{encoder_decoder_forward.1} parent=1 // pred_region
      %s6285 = ssub.s32 256, 256
      %6286 = vsyncadd [#allocation4], %s6285
      %s6287 = sshll.u32 [#allocation7], 4
      %s6288 = int_to_ptr.vmem [resolvable:$true] %s6287
      %6293 = dma.vmem_to_hbm [thread:$0]  %s6288, 256, %s25, [#allocation4], 128, 128, 8
    $region113: #{encoder_decoder_forward.1} parent=1 // pred_fallthru
      _
    // Predicated region
    $region114: #{encoder_decoder_forward.1} parent=1 // pred_check
      _
    $region115: #{encoder_decoder_forward.1} parent=1 // pred_check_branch
      %6295 = sbr.rel (0) target = $region117
    $region116: #{encoder_decoder_forward.1} parent=1 // pred_region
      %6296 = dma.done [#allocation4], 256
    $region117: #{encoder_decoder_forward.1} parent=1 // pred_fallthru
      _
    %6297 = vsyncpa [#allocation3], 1
    %6298 = vsyncpa [#allocation6], 1
    %6299 = vsyncpa [#allocation4], 1

</llo_original>
